<compile_context>
chip_gen: v6e
topology: v6e:2x2x1
jax: 0.10.0
libtpu: 0.0.40
codegen_flags: <defaults>
</compile_context>

<pallas_src>
import jax
import jax.numpy as jnp
from jax.experimental import pallas as pl
from jax.experimental.pallas import tpu as pltpu

# ---- logical model dims (match the PyTorch module) --------------------------
H_LSTM = 150       # lstm_hidden_units
D_IN = 176         # 2 * 88
D_HAND = 120       # dense_hand_units
D_PIANO = 100      # dense_piano_units
D_NOTES = 10       # dense_notes_units
N_KEYS = 88

# ---- lane-aligned packed dims ------------------------------------------------
H_PAD = 256                  # per-gate / hidden slab width (150 -> 256 lanes)
G4 = 4 * H_PAD               # fused i,f,g,o gate slab (1024 lanes)
HEAD_L1 = 256                # [x_R @ lanes 0:120 | pad | x_L @ 128:248 | pad]
HEAD_L2 = 256                # [Rpiano 0:100 | Rnotes 100:110 | Lpiano 128:228 | Lnotes 228:238]
HEAD_OUT = 256               # [R_piano 0:88 | R_notes 88 | L_piano 128:216 | L_notes 216]
TIME_BLOCK = 32              # timesteps per grid step (amortizes ~0.35us/step overhead)


# ----------------------------------------------------------------------------
# Fused kernel: layer-0 projection + 2-layer LSTM recurrence + dense heads
# ----------------------------------------------------------------------------
def make_fused_kernel(K, B, T_true, T_pad):
    guard = (T_pad != T_true)      # static: mask state updates on padded timesteps

    def kernel(x_ref, wih0_ref, b0_ref, whh0_ref, w1_ref, b1_ref,
               wh1_ref, bh1_ref, wh2_ref, bh2_ref, wh3_ref, bh3_ref,
               out_ref, hn_ref, cn_ref,
               h0_s, c0_s, h1_s, c1_s, g0_s, y_s):
        blk = pl.program_id(0)

        @pl.when(blk == 0)
        def _():
            h0_s[...] = jnp.zeros_like(h0_s)
            c0_s[...] = jnp.zeros_like(c0_s)
            h1_s[...] = jnp.zeros_like(h1_s)
            c1_s[...] = jnp.zeros_like(c1_s)

        # --- block-level layer-0 input projection (off the serial per-step path)
        g0_s[...] = (jnp.dot(x_ref[...].astype(jnp.bfloat16), wih0_ref[...],
                             preferred_element_type=jnp.float32) + b0_ref[...])

        whh0 = whh0_ref[...]          # (256, 1024)  f32 (recurrent weights stay f32)
        w1 = w1_ref[...]              # (512, 1024)  f32  = [Wih1 ; Whh1] packed
        b1 = b1_ref[...]              # (1, 1024)    f32

        def gates(gpre, c):
            # Each gate lives in its own 256-lane-aligned slab -> whole-vreg slices.
            # Padded lanes stay exactly zero (zero weights/bias/initial state).
            i = jax.nn.sigmoid(gpre[:, 0 * H_PAD:1 * H_PAD])
            f = jax.nn.sigmoid(gpre[:, 1 * H_PAD:2 * H_PAD])
            g = jnp.tanh(gpre[:, 2 * H_PAD:3 * H_PAD])
            o = jax.nn.sigmoid(gpre[:, 3 * H_PAD:4 * H_PAD])
            c_new = f * c + i * g
            h_new = o * jnp.tanh(c_new)
            return h_new, c_new

        h0 = h0_s[...]
        c0 = c0_s[...]
        h1 = h1_s[...]
        c1 = c1_s[...]

        for k in range(K):            # static unroll
            # layer 0: x-projection (and b0) already in g0_s; only h @ Whh0 is serial
            g0 = g0_s[pl.ds(k * B, B), :] + jnp.dot(
                h0, whh0, preferred_element_type=jnp.float32)
            h0n, c0n = gates(g0, c0)
            # layer 1: fused [x | h_prev] projection -> single MXU push per step
            x1 = jnp.concatenate([h0n, h1], axis=-1)
            g1 = jnp.dot(x1, w1, preferred_element_type=jnp.float32) + b1
            h1n, c1n = gates(g1, c1)
            if guard:
                valid = (blk * K + k) < T_true
                h0 = jnp.where(valid, h0n, h0)
                c0 = jnp.where(valid, c0n, c0)
                h1 = jnp.where(valid, h1n, h1)
                c1 = jnp.where(valid, c1n, c1)
            else:
                h0, c0, h1, c1 = h0n, c0n, h1n, c1n
            y_s[pl.ds(k * B, B), :] = h1

        h0_s[...] = h0
        c0_s[...] = c0
        h1_s[...] = h1
        c1_s[...] = c1

        # final-state stores only on the last grid step (states are frozen past T_true)
        @pl.when(blk == pl.num_programs(0) - 1)
        def _():
            hn_ref[0] = h0
            hn_ref[1] = h1
            cn_ref[0] = c0
            cn_ref[1] = c1

        # --- fused dense heads over the whole (K*B, 256) block -------------------
        def lrelu(v):  # F.leaky_relu default negative_slope = 0.01
            return jnp.where(v > 0, v, 0.01 * v)

        y = y_s[...].astype(jnp.bfloat16)
        a1 = lrelu(jnp.dot(y, wh1_ref[...],
                           preferred_element_type=jnp.float32) + bh1_ref[...])
        a2 = lrelu(jnp.dot(a1.astype(jnp.bfloat16), wh2_ref[...],
                           preferred_element_type=jnp.float32) + bh2_ref[...])
        out_ref[...] = (jnp.dot(a2.astype(jnp.bfloat16), wh3_ref[...],
                                preferred_element_type=jnp.float32) + bh3_ref[...])

    return kernel


def run_fused(x2d, kp, *, B, T, K, T_pad):
    """x2d: (T_pad*B, 176) f32, time-major rows t*B+b.
    Returns packed-head output (T_pad*B, 256) f32 and h_n/c_n (2, B, 256) f32."""
    grid = (T_pad // K,)
    const2 = lambda i: (0, 0)
    grid_spec = pltpu.PrefetchScalarGridSpec(
        num_scalar_prefetch=0,
        grid=grid,
        in_specs=[
            pl.BlockSpec((K * B, D_IN), lambda i: (i, 0)),
            pl.BlockSpec((D_IN, G4), const2),            # wih0 (bf16)
            pl.BlockSpec((1, G4), const2),               # b0
            pl.BlockSpec((H_PAD, G4), const2),           # whh0 (f32)
            pl.BlockSpec((2 * H_PAD, G4), const2),       # [wih1;whh1] (f32)
            pl.BlockSpec((1, G4), const2),               # b1
            pl.BlockSpec((H_PAD, HEAD_L1), const2),      # w_h1 (bf16)
            pl.BlockSpec((1, HEAD_L1), const2),
            pl.BlockSpec((HEAD_L1, HEAD_L2), const2),    # w_h2 (bf16)
            pl.BlockSpec((1, HEAD_L2), const2),
            pl.BlockSpec((HEAD_L2, HEAD_OUT), const2),   # w_h3 (bf16)
            pl.BlockSpec((1, HEAD_OUT), const2),
        ],
        out_specs=[
            pl.BlockSpec((K * B, HEAD_OUT), lambda i: (i, 0)),
            pl.BlockSpec((2, B, H_PAD), lambda i: (0, 0, 0)),
            pl.BlockSpec((2, B, H_PAD), lambda i: (0, 0, 0)),
        ],
        scratch_shapes=[pltpu.VMEM((B, H_PAD), jnp.float32)] * 4
                      + [pltpu.VMEM((K * B, G4), jnp.float32),
                         pltpu.VMEM((K * B, H_PAD), jnp.float32)],
    )
    # NOTE: constant-index weight blocks are never re-DMA'd; total VMEM (incl.
    # double buffering) stays well under the 32 MiB default scoped limit.
    return pl.pallas_call(
        make_fused_kernel(K, B, T, T_pad),
        out_shape=(
            jax.ShapeDtypeStruct((T_pad * B, HEAD_OUT), jnp.float32),  # packed heads
            jax.ShapeDtypeStruct((2, B, H_PAD), jnp.float32),          # h_n
            jax.ShapeDtypeStruct((2, B, H_PAD), jnp.float32),          # c_n
        ),
        grid_spec=grid_spec,
        compiler_params=pltpu.CompilerParams(
            dimension_semantics=("arbitrary",)),
    )(x2d, kp["wih0_p"], kp["b0_p"], kp["whh0_p"], kp["w1_p"], kp["b1_p"],
      kp["w_h1"], kp["b_h1"], kp["w_h2"], kp["b_h2"], kp["w_h3"], kp["b_h3"])


# ----------------------------------------------------------------------------
# Full forward (glue in plain JAX — only tiny output slices/transposes remain)
# ----------------------------------------------------------------------------
@jax.jit
def forward(x, kp):
    """x: (B, 2, T, 88) f32 — matches the PyTorch module (batch, hand, time, keys)."""
    x_cat = jnp.concatenate([x[:, 0], x[:, 1]], axis=-1)        # (B, T, 176)
    B, T, _ = x_cat.shape
    K = T if T < TIME_BLOCK else TIME_BLOCK
    T_pad = pl.cdiv(T, K) * K

    x_tm = jnp.transpose(x_cat, (1, 0, 2))                      # (T, B, 176) time-major
    if T_pad != T:
        x_tm = jnp.pad(x_tm, ((0, T_pad - T), (0, 0), (0, 0)))
    x2d = x_tm.reshape(T_pad * B, D_IN)

    out2d, hn_p, cn_p = run_fused(x2d, kp, B=B, T=T, K=K, T_pad=T_pad)

    out = out2d[:T * B].reshape(T, B, HEAD_OUT)                  # time-major slab
    x_R_piano = jnp.transpose(out[:, :, 0:N_KEYS], (1, 0, 2))
    x_R_num_notes = jnp.transpose(out[:, :, N_KEYS:N_KEYS + 1], (1, 0, 2))
    x_L_piano = jnp.transpose(out[:, :, 128:128 + N_KEYS], (1, 0, 2))
    x_L_num_notes = jnp.transpose(out[:, :, 128 + N_KEYS:128 + N_KEYS + 1], (1, 0, 2))
    h_n = hn_p[:, :, :H_LSTM]
    c_n = cn_p[:, :, :H_LSTM]
    return x_R_piano, x_R_num_notes, x_L_piano, x_L_num_notes, (h_n, c_n)


# ----------------------------------------------------------------------------
# Parameters: logical (unpacked, f32) init + packing into kernel layout
# ----------------------------------------------------------------------------
def init_params(key):
    keys = iter(jax.random.split(key, 32))

    def w(shape, scale=0.05):
        return scale * jax.random.normal(next(keys), shape, jnp.float32)

    H = H_LSTM
    p = {}
    # LSTM layer 0 / 1.  b = b_ih + b_hh merged, shape (1, 4H), gate order i,f,g,o.
    p["wih0"] = w((D_IN, 4 * H))
    p["whh0"] = w((H, 4 * H))
    p["b0"] = w((1, 4 * H))
    p["wih1"] = w((H, 4 * H))
    p["whh1"] = w((H, 4 * H))
    p["b1"] = w((1, 4 * H))
    # Dense heads (weights stored (in, out))
    p["w_right"], p["b_right"] = w((H, D_HAND)), w((1, D_HAND))
    p["w_left"], p["b_left"] = w((H, D_HAND)), w((1, D_HAND))
    p["w_Rpiano"], p["b_Rpiano"] = w((D_HAND, D_PIANO)), w((1, D_PIANO))
    p["w_Rnotes"], p["b_Rnotes"] = w((D_HAND, D_NOTES)), w((1, D_NOTES))
    p["w_Lpiano"], p["b_Lpiano"] = w((D_HAND, D_PIANO)), w((1, D_PIANO))
    p["w_Lnotes"], p["b_Lnotes"] = w((D_HAND, D_NOTES)), w((1, D_NOTES))
    p["w_oRpiano"], p["b_oRpiano"] = w((D_PIANO, N_KEYS)), w((1, N_KEYS))
    p["w_oRnotes"], p["b_oRnotes"] = w((D_NOTES, 1)), w((1, 1))
    p["w_oLpiano"], p["b_oLpiano"] = w((D_PIANO, N_KEYS)), w((1, N_KEYS))
    p["w_oLnotes"], p["b_oLnotes"] = w((D_NOTES, 1)), w((1, 1))
    return p


def _pack_gate_cols(w):
    """(in, 4*150) -> (in, 4*256): each gate into its own 256-lane slab (zero pad)."""
    parts = [jnp.pad(w[:, g * H_LSTM:(g + 1) * H_LSTM],
                     ((0, 0), (0, H_PAD - H_LSTM))) for g in range(4)]
    return jnp.concatenate(parts, axis=-1)


def _pad_rows(w, rows_to):
    return jnp.pad(w, ((0, rows_to - w.shape[0]), (0, 0)))


def pack_params(p):
    bf16 = jnp.bfloat16
    kp = {}
    # ---- LSTM ----
    # x-projection weight is bf16 (no compounding error); recurrent weights stay f32
    # so the hidden/cell states never pass through bf16 inside the recurrence.
    kp["wih0_p"] = _pack_gate_cols(p["wih0"]).astype(bf16)                    # (176,1024)
    kp["b0_p"] = _pack_gate_cols(p["b0"])                                     # (1,1024) f32
    kp["whh0_p"] = _pad_rows(_pack_gate_cols(p["whh0"]), H_PAD)               # (256,1024) f32
    wih1_p = _pad_rows(_pack_gate_cols(p["wih1"]), H_PAD)
    whh1_p = _pad_rows(_pack_gate_cols(p["whh1"]), H_PAD)
    kp["w1_p"] = jnp.concatenate([wih1_p, whh1_p], axis=0)                    # (512,1024) f32
    kp["b1_p"] = _pack_gate_cols(p["b1"])                                     # (1,1024) f32

    # ---- heads level 1: [right | left], each hand in a 128-lane slab ----
    w_h1 = jnp.zeros((H_PAD, HEAD_L1), jnp.float32)
    w_h1 = w_h1.at[0:H_LSTM, 0:D_HAND].set(p["w_right"])
    w_h1 = w_h1.at[0:H_LSTM, 128:128 + D_HAND].set(p["w_left"])
    b_h1 = jnp.zeros((1, HEAD_L1), jnp.float32)
    b_h1 = b_h1.at[:, 0:D_HAND].set(p["b_right"]).at[:, 128:128 + D_HAND].set(p["b_left"])
    kp["w_h1"], kp["b_h1"] = w_h1.astype(bf16), b_h1

    # ---- heads level 2 (compact, 256 lanes): [Rpiano|Rnotes | Lpiano|Lnotes] ----
    w_h2 = jnp.zeros((HEAD_L1, HEAD_L2), jnp.float32)
    w_h2 = w_h2.at[0:D_HAND, 0:D_PIANO].set(p["w_Rpiano"])
    w_h2 = w_h2.at[0:D_HAND, D_PIANO:D_PIANO + D_NOTES].set(p["w_Rnotes"])
    w_h2 = w_h2.at[128:128 + D_HAND, 128:128 + D_PIANO].set(p["w_Lpiano"])
    w_h2 = w_h2.at[128:128 + D_HAND, 128 + D_PIANO:128 + D_PIANO + D_NOTES].set(p["w_Lnotes"])
    b_h2 = jnp.zeros((1, HEAD_L2), jnp.float32)
    b_h2 = b_h2.at[:, 0:D_PIANO].set(p["b_Rpiano"])
    b_h2 = b_h2.at[:, D_PIANO:D_PIANO + D_NOTES].set(p["b_Rnotes"])
    b_h2 = b_h2.at[:, 128:128 + D_PIANO].set(p["b_Lpiano"])
    b_h2 = b_h2.at[:, 128 + D_PIANO:128 + D_PIANO + D_NOTES].set(p["b_Lnotes"])
    kp["w_h2"], kp["b_h2"] = w_h2.astype(bf16), b_h2

    # ---- heads level 3 (compact, 256 lanes): [R_piano|R_notes | L_piano|L_notes] ----
    w_h3 = jnp.zeros((HEAD_L2, HEAD_OUT), jnp.float32)
    w_h3 = w_h3.at[0:D_PIANO, 0:N_KEYS].set(p["w_oRpiano"])
    w_h3 = w_h3.at[D_PIANO:D_PIANO + D_NOTES, N_KEYS:N_KEYS + 1].set(p["w_oRnotes"])
    w_h3 = w_h3.at[128:128 + D_PIANO, 128:128 + N_KEYS].set(p["w_oLpiano"])
    w_h3 = w_h3.at[128 + D_PIANO:128 + D_PIANO + D_NOTES,
                   128 + N_KEYS:128 + N_KEYS + 1].set(p["w_oLnotes"])
    b_h3 = jnp.zeros((1, HEAD_OUT), jnp.float32)
    b_h3 = b_h3.at[:, 0:N_KEYS].set(p["b_oRpiano"])
    b_h3 = b_h3.at[:, N_KEYS:N_KEYS + 1].set(p["b_oRnotes"])
    b_h3 = b_h3.at[:, 128:128 + N_KEYS].set(p["b_oLpiano"])
    b_h3 = b_h3.at[:, 128 + N_KEYS:128 + N_KEYS + 1].set(p["b_oLnotes"])
    kp["w_h3"], kp["b_h3"] = w_h3.astype(bf16), b_h3
    return kp


# ----------------------------------------------------------------------------
# Pure-JAX f32 reference (for correctness check)
# ----------------------------------------------------------------------------
def ref_forward(x, p):
    x_cat = jnp.concatenate([x[:, 0], x[:, 1]], axis=-1)
    B, T, _ = x_cat.shape
    H = H_LSTM

    def cell(xin, h, c, wih, whh, b):
        g = xin @ wih + h @ whh + b
        i = jax.nn.sigmoid(g[:, :H])
        f = jax.nn.sigmoid(g[:, H:2 * H])
        gg = jnp.tanh(g[:, 2 * H:3 * H])
        o = jax.nn.sigmoid(g[:, 3 * H:])
        c = f * c + i * gg
        return o * jnp.tanh(c), c

    def step(carry, xt):
        h0, c0, h1, c1 = carry
        h0, c0 = cell(xt, h0, c0, p["wih0"], p["whh0"], p["b0"])
        h1, c1 = cell(h0, h1, c1, p["wih1"], p["whh1"], p["b1"])
        return (h0, c0, h1, c1), h1

    init = tuple(jnp.zeros((B, H), jnp.float32) for _ in range(4))
    (h0, c0, h1, c1), ys = jax.lax.scan(step, init, jnp.transpose(x_cat, (1, 0, 2)))
    y = jnp.transpose(ys, (1, 0, 2))

    def lrelu(v):
        return jnp.where(v > 0, v, 0.01 * v)

    x_r = lrelu(y @ p["w_right"] + p["b_right"])
    x_rp = lrelu(x_r @ p["w_Rpiano"] + p["b_Rpiano"])
    x_rn = lrelu(x_r @ p["w_Rnotes"] + p["b_Rnotes"])
    rp = x_rp @ p["w_oRpiano"] + p["b_oRpiano"]
    rn = x_rn @ p["w_oRnotes"] + p["b_oRnotes"]
    x_l = lrelu(y @ p["w_left"] + p["b_left"])
    x_lp = lrelu(x_l @ p["w_Lpiano"] + p["b_Lpiano"])
    x_ln = lrelu(x_l @ p["w_Lnotes"] + p["b_Lnotes"])
    lp = x_lp @ p["w_oLpiano"] + p["b_oLpiano"]
    ln = x_ln @ p["w_oLnotes"] + p["b_oLnotes"]
    h_n = jnp.stack([h0, h1], axis=0)
    c_n = jnp.stack([c0, c1], axis=0)
    return rp, rn, lp, ln, (h_n, c_n)


if __name__ == "__main__":
    B, T = 2, 8
    key = jax.random.PRNGKey(0)
    k_x, k_p = jax.random.split(key)
    x = jax.random.normal(k_x, (B, 2, T, N_KEYS), jnp.float32)  # (batch, hands, seq, keys)
    params = init_params(k_p)
    kparams = pack_params(params)

    out = forward(x, kparams)
    jax.block_until_ready(out)

    ref = ref_forward(x, params)
    # recurrence runs in f32; only the x-projection and heads use bf16 weights on the MXU
    names = ["R_piano", "R_num_notes", "L_piano", "L_num_notes"]
    for name, a, b in zip(names, out[:4], ref[:4]):
        assert a.shape == b.shape, f"shape mismatch in {name}"
        assert jnp.allclose(a, b, rtol=2e-2, atol=2e-2), f"mismatch in {name}"
    for a, b in zip(out[4], ref[4]):
        assert a.shape == b.shape, "shape mismatch in rnn_state"
        assert jnp.allclose(a, b, rtol=2e-2, atol=2e-2), "mismatch in rnn_state"

    print("KERNEL_OK")
</pallas_src>

<mosaic_0001>
module attributes {stable_mosaic.version = 11 : i64} {
  func.func @kernel(%arg0: i32, %arg1: memref<16x176xf32, #tpu.memory_space<vmem>>, %arg2: memref<176x1024xbf16, #tpu.memory_space<vmem>>, %arg3: memref<1x1024xf32, #tpu.memory_space<vmem>>, %arg4: memref<256x1024xf32, #tpu.memory_space<vmem>>, %arg5: memref<512x1024xf32, #tpu.memory_space<vmem>>, %arg6: memref<1x1024xf32, #tpu.memory_space<vmem>>, %arg7: memref<256x256xbf16, #tpu.memory_space<vmem>>, %arg8: memref<1x256xf32, #tpu.memory_space<vmem>>, %arg9: memref<256x256xbf16, #tpu.memory_space<vmem>>, %arg10: memref<1x256xf32, #tpu.memory_space<vmem>>, %arg11: memref<256x256xbf16, #tpu.memory_space<vmem>>, %arg12: memref<1x256xf32, #tpu.memory_space<vmem>>, %arg13: memref<16x256xf32, #tpu.memory_space<vmem>>, %arg14: memref<2x2x256xf32, #tpu.memory_space<vmem>>, %arg15: memref<2x2x256xf32, #tpu.memory_space<vmem>>, %arg16: memref<2x256xf32, #tpu.memory_space<vmem>>, %arg17: memref<2x256xf32, #tpu.memory_space<vmem>>, %arg18: memref<2x256xf32, #tpu.memory_space<vmem>>, %arg19: memref<2x256xf32, #tpu.memory_space<vmem>>, %arg20: memref<16x1024xf32, #tpu.memory_space<vmem>>, %arg21: memref<16x256xf32, #tpu.memory_space<vmem>>) attributes {dimension_semantics = [#tpu.dimension_semantics<arbitrary>], iteration_bounds = array<i64: 1>, scalar_prefetch = 0 : i64, scratch_operands = 6 : i64, tpu.core_type = #tpu.core_type<tc>, window_params = [{transform_indices = @transform_0, window_bounds = array<i64: 16, 176>}, {pipeline_mode = #tpu.pipeline_mode<synchronous>, transform_indices = @transform_1, window_bounds = array<i64: 176, 1024>}, {pipeline_mode = #tpu.pipeline_mode<synchronous>, transform_indices = @transform_2, window_bounds = array<i64: 1, 1024>}, {pipeline_mode = #tpu.pipeline_mode<synchronous>, transform_indices = @transform_3, window_bounds = array<i64: 256, 1024>}, {pipeline_mode = #tpu.pipeline_mode<synchronous>, transform_indices = @transform_4, window_bounds = array<i64: 512, 1024>}, {pipeline_mode = #tpu.pipeline_mode<synchronous>, transform_indices = @transform_5, window_bounds = array<i64: 1, 1024>}, {pipeline_mode = #tpu.pipeline_mode<synchronous>, transform_indices = @transform_6, window_bounds = array<i64: 256, 256>}, {pipeline_mode = #tpu.pipeline_mode<synchronous>, transform_indices = @transform_7, window_bounds = array<i64: 1, 256>}, {pipeline_mode = #tpu.pipeline_mode<synchronous>, transform_indices = @transform_8, window_bounds = array<i64: 256, 256>}, {pipeline_mode = #tpu.pipeline_mode<synchronous>, transform_indices = @transform_9, window_bounds = array<i64: 1, 256>}, {pipeline_mode = #tpu.pipeline_mode<synchronous>, transform_indices = @transform_10, window_bounds = array<i64: 256, 256>}, {pipeline_mode = #tpu.pipeline_mode<synchronous>, transform_indices = @transform_11, window_bounds = array<i64: 1, 256>}, {transform_indices = @transform_12, window_bounds = array<i64: 16, 256>}, {pipeline_mode = #tpu.pipeline_mode<synchronous>, transform_indices = @transform_13, window_bounds = array<i64: 2, 2, 256>}, {pipeline_mode = #tpu.pipeline_mode<synchronous>, transform_indices = @transform_14, window_bounds = array<i64: 2, 2, 256>}]} {
    %c0_i32 = arith.constant 0 : i32
    %0 = arith.cmpi eq, %arg0, %c0_i32 : i32
    %1 = arith.extui %0 : i1 to i32
    %c0_i32_0 = arith.constant 0 : i32
    %2 = arith.cmpi ne, %1, %c0_i32_0 : i32
    scf.if %2 {
      %cst_144 = arith.constant 0.000000e+00 : f32
      %519 = vector.broadcast %cst_144 : f32 to vector<2x256xf32>
      %c0_145 = arith.constant 0 : index
      %c0_146 = arith.constant 0 : index
      %520 = vector.load %arg16[%c0_145, %c0_146] : memref<2x256xf32, #tpu.memory_space<vmem>>, vector<2x256xf32>
      tpu.vector_store %arg16[%c0_145, %c0_146], %519 {strides = array<i32>} : memref<2x256xf32, #tpu.memory_space<vmem>>, vector<2x256xf32>,
      %cst_147 = arith.constant 0.000000e+00 : f32
      %521 = vector.broadcast %cst_147 : f32 to vector<2x256xf32>
      %c0_148 = arith.constant 0 : index
      %c0_149 = arith.constant 0 : index
      %522 = vector.load %arg17[%c0_148, %c0_149] : memref<2x256xf32, #tpu.memory_space<vmem>>, vector<2x256xf32>
      tpu.vector_store %arg17[%c0_148, %c0_149], %521 {strides = array<i32>} : memref<2x256xf32, #tpu.memory_space<vmem>>, vector<2x256xf32>,
      %cst_150 = arith.constant 0.000000e+00 : f32
      %523 = vector.broadcast %cst_150 : f32 to vector<2x256xf32>
      %c0_151 = arith.constant 0 : index
      %c0_152 = arith.constant 0 : index
      %524 = vector.load %arg18[%c0_151, %c0_152] : memref<2x256xf32, #tpu.memory_space<vmem>>, vector<2x256xf32>
      tpu.vector_store %arg18[%c0_151, %c0_152], %523 {strides = array<i32>} : memref<2x256xf32, #tpu.memory_space<vmem>>, vector<2x256xf32>,
      %cst_153 = arith.constant 0.000000e+00 : f32
      %525 = vector.broadcast %cst_153 : f32 to vector<2x256xf32>
      %c0_154 = arith.constant 0 : index
      %c0_155 = arith.constant 0 : index
      %526 = vector.load %arg19[%c0_154, %c0_155] : memref<2x256xf32, #tpu.memory_space<vmem>>, vector<2x256xf32>
      tpu.vector_store %arg19[%c0_154, %c0_155], %525 {strides = array<i32>} : memref<2x256xf32, #tpu.memory_space<vmem>>, vector<2x256xf32>,
    } else {
    }
    %c0 = arith.constant 0 : index
    %c0_1 = arith.constant 0 : index
    %3 = vector.load %arg1[%c0, %c0_1] : memref<16x176xf32, #tpu.memory_space<vmem>>, vector<16x176xf32>
    %4 = arith.truncf %3 : vector<16x176xf32> to vector<16x176xbf16>
    %c0_2 = arith.constant 0 : index
    %c0_3 = arith.constant 0 : index
    %5 = vector.load %arg2[%c0_2, %c0_3] : memref<176x1024xbf16, #tpu.memory_space<vmem>>, vector<176x1024xbf16>
    %cst = arith.constant dense<0.000000e+00> : vector<16x1024xf32>
    %6 = tpu.matmul %4, %5, %cst {dimension_numbers = #tpu.dot_dimension_numbers<[1], [0], [0], [1], [0, 0, 1, 1], [], []>} : vector<16x176xbf16>, vector<176x1024xbf16>, vector<16x1024xf32> -> vector<16x1024xf32>
    %c0_4 = arith.constant 0 : index
    %c0_5 = arith.constant 0 : index
    %7 = vector.load %arg3[%c0_4, %c0_5] : memref<1x1024xf32, #tpu.memory_space<vmem>>, vector<1x1024xf32>
    %8 = vector.broadcast %7 : vector<1x1024xf32> to vector<16x1024xf32>
    %9 = arith.addf %6, %8 : vector<16x1024xf32>
    %c0_6 = arith.constant 0 : index
    %c0_7 = arith.constant 0 : index
    %10 = vector.load %arg20[%c0_6, %c0_7] : memref<16x1024xf32, #tpu.memory_space<vmem>>, vector<16x1024xf32>
    tpu.vector_store %arg20[%c0_6, %c0_7], %9 {strides = array<i32>} : memref<16x1024xf32, #tpu.memory_space<vmem>>, vector<16x1024xf32>,
    %c0_8 = arith.constant 0 : index
    %c0_9 = arith.constant 0 : index
    %11 = vector.load %arg4[%c0_8, %c0_9] : memref<256x1024xf32, #tpu.memory_space<vmem>>, vector<256x1024xf32>
    %c0_10 = arith.constant 0 : index
    %c0_11 = arith.constant 0 : index
    %12 = vector.load %arg5[%c0_10, %c0_11] : memref<512x1024xf32, #tpu.memory_space<vmem>>, vector<512x1024xf32>
    %c0_12 = arith.constant 0 : index
    %c0_13 = arith.constant 0 : index
    %13 = vector.load %arg6[%c0_12, %c0_13] : memref<1x1024xf32, #tpu.memory_space<vmem>>, vector<1x1024xf32>
    %c0_14 = arith.constant 0 : index
    %c0_15 = arith.constant 0 : index
    %14 = vector.load %arg16[%c0_14, %c0_15] : memref<2x256xf32, #tpu.memory_space<vmem>>, vector<2x256xf32>
    %c0_16 = arith.constant 0 : index
    %c0_17 = arith.constant 0 : index
    %15 = vector.load %arg17[%c0_16, %c0_17] : memref<2x256xf32, #tpu.memory_space<vmem>>, vector<2x256xf32>
    %c0_18 = arith.constant 0 : index
    %c0_19 = arith.constant 0 : index
    %16 = vector.load %arg18[%c0_18, %c0_19] : memref<2x256xf32, #tpu.memory_space<vmem>>, vector<2x256xf32>
    %c0_20 = arith.constant 0 : index
    %c0_21 = arith.constant 0 : index
    %17 = vector.load %arg19[%c0_20, %c0_21] : memref<2x256xf32, #tpu.memory_space<vmem>>, vector<2x256xf32>
    %c0_22 = arith.constant 0 : index
    %c0_23 = arith.constant 0 : index
    %18 = vector.load %arg20[%c0_22, %c0_23] : memref<16x1024xf32, #tpu.memory_space<vmem>>, vector<2x1024xf32>
    %cst_24 = arith.constant dense<0.000000e+00> : vector<2x1024xf32>
    %19 = tpu.matmul %14, %11, %cst_24 {dimension_numbers = #tpu.dot_dimension_numbers<[1], [0], [0], [1], [0, 0, 1, 1], [], []>} : vector<2x256xf32>, vector<256x1024xf32>, vector<2x1024xf32> -> vector<2x1024xf32>
    %20 = arith.addf %18, %19 : vector<2x1024xf32>
    %21 = vector.extract_strided_slice %20 {offsets = [0, 0], sizes = [2, 256], strides = [1, 1]} : vector<2x1024xf32> to vector<2x256xf32>
    %22 = arith.negf %21 : vector<2x256xf32>
    %23 = math.exp %22 : vector<2x256xf32>
    %cst_25 = arith.constant 1.000000e+00 : f32
    %24 = vector.broadcast %cst_25 : f32 to vector<2x256xf32>
    %25 = arith.addf %24, %23 : vector<2x256xf32>
    %26 = arith.divf %24, %25 : vector<2x256xf32>
    %27 = vector.extract_strided_slice %20 {offsets = [0, 256], sizes = [2, 256], strides = [1, 1]} : vector<2x1024xf32> to vector<2x256xf32>
    %28 = arith.negf %27 : vector<2x256xf32>
    %29 = math.exp %28 : vector<2x256xf32>
    %cst_26 = arith.constant 1.000000e+00 : f32
    %30 = vector.broadcast %cst_26 : f32 to vector<2x256xf32>
    %31 = arith.addf %30, %29 : vector<2x256xf32>
    %32 = arith.divf %30, %31 : vector<2x256xf32>
    %33 = vector.extract_strided_slice %20 {offsets = [0, 512], sizes = [2, 256], strides = [1, 1]} : vector<2x1024xf32> to vector<2x256xf32>
    %34 = math.tanh %33 : vector<2x256xf32>
    %35 = vector.extract_strided_slice %20 {offsets = [0, 768], sizes = [2, 256], strides = [1, 1]} : vector<2x1024xf32> to vector<2x256xf32>
    %36 = arith.negf %35 : vector<2x256xf32>
    %37 = math.exp %36 : vector<2x256xf32>
    %cst_27 = arith.constant 1.000000e+00 : f32
    %38 = vector.broadcast %cst_27 : f32 to vector<2x256xf32>
    %39 = arith.addf %38, %37 : vector<2x256xf32>
    %40 = arith.divf %38, %39 : vector<2x256xf32>
    %41 = arith.mulf %32, %15 : vector<2x256xf32>
    %42 = arith.mulf %26, %34 : vector<2x256xf32>
    %43 = arith.addf %41, %42 : vector<2x256xf32>
    %44 = math.tanh %43 : vector<2x256xf32>
    %45 = arith.mulf %40, %44 : vector<2x256xf32>
    %46 = tpu.concatenate %45, %16 in 1 : vector<2x256xf32>, vector<2x256xf32> -> vector<2x512xf32>
    %cst_28 = arith.constant dense<0.000000e+00> : vector<2x1024xf32>
    %47 = tpu.matmul %46, %12, %cst_28 {dimension_numbers = #tpu.dot_dimension_numbers<[1], [0], [0], [1], [0, 0, 1, 1], [], []>} : vector<2x512xf32>, vector<512x1024xf32>, vector<2x1024xf32> -> vector<2x1024xf32>
    %48 = vector.broadcast %13 : vector<1x1024xf32> to vector<2x1024xf32>
    %49 = arith.addf %47, %48 : vector<2x1024xf32>
    %50 = vector.extract_strided_slice %49 {offsets = [0, 0], sizes = [2, 256], strides = [1, 1]} : vector<2x1024xf32> to vector<2x256xf32>
    %51 = arith.negf %50 : vector<2x256xf32>
    %52 = math.exp %51 : vector<2x256xf32>
    %cst_29 = arith.constant 1.000000e+00 : f32
    %53 = vector.broadcast %cst_29 : f32 to vector<2x256xf32>
    %54 = arith.addf %53, %52 : vector<2x256xf32>
    %55 = arith.divf %53, %54 : vector<2x256xf32>
    %56 = vector.extract_strided_slice %49 {offsets = [0, 256], sizes = [2, 256], strides = [1, 1]} : vector<2x1024xf32> to vector<2x256xf32>
    %57 = arith.negf %56 : vector<2x256xf32>
    %58 = math.exp %57 : vector<2x256xf32>
    %cst_30 = arith.constant 1.000000e+00 : f32
    %59 = vector.broadcast %cst_30 : f32 to vector<2x256xf32>
    %60 = arith.addf %59, %58 : vector<2x256xf32>
    %61 = arith.divf %59, %60 : vector<2x256xf32>
    %62 = vector.extract_strided_slice %49 {offsets = [0, 512], sizes = [2, 256], strides = [1, 1]} : vector<2x1024xf32> to vector<2x256xf32>
    %63 = math.tanh %62 : vector<2x256xf32>
    %64 = vector.extract_strided_slice %49 {offsets = [0, 768], sizes = [2, 256], strides = [1, 1]} : vector<2x1024xf32> to vector<2x256xf32>
    %65 = arith.negf %64 : vector<2x256xf32>
    %66 = math.exp %65 : vector<2x256xf32>
    %cst_31 = arith.constant 1.000000e+00 : f32
    %67 = vector.broadcast %cst_31 : f32 to vector<2x256xf32>
    %68 = arith.addf %67, %66 : vector<2x256xf32>
    %69 = arith.divf %67, %68 : vector<2x256xf32>
    %70 = arith.mulf %61, %17 : vector<2x256xf32>
    %71 = arith.mulf %55, %63 : vector<2x256xf32>
    %72 = arith.addf %70, %71 : vector<2x256xf32>
    %73 = math.tanh %72 : vector<2x256xf32>
    %74 = arith.mulf %69, %73 : vector<2x256xf32>
    %c0_32 = arith.constant 0 : index
    %c0_33 = arith.constant 0 : index
    %75 = vector.load %arg21[%c0_32, %c0_33] : memref<16x256xf32, #tpu.memory_space<vmem>>, vector<2x256xf32>
    tpu.vector_store %arg21[%c0_32, %c0_33], %74 {strides = array<i32>} : memref<16x256xf32, #tpu.memory_space<vmem>>, vector<2x256xf32>,
    %c2 = arith.constant 2 : index
    %c0_34 = arith.constant 0 : index
    %76 = vector.load %arg20[%c2, %c0_34] : memref<16x1024xf32, #tpu.memory_space<vmem>>, vector<2x1024xf32>
    %cst_35 = arith.constant dense<0.000000e+00> : vector<2x1024xf32>
    %77 = tpu.matmul %45, %11, %cst_35 {dimension_numbers = #tpu.dot_dimension_numbers<[1], [0], [0], [1], [0, 0, 1, 1], [], []>} : vector<2x256xf32>, vector<256x1024xf32>, vector<2x1024xf32> -> vector<2x1024xf32>
    %78 = arith.addf %76, %77 : vector<2x1024xf32>
    %79 = vector.extract_strided_slice %78 {offsets = [0, 0], sizes = [2, 256], strides = [1, 1]} : vector<2x1024xf32> to vector<2x256xf32>
    %80 = arith.negf %79 : vector<2x256xf32>
    %81 = math.exp %80 : vector<2x256xf32>
    %cst_36 = arith.constant 1.000000e+00 : f32
    %82 = vector.broadcast %cst_36 : f32 to vector<2x256xf32>
    %83 = arith.addf %82, %81 : vector<2x256xf32>
    %84 = arith.divf %82, %83 : vector<2x256xf32>
    %85 = vector.extract_strided_slice %78 {offsets = [0, 256], sizes = [2, 256], strides = [1, 1]} : vector<2x1024xf32> to vector<2x256xf32>
    %86 = arith.negf %85 : vector<2x256xf32>
    %87 = math.exp %86 : vector<2x256xf32>
    %cst_37 = arith.constant 1.000000e+00 : f32
    %88 = vector.broadcast %cst_37 : f32 to vector<2x256xf32>
    %89 = arith.addf %88, %87 : vector<2x256xf32>
    %90 = arith.divf %88, %89 : vector<2x256xf32>
    %91 = vector.extract_strided_slice %78 {offsets = [0, 512], sizes = [2, 256], strides = [1, 1]} : vector<2x1024xf32> to vector<2x256xf32>
    %92 = math.tanh %91 : vector<2x256xf32>
    %93 = vector.extract_strided_slice %78 {offsets = [0, 768], sizes = [2, 256], strides = [1, 1]} : vector<2x1024xf32> to vector<2x256xf32>
    %94 = arith.negf %93 : vector<2x256xf32>
    %95 = math.exp %94 : vector<2x256xf32>
    %cst_38 = arith.constant 1.000000e+00 : f32
    %96 = vector.broadcast %cst_38 : f32 to vector<2x256xf32>
    %97 = arith.addf %96, %95 : vector<2x256xf32>
    %98 = arith.divf %96, %97 : vector<2x256xf32>
    %99 = arith.mulf %90, %43 : vector<2x256xf32>
    %100 = arith.mulf %84, %92 : vector<2x256xf32>
    %101 = arith.addf %99, %100 : vector<2x256xf32>
    %102 = math.tanh %101 : vector<2x256xf32>
    %103 = arith.mulf %98, %102 : vector<2x256xf32>
    %104 = tpu.concatenate %103, %74 in 1 : vector<2x256xf32>, vector<2x256xf32> -> vector<2x512xf32>
    %cst_39 = arith.constant dense<0.000000e+00> : vector<2x1024xf32>
    %105 = tpu.matmul %104, %12, %cst_39 {dimension_numbers = #tpu.dot_dimension_numbers<[1], [0], [0], [1], [0, 0, 1, 1], [], []>} : vector<2x512xf32>, vector<512x1024xf32>, vector<2x1024xf32> -> vector<2x1024xf32>
    %106 = vector.broadcast %13 : vector<1x1024xf32> to vector<2x1024xf32>
    %107 = arith.addf %105, %106 : vector<2x1024xf32>
    %108 = vector.extract_strided_slice %107 {offsets = [0, 0], sizes = [2, 256], strides = [1, 1]} : vector<2x1024xf32> to vector<2x256xf32>
    %109 = arith.negf %108 : vector<2x256xf32>
    %110 = math.exp %109 : vector<2x256xf32>
    %cst_40 = arith.constant 1.000000e+00 : f32
    %111 = vector.broadcast %cst_40 : f32 to vector<2x256xf32>
    %112 = arith.addf %111, %110 : vector<2x256xf32>
    %113 = arith.divf %111, %112 : vector<2x256xf32>
    %114 = vector.extract_strided_slice %107 {offsets = [0, 256], sizes = [2, 256], strides = [1, 1]} : vector<2x1024xf32> to vector<2x256xf32>
    %115 = arith.negf %114 : vector<2x256xf32>
    %116 = math.exp %115 : vector<2x256xf32>
    %cst_41 = arith.constant 1.000000e+00 : f32
    %117 = vector.broadcast %cst_41 : f32 to vector<2x256xf32>
    %118 = arith.addf %117, %116 : vector<2x256xf32>
    %119 = arith.divf %117, %118 : vector<2x256xf32>
    %120 = vector.extract_strided_slice %107 {offsets = [0, 512], sizes = [2, 256], strides = [1, 1]} : vector<2x1024xf32> to vector<2x256xf32>
    %121 = math.tanh %120 : vector<2x256xf32>
    %122 = vector.extract_strided_slice %107 {offsets = [0, 768], sizes = [2, 256], strides = [1, 1]} : vector<2x1024xf32> to vector<2x256xf32>
    %123 = arith.negf %122 : vector<2x256xf32>
    %124 = math.exp %123 : vector<2x256xf32>
    %cst_42 = arith.constant 1.000000e+00 : f32
    %125 = vector.broadcast %cst_42 : f32 to vector<2x256xf32>
    %126 = arith.addf %125, %124 : vector<2x256xf32>
    %127 = arith.divf %125, %126 : vector<2x256xf32>
    %128 = arith.mulf %119, %72 : vector<2x256xf32>
    %129 = arith.mulf %113, %121 : vector<2x256xf32>
    %130 = arith.addf %128, %129 : vector<2x256xf32>
    %131 = math.tanh %130 : vector<2x256xf32>
    %132 = arith.mulf %127, %131 : vector<2x256xf32>
    %c2_43 = arith.constant 2 : index
    %c0_44 = arith.constant 0 : index
    %133 = vector.load %arg21[%c2_43, %c0_44] : memref<16x256xf32, #tpu.memory_space<vmem>>, vector<2x256xf32>
    tpu.vector_store %arg21[%c2_43, %c0_44], %132 {strides = array<i32>} : memref<16x256xf32, #tpu.memory_space<vmem>>, vector<2x256xf32>,
    %c4 = arith.constant 4 : index
    %c0_45 = arith.constant 0 : index
    %134 = vector.load %arg20[%c4, %c0_45] : memref<16x1024xf32, #tpu.memory_space<vmem>>, vector<2x1024xf32>
    %cst_46 = arith.constant dense<0.000000e+00> : vector<2x1024xf32>
    %135 = tpu.matmul %103, %11, %cst_46 {dimension_numbers = #tpu.dot_dimension_numbers<[1], [0], [0], [1], [0, 0, 1, 1], [], []>} : vector<2x256xf32>, vector<256x1024xf32>, vector<2x1024xf32> -> vector<2x1024xf32>
    %136 = arith.addf %134, %135 : vector<2x1024xf32>
    %137 = vector.extract_strided_slice %136 {offsets = [0, 0], sizes = [2, 256], strides = [1, 1]} : vector<2x1024xf32> to vector<2x256xf32>
    %138 = arith.negf %137 : vector<2x256xf32>
    %139 = math.exp %138 : vector<2x256xf32>
    %cst_47 = arith.constant 1.000000e+00 : f32
    %140 = vector.broadcast %cst_47 : f32 to vector<2x256xf32>
    %141 = arith.addf %140, %139 : vector<2x256xf32>
    %142 = arith.divf %140, %141 : vector<2x256xf32>
    %143 = vector.extract_strided_slice %136 {offsets = [0, 256], sizes = [2, 256], strides = [1, 1]} : vector<2x1024xf32> to vector<2x256xf32>
    %144 = arith.negf %143 : vector<2x256xf32>
    %145 = math.exp %144 : vector<2x256xf32>
    %cst_48 = arith.constant 1.000000e+00 : f32
    %146 = vector.broadcast %cst_48 : f32 to vector<2x256xf32>
    %147 = arith.addf %146, %145 : vector<2x256xf32>
    %148 = arith.divf %146, %147 : vector<2x256xf32>
    %149 = vector.extract_strided_slice %136 {offsets = [0, 512], sizes = [2, 256], strides = [1, 1]} : vector<2x1024xf32> to vector<2x256xf32>
    %150 = math.tanh %149 : vector<2x256xf32>
    %151 = vector.extract_strided_slice %136 {offsets = [0, 768], sizes = [2, 256], strides = [1, 1]} : vector<2x1024xf32> to vector<2x256xf32>
    %152 = arith.negf %151 : vector<2x256xf32>
    %153 = math.exp %152 : vector<2x256xf32>
    %cst_49 = arith.constant 1.000000e+00 : f32
    %154 = vector.broadcast %cst_49 : f32 to vector<2x256xf32>
    %155 = arith.addf %154, %153 : vector<2x256xf32>
    %156 = arith.divf %154, %155 : vector<2x256xf32>
    %157 = arith.mulf %148, %101 : vector<2x256xf32>
    %158 = arith.mulf %142, %150 : vector<2x256xf32>
    %159 = arith.addf %157, %158 : vector<2x256xf32>
    %160 = math.tanh %159 : vector<2x256xf32>
    %161 = arith.mulf %156, %160 : vector<2x256xf32>
    %162 = tpu.concatenate %161, %132 in 1 : vector<2x256xf32>, vector<2x256xf32> -> vector<2x512xf32>
    %cst_50 = arith.constant dense<0.000000e+00> : vector<2x1024xf32>
    %163 = tpu.matmul %162, %12, %cst_50 {dimension_numbers = #tpu.dot_dimension_numbers<[1], [0], [0], [1], [0, 0, 1, 1], [], []>} : vector<2x512xf32>, vector<512x1024xf32>, vector<2x1024xf32> -> vector<2x1024xf32>
    %164 = vector.broadcast %13 : vector<1x1024xf32> to vector<2x1024xf32>
    %165 = arith.addf %163, %164 : vector<2x1024xf32>
    %166 = vector.extract_strided_slice %165 {offsets = [0, 0], sizes = [2, 256], strides = [1, 1]} : vector<2x1024xf32> to vector<2x256xf32>
    %167 = arith.negf %166 : vector<2x256xf32>
    %168 = math.exp %167 : vector<2x256xf32>
    %cst_51 = arith.constant 1.000000e+00 : f32
    %169 = vector.broadcast %cst_51 : f32 to vector<2x256xf32>
    %170 = arith.addf %169, %168 : vector<2x256xf32>
    %171 = arith.divf %169, %170 : vector<2x256xf32>
    %172 = vector.extract_strided_slice %165 {offsets = [0, 256], sizes = [2, 256], strides = [1, 1]} : vector<2x1024xf32> to vector<2x256xf32>
    %173 = arith.negf %172 : vector<2x256xf32>
    %174 = math.exp %173 : vector<2x256xf32>
    %cst_52 = arith.constant 1.000000e+00 : f32
    %175 = vector.broadcast %cst_52 : f32 to vector<2x256xf32>
    %176 = arith.addf %175, %174 : vector<2x256xf32>
    %177 = arith.divf %175, %176 : vector<2x256xf32>
    %178 = vector.extract_strided_slice %165 {offsets = [0, 512], sizes = [2, 256], strides = [1, 1]} : vector<2x1024xf32> to vector<2x256xf32>
    %179 = math.tanh %178 : vector<2x256xf32>
    %180 = vector.extract_strided_slice %165 {offsets = [0, 768], sizes = [2, 256], strides = [1, 1]} : vector<2x1024xf32> to vector<2x256xf32>
    %181 = arith.negf %180 : vector<2x256xf32>
    %182 = math.exp %181 : vector<2x256xf32>
    %cst_53 = arith.constant 1.000000e+00 : f32
    %183 = vector.broadcast %cst_53 : f32 to vector<2x256xf32>
    %184 = arith.addf %183, %182 : vector<2x256xf32>
    %185 = arith.divf %183, %184 : vector<2x256xf32>
    %186 = arith.mulf %177, %130 : vector<2x256xf32>
    %187 = arith.mulf %171, %179 : vector<2x256xf32>
    %188 = arith.addf %186, %187 : vector<2x256xf32>
    %189 = math.tanh %188 : vector<2x256xf32>
    %190 = arith.mulf %185, %189 : vector<2x256xf32>
    %c4_54 = arith.constant 4 : index
    %c0_55 = arith.constant 0 : index
    %191 = vector.load %arg21[%c4_54, %c0_55] : memref<16x256xf32, #tpu.memory_space<vmem>>, vector<2x256xf32>
    tpu.vector_store %arg21[%c4_54, %c0_55], %190 {strides = array<i32>} : memref<16x256xf32, #tpu.memory_space<vmem>>, vector<2x256xf32>,
    %c6 = arith.constant 6 : index
    %c0_56 = arith.constant 0 : index
    %192 = vector.load %arg20[%c6, %c0_56] : memref<16x1024xf32, #tpu.memory_space<vmem>>, vector<2x1024xf32>
    %cst_57 = arith.constant dense<0.000000e+00> : vector<2x1024xf32>
    %193 = tpu.matmul %161, %11, %cst_57 {dimension_numbers = #tpu.dot_dimension_numbers<[1], [0], [0], [1], [0, 0, 1, 1], [], []>} : vector<2x256xf32>, vector<256x1024xf32>, vector<2x1024xf32> -> vector<2x1024xf32>
    %194 = arith.addf %192, %193 : vector<2x1024xf32>
    %195 = vector.extract_strided_slice %194 {offsets = [0, 0], sizes = [2, 256], strides = [1, 1]} : vector<2x1024xf32> to vector<2x256xf32>
    %196 = arith.negf %195 : vector<2x256xf32>
    %197 = math.exp %196 : vector<2x256xf32>
    %cst_58 = arith.constant 1.000000e+00 : f32
    %198 = vector.broadcast %cst_58 : f32 to vector<2x256xf32>
    %199 = arith.addf %198, %197 : vector<2x256xf32>
    %200 = arith.divf %198, %199 : vector<2x256xf32>
    %201 = vector.extract_strided_slice %194 {offsets = [0, 256], sizes = [2, 256], strides = [1, 1]} : vector<2x1024xf32> to vector<2x256xf32>
    %202 = arith.negf %201 : vector<2x256xf32>
    %203 = math.exp %202 : vector<2x256xf32>
    %cst_59 = arith.constant 1.000000e+00 : f32
    %204 = vector.broadcast %cst_59 : f32 to vector<2x256xf32>
    %205 = arith.addf %204, %203 : vector<2x256xf32>
    %206 = arith.divf %204, %205 : vector<2x256xf32>
    %207 = vector.extract_strided_slice %194 {offsets = [0, 512], sizes = [2, 256], strides = [1, 1]} : vector<2x1024xf32> to vector<2x256xf32>
    %208 = math.tanh %207 : vector<2x256xf32>
    %209 = vector.extract_strided_slice %194 {offsets = [0, 768], sizes = [2, 256], strides = [1, 1]} : vector<2x1024xf32> to vector<2x256xf32>
    %210 = arith.negf %209 : vector<2x256xf32>
    %211 = math.exp %210 : vector<2x256xf32>
    %cst_60 = arith.constant 1.000000e+00 : f32
    %212 = vector.broadcast %cst_60 : f32 to vector<2x256xf32>
    %213 = arith.addf %212, %211 : vector<2x256xf32>
    %214 = arith.divf %212, %213 : vector<2x256xf32>
    %215 = arith.mulf %206, %159 : vector<2x256xf32>
    %216 = arith.mulf %200, %208 : vector<2x256xf32>
    %217 = arith.addf %215, %216 : vector<2x256xf32>
    %218 = math.tanh %217 : vector<2x256xf32>
    %219 = arith.mulf %214, %218 : vector<2x256xf32>
    %220 = tpu.concatenate %219, %190 in 1 : vector<2x256xf32>, vector<2x256xf32> -> vector<2x512xf32>
    %cst_61 = arith.constant dense<0.000000e+00> : vector<2x1024xf32>
    %221 = tpu.matmul %220, %12, %cst_61 {dimension_numbers = #tpu.dot_dimension_numbers<[1], [0], [0], [1], [0, 0, 1, 1], [], []>} : vector<2x512xf32>, vector<512x1024xf32>, vector<2x1024xf32> -> vector<2x1024xf32>
    %222 = vector.broadcast %13 : vector<1x1024xf32> to vector<2x1024xf32>
    %223 = arith.addf %221, %222 : vector<2x1024xf32>
    %224 = vector.extract_strided_slice %223 {offsets = [0, 0], sizes = [2, 256], strides = [1, 1]} : vector<2x1024xf32> to vector<2x256xf32>
    %225 = arith.negf %224 : vector<2x256xf32>
    %226 = math.exp %225 : vector<2x256xf32>
    %cst_62 = arith.constant 1.000000e+00 : f32
    %227 = vector.broadcast %cst_62 : f32 to vector<2x256xf32>
    %228 = arith.addf %227, %226 : vector<2x256xf32>
    %229 = arith.divf %227, %228 : vector<2x256xf32>
    %230 = vector.extract_strided_slice %223 {offsets = [0, 256], sizes = [2, 256], strides = [1, 1]} : vector<2x1024xf32> to vector<2x256xf32>
    %231 = arith.negf %230 : vector<2x256xf32>
    %232 = math.exp %231 : vector<2x256xf32>
    %cst_63 = arith.constant 1.000000e+00 : f32
    %233 = vector.broadcast %cst_63 : f32 to vector<2x256xf32>
    %234 = arith.addf %233, %232 : vector<2x256xf32>
    %235 = arith.divf %233, %234 : vector<2x256xf32>
    %236 = vector.extract_strided_slice %223 {offsets = [0, 512], sizes = [2, 256], strides = [1, 1]} : vector<2x1024xf32> to vector<2x256xf32>
    %237 = math.tanh %236 : vector<2x256xf32>
    %238 = vector.extract_strided_slice %223 {offsets = [0, 768], sizes = [2, 256], strides = [1, 1]} : vector<2x1024xf32> to vector<2x256xf32>
    %239 = arith.negf %238 : vector<2x256xf32>
    %240 = math.exp %239 : vector<2x256xf32>
    %cst_64 = arith.constant 1.000000e+00 : f32
    %241 = vector.broadcast %cst_64 : f32 to vector<2x256xf32>
    %242 = arith.addf %241, %240 : vector<2x256xf32>
    %243 = arith.divf %241, %242 : vector<2x256xf32>
    %244 = arith.mulf %235, %188 : vector<2x256xf32>
    %245 = arith.mulf %229, %237 : vector<2x256xf32>
    %246 = arith.addf %244, %245 : vector<2x256xf32>
    %247 = math.tanh %246 : vector<2x256xf32>
    %248 = arith.mulf %243, %247 : vector<2x256xf32>
    %c6_65 = arith.constant 6 : index
    %c0_66 = arith.constant 0 : index
    %249 = vector.load %arg21[%c6_65, %c0_66] : memref<16x256xf32, #tpu.memory_space<vmem>>, vector<2x256xf32>
    tpu.vector_store %arg21[%c6_65, %c0_66], %248 {strides = array<i32>} : memref<16x256xf32, #tpu.memory_space<vmem>>, vector<2x256xf32>,
    %c8 = arith.constant 8 : index
    %c0_67 = arith.constant 0 : index
    %250 = vector.load %arg20[%c8, %c0_67] : memref<16x1024xf32, #tpu.memory_space<vmem>>, vector<2x1024xf32>
    %cst_68 = arith.constant dense<0.000000e+00> : vector<2x1024xf32>
    %251 = tpu.matmul %219, %11, %cst_68 {dimension_numbers = #tpu.dot_dimension_numbers<[1], [0], [0], [1], [0, 0, 1, 1], [], []>} : vector<2x256xf32>, vector<256x1024xf32>, vector<2x1024xf32> -> vector<2x1024xf32>
    %252 = arith.addf %250, %251 : vector<2x1024xf32>
    %253 = vector.extract_strided_slice %252 {offsets = [0, 0], sizes = [2, 256], strides = [1, 1]} : vector<2x1024xf32> to vector<2x256xf32>
    %254 = arith.negf %253 : vector<2x256xf32>
    %255 = math.exp %254 : vector<2x256xf32>
    %cst_69 = arith.constant 1.000000e+00 : f32
    %256 = vector.broadcast %cst_69 : f32 to vector<2x256xf32>
    %257 = arith.addf %256, %255 : vector<2x256xf32>
    %258 = arith.divf %256, %257 : vector<2x256xf32>
    %259 = vector.extract_strided_slice %252 {offsets = [0, 256], sizes = [2, 256], strides = [1, 1]} : vector<2x1024xf32> to vector<2x256xf32>
    %260 = arith.negf %259 : vector<2x256xf32>
    %261 = math.exp %260 : vector<2x256xf32>
    %cst_70 = arith.constant 1.000000e+00 : f32
    %262 = vector.broadcast %cst_70 : f32 to vector<2x256xf32>
    %263 = arith.addf %262, %261 : vector<2x256xf32>
    %264 = arith.divf %262, %263 : vector<2x256xf32>
    %265 = vector.extract_strided_slice %252 {offsets = [0, 512], sizes = [2, 256], strides = [1, 1]} : vector<2x1024xf32> to vector<2x256xf32>
    %266 = math.tanh %265 : vector<2x256xf32>
    %267 = vector.extract_strided_slice %252 {offsets = [0, 768], sizes = [2, 256], strides = [1, 1]} : vector<2x1024xf32> to vector<2x256xf32>
    %268 = arith.negf %267 : vector<2x256xf32>
    %269 = math.exp %268 : vector<2x256xf32>
    %cst_71 = arith.constant 1.000000e+00 : f32
    %270 = vector.broadcast %cst_71 : f32 to vector<2x256xf32>
    %271 = arith.addf %270, %269 : vector<2x256xf32>
    %272 = arith.divf %270, %271 : vector<2x256xf32>
    %273 = arith.mulf %264, %217 : vector<2x256xf32>
    %274 = arith.mulf %258, %266 : vector<2x256xf32>
    %275 = arith.addf %273, %274 : vector<2x256xf32>
    %276 = math.tanh %275 : vector<2x256xf32>
    %277 = arith.mulf %272, %276 : vector<2x256xf32>
    %278 = tpu.concatenate %277, %248 in 1 : vector<2x256xf32>, vector<2x256xf32> -> vector<2x512xf32>
    %cst_72 = arith.constant dense<0.000000e+00> : vector<2x1024xf32>
    %279 = tpu.matmul %278, %12, %cst_72 {dimension_numbers = #tpu.dot_dimension_numbers<[1], [0], [0], [1], [0, 0, 1, 1], [], []>} : vector<2x512xf32>, vector<512x1024xf32>, vector<2x1024xf32> -> vector<2x1024xf32>
    %280 = vector.broadcast %13 : vector<1x1024xf32> to vector<2x1024xf32>
    %281 = arith.addf %279, %280 : vector<2x1024xf32>
    %282 = vector.extract_strided_slice %281 {offsets = [0, 0], sizes = [2, 256], strides = [1, 1]} : vector<2x1024xf32> to vector<2x256xf32>
    %283 = arith.negf %282 : vector<2x256xf32>
    %284 = math.exp %283 : vector<2x256xf32>
    %cst_73 = arith.constant 1.000000e+00 : f32
    %285 = vector.broadcast %cst_73 : f32 to vector<2x256xf32>
    %286 = arith.addf %285, %284 : vector<2x256xf32>
    %287 = arith.divf %285, %286 : vector<2x256xf32>
    %288 = vector.extract_strided_slice %281 {offsets = [0, 256], sizes = [2, 256], strides = [1, 1]} : vector<2x1024xf32> to vector<2x256xf32>
    %289 = arith.negf %288 : vector<2x256xf32>
    %290 = math.exp %289 : vector<2x256xf32>
    %cst_74 = arith.constant 1.000000e+00 : f32
    %291 = vector.broadcast %cst_74 : f32 to vector<2x256xf32>
    %292 = arith.addf %291, %290 : vector<2x256xf32>
    %293 = arith.divf %291, %292 : vector<2x256xf32>
    %294 = vector.extract_strided_slice %281 {offsets = [0, 512], sizes = [2, 256], strides = [1, 1]} : vector<2x1024xf32> to vector<2x256xf32>
    %295 = math.tanh %294 : vector<2x256xf32>
    %296 = vector.extract_strided_slice %281 {offsets = [0, 768], sizes = [2, 256], strides = [1, 1]} : vector<2x1024xf32> to vector<2x256xf32>
    %297 = arith.negf %296 : vector<2x256xf32>
    %298 = math.exp %297 : vector<2x256xf32>
    %cst_75 = arith.constant 1.000000e+00 : f32
    %299 = vector.broadcast %cst_75 : f32 to vector<2x256xf32>
    %300 = arith.addf %299, %298 : vector<2x256xf32>
    %301 = arith.divf %299, %300 : vector<2x256xf32>
    %302 = arith.mulf %293, %246 : vector<2x256xf32>
    %303 = arith.mulf %287, %295 : vector<2x256xf32>
    %304 = arith.addf %302, %303 : vector<2x256xf32>
    %305 = math.tanh %304 : vector<2x256xf32>
    %306 = arith.mulf %301, %305 : vector<2x256xf32>
    %c8_76 = arith.constant 8 : index
    %c0_77 = arith.constant 0 : index
    %307 = vector.load %arg21[%c8_76, %c0_77] : memref<16x256xf32, #tpu.memory_space<vmem>>, vector<2x256xf32>
    tpu.vector_store %arg21[%c8_76, %c0_77], %306 {strides = array<i32>} : memref<16x256xf32, #tpu.memory_space<vmem>>, vector<2x256xf32>,
    %c10 = arith.constant 10 : index
    %c0_78 = arith.constant 0 : index
    %308 = vector.load %arg20[%c10, %c0_78] : memref<16x1024xf32, #tpu.memory_space<vmem>>, vector<2x1024xf32>
    %cst_79 = arith.constant dense<0.000000e+00> : vector<2x1024xf32>
    %309 = tpu.matmul %277, %11, %cst_79 {dimension_numbers = #tpu.dot_dimension_numbers<[1], [0], [0], [1], [0, 0, 1, 1], [], []>} : vector<2x256xf32>, vector<256x1024xf32>, vector<2x1024xf32> -> vector<2x1024xf32>
    %310 = arith.addf %308, %309 : vector<2x1024xf32>
    %311 = vector.extract_strided_slice %310 {offsets = [0, 0], sizes = [2, 256], strides = [1, 1]} : vector<2x1024xf32> to vector<2x256xf32>
    %312 = arith.negf %311 : vector<2x256xf32>
    %313 = math.exp %312 : vector<2x256xf32>
    %cst_80 = arith.constant 1.000000e+00 : f32
    %314 = vector.broadcast %cst_80 : f32 to vector<2x256xf32>
    %315 = arith.addf %314, %313 : vector<2x256xf32>
    %316 = arith.divf %314, %315 : vector<2x256xf32>
    %317 = vector.extract_strided_slice %310 {offsets = [0, 256], sizes = [2, 256], strides = [1, 1]} : vector<2x1024xf32> to vector<2x256xf32>
    %318 = arith.negf %317 : vector<2x256xf32>
    %319 = math.exp %318 : vector<2x256xf32>
    %cst_81 = arith.constant 1.000000e+00 : f32
    %320 = vector.broadcast %cst_81 : f32 to vector<2x256xf32>
    %321 = arith.addf %320, %319 : vector<2x256xf32>
    %322 = arith.divf %320, %321 : vector<2x256xf32>
    %323 = vector.extract_strided_slice %310 {offsets = [0, 512], sizes = [2, 256], strides = [1, 1]} : vector<2x1024xf32> to vector<2x256xf32>
    %324 = math.tanh %323 : vector<2x256xf32>
    %325 = vector.extract_strided_slice %310 {offsets = [0, 768], sizes = [2, 256], strides = [1, 1]} : vector<2x1024xf32> to vector<2x256xf32>
    %326 = arith.negf %325 : vector<2x256xf32>
    %327 = math.exp %326 : vector<2x256xf32>
    %cst_82 = arith.constant 1.000000e+00 : f32
    %328 = vector.broadcast %cst_82 : f32 to vector<2x256xf32>
    %329 = arith.addf %328, %327 : vector<2x256xf32>
    %330 = arith.divf %328, %329 : vector<2x256xf32>
    %331 = arith.mulf %322, %275 : vector<2x256xf32>
    %332 = arith.mulf %316, %324 : vector<2x256xf32>
    %333 = arith.addf %331, %332 : vector<2x256xf32>
    %334 = math.tanh %333 : vector<2x256xf32>
    %335 = arith.mulf %330, %334 : vector<2x256xf32>
    %336 = tpu.concatenate %335, %306 in 1 : vector<2x256xf32>, vector<2x256xf32> -> vector<2x512xf32>
    %cst_83 = arith.constant dense<0.000000e+00> : vector<2x1024xf32>
    %337 = tpu.matmul %336, %12, %cst_83 {dimension_numbers = #tpu.dot_dimension_numbers<[1], [0], [0], [1], [0, 0, 1, 1], [], []>} : vector<2x512xf32>, vector<512x1024xf32>, vector<2x1024xf32> -> vector<2x1024xf32>
    %338 = vector.broadcast %13 : vector<1x1024xf32> to vector<2x1024xf32>
    %339 = arith.addf %337, %338 : vector<2x1024xf32>
    %340 = vector.extract_strided_slice %339 {offsets = [0, 0], sizes = [2, 256], strides = [1, 1]} : vector<2x1024xf32> to vector<2x256xf32>
    %341 = arith.negf %340 : vector<2x256xf32>
    %342 = math.exp %341 : vector<2x256xf32>
    %cst_84 = arith.constant 1.000000e+00 : f32
    %343 = vector.broadcast %cst_84 : f32 to vector<2x256xf32>
    %344 = arith.addf %343, %342 : vector<2x256xf32>
    %345 = arith.divf %343, %344 : vector<2x256xf32>
    %346 = vector.extract_strided_slice %339 {offsets = [0, 256], sizes = [2, 256], strides = [1, 1]} : vector<2x1024xf32> to vector<2x256xf32>
    %347 = arith.negf %346 : vector<2x256xf32>
    %348 = math.exp %347 : vector<2x256xf32>
    %cst_85 = arith.constant 1.000000e+00 : f32
    %349 = vector.broadcast %cst_85 : f32 to vector<2x256xf32>
    %350 = arith.addf %349, %348 : vector<2x256xf32>
    %351 = arith.divf %349, %350 : vector<2x256xf32>
    %352 = vector.extract_strided_slice %339 {offsets = [0, 512], sizes = [2, 256], strides = [1, 1]} : vector<2x1024xf32> to vector<2x256xf32>
    %353 = math.tanh %352 : vector<2x256xf32>
    %354 = vector.extract_strided_slice %339 {offsets = [0, 768], sizes = [2, 256], strides = [1, 1]} : vector<2x1024xf32> to vector<2x256xf32>
    %355 = arith.negf %354 : vector<2x256xf32>
    %356 = math.exp %355 : vector<2x256xf32>
    %cst_86 = arith.constant 1.000000e+00 : f32
    %357 = vector.broadcast %cst_86 : f32 to vector<2x256xf32>
    %358 = arith.addf %357, %356 : vector<2x256xf32>
    %359 = arith.divf %357, %358 : vector<2x256xf32>
    %360 = arith.mulf %351, %304 : vector<2x256xf32>
    %361 = arith.mulf %345, %353 : vector<2x256xf32>
    %362 = arith.addf %360, %361 : vector<2x256xf32>
    %363 = math.tanh %362 : vector<2x256xf32>
    %364 = arith.mulf %359, %363 : vector<2x256xf32>
    %c10_87 = arith.constant 10 : index
    %c0_88 = arith.constant 0 : index
    %365 = vector.load %arg21[%c10_87, %c0_88] : memref<16x256xf32, #tpu.memory_space<vmem>>, vector<2x256xf32>
    tpu.vector_store %arg21[%c10_87, %c0_88], %364 {strides = array<i32>} : memref<16x256xf32, #tpu.memory_space<vmem>>, vector<2x256xf32>,
    %c12 = arith.constant 12 : index
    %c0_89 = arith.constant 0 : index
    %366 = vector.load %arg20[%c12, %c0_89] : memref<16x1024xf32, #tpu.memory_space<vmem>>, vector<2x1024xf32>
    %cst_90 = arith.constant dense<0.000000e+00> : vector<2x1024xf32>
    %367 = tpu.matmul %335, %11, %cst_90 {dimension_numbers = #tpu.dot_dimension_numbers<[1], [0], [0], [1], [0, 0, 1, 1], [], []>} : vector<2x256xf32>, vector<256x1024xf32>, vector<2x1024xf32> -> vector<2x1024xf32>
    %368 = arith.addf %366, %367 : vector<2x1024xf32>
    %369 = vector.extract_strided_slice %368 {offsets = [0, 0], sizes = [2, 256], strides = [1, 1]} : vector<2x1024xf32> to vector<2x256xf32>
    %370 = arith.negf %369 : vector<2x256xf32>
    %371 = math.exp %370 : vector<2x256xf32>
    %cst_91 = arith.constant 1.000000e+00 : f32
    %372 = vector.broadcast %cst_91 : f32 to vector<2x256xf32>
    %373 = arith.addf %372, %371 : vector<2x256xf32>
    %374 = arith.divf %372, %373 : vector<2x256xf32>
    %375 = vector.extract_strided_slice %368 {offsets = [0, 256], sizes = [2, 256], strides = [1, 1]} : vector<2x1024xf32> to vector<2x256xf32>
    %376 = arith.negf %375 : vector<2x256xf32>
    %377 = math.exp %376 : vector<2x256xf32>
    %cst_92 = arith.constant 1.000000e+00 : f32
    %378 = vector.broadcast %cst_92 : f32 to vector<2x256xf32>
    %379 = arith.addf %378, %377 : vector<2x256xf32>
    %380 = arith.divf %378, %379 : vector<2x256xf32>
    %381 = vector.extract_strided_slice %368 {offsets = [0, 512], sizes = [2, 256], strides = [1, 1]} : vector<2x1024xf32> to vector<2x256xf32>
    %382 = math.tanh %381 : vector<2x256xf32>
    %383 = vector.extract_strided_slice %368 {offsets = [0, 768], sizes = [2, 256], strides = [1, 1]} : vector<2x1024xf32> to vector<2x256xf32>
    %384 = arith.negf %383 : vector<2x256xf32>
    %385 = math.exp %384 : vector<2x256xf32>
    %cst_93 = arith.constant 1.000000e+00 : f32
    %386 = vector.broadcast %cst_93 : f32 to vector<2x256xf32>
    %387 = arith.addf %386, %385 : vector<2x256xf32>
    %388 = arith.divf %386, %387 : vector<2x256xf32>
    %389 = arith.mulf %380, %333 : vector<2x256xf32>
    %390 = arith.mulf %374, %382 : vector<2x256xf32>
    %391 = arith.addf %389, %390 : vector<2x256xf32>
    %392 = math.tanh %391 : vector<2x256xf32>
    %393 = arith.mulf %388, %392 : vector<2x256xf32>
    %394 = tpu.concatenate %393, %364 in 1 : vector<2x256xf32>, vector<2x256xf32> -> vector<2x512xf32>
    %cst_94 = arith.constant dense<0.000000e+00> : vector<2x1024xf32>
    %395 = tpu.matmul %394, %12, %cst_94 {dimension_numbers = #tpu.dot_dimension_numbers<[1], [0], [0], [1], [0, 0, 1, 1], [], []>} : vector<2x512xf32>, vector<512x1024xf32>, vector<2x1024xf32> -> vector<2x1024xf32>
    %396 = vector.broadcast %13 : vector<1x1024xf32> to vector<2x1024xf32>
    %397 = arith.addf %395, %396 : vector<2x1024xf32>
    %398 = vector.extract_strided_slice %397 {offsets = [0, 0], sizes = [2, 256], strides = [1, 1]} : vector<2x1024xf32> to vector<2x256xf32>
    %399 = arith.negf %398 : vector<2x256xf32>
    %400 = math.exp %399 : vector<2x256xf32>
    %cst_95 = arith.constant 1.000000e+00 : f32
    %401 = vector.broadcast %cst_95 : f32 to vector<2x256xf32>
    %402 = arith.addf %401, %400 : vector<2x256xf32>
    %403 = arith.divf %401, %402 : vector<2x256xf32>
    %404 = vector.extract_strided_slice %397 {offsets = [0, 256], sizes = [2, 256], strides = [1, 1]} : vector<2x1024xf32> to vector<2x256xf32>
    %405 = arith.negf %404 : vector<2x256xf32>
    %406 = math.exp %405 : vector<2x256xf32>
    %cst_96 = arith.constant 1.000000e+00 : f32
    %407 = vector.broadcast %cst_96 : f32 to vector<2x256xf32>
    %408 = arith.addf %407, %406 : vector<2x256xf32>
    %409 = arith.divf %407, %408 : vector<2x256xf32>
    %410 = vector.extract_strided_slice %397 {offsets = [0, 512], sizes = [2, 256], strides = [1, 1]} : vector<2x1024xf32> to vector<2x256xf32>
    %411 = math.tanh %410 : vector<2x256xf32>
    %412 = vector.extract_strided_slice %397 {offsets = [0, 768], sizes = [2, 256], strides = [1, 1]} : vector<2x1024xf32> to vector<2x256xf32>
    %413 = arith.negf %412 : vector<2x256xf32>
    %414 = math.exp %413 : vector<2x256xf32>
    %cst_97 = arith.constant 1.000000e+00 : f32
    %415 = vector.broadcast %cst_97 : f32 to vector<2x256xf32>
    %416 = arith.addf %415, %414 : vector<2x256xf32>
    %417 = arith.divf %415, %416 : vector<2x256xf32>
    %418 = arith.mulf %409, %362 : vector<2x256xf32>
    %419 = arith.mulf %403, %411 : vector<2x256xf32>
    %420 = arith.addf %418, %419 : vector<2x256xf32>
    %421 = math.tanh %420 : vector<2x256xf32>
    %422 = arith.mulf %417, %421 : vector<2x256xf32>
    %c12_98 = arith.constant 12 : index
    %c0_99 = arith.constant 0 : index
    %423 = vector.load %arg21[%c12_98, %c0_99] : memref<16x256xf32, #tpu.memory_space<vmem>>, vector<2x256xf32>
    tpu.vector_store %arg21[%c12_98, %c0_99], %422 {strides = array<i32>} : memref<16x256xf32, #tpu.memory_space<vmem>>, vector<2x256xf32>,
    %c14 = arith.constant 14 : index
    %c0_100 = arith.constant 0 : index
    %424 = vector.load %arg20[%c14, %c0_100] : memref<16x1024xf32, #tpu.memory_space<vmem>>, vector<2x1024xf32>
    %cst_101 = arith.constant dense<0.000000e+00> : vector<2x1024xf32>
    %425 = tpu.matmul %393, %11, %cst_101 {dimension_numbers = #tpu.dot_dimension_numbers<[1], [0], [0], [1], [0, 0, 1, 1], [], []>} : vector<2x256xf32>, vector<256x1024xf32>, vector<2x1024xf32> -> vector<2x1024xf32>
    %426 = arith.addf %424, %425 : vector<2x1024xf32>
    %427 = vector.extract_strided_slice %426 {offsets = [0, 0], sizes = [2, 256], strides = [1, 1]} : vector<2x1024xf32> to vector<2x256xf32>
    %428 = arith.negf %427 : vector<2x256xf32>
    %429 = math.exp %428 : vector<2x256xf32>
    %cst_102 = arith.constant 1.000000e+00 : f32
    %430 = vector.broadcast %cst_102 : f32 to vector<2x256xf32>
    %431 = arith.addf %430, %429 : vector<2x256xf32>
    %432 = arith.divf %430, %431 : vector<2x256xf32>
    %433 = vector.extract_strided_slice %426 {offsets = [0, 256], sizes = [2, 256], strides = [1, 1]} : vector<2x1024xf32> to vector<2x256xf32>
    %434 = arith.negf %433 : vector<2x256xf32>
    %435 = math.exp %434 : vector<2x256xf32>
    %cst_103 = arith.constant 1.000000e+00 : f32
    %436 = vector.broadcast %cst_103 : f32 to vector<2x256xf32>
    %437 = arith.addf %436, %435 : vector<2x256xf32>
    %438 = arith.divf %436, %437 : vector<2x256xf32>
    %439 = vector.extract_strided_slice %426 {offsets = [0, 512], sizes = [2, 256], strides = [1, 1]} : vector<2x1024xf32> to vector<2x256xf32>
    %440 = math.tanh %439 : vector<2x256xf32>
    %441 = vector.extract_strided_slice %426 {offsets = [0, 768], sizes = [2, 256], strides = [1, 1]} : vector<2x1024xf32> to vector<2x256xf32>
    %442 = arith.negf %441 : vector<2x256xf32>
    %443 = math.exp %442 : vector<2x256xf32>
    %cst_104 = arith.constant 1.000000e+00 : f32
    %444 = vector.broadcast %cst_104 : f32 to vector<2x256xf32>
    %445 = arith.addf %444, %443 : vector<2x256xf32>
    %446 = arith.divf %444, %445 : vector<2x256xf32>
    %447 = arith.mulf %438, %391 : vector<2x256xf32>
    %448 = arith.mulf %432, %440 : vector<2x256xf32>
    %449 = arith.addf %447, %448 : vector<2x256xf32>
    %450 = math.tanh %449 : vector<2x256xf32>
    %451 = arith.mulf %446, %450 : vector<2x256xf32>
    %452 = tpu.concatenate %451, %422 in 1 : vector<2x256xf32>, vector<2x256xf32> -> vector<2x512xf32>
    %cst_105 = arith.constant dense<0.000000e+00> : vector<2x1024xf32>
    %453 = tpu.matmul %452, %12, %cst_105 {dimension_numbers = #tpu.dot_dimension_numbers<[1], [0], [0], [1], [0, 0, 1, 1], [], []>} : vector<2x512xf32>, vector<512x1024xf32>, vector<2x1024xf32> -> vector<2x1024xf32>
    %454 = vector.broadcast %13 : vector<1x1024xf32> to vector<2x1024xf32>
    %455 = arith.addf %453, %454 : vector<2x1024xf32>
    %456 = vector.extract_strided_slice %455 {offsets = [0, 0], sizes = [2, 256], strides = [1, 1]} : vector<2x1024xf32> to vector<2x256xf32>
    %457 = arith.negf %456 : vector<2x256xf32>
    %458 = math.exp %457 : vector<2x256xf32>
    %cst_106 = arith.constant 1.000000e+00 : f32
    %459 = vector.broadcast %cst_106 : f32 to vector<2x256xf32>
    %460 = arith.addf %459, %458 : vector<2x256xf32>
    %461 = arith.divf %459, %460 : vector<2x256xf32>
    %462 = vector.extract_strided_slice %455 {offsets = [0, 256], sizes = [2, 256], strides = [1, 1]} : vector<2x1024xf32> to vector<2x256xf32>
    %463 = arith.negf %462 : vector<2x256xf32>
    %464 = math.exp %463 : vector<2x256xf32>
    %cst_107 = arith.constant 1.000000e+00 : f32
    %465 = vector.broadcast %cst_107 : f32 to vector<2x256xf32>
    %466 = arith.addf %465, %464 : vector<2x256xf32>
    %467 = arith.divf %465, %466 : vector<2x256xf32>
    %468 = vector.extract_strided_slice %455 {offsets = [0, 512], sizes = [2, 256], strides = [1, 1]} : vector<2x1024xf32> to vector<2x256xf32>
    %469 = math.tanh %468 : vector<2x256xf32>
    %470 = vector.extract_strided_slice %455 {offsets = [0, 768], sizes = [2, 256], strides = [1, 1]} : vector<2x1024xf32> to vector<2x256xf32>
    %471 = arith.negf %470 : vector<2x256xf32>
    %472 = math.exp %471 : vector<2x256xf32>
    %cst_108 = arith.constant 1.000000e+00 : f32
    %473 = vector.broadcast %cst_108 : f32 to vector<2x256xf32>
    %474 = arith.addf %473, %472 : vector<2x256xf32>
    %475 = arith.divf %473, %474 : vector<2x256xf32>
    %476 = arith.mulf %467, %420 : vector<2x256xf32>
    %477 = arith.mulf %461, %469 : vector<2x256xf32>
    %478 = arith.addf %476, %477 : vector<2x256xf32>
    %479 = math.tanh %478 : vector<2x256xf32>
    %480 = arith.mulf %475, %479 : vector<2x256xf32>
    %c14_109 = arith.constant 14 : index
    %c0_110 = arith.constant 0 : index
    %481 = vector.load %arg21[%c14_109, %c0_110] : memref<16x256xf32, #tpu.memory_space<vmem>>, vector<2x256xf32>
    tpu.vector_store %arg21[%c14_109, %c0_110], %480 {strides = array<i32>} : memref<16x256xf32, #tpu.memory_space<vmem>>, vector<2x256xf32>,
    %c0_111 = arith.constant 0 : index
    %c0_112 = arith.constant 0 : index
    %482 = vector.load %arg16[%c0_111, %c0_112] : memref<2x256xf32, #tpu.memory_space<vmem>>, vector<2x256xf32>
    tpu.vector_store %arg16[%c0_111, %c0_112], %451 {strides = array<i32>} : memref<2x256xf32, #tpu.memory_space<vmem>>, vector<2x256xf32>,
    %c0_113 = arith.constant 0 : index
    %c0_114 = arith.constant 0 : index
    %483 = vector.load %arg17[%c0_113, %c0_114] : memref<2x256xf32, #tpu.memory_space<vmem>>, vector<2x256xf32>
    tpu.vector_store %arg17[%c0_113, %c0_114], %449 {strides = array<i32>} : memref<2x256xf32, #tpu.memory_space<vmem>>, vector<2x256xf32>,
    %c0_115 = arith.constant 0 : index
    %c0_116 = arith.constant 0 : index
    %484 = vector.load %arg18[%c0_115, %c0_116] : memref<2x256xf32, #tpu.memory_space<vmem>>, vector<2x256xf32>
    tpu.vector_store %arg18[%c0_115, %c0_116], %480 {strides = array<i32>} : memref<2x256xf32, #tpu.memory_space<vmem>>, vector<2x256xf32>,
    %c0_117 = arith.constant 0 : index
    %c0_118 = arith.constant 0 : index
    %485 = vector.load %arg19[%c0_117, %c0_118] : memref<2x256xf32, #tpu.memory_space<vmem>>, vector<2x256xf32>
    tpu.vector_store %arg19[%c0_117, %c0_118], %478 {strides = array<i32>} : memref<2x256xf32, #tpu.memory_space<vmem>>, vector<2x256xf32>,
    %c0_i32_119 = arith.constant 0 : i32
    %486 = arith.cmpi eq, %arg0, %c0_i32_119 : i32
    %487 = arith.extui %486 : i1 to i32
    %c0_i32_120 = arith.constant 0 : i32
    %488 = arith.cmpi ne, %487, %c0_i32_120 : i32
    scf.if %488 {
      %c0_144 = arith.constant 0 : index
      %c0_145 = arith.constant 0 : index
      %c0_146 = arith.constant 0 : index
      %519 = vector.load %arg14[%c0_144, %c0_145, %c0_146] : memref<2x2x256xf32, #tpu.memory_space<vmem>>, vector<1x2x256xf32>
      %520 = vector.shape_cast %519 : vector<1x2x256xf32> to vector<2x256xf32>
      %521 = vector.shape_cast %451 : vector<2x256xf32> to vector<1x2x256xf32>
      tpu.vector_store %arg14[%c0_144, %c0_145, %c0_146], %521 {strides = array<i32>} : memref<2x2x256xf32, #tpu.memory_space<vmem>>, vector<1x2x256xf32>,
      %c1 = arith.constant 1 : index
      %c0_147 = arith.constant 0 : index
      %c0_148 = arith.constant 0 : index
      %522 = vector.load %arg14[%c1, %c0_147, %c0_148] : memref<2x2x256xf32, #tpu.memory_space<vmem>>, vector<1x2x256xf32>
      %523 = vector.shape_cast %522 : vector<1x2x256xf32> to vector<2x256xf32>
      %524 = vector.shape_cast %480 : vector<2x256xf32> to vector<1x2x256xf32>
      tpu.vector_store %arg14[%c1, %c0_147, %c0_148], %524 {strides = array<i32>} : memref<2x2x256xf32, #tpu.memory_space<vmem>>, vector<1x2x256xf32>,
      %c0_149 = arith.constant 0 : index
      %c0_150 = arith.constant 0 : index
      %c0_151 = arith.constant 0 : index
      %525 = vector.load %arg15[%c0_149, %c0_150, %c0_151] : memref<2x2x256xf32, #tpu.memory_space<vmem>>, vector<1x2x256xf32>
      %526 = vector.shape_cast %525 : vector<1x2x256xf32> to vector<2x256xf32>
      %527 = vector.shape_cast %449 : vector<2x256xf32> to vector<1x2x256xf32>
      tpu.vector_store %arg15[%c0_149, %c0_150, %c0_151], %527 {strides = array<i32>} : memref<2x2x256xf32, #tpu.memory_space<vmem>>, vector<1x2x256xf32>,
      %c1_152 = arith.constant 1 : index
      %c0_153 = arith.constant 0 : index
      %c0_154 = arith.constant 0 : index
      %528 = vector.load %arg15[%c1_152, %c0_153, %c0_154] : memref<2x2x256xf32, #tpu.memory_space<vmem>>, vector<1x2x256xf32>
      %529 = vector.shape_cast %528 : vector<1x2x256xf32> to vector<2x256xf32>
      %530 = vector.shape_cast %478 : vector<2x256xf32> to vector<1x2x256xf32>
      tpu.vector_store %arg15[%c1_152, %c0_153, %c0_154], %530 {strides = array<i32>} : memref<2x2x256xf32, #tpu.memory_space<vmem>>, vector<1x2x256xf32>,
    } else {
    }
    %c0_121 = arith.constant 0 : index
    %c0_122 = arith.constant 0 : index
    %489 = vector.load %arg21[%c0_121, %c0_122] : memref<16x256xf32, #tpu.memory_space<vmem>>, vector<16x256xf32>
    %490 = arith.truncf %489 : vector<16x256xf32> to vector<16x256xbf16>
    %c0_123 = arith.constant 0 : index
    %c0_124 = arith.constant 0 : index
    %491 = vector.load %arg7[%c0_123, %c0_124] : memref<256x256xbf16, #tpu.memory_space<vmem>>, vector<256x256xbf16>
    %cst_125 = arith.constant dense<0.000000e+00> : vector<16x256xf32>
    %492 = tpu.matmul %490, %491, %cst_125 {dimension_numbers = #tpu.dot_dimension_numbers<[1], [0], [0], [1], [0, 0, 1, 1], [], []>} : vector<16x256xbf16>, vector<256x256xbf16>, vector<16x256xf32> -> vector<16x256xf32>
    %c0_126 = arith.constant 0 : index
    %c0_127 = arith.constant 0 : index
    %493 = vector.load %arg8[%c0_126, %c0_127] : memref<1x256xf32, #tpu.memory_space<vmem>>, vector<1x256xf32>
    %494 = vector.broadcast %493 : vector<1x256xf32> to vector<16x256xf32>
    %495 = arith.addf %492, %494 : vector<16x256xf32>
    %cst_128 = arith.constant 0.000000e+00 : f32
    %496 = vector.broadcast %cst_128 : f32 to vector<16x256xf32>
    %497 = arith.cmpf ogt, %495, %496 : vector<16x256xf32>
    %cst_129 = arith.constant 0.00999999977 : f32
    %498 = vector.broadcast %cst_129 : f32 to vector<16x256xf32>
    %499 = arith.mulf %498, %495 : vector<16x256xf32>
    %500 = arith.select %497, %495, %499 : vector<16x256xi1>, vector<16x256xf32>
    %501 = arith.truncf %500 : vector<16x256xf32> to vector<16x256xbf16>
    %c0_130 = arith.constant 0 : index
    %c0_131 = arith.constant 0 : index
    %502 = vector.load %arg9[%c0_130, %c0_131] : memref<256x256xbf16, #tpu.memory_space<vmem>>, vector<256x256xbf16>
    %cst_132 = arith.constant dense<0.000000e+00> : vector<16x256xf32>
    %503 = tpu.matmul %501, %502, %cst_132 {dimension_numbers = #tpu.dot_dimension_numbers<[1], [0], [0], [1], [0, 0, 1, 1], [], []>} : vector<16x256xbf16>, vector<256x256xbf16>, vector<16x256xf32> -> vector<16x256xf32>
    %c0_133 = arith.constant 0 : index
    %c0_134 = arith.constant 0 : index
    %504 = vector.load %arg10[%c0_133, %c0_134] : memref<1x256xf32, #tpu.memory_space<vmem>>, vector<1x256xf32>
    %505 = vector.broadcast %504 : vector<1x256xf32> to vector<16x256xf32>
    %506 = arith.addf %503, %505 : vector<16x256xf32>
    %cst_135 = arith.constant 0.000000e+00 : f32
    %507 = vector.broadcast %cst_135 : f32 to vector<16x256xf32>
    %508 = arith.cmpf ogt, %506, %507 : vector<16x256xf32>
    %cst_136 = arith.constant 0.00999999977 : f32
    %509 = vector.broadcast %cst_136 : f32 to vector<16x256xf32>
    %510 = arith.mulf %509, %506 : vector<16x256xf32>
    %511 = arith.select %508, %506, %510 : vector<16x256xi1>, vector<16x256xf32>
    %512 = arith.truncf %511 : vector<16x256xf32> to vector<16x256xbf16>
    %c0_137 = arith.constant 0 : index
    %c0_138 = arith.constant 0 : index
    %513 = vector.load %arg11[%c0_137, %c0_138] : memref<256x256xbf16, #tpu.memory_space<vmem>>, vector<256x256xbf16>
    %cst_139 = arith.constant dense<0.000000e+00> : vector<16x256xf32>
    %514 = tpu.matmul %512, %513, %cst_139 {dimension_numbers = #tpu.dot_dimension_numbers<[1], [0], [0], [1], [0, 0, 1, 1], [], []>} : vector<16x256xbf16>, vector<256x256xbf16>, vector<16x256xf32> -> vector<16x256xf32>
    %c0_140 = arith.constant 0 : index
    %c0_141 = arith.constant 0 : index
    %515 = vector.load %arg12[%c0_140, %c0_141] : memref<1x256xf32, #tpu.memory_space<vmem>>, vector<1x256xf32>
    %516 = vector.broadcast %515 : vector<1x256xf32> to vector<16x256xf32>
    %517 = arith.addf %514, %516 : vector<16x256xf32>
    %c0_142 = arith.constant 0 : index
    %c0_143 = arith.constant 0 : index
    %518 = vector.load %arg13[%c0_142, %c0_143] : memref<16x256xf32, #tpu.memory_space<vmem>>, vector<16x256xf32>
    tpu.vector_store %arg13[%c0_142, %c0_143], %517 {strides = array<i32>} : memref<16x256xf32, #tpu.memory_space<vmem>>, vector<16x256xf32>,
    return
  }
  func.func @transform_0(%arg0: i32) -> (i32, i32) {
    %c0_i32 = arith.constant 0 : i32
    %c0_i32_0 = arith.constant 0 : i32
    return %arg0, %c0_i32 : i32, i32
  }
  func.func @transform_1(%arg0: i32) -> (i32, i32) {
    %c0_i32 = arith.constant 0 : i32
    %c0_i32_0 = arith.constant 0 : i32
    %c0_i32_1 = arith.constant 0 : i32
    return %c0_i32, %c0_i32_0 : i32, i32
  }
  func.func @transform_2(%arg0: i32) -> (i32, i32) {
    %c0_i32 = arith.constant 0 : i32
    %c0_i32_0 = arith.constant 0 : i32
    %c0_i32_1 = arith.constant 0 : i32
    return %c0_i32, %c0_i32_0 : i32, i32
  }
  func.func @transform_3(%arg0: i32) -> (i32, i32) {
    %c0_i32 = arith.constant 0 : i32
    %c0_i32_0 = arith.constant 0 : i32
    %c0_i32_1 = arith.constant 0 : i32
    return %c0_i32, %c0_i32_0 : i32, i32
  }
  func.func @transform_4(%arg0: i32) -> (i32, i32) {
    %c0_i32 = arith.constant 0 : i32
    %c0_i32_0 = arith.constant 0 : i32
    %c0_i32_1 = arith.constant 0 : i32
    return %c0_i32, %c0_i32_0 : i32, i32
  }
  func.func @transform_5(%arg0: i32) -> (i32, i32) {
    %c0_i32 = arith.constant 0 : i32
    %c0_i32_0 = arith.constant 0 : i32
    %c0_i32_1 = arith.constant 0 : i32
    return %c0_i32, %c0_i32_0 : i32, i32
  }
  func.func @transform_6(%arg0: i32) -> (i32, i32) {
    %c0_i32 = arith.constant 0 : i32
    %c0_i32_0 = arith.constant 0 : i32
    %c0_i32_1 = arith.constant 0 : i32
    return %c0_i32, %c0_i32_0 : i32, i32
  }
  func.func @transform_7(%arg0: i32) -> (i32, i32) {
    %c0_i32 = arith.constant 0 : i32
    %c0_i32_0 = arith.constant 0 : i32
    %c0_i32_1 = arith.constant 0 : i32
    return %c0_i32, %c0_i32_0 : i32, i32
  }
  func.func @transform_8(%arg0: i32) -> (i32, i32) {
    %c0_i32 = arith.constant 0 : i32
    %c0_i32_0 = arith.constant 0 : i32
    %c0_i32_1 = arith.constant 0 : i32
    return %c0_i32, %c0_i32_0 : i32, i32
  }
  func.func @transform_9(%arg0: i32) -> (i32, i32) {
    %c0_i32 = arith.constant 0 : i32
    %c0_i32_0 = arith.constant 0 : i32
    %c0_i32_1 = arith.constant 0 : i32
    return %c0_i32, %c0_i32_0 : i32, i32
  }
  func.func @transform_10(%arg0: i32) -> (i32, i32) {
    %c0_i32 = arith.constant 0 : i32
    %c0_i32_0 = arith.constant 0 : i32
    %c0_i32_1 = arith.constant 0 : i32
    return %c0_i32, %c0_i32_0 : i32, i32
  }
  func.func @transform_11(%arg0: i32) -> (i32, i32) {
    %c0_i32 = arith.constant 0 : i32
    %c0_i32_0 = arith.constant 0 : i32
    %c0_i32_1 = arith.constant 0 : i32
    return %c0_i32, %c0_i32_0 : i32, i32
  }
  func.func @transform_12(%arg0: i32) -> (i32, i32) {
    %c0_i32 = arith.constant 0 : i32
    %c0_i32_0 = arith.constant 0 : i32
    return %arg0, %c0_i32 : i32, i32
  }
  func.func @transform_13(%arg0: i32) -> (i32, i32, i32) {
    %c0_i32 = arith.constant 0 : i32
    %c0_i32_0 = arith.constant 0 : i32
    %c0_i32_1 = arith.constant 0 : i32
    %c0_i32_2 = arith.constant 0 : i32
    return %c0_i32, %c0_i32_0, %c0_i32_1 : i32, i32, i32
  }
  func.func @transform_14(%arg0: i32) -> (i32, i32, i32) {
    %c0_i32 = arith.constant 0 : i32
    %c0_i32_0 = arith.constant 0 : i32
    %c0_i32_1 = arith.constant 0 : i32
    %c0_i32_2 = arith.constant 0 : i32
    return %c0_i32, %c0_i32_0, %c0_i32_1 : i32, i32, i32
  }
}

</mosaic_0001>

<llo_original>
// kernel: forward.1
$region0: #{forward.1}
  #allocation0 [shape = 'u32[]', space=smem, size = 0x4, offset = 0x4, fixed_abs, tag = 'smem constant byte address 0x4 - core index']
  #allocation1 [shape = 'u32[144,128]{1,0:T(1,128)}', space=vmem, size = 0x12000, scoped, tag = 'internal scratch']
  #allocation2 [shape = 'f32[2,256]{1,0:T(2,128)}', space=vmem, size = 0x800, scoped, tag = 'scratch operand']
  #allocation3 [shape = 'f32[2,256]{1,0:T(2,128)}', space=vmem, size = 0x800, scoped, tag = 'scratch operand']
  #allocation4 [shape = 'f32[2,256]{1,0:T(2,128)}', space=vmem, size = 0x800, scoped, tag = 'scratch operand']
  #allocation5 [shape = 'f32[2,256]{1,0:T(2,128)}', space=vmem, size = 0x800, scoped, tag = 'scratch operand']
  #allocation6 [shape = 'f32[16,1024]{1,0:T(8,128)}', space=vmem, size = 0x10000, scoped, tag = 'scratch operand']
  #allocation7 [shape = 'f32[16,256]{1,0:T(8,128)}', space=vmem, size = 0x4000, scoped, tag = 'scratch operand']
  %s0 = inlined_call_operand.vmem [shape: f32[16,176], index: 0, kind: input, shape index: {}]
  %s1 = inlined_call_operand.hbm [shape: bf16[176,1024], index: 1, kind: input, shape index: {}]
  %s2 = inlined_call_operand.hbm [shape: f32[1,1024], index: 2, kind: input, shape index: {}]
  %s3 = inlined_call_operand.hbm [shape: f32[256,1024], index: 3, kind: input, shape index: {}]
  %s4 = inlined_call_operand.hbm [shape: f32[512,1024], index: 4, kind: input, shape index: {}]
  %s5 = inlined_call_operand.hbm [shape: f32[1,1024], index: 5, kind: input, shape index: {}]
  %s6 = inlined_call_operand.hbm [shape: bf16[256,256], index: 6, kind: input, shape index: {}]
  %s7 = inlined_call_operand.hbm [shape: f32[1,256], index: 7, kind: input, shape index: {}]
  %s8 = inlined_call_operand.hbm [shape: bf16[256,256], index: 8, kind: input, shape index: {}]
  %s9 = inlined_call_operand.hbm [shape: f32[1,256], index: 9, kind: input, shape index: {}]
  %s10 = inlined_call_operand.hbm [shape: bf16[256,256], index: 10, kind: input, shape index: {}]
  %s11 = inlined_call_operand.hbm [shape: f32[1,256], index: 11, kind: input, shape index: {}]
  %s12 = inlined_call_operand.vmem [shape: f32[16,256], index: 12, kind: output, shape index: {0}]
  %s13 = inlined_call_operand.hbm [shape: f32[2,2,256], index: 13, kind: output, shape index: {1}]
  %s14 = inlined_call_operand.hbm [shape: f32[2,2,256], index: 14, kind: output, shape index: {2}]
  %15 = xla_tuple %s12, %s13, %s14
  %s16 = sld [smem:[#allocation0]]
  $region126: #{forward.1} parent=0
    _
  %s18 = ssub.s32 1, %s16
  %s19 = scalar_select 0, %s18, %s16
  $region1: #{forward.1} parent=0
    #allocation8 [shape = 'u8[360448]{0}', space=vmem, size = 0x58000, scoped, tag = 'input window, operand 1, single buffered']
    #allocation9 [shape = 's32[1]{0}', space=sflag, size = 0x4, scoped, tag = 'scoped memory for forward.1']
    #allocation10 [shape = 's32[1]{0}', space=sflag, size = 0x4, scoped, tag = 'scoped memory for forward.1']
    #allocation11 [shape = 'u8[4096]{0}', space=vmem, size = 0x1000, scoped, tag = 'input window, operand 2, single buffered']
    #allocation12 [shape = 's32[1]{0}', space=sflag, size = 0x4, scoped, tag = 'scoped memory for forward.1']
    #allocation13 [shape = 'u8[1048576]{0}', space=vmem, size = 0x100000, scoped, tag = 'input window, operand 3, single buffered']
    #allocation14 [shape = 'u8[2097152]{0}', space=vmem, size = 0x200000, scoped, tag = 'input window, operand 4, single buffered']
    #allocation15 [shape = 's32[1]{0}', space=sflag, size = 0x4, scoped, tag = 'scoped memory for forward.1']
    #allocation16 [shape = 'u8[4096]{0}', space=vmem, size = 0x1000, scoped, tag = 'input window, operand 5, single buffered']
    #allocation17 [shape = 'u8[131072]{0}', space=vmem, size = 0x20000, scoped, tag = 'input window, operand 6, single buffered']
    #allocation18 [shape = 's32[1]{0}', space=sflag, size = 0x4, scoped, tag = 'scoped memory for forward.1']
    #allocation19 [shape = 'u8[1024]{0}', space=vmem, size = 0x400, scoped, tag = 'input window, operand 7, single buffered']
    #allocation20 [shape = 'u8[131072]{0}', space=vmem, size = 0x20000, scoped, tag = 'input window, operand 8, single buffered']
    #allocation21 [shape = 's32[1]{0}', space=sflag, size = 0x4, scoped, tag = 'scoped memory for forward.1']
    #allocation22 [shape = 'u8[1024]{0}', space=vmem, size = 0x400, scoped, tag = 'input window, operand 9, single buffered']
    #allocation23 [shape = 'u8[131072]{0}', space=vmem, size = 0x20000, scoped, tag = 'input window, operand 10, single buffered']
    #allocation24 [shape = 's32[1]{0}', space=sflag, size = 0x4, scoped, tag = 'scoped memory for forward.1']
    #allocation25 [shape = 'u8[1024]{0}', space=vmem, size = 0x400, scoped, tag = 'input window, operand 11, single buffered']
    #allocation26 [shape = 'u8[4096]{0}', space=vmem, size = 0x1000, scoped, tag = 'output window, operand 1, single buffered']
    #allocation27 [shape = 'u8[4096]{0}', space=vmem, size = 0x1000, scoped, tag = 'output window, operand 2, single buffered']
    #allocation28 [shape = 's32[1]{0}', space=sflag, size = 0x4, scoped, tag = 'scoped memory for forward.1']
    %20 = vsyncpa [#allocation9], 0
    %21 = vsyncpa [#allocation12], 0
    %22 = vsyncpa [#allocation15], 0
    %23 = vsyncpa [#allocation18], 0
    %24 = vsyncpa [#allocation21], 0
    %25 = vsyncpa [#allocation24], 0
    %26 = vsyncpa [#allocation10], 0
    %27 = vsyncpa [#allocation28], 0
    // Predicated region
    $region2: #{forward.1} parent=1 // pred_check
      _
    $region3: #{forward.1} parent=1 // pred_check_branch
      %29 = sbr.rel (0) target = $region5
    $region4: #{forward.1} parent=1 // pred_region
      _
    $region5: #{forward.1} parent=1 // pred_fallthru
      _
    // Predicated region
    $region6: #{forward.1} parent=1 // pred_check
      _
    $region7: #{forward.1} parent=1 // pred_check_branch
      %31 = sbr.rel (0) target = $region9
    $region8: #{forward.1} parent=1 // pred_region
      %s33 = ssub.s32 11264, 11264
      %34 = vsyncadd [#allocation9], %s33
      %s35 = sshll.u32 [#allocation8], 4
      %s36 = int_to_ptr.vmem [resolvable:$true] %s35
      %41 = dma.hbm_to_vmem [thread:$0]  %s1, 11264, %s36, [#allocation9], 512, 512, 32
    $region9: #{forward.1} parent=1 // pred_fallthru
      _
    // Predicated region
    $region10: #{forward.1} parent=1 // pred_check
      _
    $region11: #{forward.1} parent=1 // pred_check_branch
      %43 = sbr.rel (0) target = $region13
    $region12: #{forward.1} parent=1 // pred_region
      %s45 = ssub.s32 128, 128
      %46 = vsyncadd [#allocation12], %s45
      %s48 = sshll.u32 [#allocation11], 4
      %s49 = int_to_ptr.vmem [resolvable:$true] %s48
      %51 = dma.hbm_to_vmem [thread:$0]  %s2, 128, %s49, [#allocation12]
    $region13: #{forward.1} parent=1 // pred_fallthru
      _
    // Predicated region
    $region14: #{forward.1} parent=1 // pred_check
      _
    $region15: #{forward.1} parent=1 // pred_check_branch
      %53 = sbr.rel (0) target = $region17
    $region16: #{forward.1} parent=1 // pred_region
      %s55 = ssub.s32 32768, 32768
      %56 = vsyncadd [#allocation12], %s55
      %s57 = sshll.u32 [#allocation13], 4
      %s58 = int_to_ptr.vmem [resolvable:$true] %s57
      %63 = dma.hbm_to_vmem [thread:$0]  %s3, 32768, %s58, [#allocation12], 1024, 1024, 64
    $region17: #{forward.1} parent=1 // pred_fallthru
      _
    // Predicated region
    $region18: #{forward.1} parent=1 // pred_check
      _
    $region19: #{forward.1} parent=1 // pred_check_branch
      %65 = sbr.rel (0) target = $region21
    $region20: #{forward.1} parent=1 // pred_region
      %s67 = ssub.s32 65536, 65536
      %68 = vsyncadd [#allocation15], %s67
      %s69 = sshll.u32 [#allocation14], 4
      %s70 = int_to_ptr.vmem [resolvable:$true] %s69
      %75 = dma.hbm_to_vmem [thread:$0]  %s4, 65536, %s70, [#allocation15], 1024, 1024, 64
    $region21: #{forward.1} parent=1 // pred_fallthru
      _
    // Predicated region
    $region22: #{forward.1} parent=1 // pred_check
      _
    $region23: #{forward.1} parent=1 // pred_check_branch
      %77 = sbr.rel (0) target = $region25
    $region24: #{forward.1} parent=1 // pred_region
      %s79 = ssub.s32 128, 128
      %80 = vsyncadd [#allocation15], %s79
      %s82 = sshll.u32 [#allocation16], 4
      %s83 = int_to_ptr.vmem [resolvable:$true] %s82
      %85 = dma.hbm_to_vmem [thread:$0]  %s5, 128, %s83, [#allocation15]
    $region25: #{forward.1} parent=1 // pred_fallthru
      _
    // Predicated region
    $region26: #{forward.1} parent=1 // pred_check
      _
    $region27: #{forward.1} parent=1 // pred_check_branch
      %87 = sbr.rel (0) target = $region29
    $region28: #{forward.1} parent=1 // pred_region
      %s89 = ssub.s32 4096, 4096
      %90 = vsyncadd [#allocation18], %s89
      %s91 = sshll.u32 [#allocation17], 4
      %s92 = int_to_ptr.vmem [resolvable:$true] %s91
      %97 = dma.hbm_to_vmem [thread:$0]  %s6, 4096, %s92, [#allocation18], 128, 128, 8
    $region29: #{forward.1} parent=1 // pred_fallthru
      _
    // Predicated region
    $region30: #{forward.1} parent=1 // pred_check
      _
    $region31: #{forward.1} parent=1 // pred_check_branch
      %99 = sbr.rel (0) target = $region33
    $region32: #{forward.1} parent=1 // pred_region
      %s101 = ssub.s32 32, 32
      %102 = vsyncadd [#allocation18], %s101
      %s104 = sshll.u32 [#allocation19], 4
      %s105 = int_to_ptr.vmem [resolvable:$true] %s104
      %107 = dma.hbm_to_vmem [thread:$0]  %s7, 32, %s105, [#allocation18]
    $region33: #{forward.1} parent=1 // pred_fallthru
      _
    // Predicated region
    $region34: #{forward.1} parent=1 // pred_check
      _
    $region35: #{forward.1} parent=1 // pred_check_branch
      %109 = sbr.rel (0) target = $region37
    $region36: #{forward.1} parent=1 // pred_region
      %s111 = ssub.s32 4096, 4096
      %112 = vsyncadd [#allocation21], %s111
      %s113 = sshll.u32 [#allocation20], 4
      %s114 = int_to_ptr.vmem [resolvable:$true] %s113
      %119 = dma.hbm_to_vmem [thread:$0]  %s8, 4096, %s114, [#allocation21], 128, 128, 8
    $region37: #{forward.1} parent=1 // pred_fallthru
      _
    // Predicated region
    $region38: #{forward.1} parent=1 // pred_check
      _
    $region39: #{forward.1} parent=1 // pred_check_branch
      %121 = sbr.rel (0) target = $region41
    $region40: #{forward.1} parent=1 // pred_region
      %s123 = ssub.s32 32, 32
      %124 = vsyncadd [#allocation21], %s123
      %s126 = sshll.u32 [#allocation22], 4
      %s127 = int_to_ptr.vmem [resolvable:$true] %s126
      %129 = dma.hbm_to_vmem [thread:$0]  %s9, 32, %s127, [#allocation21]
    $region41: #{forward.1} parent=1 // pred_fallthru
      _
    // Predicated region
    $region42: #{forward.1} parent=1 // pred_check
      _
    $region43: #{forward.1} parent=1 // pred_check_branch
      %131 = sbr.rel (0) target = $region45
    $region44: #{forward.1} parent=1 // pred_region
      %s133 = ssub.s32 4096, 4096
      %134 = vsyncadd [#allocation24], %s133
      %s135 = sshll.u32 [#allocation23], 4
      %s136 = int_to_ptr.vmem [resolvable:$true] %s135
      %141 = dma.hbm_to_vmem [thread:$0]  %s10, 4096, %s136, [#allocation24], 128, 128, 8
    $region45: #{forward.1} parent=1 // pred_fallthru
      _
    // Predicated region
    $region46: #{forward.1} parent=1 // pred_check
      _
    $region47: #{forward.1} parent=1 // pred_check_branch
      %143 = sbr.rel (0) target = $region49
    $region48: #{forward.1} parent=1 // pred_region
      %s145 = ssub.s32 32, 32
      %146 = vsyncadd [#allocation24], %s145
      %s148 = sshll.u32 [#allocation25], 4
      %s149 = int_to_ptr.vmem [resolvable:$true] %s148
      %151 = dma.hbm_to_vmem [thread:$0]  %s11, 32, %s149, [#allocation24]
    $region49: #{forward.1} parent=1 // pred_fallthru
      _
    // Predicated region
    $region50: #{forward.1} parent=1 // pred_check
      _
    $region51: #{forward.1} parent=1 // pred_check_branch
      %153 = sbr.rel (0) target = $region53
    $region52: #{forward.1} parent=1 // pred_region
      %154 = dma.done [#allocation9], 11264
    $region53: #{forward.1} parent=1 // pred_fallthru
      _
    // Predicated region
    $region54: #{forward.1} parent=1 // pred_check
      _
    $region55: #{forward.1} parent=1 // pred_check_branch
      %156 = sbr.rel (0) target = $region57
    $region56: #{forward.1} parent=1 // pred_region
      %157 = dma.done [#allocation12], 128
    $region57: #{forward.1} parent=1 // pred_fallthru
      _
    // Predicated region
    $region58: #{forward.1} parent=1 // pred_check
      _
    $region59: #{forward.1} parent=1 // pred_check_branch
      %159 = sbr.rel (0) target = $region61
    $region60: #{forward.1} parent=1 // pred_region
      %160 = dma.done [#allocation12], 32768
    $region61: #{forward.1} parent=1 // pred_fallthru
      _
    // Predicated region
    $region62: #{forward.1} parent=1 // pred_check
      _
    $region63: #{forward.1} parent=1 // pred_check_branch
      %162 = sbr.rel (0) target = $region65
    $region64: #{forward.1} parent=1 // pred_region
      %163 = dma.done [#allocation15], 65536
    $region65: #{forward.1} parent=1 // pred_fallthru
      _
    // Predicated region
    $region66: #{forward.1} parent=1 // pred_check
      _
    $region67: #{forward.1} parent=1 // pred_check_branch
      %165 = sbr.rel (0) target = $region69
    $region68: #{forward.1} parent=1 // pred_region
      %166 = dma.done [#allocation15], 128
    $region69: #{forward.1} parent=1 // pred_fallthru
      _
    // Predicated region
    $region70: #{forward.1} parent=1 // pred_check
      _
    $region71: #{forward.1} parent=1 // pred_check_branch
      %168 = sbr.rel (0) target = $region73
    $region72: #{forward.1} parent=1 // pred_region
      %169 = dma.done [#allocation18], 4096
    $region73: #{forward.1} parent=1 // pred_fallthru
      _
    // Predicated region
    $region74: #{forward.1} parent=1 // pred_check
      _
    $region75: #{forward.1} parent=1 // pred_check_branch
      %171 = sbr.rel (0) target = $region77
    $region76: #{forward.1} parent=1 // pred_region
      %172 = dma.done [#allocation18], 32
    $region77: #{forward.1} parent=1 // pred_fallthru
      _
    // Predicated region
    $region78: #{forward.1} parent=1 // pred_check
      _
    $region79: #{forward.1} parent=1 // pred_check_branch
      %174 = sbr.rel (0) target = $region81
    $region80: #{forward.1} parent=1 // pred_region
      %175 = dma.done [#allocation21], 4096
    $region81: #{forward.1} parent=1 // pred_fallthru
      _
    // Predicated region
    $region82: #{forward.1} parent=1 // pred_check
      _
    $region83: #{forward.1} parent=1 // pred_check_branch
      %177 = sbr.rel (0) target = $region85
    $region84: #{forward.1} parent=1 // pred_region
      %178 = dma.done [#allocation21], 32
    $region85: #{forward.1} parent=1 // pred_fallthru
      _
    // Predicated region
    $region86: #{forward.1} parent=1 // pred_check
      _
    $region87: #{forward.1} parent=1 // pred_check_branch
      %180 = sbr.rel (0) target = $region89
    $region88: #{forward.1} parent=1 // pred_region
      %181 = dma.done [#allocation24], 4096
    $region89: #{forward.1} parent=1 // pred_fallthru
      _
    // Predicated region
    $region90: #{forward.1} parent=1 // pred_check
      _
    $region91: #{forward.1} parent=1 // pred_check_branch
      %183 = sbr.rel (0) target = $region93
    $region92: #{forward.1} parent=1 // pred_region
      %184 = dma.done [#allocation24], 32
    $region93: #{forward.1} parent=1 // pred_fallthru
      _
    %p186 = scmp.eq.s32.totalorder 0, 0
    // Predicated region
    $region94: #{forward.1} parent=1 // pred_check
      %p187 = pneg %p186
    $region95: #{forward.1} parent=1 // pred_check_branch
      %189 = sbr.rel (%p187) target = $region97
    $region96: #{forward.1} parent=1 // pred_region
      %190 = vst [vmem:[#allocation2] sm:$0xf] 0.0
      %191 = vst [vmem:[#allocation3] sm:$0xf] 0.0
      %192 = vst [vmem:[#allocation4] sm:$0xf] 0.0
      %193 = vst [vmem:[#allocation5] sm:$0xf] 0.0
    $region97: #{forward.1} parent=1 // pred_fallthru
      _
    %v194 = vld [vmem:[%s0] sm:$0xff]
    %v195 = vld [vmem:[%s0 + $0x8] sm:$0xff]
    %v196 = vld [vmem:[%s0 + $0x10] sm:$0xff]
    %v197 = vld [vmem:[%s0 + $0x18] sm:$0xff]
    %v198 = vpack.c.bf16 %v196, %v194
    %v199 = vpack.c.bf16 %v197, %v195
    %v200 = vld [vmem:[#allocation8] sm:$0xff]
    %v201 = vld [vmem:[#allocation8 + $0x8] sm:$0xff]
    %v202 = vld [vmem:[#allocation8 + $0x10] sm:$0xff]
    %v203 = vld [vmem:[#allocation8 + $0x18] sm:$0xff]
    %v204 = vld [vmem:[#allocation8 + $0x20] sm:$0xff]
    %v205 = vld [vmem:[#allocation8 + $0x28] sm:$0xff]
    %v206 = vld [vmem:[#allocation8 + $0x30] sm:$0xff]
    %v207 = vld [vmem:[#allocation8 + $0x38] sm:$0xff]
    %v208 = vld [vmem:[#allocation8 + $0x40] sm:$0xff]
    %v209 = vld [vmem:[#allocation8 + $0x48] sm:$0xff]
    %v210 = vld [vmem:[#allocation8 + $0x50] sm:$0xff]
    %v211 = vld [vmem:[#allocation8 + $0x58] sm:$0xff]
    %v212 = vld [vmem:[#allocation8 + $0x60] sm:$0xff]
    %v213 = vld [vmem:[#allocation8 + $0x68] sm:$0xff]
    %v214 = vld [vmem:[#allocation8 + $0x70] sm:$0xff]
    %v215 = vld [vmem:[#allocation8 + $0x78] sm:$0xff]
    %v216 = vld [vmem:[#allocation8 + $0x80] sm:$0xff]
    %v217 = vld [vmem:[#allocation8 + $0x88] sm:$0xff]
    %v218 = vld [vmem:[#allocation8 + $0x90] sm:$0xff]
    %v219 = vld [vmem:[#allocation8 + $0x98] sm:$0xff]
    %v220 = vld [vmem:[#allocation8 + $0xa0] sm:$0xff]
    %v221 = vld [vmem:[#allocation8 + $0xa8] sm:$0xff]
    %v222 = vld [vmem:[#allocation8 + $0xb0] sm:$0xff]
    %v223 = vld [vmem:[#allocation8 + $0xb8] sm:$0xff]
    %v224 = vld [vmem:[#allocation8 + $0xc0] sm:$0xff]
    %v225 = vld [vmem:[#allocation8 + $0xc8] sm:$0xff]
    %v226 = vld [vmem:[#allocation8 + $0xd0] sm:$0xff]
    %v227 = vld [vmem:[#allocation8 + $0xd8] sm:$0xff]
    %v228 = vld [vmem:[#allocation8 + $0xe0] sm:$0xff]
    %v229 = vld [vmem:[#allocation8 + $0xe8] sm:$0xff]
    %v230 = vld [vmem:[#allocation8 + $0xf0] sm:$0xff]
    %v231 = vld [vmem:[#allocation8 + $0xf8] sm:$0xff]
    %v232 = vld [vmem:[#allocation8 + $0x100] sm:$0xff]
    %v233 = vld [vmem:[#allocation8 + $0x108] sm:$0xff]
    %v234 = vld [vmem:[#allocation8 + $0x110] sm:$0xff]
    %v235 = vld [vmem:[#allocation8 + $0x118] sm:$0xff]
    %v236 = vld [vmem:[#allocation8 + $0x120] sm:$0xff]
    %v237 = vld [vmem:[#allocation8 + $0x128] sm:$0xff]
    %v238 = vld [vmem:[#allocation8 + $0x130] sm:$0xff]
    %v239 = vld [vmem:[#allocation8 + $0x138] sm:$0xff]
    %v240 = vld [vmem:[#allocation8 + $0x140] sm:$0xff]
    %v241 = vld [vmem:[#allocation8 + $0x148] sm:$0xff]
    %v242 = vld [vmem:[#allocation8 + $0x150] sm:$0xff]
    %v243 = vld [vmem:[#allocation8 + $0x158] sm:$0xff]
    %v244 = vld [vmem:[#allocation8 + $0x160] sm:$0xff]
    %v245 = vld [vmem:[#allocation8 + $0x168] sm:$0xff]
    %v246 = vld [vmem:[#allocation8 + $0x170] sm:$0xff]
    %v247 = vld [vmem:[#allocation8 + $0x178] sm:$0xff]
    %v248 = vld [vmem:[#allocation8 + $0x180] sm:$0xff]
    %v249 = vld [vmem:[#allocation8 + $0x188] sm:$0xff]
    %v250 = vld [vmem:[#allocation8 + $0x190] sm:$0xff]
    %v251 = vld [vmem:[#allocation8 + $0x198] sm:$0xff]
    %v252 = vld [vmem:[#allocation8 + $0x1a0] sm:$0xff]
    %v253 = vld [vmem:[#allocation8 + $0x1a8] sm:$0xff]
    %v254 = vld [vmem:[#allocation8 + $0x1b0] sm:$0xff]
    %v255 = vld [vmem:[#allocation8 + $0x1b8] sm:$0xff]
    %v256 = vld [vmem:[#allocation8 + $0x1c0] sm:$0xff]
    %v257 = vld [vmem:[#allocation8 + $0x1c8] sm:$0xff]
    %v258 = vld [vmem:[#allocation8 + $0x1d0] sm:$0xff]
    %v259 = vld [vmem:[#allocation8 + $0x1d8] sm:$0xff]
    %v260 = vld [vmem:[#allocation8 + $0x1e0] sm:$0xff]
    %v261 = vld [vmem:[#allocation8 + $0x1e8] sm:$0xff]
    %v262 = vld [vmem:[#allocation8 + $0x1f0] sm:$0xff]
    %v263 = vld [vmem:[#allocation8 + $0x1f8] sm:$0xff]
    %v264 = vld [vmem:[#allocation8 + $0x200] sm:$0xff]
    %v265 = vld [vmem:[#allocation8 + $0x208] sm:$0xff]
    %v266 = vld [vmem:[#allocation8 + $0x210] sm:$0xff]
    %v267 = vld [vmem:[#allocation8 + $0x218] sm:$0xff]
    %v268 = vld [vmem:[#allocation8 + $0x220] sm:$0xff]
    %v269 = vld [vmem:[#allocation8 + $0x228] sm:$0xff]
    %v270 = vld [vmem:[#allocation8 + $0x230] sm:$0xff]
    %v271 = vld [vmem:[#allocation8 + $0x238] sm:$0xff]
    %v272 = vld [vmem:[#allocation8 + $0x240] sm:$0xff]
    %v273 = vld [vmem:[#allocation8 + $0x248] sm:$0xff]
    %v274 = vld [vmem:[#allocation8 + $0x250] sm:$0xff]
    %v275 = vld [vmem:[#allocation8 + $0x258] sm:$0xff]
    %v276 = vld [vmem:[#allocation8 + $0x260] sm:$0xff]
    %v277 = vld [vmem:[#allocation8 + $0x268] sm:$0xff]
    %v278 = vld [vmem:[#allocation8 + $0x270] sm:$0xff]
    %v279 = vld [vmem:[#allocation8 + $0x278] sm:$0xff]
    %v280 = vld [vmem:[#allocation8 + $0x280] sm:$0xff]
    %v281 = vld [vmem:[#allocation8 + $0x288] sm:$0xff]
    %v282 = vld [vmem:[#allocation8 + $0x290] sm:$0xff]
    %v283 = vld [vmem:[#allocation8 + $0x298] sm:$0xff]
    %v284 = vld [vmem:[#allocation8 + $0x2a0] sm:$0xff]
    %v285 = vld [vmem:[#allocation8 + $0x2a8] sm:$0xff]
    %v286 = vld [vmem:[#allocation8 + $0x2b0] sm:$0xff]
    %v287 = vld [vmem:[#allocation8 + $0x2b8] sm:$0xff]
    %v288 = vld [vmem:[#allocation11] sm:$0xff]
    %v290 = vlaneseq
    %v291 = vshrl.u32 %v290, 7
    %v292 = vsub.s32 0, %v291
    %v293 = vrot.slane %v288, %v292
    %v294 = vlaneseq
    %v295 = vshrl.u32 %v294, 7
    %v296 = vsub.s32 1, %v295
    %v297 = vrot.slane %v288, %v296
    %v298 = vlaneseq
    %v299 = vshrl.u32 %v298, 7
    %v300 = vsub.s32 2, %v299
    %v301 = vrot.slane %v288, %v300
    %v302 = vlaneseq
    %v303 = vshrl.u32 %v302, 7
    %v304 = vsub.s32 3, %v303
    %v305 = vrot.slane %v288, %v304
    %v306 = vlaneseq
    %v307 = vshrl.u32 %v306, 7
    %v308 = vsub.s32 4, %v307
    %v309 = vrot.slane %v288, %v308
    %v310 = vlaneseq
    %v311 = vshrl.u32 %v310, 7
    %v312 = vsub.s32 5, %v311
    %v313 = vrot.slane %v288, %v312
    %v314 = vlaneseq
    %v315 = vshrl.u32 %v314, 7
    %v316 = vsub.s32 6, %v315
    %v317 = vrot.slane %v288, %v316
    %v318 = vlaneseq
    %v319 = vshrl.u32 %v318, 7
    %v320 = vsub.s32 7, %v319
    %v321 = vrot.slane %v288, %v320
    %v418 = vunpack.c.l.b16 %v200
    %v419 = vunpack.c.h.b16 %v200
    %v420 = vunpack.c.l.b16 %v201
    %v421 = vunpack.c.h.b16 %v201
    %v422 = vunpack.c.l.b16 %v202
    %v423 = vunpack.c.h.b16 %v202
    %v424 = vunpack.c.l.b16 %v203
    %v425 = vunpack.c.h.b16 %v203
    %v426 = vunpack.c.l.b16 %v204
    %v427 = vunpack.c.h.b16 %v204
    %v428 = vunpack.c.l.b16 %v205
    %v429 = vunpack.c.h.b16 %v205
    %v430 = vunpack.c.l.b16 %v206
    %v431 = vunpack.c.h.b16 %v206
    %v432 = vunpack.c.l.b16 %v207
    %v433 = vunpack.c.h.b16 %v207
    %v434 = vunpack.c.l.b16 %v208
    %v435 = vunpack.c.h.b16 %v208
    %v436 = vunpack.c.l.b16 %v209
    %v437 = vunpack.c.h.b16 %v209
    %v438 = vunpack.c.l.b16 %v210
    %v439 = vunpack.c.h.b16 %v210
    %v440 = vunpack.c.l.b16 %v211
    %v441 = vunpack.c.h.b16 %v211
    %v442 = vunpack.c.l.b16 %v212
    %v443 = vunpack.c.h.b16 %v212
    %v444 = vunpack.c.l.b16 %v213
    %v445 = vunpack.c.h.b16 %v213
    %v446 = vunpack.c.l.b16 %v214
    %v447 = vunpack.c.h.b16 %v214
    %v448 = vunpack.c.l.b16 %v215
    %v449 = vunpack.c.h.b16 %v215
    %v450 = vunpack.c.l.b16 %v216
    %v451 = vunpack.c.h.b16 %v216
    %v452 = vunpack.c.l.b16 %v217
    %v453 = vunpack.c.h.b16 %v217
    %v454 = vunpack.c.l.b16 %v218
    %v455 = vunpack.c.h.b16 %v218
    %v456 = vunpack.c.l.b16 %v219
    %v457 = vunpack.c.h.b16 %v219
    %v458 = vunpack.c.l.b16 %v220
    %v459 = vunpack.c.h.b16 %v220
    %v460 = vunpack.c.l.b16 %v221
    %v461 = vunpack.c.h.b16 %v221
    %v462 = vunpack.c.l.b16 %v222
    %v463 = vunpack.c.h.b16 %v222
    %v464 = vunpack.c.l.b16 %v223
    %v465 = vunpack.c.h.b16 %v223
    %v466 = vunpack.c.l.b16 %v224
    %v467 = vunpack.c.h.b16 %v224
    %v468 = vunpack.c.l.b16 %v225
    %v469 = vunpack.c.h.b16 %v225
    %v470 = vunpack.c.l.b16 %v226
    %v471 = vunpack.c.h.b16 %v226
    %v472 = vunpack.c.l.b16 %v227
    %v473 = vunpack.c.h.b16 %v227
    %v474 = vunpack.c.l.b16 %v228
    %v475 = vunpack.c.h.b16 %v228
    %v476 = vunpack.c.l.b16 %v229
    %v477 = vunpack.c.h.b16 %v229
    %v478 = vunpack.c.l.b16 %v230
    %v479 = vunpack.c.h.b16 %v230
    %v480 = vunpack.c.l.b16 %v231
    %v481 = vunpack.c.h.b16 %v231
    %v482 = vunpack.c.l.b16 %v232
    %v483 = vunpack.c.h.b16 %v232
    %v484 = vunpack.c.l.b16 %v233
    %v485 = vunpack.c.h.b16 %v233
    %v486 = vunpack.c.l.b16 %v234
    %v487 = vunpack.c.h.b16 %v234
    %v488 = vunpack.c.l.b16 %v235
    %v489 = vunpack.c.h.b16 %v235
    %v490 = vunpack.c.l.b16 %v236
    %v491 = vunpack.c.h.b16 %v236
    %v492 = vunpack.c.l.b16 %v237
    %v493 = vunpack.c.h.b16 %v237
    %v494 = vunpack.c.l.b16 %v238
    %v495 = vunpack.c.h.b16 %v238
    %v496 = vunpack.c.l.b16 %v239
    %v497 = vunpack.c.h.b16 %v239
    %v498 = vunpack.c.l.b16 %v240
    %v499 = vunpack.c.h.b16 %v240
    %v500 = vunpack.c.l.b16 %v241
    %v501 = vunpack.c.h.b16 %v241
    %v502 = vunpack.c.l.b16 %v242
    %v503 = vunpack.c.h.b16 %v242
    %v504 = vunpack.c.l.b16 %v243
    %v505 = vunpack.c.h.b16 %v243
    %v506 = vunpack.c.l.b16 %v244
    %v507 = vunpack.c.h.b16 %v244
    %v508 = vunpack.c.l.b16 %v245
    %v509 = vunpack.c.h.b16 %v245
    %v510 = vunpack.c.l.b16 %v246
    %v511 = vunpack.c.h.b16 %v246
    %v512 = vunpack.c.l.b16 %v247
    %v513 = vunpack.c.h.b16 %v247
    %v514 = vunpack.c.l.b16 %v248
    %v515 = vunpack.c.h.b16 %v248
    %v516 = vunpack.c.l.b16 %v249
    %v517 = vunpack.c.h.b16 %v249
    %v518 = vunpack.c.l.b16 %v250
    %v519 = vunpack.c.h.b16 %v250
    %v520 = vunpack.c.l.b16 %v251
    %v521 = vunpack.c.h.b16 %v251
    %v522 = vunpack.c.l.b16 %v252
    %v523 = vunpack.c.h.b16 %v252
    %v524 = vunpack.c.l.b16 %v253
    %v525 = vunpack.c.h.b16 %v253
    %v526 = vunpack.c.l.b16 %v254
    %v527 = vunpack.c.h.b16 %v254
    %v528 = vunpack.c.l.b16 %v255
    %v529 = vunpack.c.h.b16 %v255
    %v530 = vunpack.c.l.b16 %v256
    %v531 = vunpack.c.h.b16 %v256
    %v532 = vunpack.c.l.b16 %v257
    %v533 = vunpack.c.h.b16 %v257
    %v534 = vunpack.c.l.b16 %v258
    %v535 = vunpack.c.h.b16 %v258
    %v536 = vunpack.c.l.b16 %v259
    %v537 = vunpack.c.h.b16 %v259
    %v538 = vunpack.c.l.b16 %v260
    %v539 = vunpack.c.h.b16 %v260
    %v540 = vunpack.c.l.b16 %v261
    %v541 = vunpack.c.h.b16 %v261
    %v542 = vunpack.c.l.b16 %v262
    %v543 = vunpack.c.h.b16 %v262
    %v544 = vunpack.c.l.b16 %v263
    %v545 = vunpack.c.h.b16 %v263
    %v546 = vunpack.c.l.b16 %v264
    %v547 = vunpack.c.h.b16 %v264
    %v548 = vunpack.c.l.b16 %v265
    %v549 = vunpack.c.h.b16 %v265
    %v550 = vunpack.c.l.b16 %v266
    %v551 = vunpack.c.h.b16 %v266
    %v552 = vunpack.c.l.b16 %v267
    %v553 = vunpack.c.h.b16 %v267
    %v554 = vunpack.c.l.b16 %v268
    %v555 = vunpack.c.h.b16 %v268
    %v556 = vunpack.c.l.b16 %v269
    %v557 = vunpack.c.h.b16 %v269
    %v558 = vunpack.c.l.b16 %v270
    %v559 = vunpack.c.h.b16 %v270
    %v560 = vunpack.c.l.b16 %v271
    %v561 = vunpack.c.h.b16 %v271
    %v562 = vunpack.c.l.b16 %v272
    %v563 = vunpack.c.h.b16 %v272
    %v564 = vunpack.c.l.b16 %v273
    %v565 = vunpack.c.h.b16 %v273
    %v566 = vunpack.c.l.b16 %v274
    %v567 = vunpack.c.h.b16 %v274
    %v568 = vunpack.c.l.b16 %v275
    %v569 = vunpack.c.h.b16 %v275
    %v570 = vunpack.c.l.b16 %v276
    %v571 = vunpack.c.h.b16 %v276
    %v572 = vunpack.c.l.b16 %v277
    %v573 = vunpack.c.h.b16 %v277
    %v574 = vunpack.c.l.b16 %v278
    %v575 = vunpack.c.h.b16 %v278
    %v576 = vunpack.c.l.b16 %v279
    %v577 = vunpack.c.h.b16 %v279
    %v578 = vunpack.c.l.b16 %v280
    %v579 = vunpack.c.h.b16 %v280
    %v580 = vunpack.c.l.b16 %v281
    %v581 = vunpack.c.h.b16 %v281
    %v582 = vunpack.c.l.b16 %v282
    %v583 = vunpack.c.h.b16 %v282
    %v584 = vunpack.c.l.b16 %v283
    %v585 = vunpack.c.h.b16 %v283
    %v586 = vunpack.c.l.b16 %v284
    %v587 = vunpack.c.h.b16 %v284
    %v588 = vunpack.c.l.b16 %v285
    %v589 = vunpack.c.h.b16 %v285
    %v590 = vunpack.c.l.b16 %v286
    %v591 = vunpack.c.h.b16 %v286
    %v592 = vunpack.c.l.b16 %v287
    %v593 = vunpack.c.h.b16 %v287
    %v594 = vpack.c.b16 %v426, %v418
    %v595 = vpack.c.b16 %v427, %v419
    %v596 = vpack.c.b16 %v428, %v420
    %v597 = vpack.c.b16 %v429, %v421
    %v598 = vpack.c.b16 %v430, %v422
    %v599 = vpack.c.b16 %v431, %v423
    %v600 = vpack.c.b16 %v432, %v424
    %v601 = vpack.c.b16 %v433, %v425
    %v602 = vpack.c.b16 %v442, %v434
    %v603 = vpack.c.b16 %v443, %v435
    %v604 = vpack.c.b16 %v444, %v436
    %v605 = vpack.c.b16 %v445, %v437
    %v606 = vpack.c.b16 %v446, %v438
    %v607 = vpack.c.b16 %v447, %v439
    %v608 = vpack.c.b16 %v448, %v440
    %v609 = vpack.c.b16 %v449, %v441
    %v610 = vpack.c.b16 %v458, %v450
    %v611 = vpack.c.b16 %v459, %v451
    %v612 = vpack.c.b16 %v460, %v452
    %v613 = vpack.c.b16 %v461, %v453
    %v614 = vpack.c.b16 %v462, %v454
    %v615 = vpack.c.b16 %v463, %v455
    %v616 = vpack.c.b16 %v464, %v456
    %v617 = vpack.c.b16 %v465, %v457
    %v618 = vpack.c.b16 %v474, %v466
    %v619 = vpack.c.b16 %v475, %v467
    %v620 = vpack.c.b16 %v476, %v468
    %v621 = vpack.c.b16 %v477, %v469
    %v622 = vpack.c.b16 %v478, %v470
    %v623 = vpack.c.b16 %v479, %v471
    %v624 = vpack.c.b16 %v480, %v472
    %v625 = vpack.c.b16 %v481, %v473
    %v626 = vpack.c.b16 %v490, %v482
    %v627 = vpack.c.b16 %v491, %v483
    %v628 = vpack.c.b16 %v492, %v484
    %v629 = vpack.c.b16 %v493, %v485
    %v630 = vpack.c.b16 %v494, %v486
    %v631 = vpack.c.b16 %v495, %v487
    %v632 = vpack.c.b16 %v496, %v488
    %v633 = vpack.c.b16 %v497, %v489
    %v634 = vpack.c.b16 %v506, %v498
    %v635 = vpack.c.b16 %v507, %v499
    %v636 = vpack.c.b16 %v508, %v500
    %v637 = vpack.c.b16 %v509, %v501
    %v638 = vpack.c.b16 %v510, %v502
    %v639 = vpack.c.b16 %v511, %v503
    %v640 = vpack.c.b16 %v512, %v504
    %v641 = vpack.c.b16 %v513, %v505
    %v642 = vpack.c.b16 %v522, %v514
    %v643 = vpack.c.b16 %v523, %v515
    %v644 = vpack.c.b16 %v524, %v516
    %v645 = vpack.c.b16 %v525, %v517
    %v646 = vpack.c.b16 %v526, %v518
    %v647 = vpack.c.b16 %v527, %v519
    %v648 = vpack.c.b16 %v528, %v520
    %v649 = vpack.c.b16 %v529, %v521
    %v650 = vpack.c.b16 %v538, %v530
    %v651 = vpack.c.b16 %v539, %v531
    %v652 = vpack.c.b16 %v540, %v532
    %v653 = vpack.c.b16 %v541, %v533
    %v654 = vpack.c.b16 %v542, %v534
    %v655 = vpack.c.b16 %v543, %v535
    %v656 = vpack.c.b16 %v544, %v536
    %v657 = vpack.c.b16 %v545, %v537
    %v658 = vpack.c.b16 %v554, %v546
    %v659 = vpack.c.b16 %v555, %v547
    %v660 = vpack.c.b16 %v556, %v548
    %v661 = vpack.c.b16 %v557, %v549
    %v662 = vpack.c.b16 %v558, %v550
    %v663 = vpack.c.b16 %v559, %v551
    %v664 = vpack.c.b16 %v560, %v552
    %v665 = vpack.c.b16 %v561, %v553
    %v666 = vpack.c.b16 %v570, %v562
    %v667 = vpack.c.b16 %v571, %v563
    %v668 = vpack.c.b16 %v572, %v564
    %v669 = vpack.c.b16 %v573, %v565
    %v670 = vpack.c.b16 %v574, %v566
    %v671 = vpack.c.b16 %v575, %v567
    %v672 = vpack.c.b16 %v576, %v568
    %v673 = vpack.c.b16 %v577, %v569
    %v674 = vpack.c.b16 %v586, %v578
    %v675 = vpack.c.b16 %v587, %v579
    %v676 = vpack.c.b16 %v588, %v580
    %v677 = vpack.c.b16 %v589, %v581
    %v678 = vpack.c.b16 %v590, %v582
    %v679 = vpack.c.b16 %v591, %v583
    %v680 = vpack.c.b16 %v592, %v584
    %v681 = vpack.c.b16 %v593, %v585
    %vm770 = vcmask 392192
    %v772 = vsel %vm770, %v199, 0
    %774 = vmatprep.subr.bf16.mxu0 %v651
    %775 = vmatpush1.bf16.msra.mxu0 %v650
    %776 = vmatprep.subr.bf16.mxu0 %v643
    %777 = vmatpush1.bf16.msra.mxu0 %v642
    %778 = vmatprep.subr.bf16.mxu0 %v635
    %779 = vmatpush1.bf16.msra.mxu0 %v634
    %780 = vmatprep.subr.bf16.mxu0 %v627
    %781 = vmatpush1.bf16.msra.mxu0 %v626
    %782 = vmatprep.subr.bf16.mxu0 %v619
    %783 = vmatpush1.bf16.msra.mxu0 %v618
    %784 = vmatprep.subr.bf16.mxu0 %v611
    %785 = vmatpush1.bf16.msra.mxu0 %v610
    %786 = vmatprep.subr.bf16.mxu0 %v603
    %787 = vmatpush1.bf16.msra.mxu0 %v602
    %788 = vmatprep.subr.bf16.mxu0 %v595
    %789 = vmatpush1.bf16.msra.mxu0 %v594
    %790 = vmatprep.subr.bf16.mxu0 0
    %791 = vmatpush2.bf16.msra.mxu0 0
    %792 = vmatprep.subr.bf16.mxu0 0
    %793 = vmatpush2.bf16.msra.mxu0 0
    %794 = vmatprep.subr.bf16.mxu0 0
    %795 = vmatpush2.bf16.msra.mxu0 0
    %796 = vmatprep.subr.bf16.mxu0 0
    %797 = vmatpush2.bf16.msra.mxu0 0
    %798 = vmatprep.subr.bf16.mxu0 0
    %799 = vmatpush2.bf16.msra.mxu0 0
    %800 = vmatprep.subr.bf16.mxu0 %v675
    %801 = vmatpush2.bf16.msra.mxu0 %v674
    %802 = vmatprep.subr.bf16.mxu0 %v667
    %803 = vmatpush2.bf16.msra.mxu0 %v666
    %804 = vmatprep.subr.bf16.mxu0 %v659
    %805 = vmatpush2.bf16.msra.mxu0 %v658
    %806 = vmatprep.mubr.bf16.mxu0 %v772
    %807 = vmatmul.mubr.bf16.gmra.mxu0 %v198
    %v808 = vpop.f32.mrf.mxu0
    %v809 = vadd.f32 %v293, %v808
    %v810 = vpop.f32.mrf.mxu0
    %v811 = vadd.f32 %v297, %v810
    %v812 = vpop.f32.mrf.mxu0
    %v813 = vadd.f32 %v293, %v812
    %v814 = vpop.f32.mrf.mxu0
    %v815 = vadd.f32 %v297, %v814
    %816 = vdwg.mxu0
    %817 = vmatprep.subr.bf16.mxu0 %v653
    %818 = vmatpush1.bf16.msra.mxu0 %v652
    %819 = vmatprep.subr.bf16.mxu0 %v645
    %820 = vmatpush1.bf16.msra.mxu0 %v644
    %821 = vmatprep.subr.bf16.mxu0 %v637
    %822 = vmatpush1.bf16.msra.mxu0 %v636
    %823 = vmatprep.subr.bf16.mxu0 %v629
    %824 = vmatpush1.bf16.msra.mxu0 %v628
    %825 = vmatprep.subr.bf16.mxu0 %v621
    %826 = vmatpush1.bf16.msra.mxu0 %v620
    %827 = vmatprep.subr.bf16.mxu0 %v613
    %828 = vmatpush1.bf16.msra.mxu0 %v612
    %829 = vmatprep.subr.bf16.mxu0 %v605
    %830 = vmatpush1.bf16.msra.mxu0 %v604
    %831 = vmatprep.subr.bf16.mxu0 %v597
    %832 = vmatpush1.bf16.msra.mxu0 %v596
    %833 = vmatprep.subr.bf16.mxu0 0
    %834 = vmatpush2.bf16.msra.mxu0 0
    %835 = vmatprep.subr.bf16.mxu0 0
    %836 = vmatpush2.bf16.msra.mxu0 0
    %837 = vmatprep.subr.bf16.mxu0 0
    %838 = vmatpush2.bf16.msra.mxu0 0
    %839 = vmatprep.subr.bf16.mxu0 0
    %840 = vmatpush2.bf16.msra.mxu0 0
    %841 = vmatprep.subr.bf16.mxu0 0
    %842 = vmatpush2.bf16.msra.mxu0 0
    %843 = vmatprep.subr.bf16.mxu0 %v677
    %844 = vmatpush2.bf16.msra.mxu0 %v676
    %845 = vmatprep.subr.bf16.mxu0 %v669
    %846 = vmatpush2.bf16.msra.mxu0 %v668
    %847 = vmatprep.subr.bf16.mxu0 %v661
    %848 = vmatpush2.bf16.msra.mxu0 %v660
    %849 = vmatprep.mubr.bf16.mxu0 %v772
    %850 = vmatmul.mubr.bf16.gmra.mxu0 %v198
    %v851 = vpop.f32.mrf.mxu0
    %v852 = vadd.f32 %v301, %v851
    %v853 = vpop.f32.mrf.mxu0
    %v854 = vadd.f32 %v305, %v853
    %v855 = vpop.f32.mrf.mxu0
    %v856 = vadd.f32 %v301, %v855
    %v857 = vpop.f32.mrf.mxu0
    %v858 = vadd.f32 %v305, %v857
    %859 = vdwg.mxu0
    %860 = vmatprep.subr.bf16.mxu0 %v655
    %861 = vmatpush1.bf16.msra.mxu0 %v654
    %862 = vmatprep.subr.bf16.mxu0 %v647
    %863 = vmatpush1.bf16.msra.mxu0 %v646
    %864 = vmatprep.subr.bf16.mxu0 %v639
    %865 = vmatpush1.bf16.msra.mxu0 %v638
    %866 = vmatprep.subr.bf16.mxu0 %v631
    %867 = vmatpush1.bf16.msra.mxu0 %v630
    %868 = vmatprep.subr.bf16.mxu0 %v623
    %869 = vmatpush1.bf16.msra.mxu0 %v622
    %870 = vmatprep.subr.bf16.mxu0 %v615
    %871 = vmatpush1.bf16.msra.mxu0 %v614
    %872 = vmatprep.subr.bf16.mxu0 %v607
    %873 = vmatpush1.bf16.msra.mxu0 %v606
    %874 = vmatprep.subr.bf16.mxu0 %v599
    %875 = vmatpush1.bf16.msra.mxu0 %v598
    %876 = vmatprep.subr.bf16.mxu0 0
    %877 = vmatpush2.bf16.msra.mxu0 0
    %878 = vmatprep.subr.bf16.mxu0 0
    %879 = vmatpush2.bf16.msra.mxu0 0
    %880 = vmatprep.subr.bf16.mxu0 0
    %881 = vmatpush2.bf16.msra.mxu0 0
    %882 = vmatprep.subr.bf16.mxu0 0
    %883 = vmatpush2.bf16.msra.mxu0 0
    %884 = vmatprep.subr.bf16.mxu0 0
    %885 = vmatpush2.bf16.msra.mxu0 0
    %886 = vmatprep.subr.bf16.mxu0 %v679
    %887 = vmatpush2.bf16.msra.mxu0 %v678
    %888 = vmatprep.subr.bf16.mxu0 %v671
    %889 = vmatpush2.bf16.msra.mxu0 %v670
    %890 = vmatprep.subr.bf16.mxu0 %v663
    %891 = vmatpush2.bf16.msra.mxu0 %v662
    %892 = vmatprep.mubr.bf16.mxu0 %v772
    %893 = vmatmul.mubr.bf16.gmra.mxu0 %v198
    %v894 = vpop.f32.mrf.mxu0
    %v895 = vadd.f32 %v309, %v894
    %v896 = vpop.f32.mrf.mxu0
    %v897 = vadd.f32 %v313, %v896
    %v898 = vpop.f32.mrf.mxu0
    %v899 = vadd.f32 %v309, %v898
    %v900 = vpop.f32.mrf.mxu0
    %v901 = vadd.f32 %v313, %v900
    %902 = vdwg.mxu0
    %903 = vmatprep.subr.bf16.mxu0 %v657
    %904 = vmatpush1.bf16.msra.mxu0 %v656
    %905 = vmatprep.subr.bf16.mxu0 %v649
    %906 = vmatpush1.bf16.msra.mxu0 %v648
    %907 = vmatprep.subr.bf16.mxu0 %v641
    %908 = vmatpush1.bf16.msra.mxu0 %v640
    %909 = vmatprep.subr.bf16.mxu0 %v633
    %910 = vmatpush1.bf16.msra.mxu0 %v632
    %911 = vmatprep.subr.bf16.mxu0 %v625
    %912 = vmatpush1.bf16.msra.mxu0 %v624
    %913 = vmatprep.subr.bf16.mxu0 %v617
    %914 = vmatpush1.bf16.msra.mxu0 %v616
    %915 = vmatprep.subr.bf16.mxu0 %v609
    %916 = vmatpush1.bf16.msra.mxu0 %v608
    %917 = vmatprep.subr.bf16.mxu0 %v601
    %918 = vmatpush1.bf16.msra.mxu0 %v600
    %919 = vmatprep.subr.bf16.mxu0 0
    %920 = vmatpush2.bf16.msra.mxu0 0
    %921 = vmatprep.subr.bf16.mxu0 0
    %922 = vmatpush2.bf16.msra.mxu0 0
    %923 = vmatprep.subr.bf16.mxu0 0
    %924 = vmatpush2.bf16.msra.mxu0 0
    %925 = vmatprep.subr.bf16.mxu0 0
    %926 = vmatpush2.bf16.msra.mxu0 0
    %927 = vmatprep.subr.bf16.mxu0 0
    %928 = vmatpush2.bf16.msra.mxu0 0
    %929 = vmatprep.subr.bf16.mxu0 %v681
    %930 = vmatpush2.bf16.msra.mxu0 %v680
    %931 = vmatprep.subr.bf16.mxu0 %v673
    %932 = vmatpush2.bf16.msra.mxu0 %v672
    %933 = vmatprep.subr.bf16.mxu0 %v665
    %934 = vmatpush2.bf16.msra.mxu0 %v664
    %935 = vmatprep.mubr.bf16.mxu0 %v772
    %936 = vmatmul.mubr.bf16.gmra.mxu0 %v198
    %v937 = vpop.f32.mrf.mxu0
    %v938 = vadd.f32 %v317, %v937
    %v939 = vpop.f32.mrf.mxu0
    %v940 = vadd.f32 %v321, %v939
    %v941 = vpop.f32.mrf.mxu0
    %v942 = vadd.f32 %v317, %v941
    %v943 = vpop.f32.mrf.mxu0
    %v944 = vadd.f32 %v321, %v943
    %945 = vdwg.mxu0
    %946 = vst [vmem:[#allocation6] sm:$0xff] %v809
    %947 = vst [vmem:[#allocation6 + $0x8] sm:$0xff] %v811
    %948 = vst [vmem:[#allocation6 + $0x10] sm:$0xff] %v852
    %949 = vst [vmem:[#allocation6 + $0x18] sm:$0xff] %v854
    %950 = vst [vmem:[#allocation6 + $0x20] sm:$0xff] %v895
    %951 = vst [vmem:[#allocation6 + $0x28] sm:$0xff] %v897
    %952 = vst [vmem:[#allocation6 + $0x30] sm:$0xff] %v938
    %953 = vst [vmem:[#allocation6 + $0x38] sm:$0xff] %v940
    %954 = vst [vmem:[#allocation6 + $0x40] sm:$0xff] %v813
    %955 = vst [vmem:[#allocation6 + $0x48] sm:$0xff] %v815
    %956 = vst [vmem:[#allocation6 + $0x50] sm:$0xff] %v856
    %957 = vst [vmem:[#allocation6 + $0x58] sm:$0xff] %v858
    %958 = vst [vmem:[#allocation6 + $0x60] sm:$0xff] %v899
    %959 = vst [vmem:[#allocation6 + $0x68] sm:$0xff] %v901
    %960 = vst [vmem:[#allocation6 + $0x70] sm:$0xff] %v942
    %961 = vst [vmem:[#allocation6 + $0x78] sm:$0xff] %v944
    %v962 = vld [vmem:[#allocation13] sm:$0xff]
    %v963 = vld [vmem:[#allocation13 + $0x8] sm:$0xff]
    %v964 = vld [vmem:[#allocation13 + $0x10] sm:$0xff]
    %v965 = vld [vmem:[#allocation13 + $0x18] sm:$0xff]
    %v966 = vld [vmem:[#allocation13 + $0x20] sm:$0xff]
    %v967 = vld [vmem:[#allocation13 + $0x28] sm:$0xff]
    %v968 = vld [vmem:[#allocation13 + $0x30] sm:$0xff]
    %v969 = vld [vmem:[#allocation13 + $0x38] sm:$0xff]
    %v970 = vld [vmem:[#allocation13 + $0x40] sm:$0xff]
    %v971 = vld [vmem:[#allocation13 + $0x48] sm:$0xff]
    %v972 = vld [vmem:[#allocation13 + $0x50] sm:$0xff]
    %v973 = vld [vmem:[#allocation13 + $0x58] sm:$0xff]
    %v974 = vld [vmem:[#allocation13 + $0x60] sm:$0xff]
    %v975 = vld [vmem:[#allocation13 + $0x68] sm:$0xff]
    %v976 = vld [vmem:[#allocation13 + $0x70] sm:$0xff]
    %v977 = vld [vmem:[#allocation13 + $0x78] sm:$0xff]
    %v978 = vld [vmem:[#allocation13 + $0x80] sm:$0xff]
    %v979 = vld [vmem:[#allocation13 + $0x88] sm:$0xff]
    %v980 = vld [vmem:[#allocation13 + $0x90] sm:$0xff]
    %v981 = vld [vmem:[#allocation13 + $0x98] sm:$0xff]
    %v982 = vld [vmem:[#allocation13 + $0xa0] sm:$0xff]
    %v983 = vld [vmem:[#allocation13 + $0xa8] sm:$0xff]
    %v984 = vld [vmem:[#allocation13 + $0xb0] sm:$0xff]
    %v985 = vld [vmem:[#allocation13 + $0xb8] sm:$0xff]
    %v986 = vld [vmem:[#allocation13 + $0xc0] sm:$0xff]
    %v987 = vld [vmem:[#allocation13 + $0xc8] sm:$0xff]
    %v988 = vld [vmem:[#allocation13 + $0xd0] sm:$0xff]
    %v989 = vld [vmem:[#allocation13 + $0xd8] sm:$0xff]
    %v990 = vld [vmem:[#allocation13 + $0xe0] sm:$0xff]
    %v991 = vld [vmem:[#allocation13 + $0xe8] sm:$0xff]
    %v992 = vld [vmem:[#allocation13 + $0xf0] sm:$0xff]
    %v993 = vld [vmem:[#allocation13 + $0xf8] sm:$0xff]
    %v994 = vld [vmem:[#allocation13 + $0x100] sm:$0xff]
    %v995 = vld [vmem:[#allocation13 + $0x108] sm:$0xff]
    %v996 = vld [vmem:[#allocation13 + $0x110] sm:$0xff]
    %v997 = vld [vmem:[#allocation13 + $0x118] sm:$0xff]
    %v998 = vld [vmem:[#allocation13 + $0x120] sm:$0xff]
    %v999 = vld [vmem:[#allocation13 + $0x128] sm:$0xff]
    %v1000 = vld [vmem:[#allocation13 + $0x130] sm:$0xff]
    %v1001 = vld [vmem:[#allocation13 + $0x138] sm:$0xff]
    %v1002 = vld [vmem:[#allocation13 + $0x140] sm:$0xff]
    %v1003 = vld [vmem:[#allocation13 + $0x148] sm:$0xff]
    %v1004 = vld [vmem:[#allocation13 + $0x150] sm:$0xff]
    %v1005 = vld [vmem:[#allocation13 + $0x158] sm:$0xff]
    %v1006 = vld [vmem:[#allocation13 + $0x160] sm:$0xff]
    %v1007 = vld [vmem:[#allocation13 + $0x168] sm:$0xff]
    %v1008 = vld [vmem:[#allocation13 + $0x170] sm:$0xff]
    %v1009 = vld [vmem:[#allocation13 + $0x178] sm:$0xff]
    %v1010 = vld [vmem:[#allocation13 + $0x180] sm:$0xff]
    %v1011 = vld [vmem:[#allocation13 + $0x188] sm:$0xff]
    %v1012 = vld [vmem:[#allocation13 + $0x190] sm:$0xff]
    %v1013 = vld [vmem:[#allocation13 + $0x198] sm:$0xff]
    %v1014 = vld [vmem:[#allocation13 + $0x1a0] sm:$0xff]
    %v1015 = vld [vmem:[#allocation13 + $0x1a8] sm:$0xff]
    %v1016 = vld [vmem:[#allocation13 + $0x1b0] sm:$0xff]
    %v1017 = vld [vmem:[#allocation13 + $0x1b8] sm:$0xff]
    %v1018 = vld [vmem:[#allocation13 + $0x1c0] sm:$0xff]
    %v1019 = vld [vmem:[#allocation13 + $0x1c8] sm:$0xff]
    %v1020 = vld [vmem:[#allocation13 + $0x1d0] sm:$0xff]
    %v1021 = vld [vmem:[#allocation13 + $0x1d8] sm:$0xff]
    %v1022 = vld [vmem:[#allocation13 + $0x1e0] sm:$0xff]
    %v1023 = vld [vmem:[#allocation13 + $0x1e8] sm:$0xff]
    %v1024 = vld [vmem:[#allocation13 + $0x1f0] sm:$0xff]
    %v1025 = vld [vmem:[#allocation13 + $0x1f8] sm:$0xff]
    %v1026 = vld [vmem:[#allocation13 + $0x200] sm:$0xff]
    %v1027 = vld [vmem:[#allocation13 + $0x208] sm:$0xff]
    %v1028 = vld [vmem:[#allocation13 + $0x210] sm:$0xff]
    %v1029 = vld [vmem:[#allocation13 + $0x218] sm:$0xff]
    %v1030 = vld [vmem:[#allocation13 + $0x220] sm:$0xff]
    %v1031 = vld [vmem:[#allocation13 + $0x228] sm:$0xff]
    %v1032 = vld [vmem:[#allocation13 + $0x230] sm:$0xff]
    %v1033 = vld [vmem:[#allocation13 + $0x238] sm:$0xff]
    %v1034 = vld [vmem:[#allocation13 + $0x240] sm:$0xff]
    %v1035 = vld [vmem:[#allocation13 + $0x248] sm:$0xff]
    %v1036 = vld [vmem:[#allocation13 + $0x250] sm:$0xff]
    %v1037 = vld [vmem:[#allocation13 + $0x258] sm:$0xff]
    %v1038 = vld [vmem:[#allocation13 + $0x260] sm:$0xff]
    %v1039 = vld [vmem:[#allocation13 + $0x268] sm:$0xff]
    %v1040 = vld [vmem:[#allocation13 + $0x270] sm:$0xff]
    %v1041 = vld [vmem:[#allocation13 + $0x278] sm:$0xff]
    %v1042 = vld [vmem:[#allocation13 + $0x280] sm:$0xff]
    %v1043 = vld [vmem:[#allocation13 + $0x288] sm:$0xff]
    %v1044 = vld [vmem:[#allocation13 + $0x290] sm:$0xff]
    %v1045 = vld [vmem:[#allocation13 + $0x298] sm:$0xff]
    %v1046 = vld [vmem:[#allocation13 + $0x2a0] sm:$0xff]
    %v1047 = vld [vmem:[#allocation13 + $0x2a8] sm:$0xff]
    %v1048 = vld [vmem:[#allocation13 + $0x2b0] sm:$0xff]
    %v1049 = vld [vmem:[#allocation13 + $0x2b8] sm:$0xff]
    %v1050 = vld [vmem:[#allocation13 + $0x2c0] sm:$0xff]
    %v1051 = vld [vmem:[#allocation13 + $0x2c8] sm:$0xff]
    %v1052 = vld [vmem:[#allocation13 + $0x2d0] sm:$0xff]
    %v1053 = vld [vmem:[#allocation13 + $0x2d8] sm:$0xff]
    %v1054 = vld [vmem:[#allocation13 + $0x2e0] sm:$0xff]
    %v1055 = vld [vmem:[#allocation13 + $0x2e8] sm:$0xff]
    %v1056 = vld [vmem:[#allocation13 + $0x2f0] sm:$0xff]
    %v1057 = vld [vmem:[#allocation13 + $0x2f8] sm:$0xff]
    %v1058 = vld [vmem:[#allocation13 + $0x300] sm:$0xff]
    %v1059 = vld [vmem:[#allocation13 + $0x308] sm:$0xff]
    %v1060 = vld [vmem:[#allocation13 + $0x310] sm:$0xff]
    %v1061 = vld [vmem:[#allocation13 + $0x318] sm:$0xff]
    %v1062 = vld [vmem:[#allocation13 + $0x320] sm:$0xff]
    %v1063 = vld [vmem:[#allocation13 + $0x328] sm:$0xff]
    %v1064 = vld [vmem:[#allocation13 + $0x330] sm:$0xff]
    %v1065 = vld [vmem:[#allocation13 + $0x338] sm:$0xff]
    %v1066 = vld [vmem:[#allocation13 + $0x340] sm:$0xff]
    %v1067 = vld [vmem:[#allocation13 + $0x348] sm:$0xff]
    %v1068 = vld [vmem:[#allocation13 + $0x350] sm:$0xff]
    %v1069 = vld [vmem:[#allocation13 + $0x358] sm:$0xff]
    %v1070 = vld [vmem:[#allocation13 + $0x360] sm:$0xff]
    %v1071 = vld [vmem:[#allocation13 + $0x368] sm:$0xff]
    %v1072 = vld [vmem:[#allocation13 + $0x370] sm:$0xff]
    %v1073 = vld [vmem:[#allocation13 + $0x378] sm:$0xff]
    %v1074 = vld [vmem:[#allocation13 + $0x380] sm:$0xff]
    %v1075 = vld [vmem:[#allocation13 + $0x388] sm:$0xff]
    %v1076 = vld [vmem:[#allocation13 + $0x390] sm:$0xff]
    %v1077 = vld [vmem:[#allocation13 + $0x398] sm:$0xff]
    %v1078 = vld [vmem:[#allocation13 + $0x3a0] sm:$0xff]
    %v1079 = vld [vmem:[#allocation13 + $0x3a8] sm:$0xff]
    %v1080 = vld [vmem:[#allocation13 + $0x3b0] sm:$0xff]
    %v1081 = vld [vmem:[#allocation13 + $0x3b8] sm:$0xff]
    %v1082 = vld [vmem:[#allocation13 + $0x3c0] sm:$0xff]
    %v1083 = vld [vmem:[#allocation13 + $0x3c8] sm:$0xff]
    %v1084 = vld [vmem:[#allocation13 + $0x3d0] sm:$0xff]
    %v1085 = vld [vmem:[#allocation13 + $0x3d8] sm:$0xff]
    %v1086 = vld [vmem:[#allocation13 + $0x3e0] sm:$0xff]
    %v1087 = vld [vmem:[#allocation13 + $0x3e8] sm:$0xff]
    %v1088 = vld [vmem:[#allocation13 + $0x3f0] sm:$0xff]
    %v1089 = vld [vmem:[#allocation13 + $0x3f8] sm:$0xff]
    %v1090 = vld [vmem:[#allocation13 + $0x400] sm:$0xff]
    %v1091 = vld [vmem:[#allocation13 + $0x408] sm:$0xff]
    %v1092 = vld [vmem:[#allocation13 + $0x410] sm:$0xff]
    %v1093 = vld [vmem:[#allocation13 + $0x418] sm:$0xff]
    %v1094 = vld [vmem:[#allocation13 + $0x420] sm:$0xff]
    %v1095 = vld [vmem:[#allocation13 + $0x428] sm:$0xff]
    %v1096 = vld [vmem:[#allocation13 + $0x430] sm:$0xff]
    %v1097 = vld [vmem:[#allocation13 + $0x438] sm:$0xff]
    %v1098 = vld [vmem:[#allocation13 + $0x440] sm:$0xff]
    %v1099 = vld [vmem:[#allocation13 + $0x448] sm:$0xff]
    %v1100 = vld [vmem:[#allocation13 + $0x450] sm:$0xff]
    %v1101 = vld [vmem:[#allocation13 + $0x458] sm:$0xff]
    %v1102 = vld [vmem:[#allocation13 + $0x460] sm:$0xff]
    %v1103 = vld [vmem:[#allocation13 + $0x468] sm:$0xff]
    %v1104 = vld [vmem:[#allocation13 + $0x470] sm:$0xff]
    %v1105 = vld [vmem:[#allocation13 + $0x478] sm:$0xff]
    %v1106 = vld [vmem:[#allocation13 + $0x480] sm:$0xff]
    %v1107 = vld [vmem:[#allocation13 + $0x488] sm:$0xff]
    %v1108 = vld [vmem:[#allocation13 + $0x490] sm:$0xff]
    %v1109 = vld [vmem:[#allocation13 + $0x498] sm:$0xff]
    %v1110 = vld [vmem:[#allocation13 + $0x4a0] sm:$0xff]
    %v1111 = vld [vmem:[#allocation13 + $0x4a8] sm:$0xff]
    %v1112 = vld [vmem:[#allocation13 + $0x4b0] sm:$0xff]
    %v1113 = vld [vmem:[#allocation13 + $0x4b8] sm:$0xff]
    %v1114 = vld [vmem:[#allocation13 + $0x4c0] sm:$0xff]
    %v1115 = vld [vmem:[#allocation13 + $0x4c8] sm:$0xff]
    %v1116 = vld [vmem:[#allocation13 + $0x4d0] sm:$0xff]
    %v1117 = vld [vmem:[#allocation13 + $0x4d8] sm:$0xff]
    %v1118 = vld [vmem:[#allocation13 + $0x4e0] sm:$0xff]
    %v1119 = vld [vmem:[#allocation13 + $0x4e8] sm:$0xff]
    %v1120 = vld [vmem:[#allocation13 + $0x4f0] sm:$0xff]
    %v1121 = vld [vmem:[#allocation13 + $0x4f8] sm:$0xff]
    %v1122 = vld [vmem:[#allocation13 + $0x500] sm:$0xff]
    %v1123 = vld [vmem:[#allocation13 + $0x508] sm:$0xff]
    %v1124 = vld [vmem:[#allocation13 + $0x510] sm:$0xff]
    %v1125 = vld [vmem:[#allocation13 + $0x518] sm:$0xff]
    %v1126 = vld [vmem:[#allocation13 + $0x520] sm:$0xff]
    %v1127 = vld [vmem:[#allocation13 + $0x528] sm:$0xff]
    %v1128 = vld [vmem:[#allocation13 + $0x530] sm:$0xff]
    %v1129 = vld [vmem:[#allocation13 + $0x538] sm:$0xff]
    %v1130 = vld [vmem:[#allocation13 + $0x540] sm:$0xff]
    %v1131 = vld [vmem:[#allocation13 + $0x548] sm:$0xff]
    %v1132 = vld [vmem:[#allocation13 + $0x550] sm:$0xff]
    %v1133 = vld [vmem:[#allocation13 + $0x558] sm:$0xff]
    %v1134 = vld [vmem:[#allocation13 + $0x560] sm:$0xff]
    %v1135 = vld [vmem:[#allocation13 + $0x568] sm:$0xff]
    %v1136 = vld [vmem:[#allocation13 + $0x570] sm:$0xff]
    %v1137 = vld [vmem:[#allocation13 + $0x578] sm:$0xff]
    %v1138 = vld [vmem:[#allocation13 + $0x580] sm:$0xff]
    %v1139 = vld [vmem:[#allocation13 + $0x588] sm:$0xff]
    %v1140 = vld [vmem:[#allocation13 + $0x590] sm:$0xff]
    %v1141 = vld [vmem:[#allocation13 + $0x598] sm:$0xff]
    %v1142 = vld [vmem:[#allocation13 + $0x5a0] sm:$0xff]
    %v1143 = vld [vmem:[#allocation13 + $0x5a8] sm:$0xff]
    %v1144 = vld [vmem:[#allocation13 + $0x5b0] sm:$0xff]
    %v1145 = vld [vmem:[#allocation13 + $0x5b8] sm:$0xff]
    %v1146 = vld [vmem:[#allocation13 + $0x5c0] sm:$0xff]
    %v1147 = vld [vmem:[#allocation13 + $0x5c8] sm:$0xff]
    %v1148 = vld [vmem:[#allocation13 + $0x5d0] sm:$0xff]
    %v1149 = vld [vmem:[#allocation13 + $0x5d8] sm:$0xff]
    %v1150 = vld [vmem:[#allocation13 + $0x5e0] sm:$0xff]
    %v1151 = vld [vmem:[#allocation13 + $0x5e8] sm:$0xff]
    %v1152 = vld [vmem:[#allocation13 + $0x5f0] sm:$0xff]
    %v1153 = vld [vmem:[#allocation13 + $0x5f8] sm:$0xff]
    %v1154 = vld [vmem:[#allocation13 + $0x600] sm:$0xff]
    %v1155 = vld [vmem:[#allocation13 + $0x608] sm:$0xff]
    %v1156 = vld [vmem:[#allocation13 + $0x610] sm:$0xff]
    %v1157 = vld [vmem:[#allocation13 + $0x618] sm:$0xff]
    %v1158 = vld [vmem:[#allocation13 + $0x620] sm:$0xff]
    %v1159 = vld [vmem:[#allocation13 + $0x628] sm:$0xff]
    %v1160 = vld [vmem:[#allocation13 + $0x630] sm:$0xff]
    %v1161 = vld [vmem:[#allocation13 + $0x638] sm:$0xff]
    %v1162 = vld [vmem:[#allocation13 + $0x640] sm:$0xff]
    %v1163 = vld [vmem:[#allocation13 + $0x648] sm:$0xff]
    %v1164 = vld [vmem:[#allocation13 + $0x650] sm:$0xff]
    %v1165 = vld [vmem:[#allocation13 + $0x658] sm:$0xff]
    %v1166 = vld [vmem:[#allocation13 + $0x660] sm:$0xff]
    %v1167 = vld [vmem:[#allocation13 + $0x668] sm:$0xff]
    %v1168 = vld [vmem:[#allocation13 + $0x670] sm:$0xff]
    %v1169 = vld [vmem:[#allocation13 + $0x678] sm:$0xff]
    %v1170 = vld [vmem:[#allocation13 + $0x680] sm:$0xff]
    %v1171 = vld [vmem:[#allocation13 + $0x688] sm:$0xff]
    %v1172 = vld [vmem:[#allocation13 + $0x690] sm:$0xff]
    %v1173 = vld [vmem:[#allocation13 + $0x698] sm:$0xff]
    %v1174 = vld [vmem:[#allocation13 + $0x6a0] sm:$0xff]
    %v1175 = vld [vmem:[#allocation13 + $0x6a8] sm:$0xff]
    %v1176 = vld [vmem:[#allocation13 + $0x6b0] sm:$0xff]
    %v1177 = vld [vmem:[#allocation13 + $0x6b8] sm:$0xff]
    %v1178 = vld [vmem:[#allocation13 + $0x6c0] sm:$0xff]
    %v1179 = vld [vmem:[#allocation13 + $0x6c8] sm:$0xff]
    %v1180 = vld [vmem:[#allocation13 + $0x6d0] sm:$0xff]
    %v1181 = vld [vmem:[#allocation13 + $0x6d8] sm:$0xff]
    %v1182 = vld [vmem:[#allocation13 + $0x6e0] sm:$0xff]
    %v1183 = vld [vmem:[#allocation13 + $0x6e8] sm:$0xff]
    %v1184 = vld [vmem:[#allocation13 + $0x6f0] sm:$0xff]
    %v1185 = vld [vmem:[#allocation13 + $0x6f8] sm:$0xff]
    %v1186 = vld [vmem:[#allocation13 + $0x700] sm:$0xff]
    %v1187 = vld [vmem:[#allocation13 + $0x708] sm:$0xff]
    %v1188 = vld [vmem:[#allocation13 + $0x710] sm:$0xff]
    %v1189 = vld [vmem:[#allocation13 + $0x718] sm:$0xff]
    %v1190 = vld [vmem:[#allocation13 + $0x720] sm:$0xff]
    %v1191 = vld [vmem:[#allocation13 + $0x728] sm:$0xff]
    %v1192 = vld [vmem:[#allocation13 + $0x730] sm:$0xff]
    %v1193 = vld [vmem:[#allocation13 + $0x738] sm:$0xff]
    %v1194 = vld [vmem:[#allocation13 + $0x740] sm:$0xff]
    %v1195 = vld [vmem:[#allocation13 + $0x748] sm:$0xff]
    %v1196 = vld [vmem:[#allocation13 + $0x750] sm:$0xff]
    %v1197 = vld [vmem:[#allocation13 + $0x758] sm:$0xff]
    %v1198 = vld [vmem:[#allocation13 + $0x760] sm:$0xff]
    %v1199 = vld [vmem:[#allocation13 + $0x768] sm:$0xff]
    %v1200 = vld [vmem:[#allocation13 + $0x770] sm:$0xff]
    %v1201 = vld [vmem:[#allocation13 + $0x778] sm:$0xff]
    %v1202 = vld [vmem:[#allocation13 + $0x780] sm:$0xff]
    %v1203 = vld [vmem:[#allocation13 + $0x788] sm:$0xff]
    %v1204 = vld [vmem:[#allocation13 + $0x790] sm:$0xff]
    %v1205 = vld [vmem:[#allocation13 + $0x798] sm:$0xff]
    %v1206 = vld [vmem:[#allocation13 + $0x7a0] sm:$0xff]
    %v1207 = vld [vmem:[#allocation13 + $0x7a8] sm:$0xff]
    %v1208 = vld [vmem:[#allocation13 + $0x7b0] sm:$0xff]
    %v1209 = vld [vmem:[#allocation13 + $0x7b8] sm:$0xff]
    %v1210 = vld [vmem:[#allocation13 + $0x7c0] sm:$0xff]
    %v1211 = vld [vmem:[#allocation13 + $0x7c8] sm:$0xff]
    %v1212 = vld [vmem:[#allocation13 + $0x7d0] sm:$0xff]
    %v1213 = vld [vmem:[#allocation13 + $0x7d8] sm:$0xff]
    %v1214 = vld [vmem:[#allocation13 + $0x7e0] sm:$0xff]
    %v1215 = vld [vmem:[#allocation13 + $0x7e8] sm:$0xff]
    %v1216 = vld [vmem:[#allocation13 + $0x7f0] sm:$0xff]
    %v1217 = vld [vmem:[#allocation13 + $0x7f8] sm:$0xff]
    %v1218 = vld [vmem:[#allocation14] sm:$0xff]
    %v1219 = vld [vmem:[#allocation14 + $0x8] sm:$0xff]
    %v1220 = vld [vmem:[#allocation14 + $0x10] sm:$0xff]
    %v1221 = vld [vmem:[#allocation14 + $0x18] sm:$0xff]
    %v1222 = vld [vmem:[#allocation14 + $0x20] sm:$0xff]
    %v1223 = vld [vmem:[#allocation14 + $0x28] sm:$0xff]
    %v1224 = vld [vmem:[#allocation14 + $0x30] sm:$0xff]
    %v1225 = vld [vmem:[#allocation14 + $0x38] sm:$0xff]
    %v1226 = vld [vmem:[#allocation14 + $0x40] sm:$0xff]
    %v1227 = vld [vmem:[#allocation14 + $0x48] sm:$0xff]
    %v1228 = vld [vmem:[#allocation14 + $0x50] sm:$0xff]
    %v1229 = vld [vmem:[#allocation14 + $0x58] sm:$0xff]
    %v1230 = vld [vmem:[#allocation14 + $0x60] sm:$0xff]
    %v1231 = vld [vmem:[#allocation14 + $0x68] sm:$0xff]
    %v1232 = vld [vmem:[#allocation14 + $0x70] sm:$0xff]
    %v1233 = vld [vmem:[#allocation14 + $0x78] sm:$0xff]
    %v1234 = vld [vmem:[#allocation14 + $0x80] sm:$0xff]
    %v1235 = vld [vmem:[#allocation14 + $0x88] sm:$0xff]
    %v1236 = vld [vmem:[#allocation14 + $0x90] sm:$0xff]
    %v1237 = vld [vmem:[#allocation14 + $0x98] sm:$0xff]
    %v1238 = vld [vmem:[#allocation14 + $0xa0] sm:$0xff]
    %v1239 = vld [vmem:[#allocation14 + $0xa8] sm:$0xff]
    %v1240 = vld [vmem:[#allocation14 + $0xb0] sm:$0xff]
    %v1241 = vld [vmem:[#allocation14 + $0xb8] sm:$0xff]
    %v1242 = vld [vmem:[#allocation14 + $0xc0] sm:$0xff]
    %v1243 = vld [vmem:[#allocation14 + $0xc8] sm:$0xff]
    %v1244 = vld [vmem:[#allocation14 + $0xd0] sm:$0xff]
    %v1245 = vld [vmem:[#allocation14 + $0xd8] sm:$0xff]
    %v1246 = vld [vmem:[#allocation14 + $0xe0] sm:$0xff]
    %v1247 = vld [vmem:[#allocation14 + $0xe8] sm:$0xff]
    %v1248 = vld [vmem:[#allocation14 + $0xf0] sm:$0xff]
    %v1249 = vld [vmem:[#allocation14 + $0xf8] sm:$0xff]
    %v1250 = vld [vmem:[#allocation14 + $0x100] sm:$0xff]
    %v1251 = vld [vmem:[#allocation14 + $0x108] sm:$0xff]
    %v1252 = vld [vmem:[#allocation14 + $0x110] sm:$0xff]
    %v1253 = vld [vmem:[#allocation14 + $0x118] sm:$0xff]
    %v1254 = vld [vmem:[#allocation14 + $0x120] sm:$0xff]
    %v1255 = vld [vmem:[#allocation14 + $0x128] sm:$0xff]
    %v1256 = vld [vmem:[#allocation14 + $0x130] sm:$0xff]
    %v1257 = vld [vmem:[#allocation14 + $0x138] sm:$0xff]
    %v1258 = vld [vmem:[#allocation14 + $0x140] sm:$0xff]
    %v1259 = vld [vmem:[#allocation14 + $0x148] sm:$0xff]
    %v1260 = vld [vmem:[#allocation14 + $0x150] sm:$0xff]
    %v1261 = vld [vmem:[#allocation14 + $0x158] sm:$0xff]
    %v1262 = vld [vmem:[#allocation14 + $0x160] sm:$0xff]
    %v1263 = vld [vmem:[#allocation14 + $0x168] sm:$0xff]
    %v1264 = vld [vmem:[#allocation14 + $0x170] sm:$0xff]
    %v1265 = vld [vmem:[#allocation14 + $0x178] sm:$0xff]
    %v1266 = vld [vmem:[#allocation14 + $0x180] sm:$0xff]
    %v1267 = vld [vmem:[#allocation14 + $0x188] sm:$0xff]
    %v1268 = vld [vmem:[#allocation14 + $0x190] sm:$0xff]
    %v1269 = vld [vmem:[#allocation14 + $0x198] sm:$0xff]
    %v1270 = vld [vmem:[#allocation14 + $0x1a0] sm:$0xff]
    %v1271 = vld [vmem:[#allocation14 + $0x1a8] sm:$0xff]
    %v1272 = vld [vmem:[#allocation14 + $0x1b0] sm:$0xff]
    %v1273 = vld [vmem:[#allocation14 + $0x1b8] sm:$0xff]
    %v1274 = vld [vmem:[#allocation14 + $0x1c0] sm:$0xff]
    %v1275 = vld [vmem:[#allocation14 + $0x1c8] sm:$0xff]
    %v1276 = vld [vmem:[#allocation14 + $0x1d0] sm:$0xff]
    %v1277 = vld [vmem:[#allocation14 + $0x1d8] sm:$0xff]
    %v1278 = vld [vmem:[#allocation14 + $0x1e0] sm:$0xff]
    %v1279 = vld [vmem:[#allocation14 + $0x1e8] sm:$0xff]
    %v1280 = vld [vmem:[#allocation14 + $0x1f0] sm:$0xff]
    %v1281 = vld [vmem:[#allocation14 + $0x1f8] sm:$0xff]
    %v1282 = vld [vmem:[#allocation14 + $0x200] sm:$0xff]
    %v1283 = vld [vmem:[#allocation14 + $0x208] sm:$0xff]
    %v1284 = vld [vmem:[#allocation14 + $0x210] sm:$0xff]
    %v1285 = vld [vmem:[#allocation14 + $0x218] sm:$0xff]
    %v1286 = vld [vmem:[#allocation14 + $0x220] sm:$0xff]
    %v1287 = vld [vmem:[#allocation14 + $0x228] sm:$0xff]
    %v1288 = vld [vmem:[#allocation14 + $0x230] sm:$0xff]
    %v1289 = vld [vmem:[#allocation14 + $0x238] sm:$0xff]
    %v1290 = vld [vmem:[#allocation14 + $0x240] sm:$0xff]
    %v1291 = vld [vmem:[#allocation14 + $0x248] sm:$0xff]
    %v1292 = vld [vmem:[#allocation14 + $0x250] sm:$0xff]
    %v1293 = vld [vmem:[#allocation14 + $0x258] sm:$0xff]
    %v1294 = vld [vmem:[#allocation14 + $0x260] sm:$0xff]
    %v1295 = vld [vmem:[#allocation14 + $0x268] sm:$0xff]
    %v1296 = vld [vmem:[#allocation14 + $0x270] sm:$0xff]
    %v1297 = vld [vmem:[#allocation14 + $0x278] sm:$0xff]
    %v1298 = vld [vmem:[#allocation14 + $0x280] sm:$0xff]
    %v1299 = vld [vmem:[#allocation14 + $0x288] sm:$0xff]
    %v1300 = vld [vmem:[#allocation14 + $0x290] sm:$0xff]
    %v1301 = vld [vmem:[#allocation14 + $0x298] sm:$0xff]
    %v1302 = vld [vmem:[#allocation14 + $0x2a0] sm:$0xff]
    %v1303 = vld [vmem:[#allocation14 + $0x2a8] sm:$0xff]
    %v1304 = vld [vmem:[#allocation14 + $0x2b0] sm:$0xff]
    %v1305 = vld [vmem:[#allocation14 + $0x2b8] sm:$0xff]
    %v1306 = vld [vmem:[#allocation14 + $0x2c0] sm:$0xff]
    %v1307 = vld [vmem:[#allocation14 + $0x2c8] sm:$0xff]
    %v1308 = vld [vmem:[#allocation14 + $0x2d0] sm:$0xff]
    %v1309 = vld [vmem:[#allocation14 + $0x2d8] sm:$0xff]
    %v1310 = vld [vmem:[#allocation14 + $0x2e0] sm:$0xff]
    %v1311 = vld [vmem:[#allocation14 + $0x2e8] sm:$0xff]
    %v1312 = vld [vmem:[#allocation14 + $0x2f0] sm:$0xff]
    %v1313 = vld [vmem:[#allocation14 + $0x2f8] sm:$0xff]
    %v1314 = vld [vmem:[#allocation14 + $0x300] sm:$0xff]
    %v1315 = vld [vmem:[#allocation14 + $0x308] sm:$0xff]
    %v1316 = vld [vmem:[#allocation14 + $0x310] sm:$0xff]
    %v1317 = vld [vmem:[#allocation14 + $0x318] sm:$0xff]
    %v1318 = vld [vmem:[#allocation14 + $0x320] sm:$0xff]
    %v1319 = vld [vmem:[#allocation14 + $0x328] sm:$0xff]
    %v1320 = vld [vmem:[#allocation14 + $0x330] sm:$0xff]
    %v1321 = vld [vmem:[#allocation14 + $0x338] sm:$0xff]
    %v1322 = vld [vmem:[#allocation14 + $0x340] sm:$0xff]
    %v1323 = vld [vmem:[#allocation14 + $0x348] sm:$0xff]
    %v1324 = vld [vmem:[#allocation14 + $0x350] sm:$0xff]
    %v1325 = vld [vmem:[#allocation14 + $0x358] sm:$0xff]
    %v1326 = vld [vmem:[#allocation14 + $0x360] sm:$0xff]
    %v1327 = vld [vmem:[#allocation14 + $0x368] sm:$0xff]
    %v1328 = vld [vmem:[#allocation14 + $0x370] sm:$0xff]
    %v1329 = vld [vmem:[#allocation14 + $0x378] sm:$0xff]
    %v1330 = vld [vmem:[#allocation14 + $0x380] sm:$0xff]
    %v1331 = vld [vmem:[#allocation14 + $0x388] sm:$0xff]
    %v1332 = vld [vmem:[#allocation14 + $0x390] sm:$0xff]
    %v1333 = vld [vmem:[#allocation14 + $0x398] sm:$0xff]
    %v1334 = vld [vmem:[#allocation14 + $0x3a0] sm:$0xff]
    %v1335 = vld [vmem:[#allocation14 + $0x3a8] sm:$0xff]
    %v1336 = vld [vmem:[#allocation14 + $0x3b0] sm:$0xff]
    %v1337 = vld [vmem:[#allocation14 + $0x3b8] sm:$0xff]
    %v1338 = vld [vmem:[#allocation14 + $0x3c0] sm:$0xff]
    %v1339 = vld [vmem:[#allocation14 + $0x3c8] sm:$0xff]
    %v1340 = vld [vmem:[#allocation14 + $0x3d0] sm:$0xff]
    %v1341 = vld [vmem:[#allocation14 + $0x3d8] sm:$0xff]
    %v1342 = vld [vmem:[#allocation14 + $0x3e0] sm:$0xff]
    %v1343 = vld [vmem:[#allocation14 + $0x3e8] sm:$0xff]
    %v1344 = vld [vmem:[#allocation14 + $0x3f0] sm:$0xff]
    %v1345 = vld [vmem:[#allocation14 + $0x3f8] sm:$0xff]
    %v1346 = vld [vmem:[#allocation14 + $0x400] sm:$0xff]
    %v1347 = vld [vmem:[#allocation14 + $0x408] sm:$0xff]
    %v1348 = vld [vmem:[#allocation14 + $0x410] sm:$0xff]
    %v1349 = vld [vmem:[#allocation14 + $0x418] sm:$0xff]
    %v1350 = vld [vmem:[#allocation14 + $0x420] sm:$0xff]
    %v1351 = vld [vmem:[#allocation14 + $0x428] sm:$0xff]
    %v1352 = vld [vmem:[#allocation14 + $0x430] sm:$0xff]
    %v1353 = vld [vmem:[#allocation14 + $0x438] sm:$0xff]
    %v1354 = vld [vmem:[#allocation14 + $0x440] sm:$0xff]
    %v1355 = vld [vmem:[#allocation14 + $0x448] sm:$0xff]
    %v1356 = vld [vmem:[#allocation14 + $0x450] sm:$0xff]
    %v1357 = vld [vmem:[#allocation14 + $0x458] sm:$0xff]
    %v1358 = vld [vmem:[#allocation14 + $0x460] sm:$0xff]
    %v1359 = vld [vmem:[#allocation14 + $0x468] sm:$0xff]
    %v1360 = vld [vmem:[#allocation14 + $0x470] sm:$0xff]
    %v1361 = vld [vmem:[#allocation14 + $0x478] sm:$0xff]
    %v1362 = vld [vmem:[#allocation14 + $0x480] sm:$0xff]
    %v1363 = vld [vmem:[#allocation14 + $0x488] sm:$0xff]
    %v1364 = vld [vmem:[#allocation14 + $0x490] sm:$0xff]
    %v1365 = vld [vmem:[#allocation14 + $0x498] sm:$0xff]
    %v1366 = vld [vmem:[#allocation14 + $0x4a0] sm:$0xff]
    %v1367 = vld [vmem:[#allocation14 + $0x4a8] sm:$0xff]
    %v1368 = vld [vmem:[#allocation14 + $0x4b0] sm:$0xff]
    %v1369 = vld [vmem:[#allocation14 + $0x4b8] sm:$0xff]
    %v1370 = vld [vmem:[#allocation14 + $0x4c0] sm:$0xff]
    %v1371 = vld [vmem:[#allocation14 + $0x4c8] sm:$0xff]
    %v1372 = vld [vmem:[#allocation14 + $0x4d0] sm:$0xff]
    %v1373 = vld [vmem:[#allocation14 + $0x4d8] sm:$0xff]
    %v1374 = vld [vmem:[#allocation14 + $0x4e0] sm:$0xff]
    %v1375 = vld [vmem:[#allocation14 + $0x4e8] sm:$0xff]
    %v1376 = vld [vmem:[#allocation14 + $0x4f0] sm:$0xff]
    %v1377 = vld [vmem:[#allocation14 + $0x4f8] sm:$0xff]
    %v1378 = vld [vmem:[#allocation14 + $0x500] sm:$0xff]
    %v1379 = vld [vmem:[#allocation14 + $0x508] sm:$0xff]
    %v1380 = vld [vmem:[#allocation14 + $0x510] sm:$0xff]
    %v1381 = vld [vmem:[#allocation14 + $0x518] sm:$0xff]
    %v1382 = vld [vmem:[#allocation14 + $0x520] sm:$0xff]
    %v1383 = vld [vmem:[#allocation14 + $0x528] sm:$0xff]
    %v1384 = vld [vmem:[#allocation14 + $0x530] sm:$0xff]
    %v1385 = vld [vmem:[#allocation14 + $0x538] sm:$0xff]
    %v1386 = vld [vmem:[#allocation14 + $0x540] sm:$0xff]
    %v1387 = vld [vmem:[#allocation14 + $0x548] sm:$0xff]
    %v1388 = vld [vmem:[#allocation14 + $0x550] sm:$0xff]
    %v1389 = vld [vmem:[#allocation14 + $0x558] sm:$0xff]
    %v1390 = vld [vmem:[#allocation14 + $0x560] sm:$0xff]
    %v1391 = vld [vmem:[#allocation14 + $0x568] sm:$0xff]
    %v1392 = vld [vmem:[#allocation14 + $0x570] sm:$0xff]
    %v1393 = vld [vmem:[#allocation14 + $0x578] sm:$0xff]
    %v1394 = vld [vmem:[#allocation14 + $0x580] sm:$0xff]
    %v1395 = vld [vmem:[#allocation14 + $0x588] sm:$0xff]
    %v1396 = vld [vmem:[#allocation14 + $0x590] sm:$0xff]
    %v1397 = vld [vmem:[#allocation14 + $0x598] sm:$0xff]
    %v1398 = vld [vmem:[#allocation14 + $0x5a0] sm:$0xff]
    %v1399 = vld [vmem:[#allocation14 + $0x5a8] sm:$0xff]
    %v1400 = vld [vmem:[#allocation14 + $0x5b0] sm:$0xff]
    %v1401 = vld [vmem:[#allocation14 + $0x5b8] sm:$0xff]
    %v1402 = vld [vmem:[#allocation14 + $0x5c0] sm:$0xff]
    %v1403 = vld [vmem:[#allocation14 + $0x5c8] sm:$0xff]
    %v1404 = vld [vmem:[#allocation14 + $0x5d0] sm:$0xff]
    %v1405 = vld [vmem:[#allocation14 + $0x5d8] sm:$0xff]
    %v1406 = vld [vmem:[#allocation14 + $0x5e0] sm:$0xff]
    %v1407 = vld [vmem:[#allocation14 + $0x5e8] sm:$0xff]
    %v1408 = vld [vmem:[#allocation14 + $0x5f0] sm:$0xff]
    %v1409 = vld [vmem:[#allocation14 + $0x5f8] sm:$0xff]
    %v1410 = vld [vmem:[#allocation14 + $0x600] sm:$0xff]
    %v1411 = vld [vmem:[#allocation14 + $0x608] sm:$0xff]
    %v1412 = vld [vmem:[#allocation14 + $0x610] sm:$0xff]
    %v1413 = vld [vmem:[#allocation14 + $0x618] sm:$0xff]
    %v1414 = vld [vmem:[#allocation14 + $0x620] sm:$0xff]
    %v1415 = vld [vmem:[#allocation14 + $0x628] sm:$0xff]
    %v1416 = vld [vmem:[#allocation14 + $0x630] sm:$0xff]
    %v1417 = vld [vmem:[#allocation14 + $0x638] sm:$0xff]
    %v1418 = vld [vmem:[#allocation14 + $0x640] sm:$0xff]
    %v1419 = vld [vmem:[#allocation14 + $0x648] sm:$0xff]
    %v1420 = vld [vmem:[#allocation14 + $0x650] sm:$0xff]
    %v1421 = vld [vmem:[#allocation14 + $0x658] sm:$0xff]
    %v1422 = vld [vmem:[#allocation14 + $0x660] sm:$0xff]
    %v1423 = vld [vmem:[#allocation14 + $0x668] sm:$0xff]
    %v1424 = vld [vmem:[#allocation14 + $0x670] sm:$0xff]
    %v1425 = vld [vmem:[#allocation14 + $0x678] sm:$0xff]
    %v1426 = vld [vmem:[#allocation14 + $0x680] sm:$0xff]
    %v1427 = vld [vmem:[#allocation14 + $0x688] sm:$0xff]
    %v1428 = vld [vmem:[#allocation14 + $0x690] sm:$0xff]
    %v1429 = vld [vmem:[#allocation14 + $0x698] sm:$0xff]
    %v1430 = vld [vmem:[#allocation14 + $0x6a0] sm:$0xff]
    %v1431 = vld [vmem:[#allocation14 + $0x6a8] sm:$0xff]
    %v1432 = vld [vmem:[#allocation14 + $0x6b0] sm:$0xff]
    %v1433 = vld [vmem:[#allocation14 + $0x6b8] sm:$0xff]
    %v1434 = vld [vmem:[#allocation14 + $0x6c0] sm:$0xff]
    %v1435 = vld [vmem:[#allocation14 + $0x6c8] sm:$0xff]
    %v1436 = vld [vmem:[#allocation14 + $0x6d0] sm:$0xff]
    %v1437 = vld [vmem:[#allocation14 + $0x6d8] sm:$0xff]
    %v1438 = vld [vmem:[#allocation14 + $0x6e0] sm:$0xff]
    %v1439 = vld [vmem:[#allocation14 + $0x6e8] sm:$0xff]
    %v1440 = vld [vmem:[#allocation14 + $0x6f0] sm:$0xff]
    %v1441 = vld [vmem:[#allocation14 + $0x6f8] sm:$0xff]
    %v1442 = vld [vmem:[#allocation14 + $0x700] sm:$0xff]
    %v1443 = vld [vmem:[#allocation14 + $0x708] sm:$0xff]
    %v1444 = vld [vmem:[#allocation14 + $0x710] sm:$0xff]
    %v1445 = vld [vmem:[#allocation14 + $0x718] sm:$0xff]
    %v1446 = vld [vmem:[#allocation14 + $0x720] sm:$0xff]
    %v1447 = vld [vmem:[#allocation14 + $0x728] sm:$0xff]
    %v1448 = vld [vmem:[#allocation14 + $0x730] sm:$0xff]
    %v1449 = vld [vmem:[#allocation14 + $0x738] sm:$0xff]
    %v1450 = vld [vmem:[#allocation14 + $0x740] sm:$0xff]
    %v1451 = vld [vmem:[#allocation14 + $0x748] sm:$0xff]
    %v1452 = vld [vmem:[#allocation14 + $0x750] sm:$0xff]
    %v1453 = vld [vmem:[#allocation14 + $0x758] sm:$0xff]
    %v1454 = vld [vmem:[#allocation14 + $0x760] sm:$0xff]
    %v1455 = vld [vmem:[#allocation14 + $0x768] sm:$0xff]
    %v1456 = vld [vmem:[#allocation14 + $0x770] sm:$0xff]
    %v1457 = vld [vmem:[#allocation14 + $0x778] sm:$0xff]
    %v1458 = vld [vmem:[#allocation14 + $0x780] sm:$0xff]
    %v1459 = vld [vmem:[#allocation14 + $0x788] sm:$0xff]
    %v1460 = vld [vmem:[#allocation14 + $0x790] sm:$0xff]
    %v1461 = vld [vmem:[#allocation14 + $0x798] sm:$0xff]
    %v1462 = vld [vmem:[#allocation14 + $0x7a0] sm:$0xff]
    %v1463 = vld [vmem:[#allocation14 + $0x7a8] sm:$0xff]
    %v1464 = vld [vmem:[#allocation14 + $0x7b0] sm:$0xff]
    %v1465 = vld [vmem:[#allocation14 + $0x7b8] sm:$0xff]
    %v1466 = vld [vmem:[#allocation14 + $0x7c0] sm:$0xff]
    %v1467 = vld [vmem:[#allocation14 + $0x7c8] sm:$0xff]
    %v1468 = vld [vmem:[#allocation14 + $0x7d0] sm:$0xff]
    %v1469 = vld [vmem:[#allocation14 + $0x7d8] sm:$0xff]
    %v1470 = vld [vmem:[#allocation14 + $0x7e0] sm:$0xff]
    %v1471 = vld [vmem:[#allocation14 + $0x7e8] sm:$0xff]
    %v1472 = vld [vmem:[#allocation14 + $0x7f0] sm:$0xff]
    %v1473 = vld [vmem:[#allocation14 + $0x7f8] sm:$0xff]
    %v1474 = vld [vmem:[#allocation14 + $0x800] sm:$0xff]
    %v1475 = vld [vmem:[#allocation14 + $0x808] sm:$0xff]
    %v1476 = vld [vmem:[#allocation14 + $0x810] sm:$0xff]
    %v1477 = vld [vmem:[#allocation14 + $0x818] sm:$0xff]
    %v1478 = vld [vmem:[#allocation14 + $0x820] sm:$0xff]
    %v1479 = vld [vmem:[#allocation14 + $0x828] sm:$0xff]
    %v1480 = vld [vmem:[#allocation14 + $0x830] sm:$0xff]
    %v1481 = vld [vmem:[#allocation14 + $0x838] sm:$0xff]
    %v1482 = vld [vmem:[#allocation14 + $0x840] sm:$0xff]
    %v1483 = vld [vmem:[#allocation14 + $0x848] sm:$0xff]
    %v1484 = vld [vmem:[#allocation14 + $0x850] sm:$0xff]
    %v1485 = vld [vmem:[#allocation14 + $0x858] sm:$0xff]
    %v1486 = vld [vmem:[#allocation14 + $0x860] sm:$0xff]
    %v1487 = vld [vmem:[#allocation14 + $0x868] sm:$0xff]
    %v1488 = vld [vmem:[#allocation14 + $0x870] sm:$0xff]
    %v1489 = vld [vmem:[#allocation14 + $0x878] sm:$0xff]
    %v1490 = vld [vmem:[#allocation14 + $0x880] sm:$0xff]
    %v1491 = vld [vmem:[#allocation14 + $0x888] sm:$0xff]
    %v1492 = vld [vmem:[#allocation14 + $0x890] sm:$0xff]
    %v1493 = vld [vmem:[#allocation14 + $0x898] sm:$0xff]
    %v1494 = vld [vmem:[#allocation14 + $0x8a0] sm:$0xff]
    %v1495 = vld [vmem:[#allocation14 + $0x8a8] sm:$0xff]
    %v1496 = vld [vmem:[#allocation14 + $0x8b0] sm:$0xff]
    %v1497 = vld [vmem:[#allocation14 + $0x8b8] sm:$0xff]
    %v1498 = vld [vmem:[#allocation14 + $0x8c0] sm:$0xff]
    %v1499 = vld [vmem:[#allocation14 + $0x8c8] sm:$0xff]
    %v1500 = vld [vmem:[#allocation14 + $0x8d0] sm:$0xff]
    %v1501 = vld [vmem:[#allocation14 + $0x8d8] sm:$0xff]
    %v1502 = vld [vmem:[#allocation14 + $0x8e0] sm:$0xff]
    %v1503 = vld [vmem:[#allocation14 + $0x8e8] sm:$0xff]
    %v1504 = vld [vmem:[#allocation14 + $0x8f0] sm:$0xff]
    %v1505 = vld [vmem:[#allocation14 + $0x8f8] sm:$0xff]
    %v1506 = vld [vmem:[#allocation14 + $0x900] sm:$0xff]
    %v1507 = vld [vmem:[#allocation14 + $0x908] sm:$0xff]
    %v1508 = vld [vmem:[#allocation14 + $0x910] sm:$0xff]
    %v1509 = vld [vmem:[#allocation14 + $0x918] sm:$0xff]
    %v1510 = vld [vmem:[#allocation14 + $0x920] sm:$0xff]
    %v1511 = vld [vmem:[#allocation14 + $0x928] sm:$0xff]
    %v1512 = vld [vmem:[#allocation14 + $0x930] sm:$0xff]
    %v1513 = vld [vmem:[#allocation14 + $0x938] sm:$0xff]
    %v1514 = vld [vmem:[#allocation14 + $0x940] sm:$0xff]
    %v1515 = vld [vmem:[#allocation14 + $0x948] sm:$0xff]
    %v1516 = vld [vmem:[#allocation14 + $0x950] sm:$0xff]
    %v1517 = vld [vmem:[#allocation14 + $0x958] sm:$0xff]
    %v1518 = vld [vmem:[#allocation14 + $0x960] sm:$0xff]
    %v1519 = vld [vmem:[#allocation14 + $0x968] sm:$0xff]
    %v1520 = vld [vmem:[#allocation14 + $0x970] sm:$0xff]
    %v1521 = vld [vmem:[#allocation14 + $0x978] sm:$0xff]
    %v1522 = vld [vmem:[#allocation14 + $0x980] sm:$0xff]
    %v1523 = vld [vmem:[#allocation14 + $0x988] sm:$0xff]
    %v1524 = vld [vmem:[#allocation14 + $0x990] sm:$0xff]
    %v1525 = vld [vmem:[#allocation14 + $0x998] sm:$0xff]
    %v1526 = vld [vmem:[#allocation14 + $0x9a0] sm:$0xff]
    %v1527 = vld [vmem:[#allocation14 + $0x9a8] sm:$0xff]
    %v1528 = vld [vmem:[#allocation14 + $0x9b0] sm:$0xff]
    %v1529 = vld [vmem:[#allocation14 + $0x9b8] sm:$0xff]
    %v1530 = vld [vmem:[#allocation14 + $0x9c0] sm:$0xff]
    %v1531 = vld [vmem:[#allocation14 + $0x9c8] sm:$0xff]
    %v1532 = vld [vmem:[#allocation14 + $0x9d0] sm:$0xff]
    %v1533 = vld [vmem:[#allocation14 + $0x9d8] sm:$0xff]
    %v1534 = vld [vmem:[#allocation14 + $0x9e0] sm:$0xff]
    %v1535 = vld [vmem:[#allocation14 + $0x9e8] sm:$0xff]
    %v1536 = vld [vmem:[#allocation14 + $0x9f0] sm:$0xff]
    %v1537 = vld [vmem:[#allocation14 + $0x9f8] sm:$0xff]
    %v1538 = vld [vmem:[#allocation14 + $0xa00] sm:$0xff]
    %v1539 = vld [vmem:[#allocation14 + $0xa08] sm:$0xff]
    %v1540 = vld [vmem:[#allocation14 + $0xa10] sm:$0xff]
    %v1541 = vld [vmem:[#allocation14 + $0xa18] sm:$0xff]
    %v1542 = vld [vmem:[#allocation14 + $0xa20] sm:$0xff]
    %v1543 = vld [vmem:[#allocation14 + $0xa28] sm:$0xff]
    %v1544 = vld [vmem:[#allocation14 + $0xa30] sm:$0xff]
    %v1545 = vld [vmem:[#allocation14 + $0xa38] sm:$0xff]
    %v1546 = vld [vmem:[#allocation14 + $0xa40] sm:$0xff]
    %v1547 = vld [vmem:[#allocation14 + $0xa48] sm:$0xff]
    %v1548 = vld [vmem:[#allocation14 + $0xa50] sm:$0xff]
    %v1549 = vld [vmem:[#allocation14 + $0xa58] sm:$0xff]
    %v1550 = vld [vmem:[#allocation14 + $0xa60] sm:$0xff]
    %v1551 = vld [vmem:[#allocation14 + $0xa68] sm:$0xff]
    %v1552 = vld [vmem:[#allocation14 + $0xa70] sm:$0xff]
    %v1553 = vld [vmem:[#allocation14 + $0xa78] sm:$0xff]
    %v1554 = vld [vmem:[#allocation14 + $0xa80] sm:$0xff]
    %v1555 = vld [vmem:[#allocation14 + $0xa88] sm:$0xff]
    %v1556 = vld [vmem:[#allocation14 + $0xa90] sm:$0xff]
    %v1557 = vld [vmem:[#allocation14 + $0xa98] sm:$0xff]
    %v1558 = vld [vmem:[#allocation14 + $0xaa0] sm:$0xff]
    %v1559 = vld [vmem:[#allocation14 + $0xaa8] sm:$0xff]
    %v1560 = vld [vmem:[#allocation14 + $0xab0] sm:$0xff]
    %v1561 = vld [vmem:[#allocation14 + $0xab8] sm:$0xff]
    %v1562 = vld [vmem:[#allocation14 + $0xac0] sm:$0xff]
    %v1563 = vld [vmem:[#allocation14 + $0xac8] sm:$0xff]
    %v1564 = vld [vmem:[#allocation14 + $0xad0] sm:$0xff]
    %v1565 = vld [vmem:[#allocation14 + $0xad8] sm:$0xff]
    %v1566 = vld [vmem:[#allocation14 + $0xae0] sm:$0xff]
    %v1567 = vld [vmem:[#allocation14 + $0xae8] sm:$0xff]
    %v1568 = vld [vmem:[#allocation14 + $0xaf0] sm:$0xff]
    %v1569 = vld [vmem:[#allocation14 + $0xaf8] sm:$0xff]
    %v1570 = vld [vmem:[#allocation14 + $0xb00] sm:$0xff]
    %v1571 = vld [vmem:[#allocation14 + $0xb08] sm:$0xff]
    %v1572 = vld [vmem:[#allocation14 + $0xb10] sm:$0xff]
    %v1573 = vld [vmem:[#allocation14 + $0xb18] sm:$0xff]
    %v1574 = vld [vmem:[#allocation14 + $0xb20] sm:$0xff]
    %v1575 = vld [vmem:[#allocation14 + $0xb28] sm:$0xff]
    %v1576 = vld [vmem:[#allocation14 + $0xb30] sm:$0xff]
    %v1577 = vld [vmem:[#allocation14 + $0xb38] sm:$0xff]
    %v1578 = vld [vmem:[#allocation14 + $0xb40] sm:$0xff]
    %v1579 = vld [vmem:[#allocation14 + $0xb48] sm:$0xff]
    %v1580 = vld [vmem:[#allocation14 + $0xb50] sm:$0xff]
    %v1581 = vld [vmem:[#allocation14 + $0xb58] sm:$0xff]
    %v1582 = vld [vmem:[#allocation14 + $0xb60] sm:$0xff]
    %v1583 = vld [vmem:[#allocation14 + $0xb68] sm:$0xff]
    %v1584 = vld [vmem:[#allocation14 + $0xb70] sm:$0xff]
    %v1585 = vld [vmem:[#allocation14 + $0xb78] sm:$0xff]
    %v1586 = vld [vmem:[#allocation14 + $0xb80] sm:$0xff]
    %v1587 = vld [vmem:[#allocation14 + $0xb88] sm:$0xff]
    %v1588 = vld [vmem:[#allocation14 + $0xb90] sm:$0xff]
    %v1589 = vld [vmem:[#allocation14 + $0xb98] sm:$0xff]
    %v1590 = vld [vmem:[#allocation14 + $0xba0] sm:$0xff]
    %v1591 = vld [vmem:[#allocation14 + $0xba8] sm:$0xff]
    %v1592 = vld [vmem:[#allocation14 + $0xbb0] sm:$0xff]
    %v1593 = vld [vmem:[#allocation14 + $0xbb8] sm:$0xff]
    %v1594 = vld [vmem:[#allocation14 + $0xbc0] sm:$0xff]
    %v1595 = vld [vmem:[#allocation14 + $0xbc8] sm:$0xff]
    %v1596 = vld [vmem:[#allocation14 + $0xbd0] sm:$0xff]
    %v1597 = vld [vmem:[#allocation14 + $0xbd8] sm:$0xff]
    %v1598 = vld [vmem:[#allocation14 + $0xbe0] sm:$0xff]
    %v1599 = vld [vmem:[#allocation14 + $0xbe8] sm:$0xff]
    %v1600 = vld [vmem:[#allocation14 + $0xbf0] sm:$0xff]
    %v1601 = vld [vmem:[#allocation14 + $0xbf8] sm:$0xff]
    %v1602 = vld [vmem:[#allocation14 + $0xc00] sm:$0xff]
    %v1603 = vld [vmem:[#allocation14 + $0xc08] sm:$0xff]
    %v1604 = vld [vmem:[#allocation14 + $0xc10] sm:$0xff]
    %v1605 = vld [vmem:[#allocation14 + $0xc18] sm:$0xff]
    %v1606 = vld [vmem:[#allocation14 + $0xc20] sm:$0xff]
    %v1607 = vld [vmem:[#allocation14 + $0xc28] sm:$0xff]
    %v1608 = vld [vmem:[#allocation14 + $0xc30] sm:$0xff]
    %v1609 = vld [vmem:[#allocation14 + $0xc38] sm:$0xff]
    %v1610 = vld [vmem:[#allocation14 + $0xc40] sm:$0xff]
    %v1611 = vld [vmem:[#allocation14 + $0xc48] sm:$0xff]
    %v1612 = vld [vmem:[#allocation14 + $0xc50] sm:$0xff]
    %v1613 = vld [vmem:[#allocation14 + $0xc58] sm:$0xff]
    %v1614 = vld [vmem:[#allocation14 + $0xc60] sm:$0xff]
    %v1615 = vld [vmem:[#allocation14 + $0xc68] sm:$0xff]
    %v1616 = vld [vmem:[#allocation14 + $0xc70] sm:$0xff]
    %v1617 = vld [vmem:[#allocation14 + $0xc78] sm:$0xff]
    %v1618 = vld [vmem:[#allocation14 + $0xc80] sm:$0xff]
    %v1619 = vld [vmem:[#allocation14 + $0xc88] sm:$0xff]
    %v1620 = vld [vmem:[#allocation14 + $0xc90] sm:$0xff]
    %v1621 = vld [vmem:[#allocation14 + $0xc98] sm:$0xff]
    %v1622 = vld [vmem:[#allocation14 + $0xca0] sm:$0xff]
    %v1623 = vld [vmem:[#allocation14 + $0xca8] sm:$0xff]
    %v1624 = vld [vmem:[#allocation14 + $0xcb0] sm:$0xff]
    %v1625 = vld [vmem:[#allocation14 + $0xcb8] sm:$0xff]
    %v1626 = vld [vmem:[#allocation14 + $0xcc0] sm:$0xff]
    %v1627 = vld [vmem:[#allocation14 + $0xcc8] sm:$0xff]
    %v1628 = vld [vmem:[#allocation14 + $0xcd0] sm:$0xff]
    %v1629 = vld [vmem:[#allocation14 + $0xcd8] sm:$0xff]
    %v1630 = vld [vmem:[#allocation14 + $0xce0] sm:$0xff]
    %v1631 = vld [vmem:[#allocation14 + $0xce8] sm:$0xff]
    %v1632 = vld [vmem:[#allocation14 + $0xcf0] sm:$0xff]
    %v1633 = vld [vmem:[#allocation14 + $0xcf8] sm:$0xff]
    %v1634 = vld [vmem:[#allocation14 + $0xd00] sm:$0xff]
    %v1635 = vld [vmem:[#allocation14 + $0xd08] sm:$0xff]
    %v1636 = vld [vmem:[#allocation14 + $0xd10] sm:$0xff]
    %v1637 = vld [vmem:[#allocation14 + $0xd18] sm:$0xff]
    %v1638 = vld [vmem:[#allocation14 + $0xd20] sm:$0xff]
    %v1639 = vld [vmem:[#allocation14 + $0xd28] sm:$0xff]
    %v1640 = vld [vmem:[#allocation14 + $0xd30] sm:$0xff]
    %v1641 = vld [vmem:[#allocation14 + $0xd38] sm:$0xff]
    %v1642 = vld [vmem:[#allocation14 + $0xd40] sm:$0xff]
    %v1643 = vld [vmem:[#allocation14 + $0xd48] sm:$0xff]
    %v1644 = vld [vmem:[#allocation14 + $0xd50] sm:$0xff]
    %v1645 = vld [vmem:[#allocation14 + $0xd58] sm:$0xff]
    %v1646 = vld [vmem:[#allocation14 + $0xd60] sm:$0xff]
    %v1647 = vld [vmem:[#allocation14 + $0xd68] sm:$0xff]
    %v1648 = vld [vmem:[#allocation14 + $0xd70] sm:$0xff]
    %v1649 = vld [vmem:[#allocation14 + $0xd78] sm:$0xff]
    %v1650 = vld [vmem:[#allocation14 + $0xd80] sm:$0xff]
    %v1651 = vld [vmem:[#allocation14 + $0xd88] sm:$0xff]
    %v1652 = vld [vmem:[#allocation14 + $0xd90] sm:$0xff]
    %v1653 = vld [vmem:[#allocation14 + $0xd98] sm:$0xff]
    %v1654 = vld [vmem:[#allocation14 + $0xda0] sm:$0xff]
    %v1655 = vld [vmem:[#allocation14 + $0xda8] sm:$0xff]
    %v1656 = vld [vmem:[#allocation14 + $0xdb0] sm:$0xff]
    %v1657 = vld [vmem:[#allocation14 + $0xdb8] sm:$0xff]
    %v1658 = vld [vmem:[#allocation14 + $0xdc0] sm:$0xff]
    %v1659 = vld [vmem:[#allocation14 + $0xdc8] sm:$0xff]
    %v1660 = vld [vmem:[#allocation14 + $0xdd0] sm:$0xff]
    %v1661 = vld [vmem:[#allocation14 + $0xdd8] sm:$0xff]
    %v1662 = vld [vmem:[#allocation14 + $0xde0] sm:$0xff]
    %v1663 = vld [vmem:[#allocation14 + $0xde8] sm:$0xff]
    %v1664 = vld [vmem:[#allocation14 + $0xdf0] sm:$0xff]
    %v1665 = vld [vmem:[#allocation14 + $0xdf8] sm:$0xff]
    %v1666 = vld [vmem:[#allocation14 + $0xe00] sm:$0xff]
    %v1667 = vld [vmem:[#allocation14 + $0xe08] sm:$0xff]
    %v1668 = vld [vmem:[#allocation14 + $0xe10] sm:$0xff]
    %v1669 = vld [vmem:[#allocation14 + $0xe18] sm:$0xff]
    %v1670 = vld [vmem:[#allocation14 + $0xe20] sm:$0xff]
    %v1671 = vld [vmem:[#allocation14 + $0xe28] sm:$0xff]
    %v1672 = vld [vmem:[#allocation14 + $0xe30] sm:$0xff]
    %v1673 = vld [vmem:[#allocation14 + $0xe38] sm:$0xff]
    %v1674 = vld [vmem:[#allocation14 + $0xe40] sm:$0xff]
    %v1675 = vld [vmem:[#allocation14 + $0xe48] sm:$0xff]
    %v1676 = vld [vmem:[#allocation14 + $0xe50] sm:$0xff]
    %v1677 = vld [vmem:[#allocation14 + $0xe58] sm:$0xff]
    %v1678 = vld [vmem:[#allocation14 + $0xe60] sm:$0xff]
    %v1679 = vld [vmem:[#allocation14 + $0xe68] sm:$0xff]
    %v1680 = vld [vmem:[#allocation14 + $0xe70] sm:$0xff]
    %v1681 = vld [vmem:[#allocation14 + $0xe78] sm:$0xff]
    %v1682 = vld [vmem:[#allocation14 + $0xe80] sm:$0xff]
    %v1683 = vld [vmem:[#allocation14 + $0xe88] sm:$0xff]
    %v1684 = vld [vmem:[#allocation14 + $0xe90] sm:$0xff]
    %v1685 = vld [vmem:[#allocation14 + $0xe98] sm:$0xff]
    %v1686 = vld [vmem:[#allocation14 + $0xea0] sm:$0xff]
    %v1687 = vld [vmem:[#allocation14 + $0xea8] sm:$0xff]
    %v1688 = vld [vmem:[#allocation14 + $0xeb0] sm:$0xff]
    %v1689 = vld [vmem:[#allocation14 + $0xeb8] sm:$0xff]
    %v1690 = vld [vmem:[#allocation14 + $0xec0] sm:$0xff]
    %v1691 = vld [vmem:[#allocation14 + $0xec8] sm:$0xff]
    %v1692 = vld [vmem:[#allocation14 + $0xed0] sm:$0xff]
    %v1693 = vld [vmem:[#allocation14 + $0xed8] sm:$0xff]
    %v1694 = vld [vmem:[#allocation14 + $0xee0] sm:$0xff]
    %v1695 = vld [vmem:[#allocation14 + $0xee8] sm:$0xff]
    %v1696 = vld [vmem:[#allocation14 + $0xef0] sm:$0xff]
    %v1697 = vld [vmem:[#allocation14 + $0xef8] sm:$0xff]
    %v1698 = vld [vmem:[#allocation14 + $0xf00] sm:$0xff]
    %v1699 = vld [vmem:[#allocation14 + $0xf08] sm:$0xff]
    %v1700 = vld [vmem:[#allocation14 + $0xf10] sm:$0xff]
    %v1701 = vld [vmem:[#allocation14 + $0xf18] sm:$0xff]
    %v1702 = vld [vmem:[#allocation14 + $0xf20] sm:$0xff]
    %v1703 = vld [vmem:[#allocation14 + $0xf28] sm:$0xff]
    %v1704 = vld [vmem:[#allocation14 + $0xf30] sm:$0xff]
    %v1705 = vld [vmem:[#allocation14 + $0xf38] sm:$0xff]
    %v1706 = vld [vmem:[#allocation14 + $0xf40] sm:$0xff]
    %v1707 = vld [vmem:[#allocation14 + $0xf48] sm:$0xff]
    %v1708 = vld [vmem:[#allocation14 + $0xf50] sm:$0xff]
    %v1709 = vld [vmem:[#allocation14 + $0xf58] sm:$0xff]
    %v1710 = vld [vmem:[#allocation14 + $0xf60] sm:$0xff]
    %v1711 = vld [vmem:[#allocation14 + $0xf68] sm:$0xff]
    %v1712 = vld [vmem:[#allocation14 + $0xf70] sm:$0xff]
    %v1713 = vld [vmem:[#allocation14 + $0xf78] sm:$0xff]
    %v1714 = vld [vmem:[#allocation14 + $0xf80] sm:$0xff]
    %v1715 = vld [vmem:[#allocation14 + $0xf88] sm:$0xff]
    %v1716 = vld [vmem:[#allocation14 + $0xf90] sm:$0xff]
    %v1717 = vld [vmem:[#allocation14 + $0xf98] sm:$0xff]
    %v1718 = vld [vmem:[#allocation14 + $0xfa0] sm:$0xff]
    %v1719 = vld [vmem:[#allocation14 + $0xfa8] sm:$0xff]
    %v1720 = vld [vmem:[#allocation14 + $0xfb0] sm:$0xff]
    %v1721 = vld [vmem:[#allocation14 + $0xfb8] sm:$0xff]
    %v1722 = vld [vmem:[#allocation14 + $0xfc0] sm:$0xff]
    %v1723 = vld [vmem:[#allocation14 + $0xfc8] sm:$0xff]
    %v1724 = vld [vmem:[#allocation14 + $0xfd0] sm:$0xff]
    %v1725 = vld [vmem:[#allocation14 + $0xfd8] sm:$0xff]
    %v1726 = vld [vmem:[#allocation14 + $0xfe0] sm:$0xff]
    %v1727 = vld [vmem:[#allocation14 + $0xfe8] sm:$0xff]
    %v1728 = vld [vmem:[#allocation14 + $0xff0] sm:$0xff]
    %v1729 = vld [vmem:[#allocation14 + $0xff8] sm:$0xff]
    %v1730 = vld [vmem:[#allocation16] sm:$0xff]
    %v1731 = vld [vmem:[#allocation2] sm:$0xf]
    %v1732 = vld [vmem:[#allocation3] sm:$0xf]
    %v1733 = vld [vmem:[#allocation4] sm:$0xf]
    %v1734 = vld [vmem:[#allocation5] sm:$0xf]
    %v1735 = vld [vmem:[#allocation6] sm:$0x3]
    %v1736 = vld [vmem:[#allocation6 + $0x8] sm:$0x3]
    %v1737 = vld [vmem:[#allocation6 + $0x10] sm:$0x3]
    %v1738 = vld [vmem:[#allocation6 + $0x18] sm:$0x3]
    %v1739 = vld [vmem:[#allocation6 + $0x20] sm:$0x3]
    %v1740 = vld [vmem:[#allocation6 + $0x28] sm:$0x3]
    %v1741 = vld [vmem:[#allocation6 + $0x30] sm:$0x3]
    %v1742 = vld [vmem:[#allocation6 + $0x38] sm:$0x3]
    %v1745 = vunpack.c.l.s4 1983009808
    %v1746 = vunpack.c.0.s8 %v1745
    %v1747 = vlaneseq
    %v1748 = vshrl.u32 %v1747, 7
    %v1749 = vsub.s32 %v1746, %v1748
    %v1750 = vrot.slane %v1731, %v1749
    %v1751 = vcombine.high %v1750, %v1750
    %1754 = vmatprep.subr.mxu0 %v1083
    %1755 = vmatpush1.msra.mxu0 %v1082
    %1756 = vmatprep.subr.mxu0 %v1075
    %1757 = vmatpush1.msra.mxu0 %v1074
    %1758 = vmatprep.subr.mxu0 %v1067
    %1759 = vmatpush1.msra.mxu0 %v1066
    %1760 = vmatprep.subr.mxu0 %v1059
    %1761 = vmatpush1.msra.mxu0 %v1058
    %1762 = vmatprep.subr.mxu0 %v1051
    %1763 = vmatpush1.msra.mxu0 %v1050
    %1764 = vmatprep.subr.mxu0 %v1043
    %1765 = vmatpush1.msra.mxu0 %v1042
    %1766 = vmatprep.subr.mxu0 %v1035
    %1767 = vmatpush1.msra.mxu0 %v1034
    %1768 = vmatprep.subr.mxu0 %v1027
    %1769 = vmatpush1.msra.mxu0 %v1026
    %1770 = vmatprep.subr.mxu0 %v1019
    %1771 = vmatpush1.msra.mxu0 %v1018
    %1772 = vmatprep.subr.mxu0 %v1011
    %1773 = vmatpush1.msra.mxu0 %v1010
    %1774 = vmatprep.subr.mxu0 %v1003
    %1775 = vmatpush1.msra.mxu0 %v1002
    %1776 = vmatprep.subr.mxu0 %v995
    %1777 = vmatpush1.msra.mxu0 %v994
    %1778 = vmatprep.subr.mxu0 %v987
    %1779 = vmatpush1.msra.mxu0 %v986
    %1780 = vmatprep.subr.mxu0 %v979
    %1781 = vmatpush1.msra.mxu0 %v978
    %1782 = vmatprep.subr.mxu0 %v971
    %1783 = vmatpush1.msra.mxu0 %v970
    %1784 = vmatprep.subr.mxu0 %v963
    %1785 = vmatpush1.msra.mxu0 %v962
    %1786 = vmatprep.subr.mxu0 %v1211
    %1787 = vmatpush2.msra.mxu0 %v1210
    %1788 = vmatprep.subr.mxu0 %v1203
    %1789 = vmatpush2.msra.mxu0 %v1202
    %1790 = vmatprep.subr.mxu0 %v1195
    %1791 = vmatpush2.msra.mxu0 %v1194
    %1792 = vmatprep.subr.mxu0 %v1187
    %1793 = vmatpush2.msra.mxu0 %v1186
    %1794 = vmatprep.subr.mxu0 %v1179
    %1795 = vmatpush2.msra.mxu0 %v1178
    %1796 = vmatprep.subr.mxu0 %v1171
    %1797 = vmatpush2.msra.mxu0 %v1170
    %1798 = vmatprep.subr.mxu0 %v1163
    %1799 = vmatpush2.msra.mxu0 %v1162
    %1800 = vmatprep.subr.mxu0 %v1155
    %1801 = vmatpush2.msra.mxu0 %v1154
    %1802 = vmatprep.subr.mxu0 %v1147
    %1803 = vmatpush2.msra.mxu0 %v1146
    %1804 = vmatprep.subr.mxu0 %v1139
    %1805 = vmatpush2.msra.mxu0 %v1138
    %1806 = vmatprep.subr.mxu0 %v1131
    %1807 = vmatpush2.msra.mxu0 %v1130
    %1808 = vmatprep.subr.mxu0 %v1123
    %1809 = vmatpush2.msra.mxu0 %v1122
    %1810 = vmatprep.subr.mxu0 %v1115
    %1811 = vmatpush2.msra.mxu0 %v1114
    %1812 = vmatprep.subr.mxu0 %v1107
    %1813 = vmatpush2.msra.mxu0 %v1106
    %1814 = vmatprep.subr.mxu0 %v1099
    %1815 = vmatpush2.msra.mxu0 %v1098
    %1816 = vmatprep.subr.mxu0 %v1091
    %1817 = vmatpush2.msra.mxu0 %v1090
    %1818 = vmatprep.mubr.f32.mxu0 %v1751
    %1819 = vmatmul.mubr.f32.gmra.mxu0 %v1750
    %v1820 = vpop.f32.mrf.mxu0
    %v1821 = vadd.f32 0.0, %v1820
    %v1822 = vpop.f32.mrf.mxu0
    %v1823 = vadd.f32 0.0, %v1822
    %1824 = vdwg.mxu0
    %1825 = vmatprep.subr.mxu0 %v1085
    %1826 = vmatpush1.msra.mxu0 %v1084
    %1827 = vmatprep.subr.mxu0 %v1077
    %1828 = vmatpush1.msra.mxu0 %v1076
    %1829 = vmatprep.subr.mxu0 %v1069
    %1830 = vmatpush1.msra.mxu0 %v1068
    %1831 = vmatprep.subr.mxu0 %v1061
    %1832 = vmatpush1.msra.mxu0 %v1060
    %1833 = vmatprep.subr.mxu0 %v1053
    %1834 = vmatpush1.msra.mxu0 %v1052
    %1835 = vmatprep.subr.mxu0 %v1045
    %1836 = vmatpush1.msra.mxu0 %v1044
    %1837 = vmatprep.subr.mxu0 %v1037
    %1838 = vmatpush1.msra.mxu0 %v1036
    %1839 = vmatprep.subr.mxu0 %v1029
    %1840 = vmatpush1.msra.mxu0 %v1028
    %1841 = vmatprep.subr.mxu0 %v1021
    %1842 = vmatpush1.msra.mxu0 %v1020
    %1843 = vmatprep.subr.mxu0 %v1013
    %1844 = vmatpush1.msra.mxu0 %v1012
    %1845 = vmatprep.subr.mxu0 %v1005
    %1846 = vmatpush1.msra.mxu0 %v1004
    %1847 = vmatprep.subr.mxu0 %v997
    %1848 = vmatpush1.msra.mxu0 %v996
    %1849 = vmatprep.subr.mxu0 %v989
    %1850 = vmatpush1.msra.mxu0 %v988
    %1851 = vmatprep.subr.mxu0 %v981
    %1852 = vmatpush1.msra.mxu0 %v980
    %1853 = vmatprep.subr.mxu0 %v973
    %1854 = vmatpush1.msra.mxu0 %v972
    %1855 = vmatprep.subr.mxu0 %v965
    %1856 = vmatpush1.msra.mxu0 %v964
    %1857 = vmatprep.subr.mxu0 %v1213
    %1858 = vmatpush2.msra.mxu0 %v1212
    %1859 = vmatprep.subr.mxu0 %v1205
    %1860 = vmatpush2.msra.mxu0 %v1204
    %1861 = vmatprep.subr.mxu0 %v1197
    %1862 = vmatpush2.msra.mxu0 %v1196
    %1863 = vmatprep.subr.mxu0 %v1189
    %1864 = vmatpush2.msra.mxu0 %v1188
    %1865 = vmatprep.subr.mxu0 %v1181
    %1866 = vmatpush2.msra.mxu0 %v1180
    %1867 = vmatprep.subr.mxu0 %v1173
    %1868 = vmatpush2.msra.mxu0 %v1172
    %1869 = vmatprep.subr.mxu0 %v1165
    %1870 = vmatpush2.msra.mxu0 %v1164
    %1871 = vmatprep.subr.mxu0 %v1157
    %1872 = vmatpush2.msra.mxu0 %v1156
    %1873 = vmatprep.subr.mxu0 %v1149
    %1874 = vmatpush2.msra.mxu0 %v1148
    %1875 = vmatprep.subr.mxu0 %v1141
    %1876 = vmatpush2.msra.mxu0 %v1140
    %1877 = vmatprep.subr.mxu0 %v1133
    %1878 = vmatpush2.msra.mxu0 %v1132
    %1879 = vmatprep.subr.mxu0 %v1125
    %1880 = vmatpush2.msra.mxu0 %v1124
    %1881 = vmatprep.subr.mxu0 %v1117
    %1882 = vmatpush2.msra.mxu0 %v1116
    %1883 = vmatprep.subr.mxu0 %v1109
    %1884 = vmatpush2.msra.mxu0 %v1108
    %1885 = vmatprep.subr.mxu0 %v1101
    %1886 = vmatpush2.msra.mxu0 %v1100
    %1887 = vmatprep.subr.mxu0 %v1093
    %1888 = vmatpush2.msra.mxu0 %v1092
    %1889 = vmatprep.mubr.f32.mxu0 %v1751
    %1890 = vmatmul.mubr.f32.gmra.mxu0 %v1750
    %v1891 = vpop.f32.mrf.mxu0
    %v1892 = vadd.f32 0.0, %v1891
    %v1893 = vpop.f32.mrf.mxu0
    %v1894 = vadd.f32 0.0, %v1893
    %1895 = vdwg.mxu0
    %1896 = vmatprep.subr.mxu0 %v1087
    %1897 = vmatpush1.msra.mxu0 %v1086
    %1898 = vmatprep.subr.mxu0 %v1079
    %1899 = vmatpush1.msra.mxu0 %v1078
    %1900 = vmatprep.subr.mxu0 %v1071
    %1901 = vmatpush1.msra.mxu0 %v1070
    %1902 = vmatprep.subr.mxu0 %v1063
    %1903 = vmatpush1.msra.mxu0 %v1062
    %1904 = vmatprep.subr.mxu0 %v1055
    %1905 = vmatpush1.msra.mxu0 %v1054
    %1906 = vmatprep.subr.mxu0 %v1047
    %1907 = vmatpush1.msra.mxu0 %v1046
    %1908 = vmatprep.subr.mxu0 %v1039
    %1909 = vmatpush1.msra.mxu0 %v1038
    %1910 = vmatprep.subr.mxu0 %v1031
    %1911 = vmatpush1.msra.mxu0 %v1030
    %1912 = vmatprep.subr.mxu0 %v1023
    %1913 = vmatpush1.msra.mxu0 %v1022
    %1914 = vmatprep.subr.mxu0 %v1015
    %1915 = vmatpush1.msra.mxu0 %v1014
    %1916 = vmatprep.subr.mxu0 %v1007
    %1917 = vmatpush1.msra.mxu0 %v1006
    %1918 = vmatprep.subr.mxu0 %v999
    %1919 = vmatpush1.msra.mxu0 %v998
    %1920 = vmatprep.subr.mxu0 %v991
    %1921 = vmatpush1.msra.mxu0 %v990
    %1922 = vmatprep.subr.mxu0 %v983
    %1923 = vmatpush1.msra.mxu0 %v982
    %1924 = vmatprep.subr.mxu0 %v975
    %1925 = vmatpush1.msra.mxu0 %v974
    %1926 = vmatprep.subr.mxu0 %v967
    %1927 = vmatpush1.msra.mxu0 %v966
    %1928 = vmatprep.subr.mxu0 %v1215
    %1929 = vmatpush2.msra.mxu0 %v1214
    %1930 = vmatprep.subr.mxu0 %v1207
    %1931 = vmatpush2.msra.mxu0 %v1206
    %1932 = vmatprep.subr.mxu0 %v1199
    %1933 = vmatpush2.msra.mxu0 %v1198
    %1934 = vmatprep.subr.mxu0 %v1191
    %1935 = vmatpush2.msra.mxu0 %v1190
    %1936 = vmatprep.subr.mxu0 %v1183
    %1937 = vmatpush2.msra.mxu0 %v1182
    %1938 = vmatprep.subr.mxu0 %v1175
    %1939 = vmatpush2.msra.mxu0 %v1174
    %1940 = vmatprep.subr.mxu0 %v1167
    %1941 = vmatpush2.msra.mxu0 %v1166
    %1942 = vmatprep.subr.mxu0 %v1159
    %1943 = vmatpush2.msra.mxu0 %v1158
    %1944 = vmatprep.subr.mxu0 %v1151
    %1945 = vmatpush2.msra.mxu0 %v1150
    %1946 = vmatprep.subr.mxu0 %v1143
    %1947 = vmatpush2.msra.mxu0 %v1142
    %1948 = vmatprep.subr.mxu0 %v1135
    %1949 = vmatpush2.msra.mxu0 %v1134
    %1950 = vmatprep.subr.mxu0 %v1127
    %1951 = vmatpush2.msra.mxu0 %v1126
    %1952 = vmatprep.subr.mxu0 %v1119
    %1953 = vmatpush2.msra.mxu0 %v1118
    %1954 = vmatprep.subr.mxu0 %v1111
    %1955 = vmatpush2.msra.mxu0 %v1110
    %1956 = vmatprep.subr.mxu0 %v1103
    %1957 = vmatpush2.msra.mxu0 %v1102
    %1958 = vmatprep.subr.mxu0 %v1095
    %1959 = vmatpush2.msra.mxu0 %v1094
    %1960 = vmatprep.mubr.f32.mxu0 %v1751
    %1961 = vmatmul.mubr.f32.gmra.mxu0 %v1750
    %v1962 = vpop.f32.mrf.mxu0
    %v1963 = vadd.f32 0.0, %v1962
    %v1964 = vpop.f32.mrf.mxu0
    %v1965 = vadd.f32 0.0, %v1964
    %1966 = vdwg.mxu0
    %1967 = vmatprep.subr.mxu0 %v1089
    %1968 = vmatpush1.msra.mxu0 %v1088
    %1969 = vmatprep.subr.mxu0 %v1081
    %1970 = vmatpush1.msra.mxu0 %v1080
    %1971 = vmatprep.subr.mxu0 %v1073
    %1972 = vmatpush1.msra.mxu0 %v1072
    %1973 = vmatprep.subr.mxu0 %v1065
    %1974 = vmatpush1.msra.mxu0 %v1064
    %1975 = vmatprep.subr.mxu0 %v1057
    %1976 = vmatpush1.msra.mxu0 %v1056
    %1977 = vmatprep.subr.mxu0 %v1049
    %1978 = vmatpush1.msra.mxu0 %v1048
    %1979 = vmatprep.subr.mxu0 %v1041
    %1980 = vmatpush1.msra.mxu0 %v1040
    %1981 = vmatprep.subr.mxu0 %v1033
    %1982 = vmatpush1.msra.mxu0 %v1032
    %1983 = vmatprep.subr.mxu0 %v1025
    %1984 = vmatpush1.msra.mxu0 %v1024
    %1985 = vmatprep.subr.mxu0 %v1017
    %1986 = vmatpush1.msra.mxu0 %v1016
    %1987 = vmatprep.subr.mxu0 %v1009
    %1988 = vmatpush1.msra.mxu0 %v1008
    %1989 = vmatprep.subr.mxu0 %v1001
    %1990 = vmatpush1.msra.mxu0 %v1000
    %1991 = vmatprep.subr.mxu0 %v993
    %1992 = vmatpush1.msra.mxu0 %v992
    %1993 = vmatprep.subr.mxu0 %v985
    %1994 = vmatpush1.msra.mxu0 %v984
    %1995 = vmatprep.subr.mxu0 %v977
    %1996 = vmatpush1.msra.mxu0 %v976
    %1997 = vmatprep.subr.mxu0 %v969
    %1998 = vmatpush1.msra.mxu0 %v968
    %1999 = vmatprep.subr.mxu0 %v1217
    %2000 = vmatpush2.msra.mxu0 %v1216
    %2001 = vmatprep.subr.mxu0 %v1209
    %2002 = vmatpush2.msra.mxu0 %v1208
    %2003 = vmatprep.subr.mxu0 %v1201
    %2004 = vmatpush2.msra.mxu0 %v1200
    %2005 = vmatprep.subr.mxu0 %v1193
    %2006 = vmatpush2.msra.mxu0 %v1192
    %2007 = vmatprep.subr.mxu0 %v1185
    %2008 = vmatpush2.msra.mxu0 %v1184
    %2009 = vmatprep.subr.mxu0 %v1177
    %2010 = vmatpush2.msra.mxu0 %v1176
    %2011 = vmatprep.subr.mxu0 %v1169
    %2012 = vmatpush2.msra.mxu0 %v1168
    %2013 = vmatprep.subr.mxu0 %v1161
    %2014 = vmatpush2.msra.mxu0 %v1160
    %2015 = vmatprep.subr.mxu0 %v1153
    %2016 = vmatpush2.msra.mxu0 %v1152
    %2017 = vmatprep.subr.mxu0 %v1145
    %2018 = vmatpush2.msra.mxu0 %v1144
    %2019 = vmatprep.subr.mxu0 %v1137
    %2020 = vmatpush2.msra.mxu0 %v1136
    %2021 = vmatprep.subr.mxu0 %v1129
    %2022 = vmatpush2.msra.mxu0 %v1128
    %2023 = vmatprep.subr.mxu0 %v1121
    %2024 = vmatpush2.msra.mxu0 %v1120
    %2025 = vmatprep.subr.mxu0 %v1113
    %2026 = vmatpush2.msra.mxu0 %v1112
    %2027 = vmatprep.subr.mxu0 %v1105
    %2028 = vmatpush2.msra.mxu0 %v1104
    %2029 = vmatprep.subr.mxu0 %v1097
    %2030 = vmatpush2.msra.mxu0 %v1096
    %2031 = vmatprep.mubr.f32.mxu0 %v1751
    %2032 = vmatmul.mubr.f32.gmra.mxu0 %v1750
    %v2033 = vpop.f32.mrf.mxu0
    %v2034 = vadd.f32 0.0, %v2033
    %v2035 = vpop.f32.mrf.mxu0
    %v2036 = vadd.f32 0.0, %v2035
    %2037 = vdwg.mxu0
    %v2038 = vadd.f32 %v1735, %v1821
    %v2039 = vadd.f32 %v1736, %v1823
    %v2040 = vadd.f32 %v1737, %v1892
    %v2041 = vadd.f32 %v1738, %v1894
    %v2042 = vadd.f32 %v1739, %v1963
    %v2043 = vadd.f32 %v1740, %v1965
    %v2044 = vadd.f32 %v1741, %v2034
    %v2045 = vadd.f32 %v1742, %v2036
    %v2046 = vxor.u32 %v2038, 2147483648
    %v2047 = vxor.u32 %v2039, 2147483648
    %v2048 = vmul.f32 %v2046, 1.442695
    %v2049 = vpow.pop %v2048
    %v2050 = vmul.f32 %v2047, 1.442695
    %v2051 = vpow.pop %v2050
    %v2052 = vadd.f32 %v2049, 1.0
    %v2053 = vadd.f32 %v2051, 1.0
    %v2054 = vrcp.pop %v2052
    %v2055 = vmul.f32 1.0, %v2054
    %v2056 = vrcp.pop %v2053
    %v2057 = vmul.f32 1.0, %v2056
    %v2058 = vxor.u32 %v2040, 2147483648
    %v2059 = vxor.u32 %v2041, 2147483648
    %v2060 = vmul.f32 %v2058, 1.442695
    %v2061 = vpow.pop %v2060
    %v2062 = vmul.f32 %v2059, 1.442695
    %v2063 = vpow.pop %v2062
    %v2064 = vadd.f32 %v2061, 1.0
    %v2065 = vadd.f32 %v2063, 1.0
    %v2066 = vrcp.pop %v2064
    %v2067 = vmul.f32 1.0, %v2066
    %v2068 = vrcp.pop %v2065
    %v2069 = vmul.f32 1.0, %v2068
    %v2070 = vtanh.pop %v2042
    %v2071 = vtanh.pop %v2043
    %v2072 = vxor.u32 %v2044, 2147483648
    %v2073 = vxor.u32 %v2045, 2147483648
    %v2074 = vmul.f32 %v2072, 1.442695
    %v2075 = vpow.pop %v2074
    %v2076 = vmul.f32 %v2073, 1.442695
    %v2077 = vpow.pop %v2076
    %v2078 = vadd.f32 %v2075, 1.0
    %v2079 = vadd.f32 %v2077, 1.0
    %v2080 = vrcp.pop %v2078
    %v2081 = vmul.f32 1.0, %v2080
    %v2082 = vrcp.pop %v2079
    %v2083 = vmul.f32 1.0, %v2082
    %v2086 = vunpack.c.l.s4 1983009808
    %v2087 = vunpack.c.0.s8 %v2086
    %v2088 = vlaneseq
    %v2089 = vshrl.u32 %v2088, 7
    %v2090 = vsub.s32 %v2087, %v2089
    %v2091 = vrot.slane %v1732, %v2090
    %v2092 = vcombine.high %v2091, %v2091
    %v2095 = vmul.f32 %v2067, %v2091
    %v2096 = vmul.f32 %v2069, %v2092
    %v2097 = vmul.f32 %v2055, %v2070
    %v2098 = vmul.f32 %v2057, %v2071
    %v2099 = vadd.f32 %v2095, %v2097
    %v2100 = vadd.f32 %v2096, %v2098
    %v2101 = vtanh.pop %v2099
    %v2102 = vtanh.pop %v2100
    %v2103 = vmul.f32 %v2081, %v2101
    %v2104 = vmul.f32 %v2083, %v2102
    %v2107 = vunpack.c.l.s4 1983009808
    %v2108 = vunpack.c.0.s8 %v2107
    %v2109 = vlaneseq
    %v2110 = vshrl.u32 %v2109, 7
    %v2111 = vsub.s32 %v2108, %v2110
    %v2112 = vrot.slane %v1733, %v2111
    %v2113 = vcombine.high %v2112, %v2112
    %v2117 = vlaneseq
    %v2118 = vshrl.u32 %v2117, 7
    %v2119 = vsub.s32 0, %v2118
    %v2120 = vrot.slane %v1730, %v2119
    %v2121 = vlaneseq
    %v2122 = vshrl.u32 %v2121, 7
    %v2123 = vsub.s32 1, %v2122
    %v2124 = vrot.slane %v1730, %v2123
    %v2125 = vlaneseq
    %v2126 = vshrl.u32 %v2125, 7
    %v2127 = vsub.s32 2, %v2126
    %v2128 = vrot.slane %v1730, %v2127
    %v2129 = vlaneseq
    %v2130 = vshrl.u32 %v2129, 7
    %v2131 = vsub.s32 3, %v2130
    %v2132 = vrot.slane %v1730, %v2131
    %v2133 = vlaneseq
    %v2134 = vshrl.u32 %v2133, 7
    %v2135 = vsub.s32 4, %v2134
    %v2136 = vrot.slane %v1730, %v2135
    %v2137 = vlaneseq
    %v2138 = vshrl.u32 %v2137, 7
    %v2139 = vsub.s32 5, %v2138
    %v2140 = vrot.slane %v1730, %v2139
    %v2141 = vlaneseq
    %v2142 = vshrl.u32 %v2141, 7
    %v2143 = vsub.s32 6, %v2142
    %v2144 = vrot.slane %v1730, %v2143
    %v2145 = vlaneseq
    %v2146 = vshrl.u32 %v2145, 7
    %v2147 = vsub.s32 7, %v2146
    %v2148 = vrot.slane %v1730, %v2147
    %2157 = vmatprep.subr.mxu0 %v1339
    %2158 = vmatpush1.msra.mxu0 %v1338
    %2159 = vmatprep.subr.mxu0 %v1331
    %2160 = vmatpush1.msra.mxu0 %v1330
    %2161 = vmatprep.subr.mxu0 %v1323
    %2162 = vmatpush1.msra.mxu0 %v1322
    %2163 = vmatprep.subr.mxu0 %v1315
    %2164 = vmatpush1.msra.mxu0 %v1314
    %2165 = vmatprep.subr.mxu0 %v1307
    %2166 = vmatpush1.msra.mxu0 %v1306
    %2167 = vmatprep.subr.mxu0 %v1299
    %2168 = vmatpush1.msra.mxu0 %v1298
    %2169 = vmatprep.subr.mxu0 %v1291
    %2170 = vmatpush1.msra.mxu0 %v1290
    %2171 = vmatprep.subr.mxu0 %v1283
    %2172 = vmatpush1.msra.mxu0 %v1282
    %2173 = vmatprep.subr.mxu0 %v1275
    %2174 = vmatpush1.msra.mxu0 %v1274
    %2175 = vmatprep.subr.mxu0 %v1267
    %2176 = vmatpush1.msra.mxu0 %v1266
    %2177 = vmatprep.subr.mxu0 %v1259
    %2178 = vmatpush1.msra.mxu0 %v1258
    %2179 = vmatprep.subr.mxu0 %v1251
    %2180 = vmatpush1.msra.mxu0 %v1250
    %2181 = vmatprep.subr.mxu0 %v1243
    %2182 = vmatpush1.msra.mxu0 %v1242
    %2183 = vmatprep.subr.mxu0 %v1235
    %2184 = vmatpush1.msra.mxu0 %v1234
    %2185 = vmatprep.subr.mxu0 %v1227
    %2186 = vmatpush1.msra.mxu0 %v1226
    %2187 = vmatprep.subr.mxu0 %v1219
    %2188 = vmatpush1.msra.mxu0 %v1218
    %2189 = vmatprep.subr.mxu0 %v1467
    %2190 = vmatpush2.msra.mxu0 %v1466
    %2191 = vmatprep.subr.mxu0 %v1459
    %2192 = vmatpush2.msra.mxu0 %v1458
    %2193 = vmatprep.subr.mxu0 %v1451
    %2194 = vmatpush2.msra.mxu0 %v1450
    %2195 = vmatprep.subr.mxu0 %v1443
    %2196 = vmatpush2.msra.mxu0 %v1442
    %2197 = vmatprep.subr.mxu0 %v1435
    %2198 = vmatpush2.msra.mxu0 %v1434
    %2199 = vmatprep.subr.mxu0 %v1427
    %2200 = vmatpush2.msra.mxu0 %v1426
    %2201 = vmatprep.subr.mxu0 %v1419
    %2202 = vmatpush2.msra.mxu0 %v1418
    %2203 = vmatprep.subr.mxu0 %v1411
    %2204 = vmatpush2.msra.mxu0 %v1410
    %2205 = vmatprep.subr.mxu0 %v1403
    %2206 = vmatpush2.msra.mxu0 %v1402
    %2207 = vmatprep.subr.mxu0 %v1395
    %2208 = vmatpush2.msra.mxu0 %v1394
    %2209 = vmatprep.subr.mxu0 %v1387
    %2210 = vmatpush2.msra.mxu0 %v1386
    %2211 = vmatprep.subr.mxu0 %v1379
    %2212 = vmatpush2.msra.mxu0 %v1378
    %2213 = vmatprep.subr.mxu0 %v1371
    %2214 = vmatpush2.msra.mxu0 %v1370
    %2215 = vmatprep.subr.mxu0 %v1363
    %2216 = vmatpush2.msra.mxu0 %v1362
    %2217 = vmatprep.subr.mxu0 %v1355
    %2218 = vmatpush2.msra.mxu0 %v1354
    %2219 = vmatprep.subr.mxu0 %v1347
    %2220 = vmatpush2.msra.mxu0 %v1346
    %2221 = vmatprep.mubr.f32.mxu0 %v2104
    %2222 = vmatmul.mubr.f32.gmra.mxu0 %v2103
    %v2223 = vpop.f32.mrf.mxu0
    %v2224 = vadd.f32 %v2120, %v2223
    %v2225 = vpop.f32.mrf.mxu0
    %v2226 = vadd.f32 %v2124, %v2225
    %2227 = vdwg.mxu0
    %2228 = vmatprep.subr.mxu0 %v1595
    %2229 = vmatpush1.msra.mxu0 %v1594
    %2230 = vmatprep.subr.mxu0 %v1587
    %2231 = vmatpush1.msra.mxu0 %v1586
    %2232 = vmatprep.subr.mxu0 %v1579
    %2233 = vmatpush1.msra.mxu0 %v1578
    %2234 = vmatprep.subr.mxu0 %v1571
    %2235 = vmatpush1.msra.mxu0 %v1570
    %2236 = vmatprep.subr.mxu0 %v1563
    %2237 = vmatpush1.msra.mxu0 %v1562
    %2238 = vmatprep.subr.mxu0 %v1555
    %2239 = vmatpush1.msra.mxu0 %v1554
    %2240 = vmatprep.subr.mxu0 %v1547
    %2241 = vmatpush1.msra.mxu0 %v1546
    %2242 = vmatprep.subr.mxu0 %v1539
    %2243 = vmatpush1.msra.mxu0 %v1538
    %2244 = vmatprep.subr.mxu0 %v1531
    %2245 = vmatpush1.msra.mxu0 %v1530
    %2246 = vmatprep.subr.mxu0 %v1523
    %2247 = vmatpush1.msra.mxu0 %v1522
    %2248 = vmatprep.subr.mxu0 %v1515
    %2249 = vmatpush1.msra.mxu0 %v1514
    %2250 = vmatprep.subr.mxu0 %v1507
    %2251 = vmatpush1.msra.mxu0 %v1506
    %2252 = vmatprep.subr.mxu0 %v1499
    %2253 = vmatpush1.msra.mxu0 %v1498
    %2254 = vmatprep.subr.mxu0 %v1491
    %2255 = vmatpush1.msra.mxu0 %v1490
    %2256 = vmatprep.subr.mxu0 %v1483
    %2257 = vmatpush1.msra.mxu0 %v1482
    %2258 = vmatprep.subr.mxu0 %v1475
    %2259 = vmatpush1.msra.mxu0 %v1474
    %2260 = vmatprep.subr.mxu0 %v1723
    %2261 = vmatpush2.msra.mxu0 %v1722
    %2262 = vmatprep.subr.mxu0 %v1715
    %2263 = vmatpush2.msra.mxu0 %v1714
    %2264 = vmatprep.subr.mxu0 %v1707
    %2265 = vmatpush2.msra.mxu0 %v1706
    %2266 = vmatprep.subr.mxu0 %v1699
    %2267 = vmatpush2.msra.mxu0 %v1698
    %2268 = vmatprep.subr.mxu0 %v1691
    %2269 = vmatpush2.msra.mxu0 %v1690
    %2270 = vmatprep.subr.mxu0 %v1683
    %2271 = vmatpush2.msra.mxu0 %v1682
    %2272 = vmatprep.subr.mxu0 %v1675
    %2273 = vmatpush2.msra.mxu0 %v1674
    %2274 = vmatprep.subr.mxu0 %v1667
    %2275 = vmatpush2.msra.mxu0 %v1666
    %2276 = vmatprep.subr.mxu0 %v1659
    %2277 = vmatpush2.msra.mxu0 %v1658
    %2278 = vmatprep.subr.mxu0 %v1651
    %2279 = vmatpush2.msra.mxu0 %v1650
    %2280 = vmatprep.subr.mxu0 %v1643
    %2281 = vmatpush2.msra.mxu0 %v1642
    %2282 = vmatprep.subr.mxu0 %v1635
    %2283 = vmatpush2.msra.mxu0 %v1634
    %2284 = vmatprep.subr.mxu0 %v1627
    %2285 = vmatpush2.msra.mxu0 %v1626
    %2286 = vmatprep.subr.mxu0 %v1619
    %2287 = vmatpush2.msra.mxu0 %v1618
    %2288 = vmatprep.subr.mxu0 %v1611
    %2289 = vmatpush2.msra.mxu0 %v1610
    %2290 = vmatprep.subr.mxu0 %v1603
    %2291 = vmatpush2.msra.mxu0 %v1602
    %2292 = vmatprep.mubr.f32.mxu0 %v2113
    %2293 = vmatmul.mubr.f32.gmra.mxu0 %v2112
    %v2294 = vpop.f32.mrf.mxu0
    %v2295 = vadd.f32 %v2224, %v2294
    %v2296 = vpop.f32.mrf.mxu0
    %v2297 = vadd.f32 %v2226, %v2296
    %2298 = vdwg.mxu0
    %2299 = vmatprep.subr.mxu0 %v1341
    %2300 = vmatpush1.msra.mxu0 %v1340
    %2301 = vmatprep.subr.mxu0 %v1333
    %2302 = vmatpush1.msra.mxu0 %v1332
    %2303 = vmatprep.subr.mxu0 %v1325
    %2304 = vmatpush1.msra.mxu0 %v1324
    %2305 = vmatprep.subr.mxu0 %v1317
    %2306 = vmatpush1.msra.mxu0 %v1316
    %2307 = vmatprep.subr.mxu0 %v1309
    %2308 = vmatpush1.msra.mxu0 %v1308
    %2309 = vmatprep.subr.mxu0 %v1301
    %2310 = vmatpush1.msra.mxu0 %v1300
    %2311 = vmatprep.subr.mxu0 %v1293
    %2312 = vmatpush1.msra.mxu0 %v1292
    %2313 = vmatprep.subr.mxu0 %v1285
    %2314 = vmatpush1.msra.mxu0 %v1284
    %2315 = vmatprep.subr.mxu0 %v1277
    %2316 = vmatpush1.msra.mxu0 %v1276
    %2317 = vmatprep.subr.mxu0 %v1269
    %2318 = vmatpush1.msra.mxu0 %v1268
    %2319 = vmatprep.subr.mxu0 %v1261
    %2320 = vmatpush1.msra.mxu0 %v1260
    %2321 = vmatprep.subr.mxu0 %v1253
    %2322 = vmatpush1.msra.mxu0 %v1252
    %2323 = vmatprep.subr.mxu0 %v1245
    %2324 = vmatpush1.msra.mxu0 %v1244
    %2325 = vmatprep.subr.mxu0 %v1237
    %2326 = vmatpush1.msra.mxu0 %v1236
    %2327 = vmatprep.subr.mxu0 %v1229
    %2328 = vmatpush1.msra.mxu0 %v1228
    %2329 = vmatprep.subr.mxu0 %v1221
    %2330 = vmatpush1.msra.mxu0 %v1220
    %2331 = vmatprep.subr.mxu0 %v1469
    %2332 = vmatpush2.msra.mxu0 %v1468
    %2333 = vmatprep.subr.mxu0 %v1461
    %2334 = vmatpush2.msra.mxu0 %v1460
    %2335 = vmatprep.subr.mxu0 %v1453
    %2336 = vmatpush2.msra.mxu0 %v1452
    %2337 = vmatprep.subr.mxu0 %v1445
    %2338 = vmatpush2.msra.mxu0 %v1444
    %2339 = vmatprep.subr.mxu0 %v1437
    %2340 = vmatpush2.msra.mxu0 %v1436
    %2341 = vmatprep.subr.mxu0 %v1429
    %2342 = vmatpush2.msra.mxu0 %v1428
    %2343 = vmatprep.subr.mxu0 %v1421
    %2344 = vmatpush2.msra.mxu0 %v1420
    %2345 = vmatprep.subr.mxu0 %v1413
    %2346 = vmatpush2.msra.mxu0 %v1412
    %2347 = vmatprep.subr.mxu0 %v1405
    %2348 = vmatpush2.msra.mxu0 %v1404
    %2349 = vmatprep.subr.mxu0 %v1397
    %2350 = vmatpush2.msra.mxu0 %v1396
    %2351 = vmatprep.subr.mxu0 %v1389
    %2352 = vmatpush2.msra.mxu0 %v1388
    %2353 = vmatprep.subr.mxu0 %v1381
    %2354 = vmatpush2.msra.mxu0 %v1380
    %2355 = vmatprep.subr.mxu0 %v1373
    %2356 = vmatpush2.msra.mxu0 %v1372
    %2357 = vmatprep.subr.mxu0 %v1365
    %2358 = vmatpush2.msra.mxu0 %v1364
    %2359 = vmatprep.subr.mxu0 %v1357
    %2360 = vmatpush2.msra.mxu0 %v1356
    %2361 = vmatprep.subr.mxu0 %v1349
    %2362 = vmatpush2.msra.mxu0 %v1348
    %2363 = vmatprep.mubr.f32.mxu0 %v2104
    %2364 = vmatmul.mubr.f32.gmra.mxu0 %v2103
    %v2365 = vpop.f32.mrf.mxu0
    %v2366 = vadd.f32 %v2128, %v2365
    %v2367 = vpop.f32.mrf.mxu0
    %v2368 = vadd.f32 %v2132, %v2367
    %2369 = vdwg.mxu0
    %2370 = vmatprep.subr.mxu0 %v1597
    %2371 = vmatpush1.msra.mxu0 %v1596
    %2372 = vmatprep.subr.mxu0 %v1589
    %2373 = vmatpush1.msra.mxu0 %v1588
    %2374 = vmatprep.subr.mxu0 %v1581
    %2375 = vmatpush1.msra.mxu0 %v1580
    %2376 = vmatprep.subr.mxu0 %v1573
    %2377 = vmatpush1.msra.mxu0 %v1572
    %2378 = vmatprep.subr.mxu0 %v1565
    %2379 = vmatpush1.msra.mxu0 %v1564
    %2380 = vmatprep.subr.mxu0 %v1557
    %2381 = vmatpush1.msra.mxu0 %v1556
    %2382 = vmatprep.subr.mxu0 %v1549
    %2383 = vmatpush1.msra.mxu0 %v1548
    %2384 = vmatprep.subr.mxu0 %v1541
    %2385 = vmatpush1.msra.mxu0 %v1540
    %2386 = vmatprep.subr.mxu0 %v1533
    %2387 = vmatpush1.msra.mxu0 %v1532
    %2388 = vmatprep.subr.mxu0 %v1525
    %2389 = vmatpush1.msra.mxu0 %v1524
    %2390 = vmatprep.subr.mxu0 %v1517
    %2391 = vmatpush1.msra.mxu0 %v1516
    %2392 = vmatprep.subr.mxu0 %v1509
    %2393 = vmatpush1.msra.mxu0 %v1508
    %2394 = vmatprep.subr.mxu0 %v1501
    %2395 = vmatpush1.msra.mxu0 %v1500
    %2396 = vmatprep.subr.mxu0 %v1493
    %2397 = vmatpush1.msra.mxu0 %v1492
    %2398 = vmatprep.subr.mxu0 %v1485
    %2399 = vmatpush1.msra.mxu0 %v1484
    %2400 = vmatprep.subr.mxu0 %v1477
    %2401 = vmatpush1.msra.mxu0 %v1476
    %2402 = vmatprep.subr.mxu0 %v1725
    %2403 = vmatpush2.msra.mxu0 %v1724
    %2404 = vmatprep.subr.mxu0 %v1717
    %2405 = vmatpush2.msra.mxu0 %v1716
    %2406 = vmatprep.subr.mxu0 %v1709
    %2407 = vmatpush2.msra.mxu0 %v1708
    %2408 = vmatprep.subr.mxu0 %v1701
    %2409 = vmatpush2.msra.mxu0 %v1700
    %2410 = vmatprep.subr.mxu0 %v1693
    %2411 = vmatpush2.msra.mxu0 %v1692
    %2412 = vmatprep.subr.mxu0 %v1685
    %2413 = vmatpush2.msra.mxu0 %v1684
    %2414 = vmatprep.subr.mxu0 %v1677
    %2415 = vmatpush2.msra.mxu0 %v1676
    %2416 = vmatprep.subr.mxu0 %v1669
    %2417 = vmatpush2.msra.mxu0 %v1668
    %2418 = vmatprep.subr.mxu0 %v1661
    %2419 = vmatpush2.msra.mxu0 %v1660
    %2420 = vmatprep.subr.mxu0 %v1653
    %2421 = vmatpush2.msra.mxu0 %v1652
    %2422 = vmatprep.subr.mxu0 %v1645
    %2423 = vmatpush2.msra.mxu0 %v1644
    %2424 = vmatprep.subr.mxu0 %v1637
    %2425 = vmatpush2.msra.mxu0 %v1636
    %2426 = vmatprep.subr.mxu0 %v1629
    %2427 = vmatpush2.msra.mxu0 %v1628
    %2428 = vmatprep.subr.mxu0 %v1621
    %2429 = vmatpush2.msra.mxu0 %v1620
    %2430 = vmatprep.subr.mxu0 %v1613
    %2431 = vmatpush2.msra.mxu0 %v1612
    %2432 = vmatprep.subr.mxu0 %v1605
    %2433 = vmatpush2.msra.mxu0 %v1604
    %2434 = vmatprep.mubr.f32.mxu0 %v2113
    %2435 = vmatmul.mubr.f32.gmra.mxu0 %v2112
    %v2436 = vpop.f32.mrf.mxu0
    %v2437 = vadd.f32 %v2366, %v2436
    %v2438 = vpop.f32.mrf.mxu0
    %v2439 = vadd.f32 %v2368, %v2438
    %2440 = vdwg.mxu0
    %2441 = vmatprep.subr.mxu0 %v1343
    %2442 = vmatpush1.msra.mxu0 %v1342
    %2443 = vmatprep.subr.mxu0 %v1335
    %2444 = vmatpush1.msra.mxu0 %v1334
    %2445 = vmatprep.subr.mxu0 %v1327
    %2446 = vmatpush1.msra.mxu0 %v1326
    %2447 = vmatprep.subr.mxu0 %v1319
    %2448 = vmatpush1.msra.mxu0 %v1318
    %2449 = vmatprep.subr.mxu0 %v1311
    %2450 = vmatpush1.msra.mxu0 %v1310
    %2451 = vmatprep.subr.mxu0 %v1303
    %2452 = vmatpush1.msra.mxu0 %v1302
    %2453 = vmatprep.subr.mxu0 %v1295
    %2454 = vmatpush1.msra.mxu0 %v1294
    %2455 = vmatprep.subr.mxu0 %v1287
    %2456 = vmatpush1.msra.mxu0 %v1286
    %2457 = vmatprep.subr.mxu0 %v1279
    %2458 = vmatpush1.msra.mxu0 %v1278
    %2459 = vmatprep.subr.mxu0 %v1271
    %2460 = vmatpush1.msra.mxu0 %v1270
    %2461 = vmatprep.subr.mxu0 %v1263
    %2462 = vmatpush1.msra.mxu0 %v1262
    %2463 = vmatprep.subr.mxu0 %v1255
    %2464 = vmatpush1.msra.mxu0 %v1254
    %2465 = vmatprep.subr.mxu0 %v1247
    %2466 = vmatpush1.msra.mxu0 %v1246
    %2467 = vmatprep.subr.mxu0 %v1239
    %2468 = vmatpush1.msra.mxu0 %v1238
    %2469 = vmatprep.subr.mxu0 %v1231
    %2470 = vmatpush1.msra.mxu0 %v1230
    %2471 = vmatprep.subr.mxu0 %v1223
    %2472 = vmatpush1.msra.mxu0 %v1222
    %2473 = vmatprep.subr.mxu0 %v1471
    %2474 = vmatpush2.msra.mxu0 %v1470
    %2475 = vmatprep.subr.mxu0 %v1463
    %2476 = vmatpush2.msra.mxu0 %v1462
    %2477 = vmatprep.subr.mxu0 %v1455
    %2478 = vmatpush2.msra.mxu0 %v1454
    %2479 = vmatprep.subr.mxu0 %v1447
    %2480 = vmatpush2.msra.mxu0 %v1446
    %2481 = vmatprep.subr.mxu0 %v1439
    %2482 = vmatpush2.msra.mxu0 %v1438
    %2483 = vmatprep.subr.mxu0 %v1431
    %2484 = vmatpush2.msra.mxu0 %v1430
    %2485 = vmatprep.subr.mxu0 %v1423
    %2486 = vmatpush2.msra.mxu0 %v1422
    %2487 = vmatprep.subr.mxu0 %v1415
    %2488 = vmatpush2.msra.mxu0 %v1414
    %2489 = vmatprep.subr.mxu0 %v1407
    %2490 = vmatpush2.msra.mxu0 %v1406
    %2491 = vmatprep.subr.mxu0 %v1399
    %2492 = vmatpush2.msra.mxu0 %v1398
    %2493 = vmatprep.subr.mxu0 %v1391
    %2494 = vmatpush2.msra.mxu0 %v1390
    %2495 = vmatprep.subr.mxu0 %v1383
    %2496 = vmatpush2.msra.mxu0 %v1382
    %2497 = vmatprep.subr.mxu0 %v1375
    %2498 = vmatpush2.msra.mxu0 %v1374
    %2499 = vmatprep.subr.mxu0 %v1367
    %2500 = vmatpush2.msra.mxu0 %v1366
    %2501 = vmatprep.subr.mxu0 %v1359
    %2502 = vmatpush2.msra.mxu0 %v1358
    %2503 = vmatprep.subr.mxu0 %v1351
    %2504 = vmatpush2.msra.mxu0 %v1350
    %2505 = vmatprep.mubr.f32.mxu0 %v2104
    %2506 = vmatmul.mubr.f32.gmra.mxu0 %v2103
    %v2507 = vpop.f32.mrf.mxu0
    %v2508 = vadd.f32 %v2136, %v2507
    %v2509 = vpop.f32.mrf.mxu0
    %v2510 = vadd.f32 %v2140, %v2509
    %2511 = vdwg.mxu0
    %2512 = vmatprep.subr.mxu0 %v1599
    %2513 = vmatpush1.msra.mxu0 %v1598
    %2514 = vmatprep.subr.mxu0 %v1591
    %2515 = vmatpush1.msra.mxu0 %v1590
    %2516 = vmatprep.subr.mxu0 %v1583
    %2517 = vmatpush1.msra.mxu0 %v1582
    %2518 = vmatprep.subr.mxu0 %v1575
    %2519 = vmatpush1.msra.mxu0 %v1574
    %2520 = vmatprep.subr.mxu0 %v1567
    %2521 = vmatpush1.msra.mxu0 %v1566
    %2522 = vmatprep.subr.mxu0 %v1559
    %2523 = vmatpush1.msra.mxu0 %v1558
    %2524 = vmatprep.subr.mxu0 %v1551
    %2525 = vmatpush1.msra.mxu0 %v1550
    %2526 = vmatprep.subr.mxu0 %v1543
    %2527 = vmatpush1.msra.mxu0 %v1542
    %2528 = vmatprep.subr.mxu0 %v1535
    %2529 = vmatpush1.msra.mxu0 %v1534
    %2530 = vmatprep.subr.mxu0 %v1527
    %2531 = vmatpush1.msra.mxu0 %v1526
    %2532 = vmatprep.subr.mxu0 %v1519
    %2533 = vmatpush1.msra.mxu0 %v1518
    %2534 = vmatprep.subr.mxu0 %v1511
    %2535 = vmatpush1.msra.mxu0 %v1510
    %2536 = vmatprep.subr.mxu0 %v1503
    %2537 = vmatpush1.msra.mxu0 %v1502
    %2538 = vmatprep.subr.mxu0 %v1495
    %2539 = vmatpush1.msra.mxu0 %v1494
    %2540 = vmatprep.subr.mxu0 %v1487
    %2541 = vmatpush1.msra.mxu0 %v1486
    %2542 = vmatprep.subr.mxu0 %v1479
    %2543 = vmatpush1.msra.mxu0 %v1478
    %2544 = vmatprep.subr.mxu0 %v1727
    %2545 = vmatpush2.msra.mxu0 %v1726
    %2546 = vmatprep.subr.mxu0 %v1719
    %2547 = vmatpush2.msra.mxu0 %v1718
    %2548 = vmatprep.subr.mxu0 %v1711
    %2549 = vmatpush2.msra.mxu0 %v1710
    %2550 = vmatprep.subr.mxu0 %v1703
    %2551 = vmatpush2.msra.mxu0 %v1702
    %2552 = vmatprep.subr.mxu0 %v1695
    %2553 = vmatpush2.msra.mxu0 %v1694
    %2554 = vmatprep.subr.mxu0 %v1687
    %2555 = vmatpush2.msra.mxu0 %v1686
    %2556 = vmatprep.subr.mxu0 %v1679
    %2557 = vmatpush2.msra.mxu0 %v1678
    %2558 = vmatprep.subr.mxu0 %v1671
    %2559 = vmatpush2.msra.mxu0 %v1670
    %2560 = vmatprep.subr.mxu0 %v1663
    %2561 = vmatpush2.msra.mxu0 %v1662
    %2562 = vmatprep.subr.mxu0 %v1655
    %2563 = vmatpush2.msra.mxu0 %v1654
    %2564 = vmatprep.subr.mxu0 %v1647
    %2565 = vmatpush2.msra.mxu0 %v1646
    %2566 = vmatprep.subr.mxu0 %v1639
    %2567 = vmatpush2.msra.mxu0 %v1638
    %2568 = vmatprep.subr.mxu0 %v1631
    %2569 = vmatpush2.msra.mxu0 %v1630
    %2570 = vmatprep.subr.mxu0 %v1623
    %2571 = vmatpush2.msra.mxu0 %v1622
    %2572 = vmatprep.subr.mxu0 %v1615
    %2573 = vmatpush2.msra.mxu0 %v1614
    %2574 = vmatprep.subr.mxu0 %v1607
    %2575 = vmatpush2.msra.mxu0 %v1606
    %2576 = vmatprep.mubr.f32.mxu0 %v2113
    %2577 = vmatmul.mubr.f32.gmra.mxu0 %v2112
    %v2578 = vpop.f32.mrf.mxu0
    %v2579 = vadd.f32 %v2508, %v2578
    %v2580 = vpop.f32.mrf.mxu0
    %v2581 = vadd.f32 %v2510, %v2580
    %2582 = vdwg.mxu0
    %2583 = vmatprep.subr.mxu0 %v1345
    %2584 = vmatpush1.msra.mxu0 %v1344
    %2585 = vmatprep.subr.mxu0 %v1337
    %2586 = vmatpush1.msra.mxu0 %v1336
    %2587 = vmatprep.subr.mxu0 %v1329
    %2588 = vmatpush1.msra.mxu0 %v1328
    %2589 = vmatprep.subr.mxu0 %v1321
    %2590 = vmatpush1.msra.mxu0 %v1320
    %2591 = vmatprep.subr.mxu0 %v1313
    %2592 = vmatpush1.msra.mxu0 %v1312
    %2593 = vmatprep.subr.mxu0 %v1305
    %2594 = vmatpush1.msra.mxu0 %v1304
    %2595 = vmatprep.subr.mxu0 %v1297
    %2596 = vmatpush1.msra.mxu0 %v1296
    %2597 = vmatprep.subr.mxu0 %v1289
    %2598 = vmatpush1.msra.mxu0 %v1288
    %2599 = vmatprep.subr.mxu0 %v1281
    %2600 = vmatpush1.msra.mxu0 %v1280
    %2601 = vmatprep.subr.mxu0 %v1273
    %2602 = vmatpush1.msra.mxu0 %v1272
    %2603 = vmatprep.subr.mxu0 %v1265
    %2604 = vmatpush1.msra.mxu0 %v1264
    %2605 = vmatprep.subr.mxu0 %v1257
    %2606 = vmatpush1.msra.mxu0 %v1256
    %2607 = vmatprep.subr.mxu0 %v1249
    %2608 = vmatpush1.msra.mxu0 %v1248
    %2609 = vmatprep.subr.mxu0 %v1241
    %2610 = vmatpush1.msra.mxu0 %v1240
    %2611 = vmatprep.subr.mxu0 %v1233
    %2612 = vmatpush1.msra.mxu0 %v1232
    %2613 = vmatprep.subr.mxu0 %v1225
    %2614 = vmatpush1.msra.mxu0 %v1224
    %2615 = vmatprep.subr.mxu0 %v1473
    %2616 = vmatpush2.msra.mxu0 %v1472
    %2617 = vmatprep.subr.mxu0 %v1465
    %2618 = vmatpush2.msra.mxu0 %v1464
    %2619 = vmatprep.subr.mxu0 %v1457
    %2620 = vmatpush2.msra.mxu0 %v1456
    %2621 = vmatprep.subr.mxu0 %v1449
    %2622 = vmatpush2.msra.mxu0 %v1448
    %2623 = vmatprep.subr.mxu0 %v1441
    %2624 = vmatpush2.msra.mxu0 %v1440
    %2625 = vmatprep.subr.mxu0 %v1433
    %2626 = vmatpush2.msra.mxu0 %v1432
    %2627 = vmatprep.subr.mxu0 %v1425
    %2628 = vmatpush2.msra.mxu0 %v1424
    %2629 = vmatprep.subr.mxu0 %v1417
    %2630 = vmatpush2.msra.mxu0 %v1416
    %2631 = vmatprep.subr.mxu0 %v1409
    %2632 = vmatpush2.msra.mxu0 %v1408
    %2633 = vmatprep.subr.mxu0 %v1401
    %2634 = vmatpush2.msra.mxu0 %v1400
    %2635 = vmatprep.subr.mxu0 %v1393
    %2636 = vmatpush2.msra.mxu0 %v1392
    %2637 = vmatprep.subr.mxu0 %v1385
    %2638 = vmatpush2.msra.mxu0 %v1384
    %2639 = vmatprep.subr.mxu0 %v1377
    %2640 = vmatpush2.msra.mxu0 %v1376
    %2641 = vmatprep.subr.mxu0 %v1369
    %2642 = vmatpush2.msra.mxu0 %v1368
    %2643 = vmatprep.subr.mxu0 %v1361
    %2644 = vmatpush2.msra.mxu0 %v1360
    %2645 = vmatprep.subr.mxu0 %v1353
    %2646 = vmatpush2.msra.mxu0 %v1352
    %2647 = vmatprep.mubr.f32.mxu0 %v2104
    %2648 = vmatmul.mubr.f32.gmra.mxu0 %v2103
    %v2649 = vpop.f32.mrf.mxu0
    %v2650 = vadd.f32 %v2144, %v2649
    %v2651 = vpop.f32.mrf.mxu0
    %v2652 = vadd.f32 %v2148, %v2651
    %2653 = vdwg.mxu0
    %2654 = vmatprep.subr.mxu0 %v1601
    %2655 = vmatpush1.msra.mxu0 %v1600
    %2656 = vmatprep.subr.mxu0 %v1593
    %2657 = vmatpush1.msra.mxu0 %v1592
    %2658 = vmatprep.subr.mxu0 %v1585
    %2659 = vmatpush1.msra.mxu0 %v1584
    %2660 = vmatprep.subr.mxu0 %v1577
    %2661 = vmatpush1.msra.mxu0 %v1576
    %2662 = vmatprep.subr.mxu0 %v1569
    %2663 = vmatpush1.msra.mxu0 %v1568
    %2664 = vmatprep.subr.mxu0 %v1561
    %2665 = vmatpush1.msra.mxu0 %v1560
    %2666 = vmatprep.subr.mxu0 %v1553
    %2667 = vmatpush1.msra.mxu0 %v1552
    %2668 = vmatprep.subr.mxu0 %v1545
    %2669 = vmatpush1.msra.mxu0 %v1544
    %2670 = vmatprep.subr.mxu0 %v1537
    %2671 = vmatpush1.msra.mxu0 %v1536
    %2672 = vmatprep.subr.mxu0 %v1529
    %2673 = vmatpush1.msra.mxu0 %v1528
    %2674 = vmatprep.subr.mxu0 %v1521
    %2675 = vmatpush1.msra.mxu0 %v1520
    %2676 = vmatprep.subr.mxu0 %v1513
    %2677 = vmatpush1.msra.mxu0 %v1512
    %2678 = vmatprep.subr.mxu0 %v1505
    %2679 = vmatpush1.msra.mxu0 %v1504
    %2680 = vmatprep.subr.mxu0 %v1497
    %2681 = vmatpush1.msra.mxu0 %v1496
    %2682 = vmatprep.subr.mxu0 %v1489
    %2683 = vmatpush1.msra.mxu0 %v1488
    %2684 = vmatprep.subr.mxu0 %v1481
    %2685 = vmatpush1.msra.mxu0 %v1480
    %2686 = vmatprep.subr.mxu0 %v1729
    %2687 = vmatpush2.msra.mxu0 %v1728
    %2688 = vmatprep.subr.mxu0 %v1721
    %2689 = vmatpush2.msra.mxu0 %v1720
    %2690 = vmatprep.subr.mxu0 %v1713
    %2691 = vmatpush2.msra.mxu0 %v1712
    %2692 = vmatprep.subr.mxu0 %v1705
    %2693 = vmatpush2.msra.mxu0 %v1704
    %2694 = vmatprep.subr.mxu0 %v1697
    %2695 = vmatpush2.msra.mxu0 %v1696
    %2696 = vmatprep.subr.mxu0 %v1689
    %2697 = vmatpush2.msra.mxu0 %v1688
    %2698 = vmatprep.subr.mxu0 %v1681
    %2699 = vmatpush2.msra.mxu0 %v1680
    %2700 = vmatprep.subr.mxu0 %v1673
    %2701 = vmatpush2.msra.mxu0 %v1672
    %2702 = vmatprep.subr.mxu0 %v1665
    %2703 = vmatpush2.msra.mxu0 %v1664
    %2704 = vmatprep.subr.mxu0 %v1657
    %2705 = vmatpush2.msra.mxu0 %v1656
    %2706 = vmatprep.subr.mxu0 %v1649
    %2707 = vmatpush2.msra.mxu0 %v1648
    %2708 = vmatprep.subr.mxu0 %v1641
    %2709 = vmatpush2.msra.mxu0 %v1640
    %2710 = vmatprep.subr.mxu0 %v1633
    %2711 = vmatpush2.msra.mxu0 %v1632
    %2712 = vmatprep.subr.mxu0 %v1625
    %2713 = vmatpush2.msra.mxu0 %v1624
    %2714 = vmatprep.subr.mxu0 %v1617
    %2715 = vmatpush2.msra.mxu0 %v1616
    %2716 = vmatprep.subr.mxu0 %v1609
    %2717 = vmatpush2.msra.mxu0 %v1608
    %2718 = vmatprep.mubr.f32.mxu0 %v2113
    %2719 = vmatmul.mubr.f32.gmra.mxu0 %v2112
    %v2720 = vpop.f32.mrf.mxu0
    %v2721 = vadd.f32 %v2650, %v2720
    %v2722 = vpop.f32.mrf.mxu0
    %v2723 = vadd.f32 %v2652, %v2722
    %2724 = vdwg.mxu0
    %v2725 = vxor.u32 %v2295, 2147483648
    %v2726 = vxor.u32 %v2297, 2147483648
    %v2727 = vmul.f32 %v2725, 1.442695
    %v2728 = vpow.pop %v2727
    %v2729 = vmul.f32 %v2726, 1.442695
    %v2730 = vpow.pop %v2729
    %v2731 = vadd.f32 %v2728, 1.0
    %v2732 = vadd.f32 %v2730, 1.0
    %v2733 = vrcp.pop %v2731
    %v2734 = vmul.f32 1.0, %v2733
    %v2735 = vrcp.pop %v2732
    %v2736 = vmul.f32 1.0, %v2735
    %v2737 = vxor.u32 %v2437, 2147483648
    %v2738 = vxor.u32 %v2439, 2147483648
    %v2739 = vmul.f32 %v2737, 1.442695
    %v2740 = vpow.pop %v2739
    %v2741 = vmul.f32 %v2738, 1.442695
    %v2742 = vpow.pop %v2741
    %v2743 = vadd.f32 %v2740, 1.0
    %v2744 = vadd.f32 %v2742, 1.0
    %v2745 = vrcp.pop %v2743
    %v2746 = vmul.f32 1.0, %v2745
    %v2747 = vrcp.pop %v2744
    %v2748 = vmul.f32 1.0, %v2747
    %v2749 = vtanh.pop %v2579
    %v2750 = vtanh.pop %v2581
    %v2751 = vxor.u32 %v2721, 2147483648
    %v2752 = vxor.u32 %v2723, 2147483648
    %v2753 = vmul.f32 %v2751, 1.442695
    %v2754 = vpow.pop %v2753
    %v2755 = vmul.f32 %v2752, 1.442695
    %v2756 = vpow.pop %v2755
    %v2757 = vadd.f32 %v2754, 1.0
    %v2758 = vadd.f32 %v2756, 1.0
    %v2759 = vrcp.pop %v2757
    %v2760 = vmul.f32 1.0, %v2759
    %v2761 = vrcp.pop %v2758
    %v2762 = vmul.f32 1.0, %v2761
    %v2765 = vunpack.c.l.s4 1983009808
    %v2766 = vunpack.c.0.s8 %v2765
    %v2767 = vlaneseq
    %v2768 = vshrl.u32 %v2767, 7
    %v2769 = vsub.s32 %v2766, %v2768
    %v2770 = vrot.slane %v1734, %v2769
    %v2771 = vcombine.high %v2770, %v2770
    %v2774 = vmul.f32 %v2746, %v2770
    %v2775 = vmul.f32 %v2748, %v2771
    %v2776 = vmul.f32 %v2734, %v2749
    %v2777 = vmul.f32 %v2736, %v2750
    %v2778 = vadd.f32 %v2774, %v2776
    %v2779 = vadd.f32 %v2775, %v2777
    %v2780 = vtanh.pop %v2778
    %v2781 = vtanh.pop %v2779
    %v2782 = vmul.f32 %v2760, %v2780
    %v2783 = vmul.f32 %v2762, %v2781
    %2784 = vst [vmem:[#allocation7] sm:$0x3] %v2782
    %2785 = vst [vmem:[#allocation7 + $0x8] sm:$0x3] %v2783
    %v2786 = vld [vmem:[#allocation6] sm:$0xc]
    %v2787 = vld [vmem:[#allocation6 + $0x8] sm:$0xc]
    %v2788 = vld [vmem:[#allocation6 + $0x10] sm:$0xc]
    %v2789 = vld [vmem:[#allocation6 + $0x18] sm:$0xc]
    %v2790 = vld [vmem:[#allocation6 + $0x20] sm:$0xc]
    %v2791 = vld [vmem:[#allocation6 + $0x28] sm:$0xc]
    %v2792 = vld [vmem:[#allocation6 + $0x30] sm:$0xc]
    %v2793 = vld [vmem:[#allocation6 + $0x38] sm:$0xc]
    %2794 = vmatprep.subr.mxu0 %v1083
    %2795 = vmatpush1.msra.mxu0 %v1082
    %2796 = vmatprep.subr.mxu0 %v1075
    %2797 = vmatpush1.msra.mxu0 %v1074
    %2798 = vmatprep.subr.mxu0 %v1067
    %2799 = vmatpush1.msra.mxu0 %v1066
    %2800 = vmatprep.subr.mxu0 %v1059
    %2801 = vmatpush1.msra.mxu0 %v1058
    %2802 = vmatprep.subr.mxu0 %v1051
    %2803 = vmatpush1.msra.mxu0 %v1050
    %2804 = vmatprep.subr.mxu0 %v1043
    %2805 = vmatpush1.msra.mxu0 %v1042
    %2806 = vmatprep.subr.mxu0 %v1035
    %2807 = vmatpush1.msra.mxu0 %v1034
    %2808 = vmatprep.subr.mxu0 %v1027
    %2809 = vmatpush1.msra.mxu0 %v1026
    %2810 = vmatprep.subr.mxu0 %v1019
    %2811 = vmatpush1.msra.mxu0 %v1018
    %2812 = vmatprep.subr.mxu0 %v1011
    %2813 = vmatpush1.msra.mxu0 %v1010
    %2814 = vmatprep.subr.mxu0 %v1003
    %2815 = vmatpush1.msra.mxu0 %v1002
    %2816 = vmatprep.subr.mxu0 %v995
    %2817 = vmatpush1.msra.mxu0 %v994
    %2818 = vmatprep.subr.mxu0 %v987
    %2819 = vmatpush1.msra.mxu0 %v986
    %2820 = vmatprep.subr.mxu0 %v979
    %2821 = vmatpush1.msra.mxu0 %v978
    %2822 = vmatprep.subr.mxu0 %v971
    %2823 = vmatpush1.msra.mxu0 %v970
    %2824 = vmatprep.subr.mxu0 %v963
    %2825 = vmatpush1.msra.mxu0 %v962
    %2826 = vmatprep.subr.mxu0 %v1211
    %2827 = vmatpush2.msra.mxu0 %v1210
    %2828 = vmatprep.subr.mxu0 %v1203
    %2829 = vmatpush2.msra.mxu0 %v1202
    %2830 = vmatprep.subr.mxu0 %v1195
    %2831 = vmatpush2.msra.mxu0 %v1194
    %2832 = vmatprep.subr.mxu0 %v1187
    %2833 = vmatpush2.msra.mxu0 %v1186
    %2834 = vmatprep.subr.mxu0 %v1179
    %2835 = vmatpush2.msra.mxu0 %v1178
    %2836 = vmatprep.subr.mxu0 %v1171
    %2837 = vmatpush2.msra.mxu0 %v1170
    %2838 = vmatprep.subr.mxu0 %v1163
    %2839 = vmatpush2.msra.mxu0 %v1162
    %2840 = vmatprep.subr.mxu0 %v1155
    %2841 = vmatpush2.msra.mxu0 %v1154
    %2842 = vmatprep.subr.mxu0 %v1147
    %2843 = vmatpush2.msra.mxu0 %v1146
    %2844 = vmatprep.subr.mxu0 %v1139
    %2845 = vmatpush2.msra.mxu0 %v1138
    %2846 = vmatprep.subr.mxu0 %v1131
    %2847 = vmatpush2.msra.mxu0 %v1130
    %2848 = vmatprep.subr.mxu0 %v1123
    %2849 = vmatpush2.msra.mxu0 %v1122
    %2850 = vmatprep.subr.mxu0 %v1115
    %2851 = vmatpush2.msra.mxu0 %v1114
    %2852 = vmatprep.subr.mxu0 %v1107
    %2853 = vmatpush2.msra.mxu0 %v1106
    %2854 = vmatprep.subr.mxu0 %v1099
    %2855 = vmatpush2.msra.mxu0 %v1098
    %2856 = vmatprep.subr.mxu0 %v1091
    %2857 = vmatpush2.msra.mxu0 %v1090
    %2858 = vmatprep.mubr.f32.mxu0 %v2104
    %2859 = vmatmul.mubr.f32.gmra.mxu0 %v2103
    %v2860 = vpop.f32.mrf.mxu0
    %v2861 = vadd.f32 0.0, %v2860
    %v2862 = vpop.f32.mrf.mxu0
    %v2863 = vadd.f32 0.0, %v2862
    %2864 = vdwg.mxu0
    %2865 = vmatprep.subr.mxu0 %v1085
    %2866 = vmatpush1.msra.mxu0 %v1084
    %2867 = vmatprep.subr.mxu0 %v1077
    %2868 = vmatpush1.msra.mxu0 %v1076
    %2869 = vmatprep.subr.mxu0 %v1069
    %2870 = vmatpush1.msra.mxu0 %v1068
    %2871 = vmatprep.subr.mxu0 %v1061
    %2872 = vmatpush1.msra.mxu0 %v1060
    %2873 = vmatprep.subr.mxu0 %v1053
    %2874 = vmatpush1.msra.mxu0 %v1052
    %2875 = vmatprep.subr.mxu0 %v1045
    %2876 = vmatpush1.msra.mxu0 %v1044
    %2877 = vmatprep.subr.mxu0 %v1037
    %2878 = vmatpush1.msra.mxu0 %v1036
    %2879 = vmatprep.subr.mxu0 %v1029
    %2880 = vmatpush1.msra.mxu0 %v1028
    %2881 = vmatprep.subr.mxu0 %v1021
    %2882 = vmatpush1.msra.mxu0 %v1020
    %2883 = vmatprep.subr.mxu0 %v1013
    %2884 = vmatpush1.msra.mxu0 %v1012
    %2885 = vmatprep.subr.mxu0 %v1005
    %2886 = vmatpush1.msra.mxu0 %v1004
    %2887 = vmatprep.subr.mxu0 %v997
    %2888 = vmatpush1.msra.mxu0 %v996
    %2889 = vmatprep.subr.mxu0 %v989
    %2890 = vmatpush1.msra.mxu0 %v988
    %2891 = vmatprep.subr.mxu0 %v981
    %2892 = vmatpush1.msra.mxu0 %v980
    %2893 = vmatprep.subr.mxu0 %v973
    %2894 = vmatpush1.msra.mxu0 %v972
    %2895 = vmatprep.subr.mxu0 %v965
    %2896 = vmatpush1.msra.mxu0 %v964
    %2897 = vmatprep.subr.mxu0 %v1213
    %2898 = vmatpush2.msra.mxu0 %v1212
    %2899 = vmatprep.subr.mxu0 %v1205
    %2900 = vmatpush2.msra.mxu0 %v1204
    %2901 = vmatprep.subr.mxu0 %v1197
    %2902 = vmatpush2.msra.mxu0 %v1196
    %2903 = vmatprep.subr.mxu0 %v1189
    %2904 = vmatpush2.msra.mxu0 %v1188
    %2905 = vmatprep.subr.mxu0 %v1181
    %2906 = vmatpush2.msra.mxu0 %v1180
    %2907 = vmatprep.subr.mxu0 %v1173
    %2908 = vmatpush2.msra.mxu0 %v1172
    %2909 = vmatprep.subr.mxu0 %v1165
    %2910 = vmatpush2.msra.mxu0 %v1164
    %2911 = vmatprep.subr.mxu0 %v1157
    %2912 = vmatpush2.msra.mxu0 %v1156
    %2913 = vmatprep.subr.mxu0 %v1149
    %2914 = vmatpush2.msra.mxu0 %v1148
    %2915 = vmatprep.subr.mxu0 %v1141
    %2916 = vmatpush2.msra.mxu0 %v1140
    %2917 = vmatprep.subr.mxu0 %v1133
    %2918 = vmatpush2.msra.mxu0 %v1132
    %2919 = vmatprep.subr.mxu0 %v1125
    %2920 = vmatpush2.msra.mxu0 %v1124
    %2921 = vmatprep.subr.mxu0 %v1117
    %2922 = vmatpush2.msra.mxu0 %v1116
    %2923 = vmatprep.subr.mxu0 %v1109
    %2924 = vmatpush2.msra.mxu0 %v1108
    %2925 = vmatprep.subr.mxu0 %v1101
    %2926 = vmatpush2.msra.mxu0 %v1100
    %2927 = vmatprep.subr.mxu0 %v1093
    %2928 = vmatpush2.msra.mxu0 %v1092
    %2929 = vmatprep.mubr.f32.mxu0 %v2104
    %2930 = vmatmul.mubr.f32.gmra.mxu0 %v2103
    %v2931 = vpop.f32.mrf.mxu0
    %v2932 = vadd.f32 0.0, %v2931
    %v2933 = vpop.f32.mrf.mxu0
    %v2934 = vadd.f32 0.0, %v2933
    %2935 = vdwg.mxu0
    %2936 = vmatprep.subr.mxu0 %v1087
    %2937 = vmatpush1.msra.mxu0 %v1086
    %2938 = vmatprep.subr.mxu0 %v1079
    %2939 = vmatpush1.msra.mxu0 %v1078
    %2940 = vmatprep.subr.mxu0 %v1071
    %2941 = vmatpush1.msra.mxu0 %v1070
    %2942 = vmatprep.subr.mxu0 %v1063
    %2943 = vmatpush1.msra.mxu0 %v1062
    %2944 = vmatprep.subr.mxu0 %v1055
    %2945 = vmatpush1.msra.mxu0 %v1054
    %2946 = vmatprep.subr.mxu0 %v1047
    %2947 = vmatpush1.msra.mxu0 %v1046
    %2948 = vmatprep.subr.mxu0 %v1039
    %2949 = vmatpush1.msra.mxu0 %v1038
    %2950 = vmatprep.subr.mxu0 %v1031
    %2951 = vmatpush1.msra.mxu0 %v1030
    %2952 = vmatprep.subr.mxu0 %v1023
    %2953 = vmatpush1.msra.mxu0 %v1022
    %2954 = vmatprep.subr.mxu0 %v1015
    %2955 = vmatpush1.msra.mxu0 %v1014
    %2956 = vmatprep.subr.mxu0 %v1007
    %2957 = vmatpush1.msra.mxu0 %v1006
    %2958 = vmatprep.subr.mxu0 %v999
    %2959 = vmatpush1.msra.mxu0 %v998
    %2960 = vmatprep.subr.mxu0 %v991
    %2961 = vmatpush1.msra.mxu0 %v990
    %2962 = vmatprep.subr.mxu0 %v983
    %2963 = vmatpush1.msra.mxu0 %v982
    %2964 = vmatprep.subr.mxu0 %v975
    %2965 = vmatpush1.msra.mxu0 %v974
    %2966 = vmatprep.subr.mxu0 %v967
    %2967 = vmatpush1.msra.mxu0 %v966
    %2968 = vmatprep.subr.mxu0 %v1215
    %2969 = vmatpush2.msra.mxu0 %v1214
    %2970 = vmatprep.subr.mxu0 %v1207
    %2971 = vmatpush2.msra.mxu0 %v1206
    %2972 = vmatprep.subr.mxu0 %v1199
    %2973 = vmatpush2.msra.mxu0 %v1198
    %2974 = vmatprep.subr.mxu0 %v1191
    %2975 = vmatpush2.msra.mxu0 %v1190
    %2976 = vmatprep.subr.mxu0 %v1183
    %2977 = vmatpush2.msra.mxu0 %v1182
    %2978 = vmatprep.subr.mxu0 %v1175
    %2979 = vmatpush2.msra.mxu0 %v1174
    %2980 = vmatprep.subr.mxu0 %v1167
    %2981 = vmatpush2.msra.mxu0 %v1166
    %2982 = vmatprep.subr.mxu0 %v1159
    %2983 = vmatpush2.msra.mxu0 %v1158
    %2984 = vmatprep.subr.mxu0 %v1151
    %2985 = vmatpush2.msra.mxu0 %v1150
    %2986 = vmatprep.subr.mxu0 %v1143
    %2987 = vmatpush2.msra.mxu0 %v1142
    %2988 = vmatprep.subr.mxu0 %v1135
    %2989 = vmatpush2.msra.mxu0 %v1134
    %2990 = vmatprep.subr.mxu0 %v1127
    %2991 = vmatpush2.msra.mxu0 %v1126
    %2992 = vmatprep.subr.mxu0 %v1119
    %2993 = vmatpush2.msra.mxu0 %v1118
    %2994 = vmatprep.subr.mxu0 %v1111
    %2995 = vmatpush2.msra.mxu0 %v1110
    %2996 = vmatprep.subr.mxu0 %v1103
    %2997 = vmatpush2.msra.mxu0 %v1102
    %2998 = vmatprep.subr.mxu0 %v1095
    %2999 = vmatpush2.msra.mxu0 %v1094
    %3000 = vmatprep.mubr.f32.mxu0 %v2104
    %3001 = vmatmul.mubr.f32.gmra.mxu0 %v2103
    %v3002 = vpop.f32.mrf.mxu0
    %v3003 = vadd.f32 0.0, %v3002
    %v3004 = vpop.f32.mrf.mxu0
    %v3005 = vadd.f32 0.0, %v3004
    %3006 = vdwg.mxu0
    %3007 = vmatprep.subr.mxu0 %v1089
    %3008 = vmatpush1.msra.mxu0 %v1088
    %3009 = vmatprep.subr.mxu0 %v1081
    %3010 = vmatpush1.msra.mxu0 %v1080
    %3011 = vmatprep.subr.mxu0 %v1073
    %3012 = vmatpush1.msra.mxu0 %v1072
    %3013 = vmatprep.subr.mxu0 %v1065
    %3014 = vmatpush1.msra.mxu0 %v1064
    %3015 = vmatprep.subr.mxu0 %v1057
    %3016 = vmatpush1.msra.mxu0 %v1056
    %3017 = vmatprep.subr.mxu0 %v1049
    %3018 = vmatpush1.msra.mxu0 %v1048
    %3019 = vmatprep.subr.mxu0 %v1041
    %3020 = vmatpush1.msra.mxu0 %v1040
    %3021 = vmatprep.subr.mxu0 %v1033
    %3022 = vmatpush1.msra.mxu0 %v1032
    %3023 = vmatprep.subr.mxu0 %v1025
    %3024 = vmatpush1.msra.mxu0 %v1024
    %3025 = vmatprep.subr.mxu0 %v1017
    %3026 = vmatpush1.msra.mxu0 %v1016
    %3027 = vmatprep.subr.mxu0 %v1009
    %3028 = vmatpush1.msra.mxu0 %v1008
    %3029 = vmatprep.subr.mxu0 %v1001
    %3030 = vmatpush1.msra.mxu0 %v1000
    %3031 = vmatprep.subr.mxu0 %v993
    %3032 = vmatpush1.msra.mxu0 %v992
    %3033 = vmatprep.subr.mxu0 %v985
    %3034 = vmatpush1.msra.mxu0 %v984
    %3035 = vmatprep.subr.mxu0 %v977
    %3036 = vmatpush1.msra.mxu0 %v976
    %3037 = vmatprep.subr.mxu0 %v969
    %3038 = vmatpush1.msra.mxu0 %v968
    %3039 = vmatprep.subr.mxu0 %v1217
    %3040 = vmatpush2.msra.mxu0 %v1216
    %3041 = vmatprep.subr.mxu0 %v1209
    %3042 = vmatpush2.msra.mxu0 %v1208
    %3043 = vmatprep.subr.mxu0 %v1201
    %3044 = vmatpush2.msra.mxu0 %v1200
    %3045 = vmatprep.subr.mxu0 %v1193
    %3046 = vmatpush2.msra.mxu0 %v1192
    %3047 = vmatprep.subr.mxu0 %v1185
    %3048 = vmatpush2.msra.mxu0 %v1184
    %3049 = vmatprep.subr.mxu0 %v1177
    %3050 = vmatpush2.msra.mxu0 %v1176
    %3051 = vmatprep.subr.mxu0 %v1169
    %3052 = vmatpush2.msra.mxu0 %v1168
    %3053 = vmatprep.subr.mxu0 %v1161
    %3054 = vmatpush2.msra.mxu0 %v1160
    %3055 = vmatprep.subr.mxu0 %v1153
    %3056 = vmatpush2.msra.mxu0 %v1152
    %3057 = vmatprep.subr.mxu0 %v1145
    %3058 = vmatpush2.msra.mxu0 %v1144
    %3059 = vmatprep.subr.mxu0 %v1137
    %3060 = vmatpush2.msra.mxu0 %v1136
    %3061 = vmatprep.subr.mxu0 %v1129
    %3062 = vmatpush2.msra.mxu0 %v1128
    %3063 = vmatprep.subr.mxu0 %v1121
    %3064 = vmatpush2.msra.mxu0 %v1120
    %3065 = vmatprep.subr.mxu0 %v1113
    %3066 = vmatpush2.msra.mxu0 %v1112
    %3067 = vmatprep.subr.mxu0 %v1105
    %3068 = vmatpush2.msra.mxu0 %v1104
    %3069 = vmatprep.subr.mxu0 %v1097
    %3070 = vmatpush2.msra.mxu0 %v1096
    %3071 = vmatprep.mubr.f32.mxu0 %v2104
    %3072 = vmatmul.mubr.f32.gmra.mxu0 %v2103
    %v3073 = vpop.f32.mrf.mxu0
    %v3074 = vadd.f32 0.0, %v3073
    %v3075 = vpop.f32.mrf.mxu0
    %v3076 = vadd.f32 0.0, %v3075
    %3077 = vdwg.mxu0
    %v3086 = vrot.slane %v2861, 6
    %v3087 = vrot.slane %v2863, 6
    %v3088 = vrot.slane %v2932, 6
    %v3089 = vrot.slane %v2934, 6
    %v3090 = vrot.slane %v3003, 6
    %v3091 = vrot.slane %v3005, 6
    %v3092 = vrot.slane %v3074, 6
    %v3093 = vrot.slane %v3076, 6
    %v3102 = vadd.f32 %v2786, %v3086
    %v3103 = vadd.f32 %v2787, %v3087
    %v3104 = vadd.f32 %v2788, %v3088
    %v3105 = vadd.f32 %v2789, %v3089
    %v3106 = vadd.f32 %v2790, %v3090
    %v3107 = vadd.f32 %v2791, %v3091
    %v3108 = vadd.f32 %v2792, %v3092
    %v3109 = vadd.f32 %v2793, %v3093
    %v3110 = vxor.u32 %v3102, 2147483648
    %v3111 = vxor.u32 %v3103, 2147483648
    %v3112 = vmul.f32 %v3110, 1.442695
    %v3113 = vpow.pop %v3112
    %v3114 = vmul.f32 %v3111, 1.442695
    %v3115 = vpow.pop %v3114
    %v3116 = vadd.f32 %v3113, 1.0
    %v3117 = vadd.f32 %v3115, 1.0
    %v3118 = vrcp.pop %v3116
    %v3119 = vmul.f32 1.0, %v3118
    %v3120 = vrcp.pop %v3117
    %v3121 = vmul.f32 1.0, %v3120
    %v3122 = vxor.u32 %v3104, 2147483648
    %v3123 = vxor.u32 %v3105, 2147483648
    %v3124 = vmul.f32 %v3122, 1.442695
    %v3125 = vpow.pop %v3124
    %v3126 = vmul.f32 %v3123, 1.442695
    %v3127 = vpow.pop %v3126
    %v3128 = vadd.f32 %v3125, 1.0
    %v3129 = vadd.f32 %v3127, 1.0
    %v3130 = vrcp.pop %v3128
    %v3131 = vmul.f32 1.0, %v3130
    %v3132 = vrcp.pop %v3129
    %v3133 = vmul.f32 1.0, %v3132
    %v3134 = vtanh.pop %v3106
    %v3135 = vtanh.pop %v3107
    %v3136 = vxor.u32 %v3108, 2147483648
    %v3137 = vxor.u32 %v3109, 2147483648
    %v3138 = vmul.f32 %v3136, 1.442695
    %v3139 = vpow.pop %v3138
    %v3140 = vmul.f32 %v3137, 1.442695
    %v3141 = vpow.pop %v3140
    %v3142 = vadd.f32 %v3139, 1.0
    %v3143 = vadd.f32 %v3141, 1.0
    %v3144 = vrcp.pop %v3142
    %v3145 = vmul.f32 1.0, %v3144
    %v3146 = vrcp.pop %v3143
    %v3147 = vmul.f32 1.0, %v3146
    %v3150 = vrot.slane %v2099, 6
    %v3151 = vrot.slane %v2100, 6
    %v3154 = vmul.f32 %v3131, %v3150
    %v3155 = vmul.f32 %v3133, %v3151
    %v3156 = vmul.f32 %v3119, %v3134
    %v3157 = vmul.f32 %v3121, %v3135
    %v3158 = vadd.f32 %v3154, %v3156
    %v3159 = vadd.f32 %v3155, %v3157
    %v3160 = vtanh.pop %v3158
    %v3161 = vtanh.pop %v3159
    %v3162 = vmul.f32 %v3145, %v3160
    %v3163 = vmul.f32 %v3147, %v3161
    %v3166 = vrot.slane %v2782, 6
    %v3167 = vrot.slane %v2783, 6
    %v3170 = vrot.slane %v3162, 2
    %v3171 = vrot.slane %v3163, 2
    %v3172 = vrot.slane %v3166, 2
    %v3173 = vrot.slane %v3167, 2
    %3178 = vmatprep.subr.mxu0 %v1339
    %3179 = vmatpush1.msra.mxu0 %v1338
    %3180 = vmatprep.subr.mxu0 %v1331
    %3181 = vmatpush1.msra.mxu0 %v1330
    %3182 = vmatprep.subr.mxu0 %v1323
    %3183 = vmatpush1.msra.mxu0 %v1322
    %3184 = vmatprep.subr.mxu0 %v1315
    %3185 = vmatpush1.msra.mxu0 %v1314
    %3186 = vmatprep.subr.mxu0 %v1307
    %3187 = vmatpush1.msra.mxu0 %v1306
    %3188 = vmatprep.subr.mxu0 %v1299
    %3189 = vmatpush1.msra.mxu0 %v1298
    %3190 = vmatprep.subr.mxu0 %v1291
    %3191 = vmatpush1.msra.mxu0 %v1290
    %3192 = vmatprep.subr.mxu0 %v1283
    %3193 = vmatpush1.msra.mxu0 %v1282
    %3194 = vmatprep.subr.mxu0 %v1275
    %3195 = vmatpush1.msra.mxu0 %v1274
    %3196 = vmatprep.subr.mxu0 %v1267
    %3197 = vmatpush1.msra.mxu0 %v1266
    %3198 = vmatprep.subr.mxu0 %v1259
    %3199 = vmatpush1.msra.mxu0 %v1258
    %3200 = vmatprep.subr.mxu0 %v1251
    %3201 = vmatpush1.msra.mxu0 %v1250
    %3202 = vmatprep.subr.mxu0 %v1243
    %3203 = vmatpush1.msra.mxu0 %v1242
    %3204 = vmatprep.subr.mxu0 %v1235
    %3205 = vmatpush1.msra.mxu0 %v1234
    %3206 = vmatprep.subr.mxu0 %v1227
    %3207 = vmatpush1.msra.mxu0 %v1226
    %3208 = vmatprep.subr.mxu0 %v1219
    %3209 = vmatpush1.msra.mxu0 %v1218
    %3210 = vmatprep.subr.mxu0 %v1467
    %3211 = vmatpush2.msra.mxu0 %v1466
    %3212 = vmatprep.subr.mxu0 %v1459
    %3213 = vmatpush2.msra.mxu0 %v1458
    %3214 = vmatprep.subr.mxu0 %v1451
    %3215 = vmatpush2.msra.mxu0 %v1450
    %3216 = vmatprep.subr.mxu0 %v1443
    %3217 = vmatpush2.msra.mxu0 %v1442
    %3218 = vmatprep.subr.mxu0 %v1435
    %3219 = vmatpush2.msra.mxu0 %v1434
    %3220 = vmatprep.subr.mxu0 %v1427
    %3221 = vmatpush2.msra.mxu0 %v1426
    %3222 = vmatprep.subr.mxu0 %v1419
    %3223 = vmatpush2.msra.mxu0 %v1418
    %3224 = vmatprep.subr.mxu0 %v1411
    %3225 = vmatpush2.msra.mxu0 %v1410
    %3226 = vmatprep.subr.mxu0 %v1403
    %3227 = vmatpush2.msra.mxu0 %v1402
    %3228 = vmatprep.subr.mxu0 %v1395
    %3229 = vmatpush2.msra.mxu0 %v1394
    %3230 = vmatprep.subr.mxu0 %v1387
    %3231 = vmatpush2.msra.mxu0 %v1386
    %3232 = vmatprep.subr.mxu0 %v1379
    %3233 = vmatpush2.msra.mxu0 %v1378
    %3234 = vmatprep.subr.mxu0 %v1371
    %3235 = vmatpush2.msra.mxu0 %v1370
    %3236 = vmatprep.subr.mxu0 %v1363
    %3237 = vmatpush2.msra.mxu0 %v1362
    %3238 = vmatprep.subr.mxu0 %v1355
    %3239 = vmatpush2.msra.mxu0 %v1354
    %3240 = vmatprep.subr.mxu0 %v1347
    %3241 = vmatpush2.msra.mxu0 %v1346
    %3242 = vmatprep.mubr.f32.mxu0 %v3171
    %3243 = vmatmul.mubr.f32.gmra.mxu0 %v3170
    %v3244 = vpop.f32.mrf.mxu0
    %v3245 = vadd.f32 %v2120, %v3244
    %v3246 = vpop.f32.mrf.mxu0
    %v3247 = vadd.f32 %v2124, %v3246
    %3248 = vdwg.mxu0
    %3249 = vmatprep.subr.mxu0 %v1595
    %3250 = vmatpush1.msra.mxu0 %v1594
    %3251 = vmatprep.subr.mxu0 %v1587
    %3252 = vmatpush1.msra.mxu0 %v1586
    %3253 = vmatprep.subr.mxu0 %v1579
    %3254 = vmatpush1.msra.mxu0 %v1578
    %3255 = vmatprep.subr.mxu0 %v1571
    %3256 = vmatpush1.msra.mxu0 %v1570
    %3257 = vmatprep.subr.mxu0 %v1563
    %3258 = vmatpush1.msra.mxu0 %v1562
    %3259 = vmatprep.subr.mxu0 %v1555
    %3260 = vmatpush1.msra.mxu0 %v1554
    %3261 = vmatprep.subr.mxu0 %v1547
    %3262 = vmatpush1.msra.mxu0 %v1546
    %3263 = vmatprep.subr.mxu0 %v1539
    %3264 = vmatpush1.msra.mxu0 %v1538
    %3265 = vmatprep.subr.mxu0 %v1531
    %3266 = vmatpush1.msra.mxu0 %v1530
    %3267 = vmatprep.subr.mxu0 %v1523
    %3268 = vmatpush1.msra.mxu0 %v1522
    %3269 = vmatprep.subr.mxu0 %v1515
    %3270 = vmatpush1.msra.mxu0 %v1514
    %3271 = vmatprep.subr.mxu0 %v1507
    %3272 = vmatpush1.msra.mxu0 %v1506
    %3273 = vmatprep.subr.mxu0 %v1499
    %3274 = vmatpush1.msra.mxu0 %v1498
    %3275 = vmatprep.subr.mxu0 %v1491
    %3276 = vmatpush1.msra.mxu0 %v1490
    %3277 = vmatprep.subr.mxu0 %v1483
    %3278 = vmatpush1.msra.mxu0 %v1482
    %3279 = vmatprep.subr.mxu0 %v1475
    %3280 = vmatpush1.msra.mxu0 %v1474
    %3281 = vmatprep.subr.mxu0 %v1723
    %3282 = vmatpush2.msra.mxu0 %v1722
    %3283 = vmatprep.subr.mxu0 %v1715
    %3284 = vmatpush2.msra.mxu0 %v1714
    %3285 = vmatprep.subr.mxu0 %v1707
    %3286 = vmatpush2.msra.mxu0 %v1706
    %3287 = vmatprep.subr.mxu0 %v1699
    %3288 = vmatpush2.msra.mxu0 %v1698
    %3289 = vmatprep.subr.mxu0 %v1691
    %3290 = vmatpush2.msra.mxu0 %v1690
    %3291 = vmatprep.subr.mxu0 %v1683
    %3292 = vmatpush2.msra.mxu0 %v1682
    %3293 = vmatprep.subr.mxu0 %v1675
    %3294 = vmatpush2.msra.mxu0 %v1674
    %3295 = vmatprep.subr.mxu0 %v1667
    %3296 = vmatpush2.msra.mxu0 %v1666
    %3297 = vmatprep.subr.mxu0 %v1659
    %3298 = vmatpush2.msra.mxu0 %v1658
    %3299 = vmatprep.subr.mxu0 %v1651
    %3300 = vmatpush2.msra.mxu0 %v1650
    %3301 = vmatprep.subr.mxu0 %v1643
    %3302 = vmatpush2.msra.mxu0 %v1642
    %3303 = vmatprep.subr.mxu0 %v1635
    %3304 = vmatpush2.msra.mxu0 %v1634
    %3305 = vmatprep.subr.mxu0 %v1627
    %3306 = vmatpush2.msra.mxu0 %v1626
    %3307 = vmatprep.subr.mxu0 %v1619
    %3308 = vmatpush2.msra.mxu0 %v1618
    %3309 = vmatprep.subr.mxu0 %v1611
    %3310 = vmatpush2.msra.mxu0 %v1610
    %3311 = vmatprep.subr.mxu0 %v1603
    %3312 = vmatpush2.msra.mxu0 %v1602
    %3313 = vmatprep.mubr.f32.mxu0 %v3173
    %3314 = vmatmul.mubr.f32.gmra.mxu0 %v3172
    %v3315 = vpop.f32.mrf.mxu0
    %v3316 = vadd.f32 %v3245, %v3315
    %v3317 = vpop.f32.mrf.mxu0
    %v3318 = vadd.f32 %v3247, %v3317
    %3319 = vdwg.mxu0
    %3320 = vmatprep.subr.mxu0 %v1341
    %3321 = vmatpush1.msra.mxu0 %v1340
    %3322 = vmatprep.subr.mxu0 %v1333
    %3323 = vmatpush1.msra.mxu0 %v1332
    %3324 = vmatprep.subr.mxu0 %v1325
    %3325 = vmatpush1.msra.mxu0 %v1324
    %3326 = vmatprep.subr.mxu0 %v1317
    %3327 = vmatpush1.msra.mxu0 %v1316
    %3328 = vmatprep.subr.mxu0 %v1309
    %3329 = vmatpush1.msra.mxu0 %v1308
    %3330 = vmatprep.subr.mxu0 %v1301
    %3331 = vmatpush1.msra.mxu0 %v1300
    %3332 = vmatprep.subr.mxu0 %v1293
    %3333 = vmatpush1.msra.mxu0 %v1292
    %3334 = vmatprep.subr.mxu0 %v1285
    %3335 = vmatpush1.msra.mxu0 %v1284
    %3336 = vmatprep.subr.mxu0 %v1277
    %3337 = vmatpush1.msra.mxu0 %v1276
    %3338 = vmatprep.subr.mxu0 %v1269
    %3339 = vmatpush1.msra.mxu0 %v1268
    %3340 = vmatprep.subr.mxu0 %v1261
    %3341 = vmatpush1.msra.mxu0 %v1260
    %3342 = vmatprep.subr.mxu0 %v1253
    %3343 = vmatpush1.msra.mxu0 %v1252
    %3344 = vmatprep.subr.mxu0 %v1245
    %3345 = vmatpush1.msra.mxu0 %v1244
    %3346 = vmatprep.subr.mxu0 %v1237
    %3347 = vmatpush1.msra.mxu0 %v1236
    %3348 = vmatprep.subr.mxu0 %v1229
    %3349 = vmatpush1.msra.mxu0 %v1228
    %3350 = vmatprep.subr.mxu0 %v1221
    %3351 = vmatpush1.msra.mxu0 %v1220
    %3352 = vmatprep.subr.mxu0 %v1469
    %3353 = vmatpush2.msra.mxu0 %v1468
    %3354 = vmatprep.subr.mxu0 %v1461
    %3355 = vmatpush2.msra.mxu0 %v1460
    %3356 = vmatprep.subr.mxu0 %v1453
    %3357 = vmatpush2.msra.mxu0 %v1452
    %3358 = vmatprep.subr.mxu0 %v1445
    %3359 = vmatpush2.msra.mxu0 %v1444
    %3360 = vmatprep.subr.mxu0 %v1437
    %3361 = vmatpush2.msra.mxu0 %v1436
    %3362 = vmatprep.subr.mxu0 %v1429
    %3363 = vmatpush2.msra.mxu0 %v1428
    %3364 = vmatprep.subr.mxu0 %v1421
    %3365 = vmatpush2.msra.mxu0 %v1420
    %3366 = vmatprep.subr.mxu0 %v1413
    %3367 = vmatpush2.msra.mxu0 %v1412
    %3368 = vmatprep.subr.mxu0 %v1405
    %3369 = vmatpush2.msra.mxu0 %v1404
    %3370 = vmatprep.subr.mxu0 %v1397
    %3371 = vmatpush2.msra.mxu0 %v1396
    %3372 = vmatprep.subr.mxu0 %v1389
    %3373 = vmatpush2.msra.mxu0 %v1388
    %3374 = vmatprep.subr.mxu0 %v1381
    %3375 = vmatpush2.msra.mxu0 %v1380
    %3376 = vmatprep.subr.mxu0 %v1373
    %3377 = vmatpush2.msra.mxu0 %v1372
    %3378 = vmatprep.subr.mxu0 %v1365
    %3379 = vmatpush2.msra.mxu0 %v1364
    %3380 = vmatprep.subr.mxu0 %v1357
    %3381 = vmatpush2.msra.mxu0 %v1356
    %3382 = vmatprep.subr.mxu0 %v1349
    %3383 = vmatpush2.msra.mxu0 %v1348
    %3384 = vmatprep.mubr.f32.mxu0 %v3171
    %3385 = vmatmul.mubr.f32.gmra.mxu0 %v3170
    %v3386 = vpop.f32.mrf.mxu0
    %v3387 = vadd.f32 %v2128, %v3386
    %v3388 = vpop.f32.mrf.mxu0
    %v3389 = vadd.f32 %v2132, %v3388
    %3390 = vdwg.mxu0
    %3391 = vmatprep.subr.mxu0 %v1597
    %3392 = vmatpush1.msra.mxu0 %v1596
    %3393 = vmatprep.subr.mxu0 %v1589
    %3394 = vmatpush1.msra.mxu0 %v1588
    %3395 = vmatprep.subr.mxu0 %v1581
    %3396 = vmatpush1.msra.mxu0 %v1580
    %3397 = vmatprep.subr.mxu0 %v1573
    %3398 = vmatpush1.msra.mxu0 %v1572
    %3399 = vmatprep.subr.mxu0 %v1565
    %3400 = vmatpush1.msra.mxu0 %v1564
    %3401 = vmatprep.subr.mxu0 %v1557
    %3402 = vmatpush1.msra.mxu0 %v1556
    %3403 = vmatprep.subr.mxu0 %v1549
    %3404 = vmatpush1.msra.mxu0 %v1548
    %3405 = vmatprep.subr.mxu0 %v1541
    %3406 = vmatpush1.msra.mxu0 %v1540
    %3407 = vmatprep.subr.mxu0 %v1533
    %3408 = vmatpush1.msra.mxu0 %v1532
    %3409 = vmatprep.subr.mxu0 %v1525
    %3410 = vmatpush1.msra.mxu0 %v1524
    %3411 = vmatprep.subr.mxu0 %v1517
    %3412 = vmatpush1.msra.mxu0 %v1516
    %3413 = vmatprep.subr.mxu0 %v1509
    %3414 = vmatpush1.msra.mxu0 %v1508
    %3415 = vmatprep.subr.mxu0 %v1501
    %3416 = vmatpush1.msra.mxu0 %v1500
    %3417 = vmatprep.subr.mxu0 %v1493
    %3418 = vmatpush1.msra.mxu0 %v1492
    %3419 = vmatprep.subr.mxu0 %v1485
    %3420 = vmatpush1.msra.mxu0 %v1484
    %3421 = vmatprep.subr.mxu0 %v1477
    %3422 = vmatpush1.msra.mxu0 %v1476
    %3423 = vmatprep.subr.mxu0 %v1725
    %3424 = vmatpush2.msra.mxu0 %v1724
    %3425 = vmatprep.subr.mxu0 %v1717
    %3426 = vmatpush2.msra.mxu0 %v1716
    %3427 = vmatprep.subr.mxu0 %v1709
    %3428 = vmatpush2.msra.mxu0 %v1708
    %3429 = vmatprep.subr.mxu0 %v1701
    %3430 = vmatpush2.msra.mxu0 %v1700
    %3431 = vmatprep.subr.mxu0 %v1693
    %3432 = vmatpush2.msra.mxu0 %v1692
    %3433 = vmatprep.subr.mxu0 %v1685
    %3434 = vmatpush2.msra.mxu0 %v1684
    %3435 = vmatprep.subr.mxu0 %v1677
    %3436 = vmatpush2.msra.mxu0 %v1676
    %3437 = vmatprep.subr.mxu0 %v1669
    %3438 = vmatpush2.msra.mxu0 %v1668
    %3439 = vmatprep.subr.mxu0 %v1661
    %3440 = vmatpush2.msra.mxu0 %v1660
    %3441 = vmatprep.subr.mxu0 %v1653
    %3442 = vmatpush2.msra.mxu0 %v1652
    %3443 = vmatprep.subr.mxu0 %v1645
    %3444 = vmatpush2.msra.mxu0 %v1644
    %3445 = vmatprep.subr.mxu0 %v1637
    %3446 = vmatpush2.msra.mxu0 %v1636
    %3447 = vmatprep.subr.mxu0 %v1629
    %3448 = vmatpush2.msra.mxu0 %v1628
    %3449 = vmatprep.subr.mxu0 %v1621
    %3450 = vmatpush2.msra.mxu0 %v1620
    %3451 = vmatprep.subr.mxu0 %v1613
    %3452 = vmatpush2.msra.mxu0 %v1612
    %3453 = vmatprep.subr.mxu0 %v1605
    %3454 = vmatpush2.msra.mxu0 %v1604
    %3455 = vmatprep.mubr.f32.mxu0 %v3173
    %3456 = vmatmul.mubr.f32.gmra.mxu0 %v3172
    %v3457 = vpop.f32.mrf.mxu0
    %v3458 = vadd.f32 %v3387, %v3457
    %v3459 = vpop.f32.mrf.mxu0
    %v3460 = vadd.f32 %v3389, %v3459
    %3461 = vdwg.mxu0
    %3462 = vmatprep.subr.mxu0 %v1343
    %3463 = vmatpush1.msra.mxu0 %v1342
    %3464 = vmatprep.subr.mxu0 %v1335
    %3465 = vmatpush1.msra.mxu0 %v1334
    %3466 = vmatprep.subr.mxu0 %v1327
    %3467 = vmatpush1.msra.mxu0 %v1326
    %3468 = vmatprep.subr.mxu0 %v1319
    %3469 = vmatpush1.msra.mxu0 %v1318
    %3470 = vmatprep.subr.mxu0 %v1311
    %3471 = vmatpush1.msra.mxu0 %v1310
    %3472 = vmatprep.subr.mxu0 %v1303
    %3473 = vmatpush1.msra.mxu0 %v1302
    %3474 = vmatprep.subr.mxu0 %v1295
    %3475 = vmatpush1.msra.mxu0 %v1294
    %3476 = vmatprep.subr.mxu0 %v1287
    %3477 = vmatpush1.msra.mxu0 %v1286
    %3478 = vmatprep.subr.mxu0 %v1279
    %3479 = vmatpush1.msra.mxu0 %v1278
    %3480 = vmatprep.subr.mxu0 %v1271
    %3481 = vmatpush1.msra.mxu0 %v1270
    %3482 = vmatprep.subr.mxu0 %v1263
    %3483 = vmatpush1.msra.mxu0 %v1262
    %3484 = vmatprep.subr.mxu0 %v1255
    %3485 = vmatpush1.msra.mxu0 %v1254
    %3486 = vmatprep.subr.mxu0 %v1247
    %3487 = vmatpush1.msra.mxu0 %v1246
    %3488 = vmatprep.subr.mxu0 %v1239
    %3489 = vmatpush1.msra.mxu0 %v1238
    %3490 = vmatprep.subr.mxu0 %v1231
    %3491 = vmatpush1.msra.mxu0 %v1230
    %3492 = vmatprep.subr.mxu0 %v1223
    %3493 = vmatpush1.msra.mxu0 %v1222
    %3494 = vmatprep.subr.mxu0 %v1471
    %3495 = vmatpush2.msra.mxu0 %v1470
    %3496 = vmatprep.subr.mxu0 %v1463
    %3497 = vmatpush2.msra.mxu0 %v1462
    %3498 = vmatprep.subr.mxu0 %v1455
    %3499 = vmatpush2.msra.mxu0 %v1454
    %3500 = vmatprep.subr.mxu0 %v1447
    %3501 = vmatpush2.msra.mxu0 %v1446
    %3502 = vmatprep.subr.mxu0 %v1439
    %3503 = vmatpush2.msra.mxu0 %v1438
    %3504 = vmatprep.subr.mxu0 %v1431
    %3505 = vmatpush2.msra.mxu0 %v1430
    %3506 = vmatprep.subr.mxu0 %v1423
    %3507 = vmatpush2.msra.mxu0 %v1422
    %3508 = vmatprep.subr.mxu0 %v1415
    %3509 = vmatpush2.msra.mxu0 %v1414
    %3510 = vmatprep.subr.mxu0 %v1407
    %3511 = vmatpush2.msra.mxu0 %v1406
    %3512 = vmatprep.subr.mxu0 %v1399
    %3513 = vmatpush2.msra.mxu0 %v1398
    %3514 = vmatprep.subr.mxu0 %v1391
    %3515 = vmatpush2.msra.mxu0 %v1390
    %3516 = vmatprep.subr.mxu0 %v1383
    %3517 = vmatpush2.msra.mxu0 %v1382
    %3518 = vmatprep.subr.mxu0 %v1375
    %3519 = vmatpush2.msra.mxu0 %v1374
    %3520 = vmatprep.subr.mxu0 %v1367
    %3521 = vmatpush2.msra.mxu0 %v1366
    %3522 = vmatprep.subr.mxu0 %v1359
    %3523 = vmatpush2.msra.mxu0 %v1358
    %3524 = vmatprep.subr.mxu0 %v1351
    %3525 = vmatpush2.msra.mxu0 %v1350
    %3526 = vmatprep.mubr.f32.mxu0 %v3171
    %3527 = vmatmul.mubr.f32.gmra.mxu0 %v3170
    %v3528 = vpop.f32.mrf.mxu0
    %v3529 = vadd.f32 %v2136, %v3528
    %v3530 = vpop.f32.mrf.mxu0
    %v3531 = vadd.f32 %v2140, %v3530
    %3532 = vdwg.mxu0
    %3533 = vmatprep.subr.mxu0 %v1599
    %3534 = vmatpush1.msra.mxu0 %v1598
    %3535 = vmatprep.subr.mxu0 %v1591
    %3536 = vmatpush1.msra.mxu0 %v1590
    %3537 = vmatprep.subr.mxu0 %v1583
    %3538 = vmatpush1.msra.mxu0 %v1582
    %3539 = vmatprep.subr.mxu0 %v1575
    %3540 = vmatpush1.msra.mxu0 %v1574
    %3541 = vmatprep.subr.mxu0 %v1567
    %3542 = vmatpush1.msra.mxu0 %v1566
    %3543 = vmatprep.subr.mxu0 %v1559
    %3544 = vmatpush1.msra.mxu0 %v1558
    %3545 = vmatprep.subr.mxu0 %v1551
    %3546 = vmatpush1.msra.mxu0 %v1550
    %3547 = vmatprep.subr.mxu0 %v1543
    %3548 = vmatpush1.msra.mxu0 %v1542
    %3549 = vmatprep.subr.mxu0 %v1535
    %3550 = vmatpush1.msra.mxu0 %v1534
    %3551 = vmatprep.subr.mxu0 %v1527
    %3552 = vmatpush1.msra.mxu0 %v1526
    %3553 = vmatprep.subr.mxu0 %v1519
    %3554 = vmatpush1.msra.mxu0 %v1518
    %3555 = vmatprep.subr.mxu0 %v1511
    %3556 = vmatpush1.msra.mxu0 %v1510
    %3557 = vmatprep.subr.mxu0 %v1503
    %3558 = vmatpush1.msra.mxu0 %v1502
    %3559 = vmatprep.subr.mxu0 %v1495
    %3560 = vmatpush1.msra.mxu0 %v1494
    %3561 = vmatprep.subr.mxu0 %v1487
    %3562 = vmatpush1.msra.mxu0 %v1486
    %3563 = vmatprep.subr.mxu0 %v1479
    %3564 = vmatpush1.msra.mxu0 %v1478
    %3565 = vmatprep.subr.mxu0 %v1727
    %3566 = vmatpush2.msra.mxu0 %v1726
    %3567 = vmatprep.subr.mxu0 %v1719
    %3568 = vmatpush2.msra.mxu0 %v1718
    %3569 = vmatprep.subr.mxu0 %v1711
    %3570 = vmatpush2.msra.mxu0 %v1710
    %3571 = vmatprep.subr.mxu0 %v1703
    %3572 = vmatpush2.msra.mxu0 %v1702
    %3573 = vmatprep.subr.mxu0 %v1695
    %3574 = vmatpush2.msra.mxu0 %v1694
    %3575 = vmatprep.subr.mxu0 %v1687
    %3576 = vmatpush2.msra.mxu0 %v1686
    %3577 = vmatprep.subr.mxu0 %v1679
    %3578 = vmatpush2.msra.mxu0 %v1678
    %3579 = vmatprep.subr.mxu0 %v1671
    %3580 = vmatpush2.msra.mxu0 %v1670
    %3581 = vmatprep.subr.mxu0 %v1663
    %3582 = vmatpush2.msra.mxu0 %v1662
    %3583 = vmatprep.subr.mxu0 %v1655
    %3584 = vmatpush2.msra.mxu0 %v1654
    %3585 = vmatprep.subr.mxu0 %v1647
    %3586 = vmatpush2.msra.mxu0 %v1646
    %3587 = vmatprep.subr.mxu0 %v1639
    %3588 = vmatpush2.msra.mxu0 %v1638
    %3589 = vmatprep.subr.mxu0 %v1631
    %3590 = vmatpush2.msra.mxu0 %v1630
    %3591 = vmatprep.subr.mxu0 %v1623
    %3592 = vmatpush2.msra.mxu0 %v1622
    %3593 = vmatprep.subr.mxu0 %v1615
    %3594 = vmatpush2.msra.mxu0 %v1614
    %3595 = vmatprep.subr.mxu0 %v1607
    %3596 = vmatpush2.msra.mxu0 %v1606
    %3597 = vmatprep.mubr.f32.mxu0 %v3173
    %3598 = vmatmul.mubr.f32.gmra.mxu0 %v3172
    %v3599 = vpop.f32.mrf.mxu0
    %v3600 = vadd.f32 %v3529, %v3599
    %v3601 = vpop.f32.mrf.mxu0
    %v3602 = vadd.f32 %v3531, %v3601
    %3603 = vdwg.mxu0
    %3604 = vmatprep.subr.mxu0 %v1345
    %3605 = vmatpush1.msra.mxu0 %v1344
    %3606 = vmatprep.subr.mxu0 %v1337
    %3607 = vmatpush1.msra.mxu0 %v1336
    %3608 = vmatprep.subr.mxu0 %v1329
    %3609 = vmatpush1.msra.mxu0 %v1328
    %3610 = vmatprep.subr.mxu0 %v1321
    %3611 = vmatpush1.msra.mxu0 %v1320
    %3612 = vmatprep.subr.mxu0 %v1313
    %3613 = vmatpush1.msra.mxu0 %v1312
    %3614 = vmatprep.subr.mxu0 %v1305
    %3615 = vmatpush1.msra.mxu0 %v1304
    %3616 = vmatprep.subr.mxu0 %v1297
    %3617 = vmatpush1.msra.mxu0 %v1296
    %3618 = vmatprep.subr.mxu0 %v1289
    %3619 = vmatpush1.msra.mxu0 %v1288
    %3620 = vmatprep.subr.mxu0 %v1281
    %3621 = vmatpush1.msra.mxu0 %v1280
    %3622 = vmatprep.subr.mxu0 %v1273
    %3623 = vmatpush1.msra.mxu0 %v1272
    %3624 = vmatprep.subr.mxu0 %v1265
    %3625 = vmatpush1.msra.mxu0 %v1264
    %3626 = vmatprep.subr.mxu0 %v1257
    %3627 = vmatpush1.msra.mxu0 %v1256
    %3628 = vmatprep.subr.mxu0 %v1249
    %3629 = vmatpush1.msra.mxu0 %v1248
    %3630 = vmatprep.subr.mxu0 %v1241
    %3631 = vmatpush1.msra.mxu0 %v1240
    %3632 = vmatprep.subr.mxu0 %v1233
    %3633 = vmatpush1.msra.mxu0 %v1232
    %3634 = vmatprep.subr.mxu0 %v1225
    %3635 = vmatpush1.msra.mxu0 %v1224
    %3636 = vmatprep.subr.mxu0 %v1473
    %3637 = vmatpush2.msra.mxu0 %v1472
    %3638 = vmatprep.subr.mxu0 %v1465
    %3639 = vmatpush2.msra.mxu0 %v1464
    %3640 = vmatprep.subr.mxu0 %v1457
    %3641 = vmatpush2.msra.mxu0 %v1456
    %3642 = vmatprep.subr.mxu0 %v1449
    %3643 = vmatpush2.msra.mxu0 %v1448
    %3644 = vmatprep.subr.mxu0 %v1441
    %3645 = vmatpush2.msra.mxu0 %v1440
    %3646 = vmatprep.subr.mxu0 %v1433
    %3647 = vmatpush2.msra.mxu0 %v1432
    %3648 = vmatprep.subr.mxu0 %v1425
    %3649 = vmatpush2.msra.mxu0 %v1424
    %3650 = vmatprep.subr.mxu0 %v1417
    %3651 = vmatpush2.msra.mxu0 %v1416
    %3652 = vmatprep.subr.mxu0 %v1409
    %3653 = vmatpush2.msra.mxu0 %v1408
    %3654 = vmatprep.subr.mxu0 %v1401
    %3655 = vmatpush2.msra.mxu0 %v1400
    %3656 = vmatprep.subr.mxu0 %v1393
    %3657 = vmatpush2.msra.mxu0 %v1392
    %3658 = vmatprep.subr.mxu0 %v1385
    %3659 = vmatpush2.msra.mxu0 %v1384
    %3660 = vmatprep.subr.mxu0 %v1377
    %3661 = vmatpush2.msra.mxu0 %v1376
    %3662 = vmatprep.subr.mxu0 %v1369
    %3663 = vmatpush2.msra.mxu0 %v1368
    %3664 = vmatprep.subr.mxu0 %v1361
    %3665 = vmatpush2.msra.mxu0 %v1360
    %3666 = vmatprep.subr.mxu0 %v1353
    %3667 = vmatpush2.msra.mxu0 %v1352
    %3668 = vmatprep.mubr.f32.mxu0 %v3171
    %3669 = vmatmul.mubr.f32.gmra.mxu0 %v3170
    %v3670 = vpop.f32.mrf.mxu0
    %v3671 = vadd.f32 %v2144, %v3670
    %v3672 = vpop.f32.mrf.mxu0
    %v3673 = vadd.f32 %v2148, %v3672
    %3674 = vdwg.mxu0
    %3675 = vmatprep.subr.mxu0 %v1601
    %3676 = vmatpush1.msra.mxu0 %v1600
    %3677 = vmatprep.subr.mxu0 %v1593
    %3678 = vmatpush1.msra.mxu0 %v1592
    %3679 = vmatprep.subr.mxu0 %v1585
    %3680 = vmatpush1.msra.mxu0 %v1584
    %3681 = vmatprep.subr.mxu0 %v1577
    %3682 = vmatpush1.msra.mxu0 %v1576
    %3683 = vmatprep.subr.mxu0 %v1569
    %3684 = vmatpush1.msra.mxu0 %v1568
    %3685 = vmatprep.subr.mxu0 %v1561
    %3686 = vmatpush1.msra.mxu0 %v1560
    %3687 = vmatprep.subr.mxu0 %v1553
    %3688 = vmatpush1.msra.mxu0 %v1552
    %3689 = vmatprep.subr.mxu0 %v1545
    %3690 = vmatpush1.msra.mxu0 %v1544
    %3691 = vmatprep.subr.mxu0 %v1537
    %3692 = vmatpush1.msra.mxu0 %v1536
    %3693 = vmatprep.subr.mxu0 %v1529
    %3694 = vmatpush1.msra.mxu0 %v1528
    %3695 = vmatprep.subr.mxu0 %v1521
    %3696 = vmatpush1.msra.mxu0 %v1520
    %3697 = vmatprep.subr.mxu0 %v1513
    %3698 = vmatpush1.msra.mxu0 %v1512
    %3699 = vmatprep.subr.mxu0 %v1505
    %3700 = vmatpush1.msra.mxu0 %v1504
    %3701 = vmatprep.subr.mxu0 %v1497
    %3702 = vmatpush1.msra.mxu0 %v1496
    %3703 = vmatprep.subr.mxu0 %v1489
    %3704 = vmatpush1.msra.mxu0 %v1488
    %3705 = vmatprep.subr.mxu0 %v1481
    %3706 = vmatpush1.msra.mxu0 %v1480
    %3707 = vmatprep.subr.mxu0 %v1729
    %3708 = vmatpush2.msra.mxu0 %v1728
    %3709 = vmatprep.subr.mxu0 %v1721
    %3710 = vmatpush2.msra.mxu0 %v1720
    %3711 = vmatprep.subr.mxu0 %v1713
    %3712 = vmatpush2.msra.mxu0 %v1712
    %3713 = vmatprep.subr.mxu0 %v1705
    %3714 = vmatpush2.msra.mxu0 %v1704
    %3715 = vmatprep.subr.mxu0 %v1697
    %3716 = vmatpush2.msra.mxu0 %v1696
    %3717 = vmatprep.subr.mxu0 %v1689
    %3718 = vmatpush2.msra.mxu0 %v1688
    %3719 = vmatprep.subr.mxu0 %v1681
    %3720 = vmatpush2.msra.mxu0 %v1680
    %3721 = vmatprep.subr.mxu0 %v1673
    %3722 = vmatpush2.msra.mxu0 %v1672
    %3723 = vmatprep.subr.mxu0 %v1665
    %3724 = vmatpush2.msra.mxu0 %v1664
    %3725 = vmatprep.subr.mxu0 %v1657
    %3726 = vmatpush2.msra.mxu0 %v1656
    %3727 = vmatprep.subr.mxu0 %v1649
    %3728 = vmatpush2.msra.mxu0 %v1648
    %3729 = vmatprep.subr.mxu0 %v1641
    %3730 = vmatpush2.msra.mxu0 %v1640
    %3731 = vmatprep.subr.mxu0 %v1633
    %3732 = vmatpush2.msra.mxu0 %v1632
    %3733 = vmatprep.subr.mxu0 %v1625
    %3734 = vmatpush2.msra.mxu0 %v1624
    %3735 = vmatprep.subr.mxu0 %v1617
    %3736 = vmatpush2.msra.mxu0 %v1616
    %3737 = vmatprep.subr.mxu0 %v1609
    %3738 = vmatpush2.msra.mxu0 %v1608
    %3739 = vmatprep.mubr.f32.mxu0 %v3173
    %3740 = vmatmul.mubr.f32.gmra.mxu0 %v3172
    %v3741 = vpop.f32.mrf.mxu0
    %v3742 = vadd.f32 %v3671, %v3741
    %v3743 = vpop.f32.mrf.mxu0
    %v3744 = vadd.f32 %v3673, %v3743
    %3745 = vdwg.mxu0
    %v3746 = vxor.u32 %v3316, 2147483648
    %v3747 = vxor.u32 %v3318, 2147483648
    %v3748 = vmul.f32 %v3746, 1.442695
    %v3749 = vpow.pop %v3748
    %v3750 = vmul.f32 %v3747, 1.442695
    %v3751 = vpow.pop %v3750
    %v3752 = vadd.f32 %v3749, 1.0
    %v3753 = vadd.f32 %v3751, 1.0
    %v3754 = vrcp.pop %v3752
    %v3755 = vmul.f32 1.0, %v3754
    %v3756 = vrcp.pop %v3753
    %v3757 = vmul.f32 1.0, %v3756
    %v3758 = vxor.u32 %v3458, 2147483648
    %v3759 = vxor.u32 %v3460, 2147483648
    %v3760 = vmul.f32 %v3758, 1.442695
    %v3761 = vpow.pop %v3760
    %v3762 = vmul.f32 %v3759, 1.442695
    %v3763 = vpow.pop %v3762
    %v3764 = vadd.f32 %v3761, 1.0
    %v3765 = vadd.f32 %v3763, 1.0
    %v3766 = vrcp.pop %v3764
    %v3767 = vmul.f32 1.0, %v3766
    %v3768 = vrcp.pop %v3765
    %v3769 = vmul.f32 1.0, %v3768
    %v3770 = vtanh.pop %v3600
    %v3771 = vtanh.pop %v3602
    %v3772 = vxor.u32 %v3742, 2147483648
    %v3773 = vxor.u32 %v3744, 2147483648
    %v3774 = vmul.f32 %v3772, 1.442695
    %v3775 = vpow.pop %v3774
    %v3776 = vmul.f32 %v3773, 1.442695
    %v3777 = vpow.pop %v3776
    %v3778 = vadd.f32 %v3775, 1.0
    %v3779 = vadd.f32 %v3777, 1.0
    %v3780 = vrcp.pop %v3778
    %v3781 = vmul.f32 1.0, %v3780
    %v3782 = vrcp.pop %v3779
    %v3783 = vmul.f32 1.0, %v3782
    %v3784 = vmul.f32 %v3767, %v2778
    %v3785 = vmul.f32 %v3769, %v2779
    %v3786 = vmul.f32 %v3755, %v3770
    %v3787 = vmul.f32 %v3757, %v3771
    %v3788 = vadd.f32 %v3784, %v3786
    %v3789 = vadd.f32 %v3785, %v3787
    %v3790 = vtanh.pop %v3788
    %v3791 = vtanh.pop %v3789
    %v3792 = vmul.f32 %v3781, %v3790
    %v3793 = vmul.f32 %v3783, %v3791
    %v3796 = vrot.slane %v3792, 6
    %v3797 = vrot.slane %v3793, 6
    %3800 = vst [vmem:[#allocation7] sm:$0xc] %v3796
    %3801 = vst [vmem:[#allocation7 + $0x8] sm:$0xc] %v3797
    %v3802 = vld [vmem:[#allocation6] sm:$0x30]
    %v3803 = vld [vmem:[#allocation6 + $0x8] sm:$0x30]
    %v3804 = vld [vmem:[#allocation6 + $0x10] sm:$0x30]
    %v3805 = vld [vmem:[#allocation6 + $0x18] sm:$0x30]
    %v3806 = vld [vmem:[#allocation6 + $0x20] sm:$0x30]
    %v3807 = vld [vmem:[#allocation6 + $0x28] sm:$0x30]
    %v3808 = vld [vmem:[#allocation6 + $0x30] sm:$0x30]
    %v3809 = vld [vmem:[#allocation6 + $0x38] sm:$0x30]
    %3810 = vmatprep.subr.mxu0 %v1083
    %3811 = vmatpush1.msra.mxu0 %v1082
    %3812 = vmatprep.subr.mxu0 %v1075
    %3813 = vmatpush1.msra.mxu0 %v1074
    %3814 = vmatprep.subr.mxu0 %v1067
    %3815 = vmatpush1.msra.mxu0 %v1066
    %3816 = vmatprep.subr.mxu0 %v1059
    %3817 = vmatpush1.msra.mxu0 %v1058
    %3818 = vmatprep.subr.mxu0 %v1051
    %3819 = vmatpush1.msra.mxu0 %v1050
    %3820 = vmatprep.subr.mxu0 %v1043
    %3821 = vmatpush1.msra.mxu0 %v1042
    %3822 = vmatprep.subr.mxu0 %v1035
    %3823 = vmatpush1.msra.mxu0 %v1034
    %3824 = vmatprep.subr.mxu0 %v1027
    %3825 = vmatpush1.msra.mxu0 %v1026
    %3826 = vmatprep.subr.mxu0 %v1019
    %3827 = vmatpush1.msra.mxu0 %v1018
    %3828 = vmatprep.subr.mxu0 %v1011
    %3829 = vmatpush1.msra.mxu0 %v1010
    %3830 = vmatprep.subr.mxu0 %v1003
    %3831 = vmatpush1.msra.mxu0 %v1002
    %3832 = vmatprep.subr.mxu0 %v995
    %3833 = vmatpush1.msra.mxu0 %v994
    %3834 = vmatprep.subr.mxu0 %v987
    %3835 = vmatpush1.msra.mxu0 %v986
    %3836 = vmatprep.subr.mxu0 %v979
    %3837 = vmatpush1.msra.mxu0 %v978
    %3838 = vmatprep.subr.mxu0 %v971
    %3839 = vmatpush1.msra.mxu0 %v970
    %3840 = vmatprep.subr.mxu0 %v963
    %3841 = vmatpush1.msra.mxu0 %v962
    %3842 = vmatprep.subr.mxu0 %v1211
    %3843 = vmatpush2.msra.mxu0 %v1210
    %3844 = vmatprep.subr.mxu0 %v1203
    %3845 = vmatpush2.msra.mxu0 %v1202
    %3846 = vmatprep.subr.mxu0 %v1195
    %3847 = vmatpush2.msra.mxu0 %v1194
    %3848 = vmatprep.subr.mxu0 %v1187
    %3849 = vmatpush2.msra.mxu0 %v1186
    %3850 = vmatprep.subr.mxu0 %v1179
    %3851 = vmatpush2.msra.mxu0 %v1178
    %3852 = vmatprep.subr.mxu0 %v1171
    %3853 = vmatpush2.msra.mxu0 %v1170
    %3854 = vmatprep.subr.mxu0 %v1163
    %3855 = vmatpush2.msra.mxu0 %v1162
    %3856 = vmatprep.subr.mxu0 %v1155
    %3857 = vmatpush2.msra.mxu0 %v1154
    %3858 = vmatprep.subr.mxu0 %v1147
    %3859 = vmatpush2.msra.mxu0 %v1146
    %3860 = vmatprep.subr.mxu0 %v1139
    %3861 = vmatpush2.msra.mxu0 %v1138
    %3862 = vmatprep.subr.mxu0 %v1131
    %3863 = vmatpush2.msra.mxu0 %v1130
    %3864 = vmatprep.subr.mxu0 %v1123
    %3865 = vmatpush2.msra.mxu0 %v1122
    %3866 = vmatprep.subr.mxu0 %v1115
    %3867 = vmatpush2.msra.mxu0 %v1114
    %3868 = vmatprep.subr.mxu0 %v1107
    %3869 = vmatpush2.msra.mxu0 %v1106
    %3870 = vmatprep.subr.mxu0 %v1099
    %3871 = vmatpush2.msra.mxu0 %v1098
    %3872 = vmatprep.subr.mxu0 %v1091
    %3873 = vmatpush2.msra.mxu0 %v1090
    %3874 = vmatprep.mubr.f32.mxu0 %v3171
    %3875 = vmatmul.mubr.f32.gmra.mxu0 %v3170
    %v3876 = vpop.f32.mrf.mxu0
    %v3877 = vadd.f32 0.0, %v3876
    %v3878 = vpop.f32.mrf.mxu0
    %v3879 = vadd.f32 0.0, %v3878
    %3880 = vdwg.mxu0
    %3881 = vmatprep.subr.mxu0 %v1085
    %3882 = vmatpush1.msra.mxu0 %v1084
    %3883 = vmatprep.subr.mxu0 %v1077
    %3884 = vmatpush1.msra.mxu0 %v1076
    %3885 = vmatprep.subr.mxu0 %v1069
    %3886 = vmatpush1.msra.mxu0 %v1068
    %3887 = vmatprep.subr.mxu0 %v1061
    %3888 = vmatpush1.msra.mxu0 %v1060
    %3889 = vmatprep.subr.mxu0 %v1053
    %3890 = vmatpush1.msra.mxu0 %v1052
    %3891 = vmatprep.subr.mxu0 %v1045
    %3892 = vmatpush1.msra.mxu0 %v1044
    %3893 = vmatprep.subr.mxu0 %v1037
    %3894 = vmatpush1.msra.mxu0 %v1036
    %3895 = vmatprep.subr.mxu0 %v1029
    %3896 = vmatpush1.msra.mxu0 %v1028
    %3897 = vmatprep.subr.mxu0 %v1021
    %3898 = vmatpush1.msra.mxu0 %v1020
    %3899 = vmatprep.subr.mxu0 %v1013
    %3900 = vmatpush1.msra.mxu0 %v1012
    %3901 = vmatprep.subr.mxu0 %v1005
    %3902 = vmatpush1.msra.mxu0 %v1004
    %3903 = vmatprep.subr.mxu0 %v997
    %3904 = vmatpush1.msra.mxu0 %v996
    %3905 = vmatprep.subr.mxu0 %v989
    %3906 = vmatpush1.msra.mxu0 %v988
    %3907 = vmatprep.subr.mxu0 %v981
    %3908 = vmatpush1.msra.mxu0 %v980
    %3909 = vmatprep.subr.mxu0 %v973
    %3910 = vmatpush1.msra.mxu0 %v972
    %3911 = vmatprep.subr.mxu0 %v965
    %3912 = vmatpush1.msra.mxu0 %v964
    %3913 = vmatprep.subr.mxu0 %v1213
    %3914 = vmatpush2.msra.mxu0 %v1212
    %3915 = vmatprep.subr.mxu0 %v1205
    %3916 = vmatpush2.msra.mxu0 %v1204
    %3917 = vmatprep.subr.mxu0 %v1197
    %3918 = vmatpush2.msra.mxu0 %v1196
    %3919 = vmatprep.subr.mxu0 %v1189
    %3920 = vmatpush2.msra.mxu0 %v1188
    %3921 = vmatprep.subr.mxu0 %v1181
    %3922 = vmatpush2.msra.mxu0 %v1180
    %3923 = vmatprep.subr.mxu0 %v1173
    %3924 = vmatpush2.msra.mxu0 %v1172
    %3925 = vmatprep.subr.mxu0 %v1165
    %3926 = vmatpush2.msra.mxu0 %v1164
    %3927 = vmatprep.subr.mxu0 %v1157
    %3928 = vmatpush2.msra.mxu0 %v1156
    %3929 = vmatprep.subr.mxu0 %v1149
    %3930 = vmatpush2.msra.mxu0 %v1148
    %3931 = vmatprep.subr.mxu0 %v1141
    %3932 = vmatpush2.msra.mxu0 %v1140
    %3933 = vmatprep.subr.mxu0 %v1133
    %3934 = vmatpush2.msra.mxu0 %v1132
    %3935 = vmatprep.subr.mxu0 %v1125
    %3936 = vmatpush2.msra.mxu0 %v1124
    %3937 = vmatprep.subr.mxu0 %v1117
    %3938 = vmatpush2.msra.mxu0 %v1116
    %3939 = vmatprep.subr.mxu0 %v1109
    %3940 = vmatpush2.msra.mxu0 %v1108
    %3941 = vmatprep.subr.mxu0 %v1101
    %3942 = vmatpush2.msra.mxu0 %v1100
    %3943 = vmatprep.subr.mxu0 %v1093
    %3944 = vmatpush2.msra.mxu0 %v1092
    %3945 = vmatprep.mubr.f32.mxu0 %v3171
    %3946 = vmatmul.mubr.f32.gmra.mxu0 %v3170
    %v3947 = vpop.f32.mrf.mxu0
    %v3948 = vadd.f32 0.0, %v3947
    %v3949 = vpop.f32.mrf.mxu0
    %v3950 = vadd.f32 0.0, %v3949
    %3951 = vdwg.mxu0
    %3952 = vmatprep.subr.mxu0 %v1087
    %3953 = vmatpush1.msra.mxu0 %v1086
    %3954 = vmatprep.subr.mxu0 %v1079
    %3955 = vmatpush1.msra.mxu0 %v1078
    %3956 = vmatprep.subr.mxu0 %v1071
    %3957 = vmatpush1.msra.mxu0 %v1070
    %3958 = vmatprep.subr.mxu0 %v1063
    %3959 = vmatpush1.msra.mxu0 %v1062
    %3960 = vmatprep.subr.mxu0 %v1055
    %3961 = vmatpush1.msra.mxu0 %v1054
    %3962 = vmatprep.subr.mxu0 %v1047
    %3963 = vmatpush1.msra.mxu0 %v1046
    %3964 = vmatprep.subr.mxu0 %v1039
    %3965 = vmatpush1.msra.mxu0 %v1038
    %3966 = vmatprep.subr.mxu0 %v1031
    %3967 = vmatpush1.msra.mxu0 %v1030
    %3968 = vmatprep.subr.mxu0 %v1023
    %3969 = vmatpush1.msra.mxu0 %v1022
    %3970 = vmatprep.subr.mxu0 %v1015
    %3971 = vmatpush1.msra.mxu0 %v1014
    %3972 = vmatprep.subr.mxu0 %v1007
    %3973 = vmatpush1.msra.mxu0 %v1006
    %3974 = vmatprep.subr.mxu0 %v999
    %3975 = vmatpush1.msra.mxu0 %v998
    %3976 = vmatprep.subr.mxu0 %v991
    %3977 = vmatpush1.msra.mxu0 %v990
    %3978 = vmatprep.subr.mxu0 %v983
    %3979 = vmatpush1.msra.mxu0 %v982
    %3980 = vmatprep.subr.mxu0 %v975
    %3981 = vmatpush1.msra.mxu0 %v974
    %3982 = vmatprep.subr.mxu0 %v967
    %3983 = vmatpush1.msra.mxu0 %v966
    %3984 = vmatprep.subr.mxu0 %v1215
    %3985 = vmatpush2.msra.mxu0 %v1214
    %3986 = vmatprep.subr.mxu0 %v1207
    %3987 = vmatpush2.msra.mxu0 %v1206
    %3988 = vmatprep.subr.mxu0 %v1199
    %3989 = vmatpush2.msra.mxu0 %v1198
    %3990 = vmatprep.subr.mxu0 %v1191
    %3991 = vmatpush2.msra.mxu0 %v1190
    %3992 = vmatprep.subr.mxu0 %v1183
    %3993 = vmatpush2.msra.mxu0 %v1182
    %3994 = vmatprep.subr.mxu0 %v1175
    %3995 = vmatpush2.msra.mxu0 %v1174
    %3996 = vmatprep.subr.mxu0 %v1167
    %3997 = vmatpush2.msra.mxu0 %v1166
    %3998 = vmatprep.subr.mxu0 %v1159
    %3999 = vmatpush2.msra.mxu0 %v1158
    %4000 = vmatprep.subr.mxu0 %v1151
    %4001 = vmatpush2.msra.mxu0 %v1150
    %4002 = vmatprep.subr.mxu0 %v1143
    %4003 = vmatpush2.msra.mxu0 %v1142
    %4004 = vmatprep.subr.mxu0 %v1135
    %4005 = vmatpush2.msra.mxu0 %v1134
    %4006 = vmatprep.subr.mxu0 %v1127
    %4007 = vmatpush2.msra.mxu0 %v1126
    %4008 = vmatprep.subr.mxu0 %v1119
    %4009 = vmatpush2.msra.mxu0 %v1118
    %4010 = vmatprep.subr.mxu0 %v1111
    %4011 = vmatpush2.msra.mxu0 %v1110
    %4012 = vmatprep.subr.mxu0 %v1103
    %4013 = vmatpush2.msra.mxu0 %v1102
    %4014 = vmatprep.subr.mxu0 %v1095
    %4015 = vmatpush2.msra.mxu0 %v1094
    %4016 = vmatprep.mubr.f32.mxu0 %v3171
    %4017 = vmatmul.mubr.f32.gmra.mxu0 %v3170
    %v4018 = vpop.f32.mrf.mxu0
    %v4019 = vadd.f32 0.0, %v4018
    %v4020 = vpop.f32.mrf.mxu0
    %v4021 = vadd.f32 0.0, %v4020
    %4022 = vdwg.mxu0
    %4023 = vmatprep.subr.mxu0 %v1089
    %4024 = vmatpush1.msra.mxu0 %v1088
    %4025 = vmatprep.subr.mxu0 %v1081
    %4026 = vmatpush1.msra.mxu0 %v1080
    %4027 = vmatprep.subr.mxu0 %v1073
    %4028 = vmatpush1.msra.mxu0 %v1072
    %4029 = vmatprep.subr.mxu0 %v1065
    %4030 = vmatpush1.msra.mxu0 %v1064
    %4031 = vmatprep.subr.mxu0 %v1057
    %4032 = vmatpush1.msra.mxu0 %v1056
    %4033 = vmatprep.subr.mxu0 %v1049
    %4034 = vmatpush1.msra.mxu0 %v1048
    %4035 = vmatprep.subr.mxu0 %v1041
    %4036 = vmatpush1.msra.mxu0 %v1040
    %4037 = vmatprep.subr.mxu0 %v1033
    %4038 = vmatpush1.msra.mxu0 %v1032
    %4039 = vmatprep.subr.mxu0 %v1025
    %4040 = vmatpush1.msra.mxu0 %v1024
    %4041 = vmatprep.subr.mxu0 %v1017
    %4042 = vmatpush1.msra.mxu0 %v1016
    %4043 = vmatprep.subr.mxu0 %v1009
    %4044 = vmatpush1.msra.mxu0 %v1008
    %4045 = vmatprep.subr.mxu0 %v1001
    %4046 = vmatpush1.msra.mxu0 %v1000
    %4047 = vmatprep.subr.mxu0 %v993
    %4048 = vmatpush1.msra.mxu0 %v992
    %4049 = vmatprep.subr.mxu0 %v985
    %4050 = vmatpush1.msra.mxu0 %v984
    %4051 = vmatprep.subr.mxu0 %v977
    %4052 = vmatpush1.msra.mxu0 %v976
    %4053 = vmatprep.subr.mxu0 %v969
    %4054 = vmatpush1.msra.mxu0 %v968
    %4055 = vmatprep.subr.mxu0 %v1217
    %4056 = vmatpush2.msra.mxu0 %v1216
    %4057 = vmatprep.subr.mxu0 %v1209
    %4058 = vmatpush2.msra.mxu0 %v1208
    %4059 = vmatprep.subr.mxu0 %v1201
    %4060 = vmatpush2.msra.mxu0 %v1200
    %4061 = vmatprep.subr.mxu0 %v1193
    %4062 = vmatpush2.msra.mxu0 %v1192
    %4063 = vmatprep.subr.mxu0 %v1185
    %4064 = vmatpush2.msra.mxu0 %v1184
    %4065 = vmatprep.subr.mxu0 %v1177
    %4066 = vmatpush2.msra.mxu0 %v1176
    %4067 = vmatprep.subr.mxu0 %v1169
    %4068 = vmatpush2.msra.mxu0 %v1168
    %4069 = vmatprep.subr.mxu0 %v1161
    %4070 = vmatpush2.msra.mxu0 %v1160
    %4071 = vmatprep.subr.mxu0 %v1153
    %4072 = vmatpush2.msra.mxu0 %v1152
    %4073 = vmatprep.subr.mxu0 %v1145
    %4074 = vmatpush2.msra.mxu0 %v1144
    %4075 = vmatprep.subr.mxu0 %v1137
    %4076 = vmatpush2.msra.mxu0 %v1136
    %4077 = vmatprep.subr.mxu0 %v1129
    %4078 = vmatpush2.msra.mxu0 %v1128
    %4079 = vmatprep.subr.mxu0 %v1121
    %4080 = vmatpush2.msra.mxu0 %v1120
    %4081 = vmatprep.subr.mxu0 %v1113
    %4082 = vmatpush2.msra.mxu0 %v1112
    %4083 = vmatprep.subr.mxu0 %v1105
    %4084 = vmatpush2.msra.mxu0 %v1104
    %4085 = vmatprep.subr.mxu0 %v1097
    %4086 = vmatpush2.msra.mxu0 %v1096
    %4087 = vmatprep.mubr.f32.mxu0 %v3171
    %4088 = vmatmul.mubr.f32.gmra.mxu0 %v3170
    %v4089 = vpop.f32.mrf.mxu0
    %v4090 = vadd.f32 0.0, %v4089
    %v4091 = vpop.f32.mrf.mxu0
    %v4092 = vadd.f32 0.0, %v4091
    %4093 = vdwg.mxu0
    %v4102 = vrot.slane %v3877, 4
    %v4103 = vrot.slane %v3879, 4
    %v4104 = vrot.slane %v3948, 4
    %v4105 = vrot.slane %v3950, 4
    %v4106 = vrot.slane %v4019, 4
    %v4107 = vrot.slane %v4021, 4
    %v4108 = vrot.slane %v4090, 4
    %v4109 = vrot.slane %v4092, 4
    %v4118 = vadd.f32 %v3802, %v4102
    %v4119 = vadd.f32 %v3803, %v4103
    %v4120 = vadd.f32 %v3804, %v4104
    %v4121 = vadd.f32 %v3805, %v4105
    %v4122 = vadd.f32 %v3806, %v4106
    %v4123 = vadd.f32 %v3807, %v4107
    %v4124 = vadd.f32 %v3808, %v4108
    %v4125 = vadd.f32 %v3809, %v4109
    %v4126 = vxor.u32 %v4118, 2147483648
    %v4127 = vxor.u32 %v4119, 2147483648
    %v4128 = vmul.f32 %v4126, 1.442695
    %v4129 = vpow.pop %v4128
    %v4130 = vmul.f32 %v4127, 1.442695
    %v4131 = vpow.pop %v4130
    %v4132 = vadd.f32 %v4129, 1.0
    %v4133 = vadd.f32 %v4131, 1.0
    %v4134 = vrcp.pop %v4132
    %v4135 = vmul.f32 1.0, %v4134
    %v4136 = vrcp.pop %v4133
    %v4137 = vmul.f32 1.0, %v4136
    %v4138 = vxor.u32 %v4120, 2147483648
    %v4139 = vxor.u32 %v4121, 2147483648
    %v4140 = vmul.f32 %v4138, 1.442695
    %v4141 = vpow.pop %v4140
    %v4142 = vmul.f32 %v4139, 1.442695
    %v4143 = vpow.pop %v4142
    %v4144 = vadd.f32 %v4141, 1.0
    %v4145 = vadd.f32 %v4143, 1.0
    %v4146 = vrcp.pop %v4144
    %v4147 = vmul.f32 1.0, %v4146
    %v4148 = vrcp.pop %v4145
    %v4149 = vmul.f32 1.0, %v4148
    %v4150 = vtanh.pop %v4122
    %v4151 = vtanh.pop %v4123
    %v4152 = vxor.u32 %v4124, 2147483648
    %v4153 = vxor.u32 %v4125, 2147483648
    %v4154 = vmul.f32 %v4152, 1.442695
    %v4155 = vpow.pop %v4154
    %v4156 = vmul.f32 %v4153, 1.442695
    %v4157 = vpow.pop %v4156
    %v4158 = vadd.f32 %v4155, 1.0
    %v4159 = vadd.f32 %v4157, 1.0
    %v4160 = vrcp.pop %v4158
    %v4161 = vmul.f32 1.0, %v4160
    %v4162 = vrcp.pop %v4159
    %v4163 = vmul.f32 1.0, %v4162
    %v4166 = vrot.slane %v3158, 6
    %v4167 = vrot.slane %v3159, 6
    %v4170 = vmul.f32 %v4147, %v4166
    %v4171 = vmul.f32 %v4149, %v4167
    %v4172 = vmul.f32 %v4135, %v4150
    %v4173 = vmul.f32 %v4137, %v4151
    %v4174 = vadd.f32 %v4170, %v4172
    %v4175 = vadd.f32 %v4171, %v4173
    %v4176 = vtanh.pop %v4174
    %v4177 = vtanh.pop %v4175
    %v4178 = vmul.f32 %v4161, %v4176
    %v4179 = vmul.f32 %v4163, %v4177
    %v4180 = vrot.slane %v3792, 4
    %v4181 = vrot.slane %v3793, 4
    %v4184 = vrot.slane %v4178, 4
    %v4185 = vrot.slane %v4179, 4
    %v4186 = vrot.slane %v4180, 4
    %v4187 = vrot.slane %v4181, 4
    %4192 = vmatprep.subr.mxu0 %v1339
    %4193 = vmatpush1.msra.mxu0 %v1338
    %4194 = vmatprep.subr.mxu0 %v1331
    %4195 = vmatpush1.msra.mxu0 %v1330
    %4196 = vmatprep.subr.mxu0 %v1323
    %4197 = vmatpush1.msra.mxu0 %v1322
    %4198 = vmatprep.subr.mxu0 %v1315
    %4199 = vmatpush1.msra.mxu0 %v1314
    %4200 = vmatprep.subr.mxu0 %v1307
    %4201 = vmatpush1.msra.mxu0 %v1306
    %4202 = vmatprep.subr.mxu0 %v1299
    %4203 = vmatpush1.msra.mxu0 %v1298
    %4204 = vmatprep.subr.mxu0 %v1291
    %4205 = vmatpush1.msra.mxu0 %v1290
    %4206 = vmatprep.subr.mxu0 %v1283
    %4207 = vmatpush1.msra.mxu0 %v1282
    %4208 = vmatprep.subr.mxu0 %v1275
    %4209 = vmatpush1.msra.mxu0 %v1274
    %4210 = vmatprep.subr.mxu0 %v1267
    %4211 = vmatpush1.msra.mxu0 %v1266
    %4212 = vmatprep.subr.mxu0 %v1259
    %4213 = vmatpush1.msra.mxu0 %v1258
    %4214 = vmatprep.subr.mxu0 %v1251
    %4215 = vmatpush1.msra.mxu0 %v1250
    %4216 = vmatprep.subr.mxu0 %v1243
    %4217 = vmatpush1.msra.mxu0 %v1242
    %4218 = vmatprep.subr.mxu0 %v1235
    %4219 = vmatpush1.msra.mxu0 %v1234
    %4220 = vmatprep.subr.mxu0 %v1227
    %4221 = vmatpush1.msra.mxu0 %v1226
    %4222 = vmatprep.subr.mxu0 %v1219
    %4223 = vmatpush1.msra.mxu0 %v1218
    %4224 = vmatprep.subr.mxu0 %v1467
    %4225 = vmatpush2.msra.mxu0 %v1466
    %4226 = vmatprep.subr.mxu0 %v1459
    %4227 = vmatpush2.msra.mxu0 %v1458
    %4228 = vmatprep.subr.mxu0 %v1451
    %4229 = vmatpush2.msra.mxu0 %v1450
    %4230 = vmatprep.subr.mxu0 %v1443
    %4231 = vmatpush2.msra.mxu0 %v1442
    %4232 = vmatprep.subr.mxu0 %v1435
    %4233 = vmatpush2.msra.mxu0 %v1434
    %4234 = vmatprep.subr.mxu0 %v1427
    %4235 = vmatpush2.msra.mxu0 %v1426
    %4236 = vmatprep.subr.mxu0 %v1419
    %4237 = vmatpush2.msra.mxu0 %v1418
    %4238 = vmatprep.subr.mxu0 %v1411
    %4239 = vmatpush2.msra.mxu0 %v1410
    %4240 = vmatprep.subr.mxu0 %v1403
    %4241 = vmatpush2.msra.mxu0 %v1402
    %4242 = vmatprep.subr.mxu0 %v1395
    %4243 = vmatpush2.msra.mxu0 %v1394
    %4244 = vmatprep.subr.mxu0 %v1387
    %4245 = vmatpush2.msra.mxu0 %v1386
    %4246 = vmatprep.subr.mxu0 %v1379
    %4247 = vmatpush2.msra.mxu0 %v1378
    %4248 = vmatprep.subr.mxu0 %v1371
    %4249 = vmatpush2.msra.mxu0 %v1370
    %4250 = vmatprep.subr.mxu0 %v1363
    %4251 = vmatpush2.msra.mxu0 %v1362
    %4252 = vmatprep.subr.mxu0 %v1355
    %4253 = vmatpush2.msra.mxu0 %v1354
    %4254 = vmatprep.subr.mxu0 %v1347
    %4255 = vmatpush2.msra.mxu0 %v1346
    %4256 = vmatprep.mubr.f32.mxu0 %v4185
    %4257 = vmatmul.mubr.f32.gmra.mxu0 %v4184
    %v4258 = vpop.f32.mrf.mxu0
    %v4259 = vadd.f32 %v2120, %v4258
    %v4260 = vpop.f32.mrf.mxu0
    %v4261 = vadd.f32 %v2124, %v4260
    %4262 = vdwg.mxu0
    %4263 = vmatprep.subr.mxu0 %v1595
    %4264 = vmatpush1.msra.mxu0 %v1594
    %4265 = vmatprep.subr.mxu0 %v1587
    %4266 = vmatpush1.msra.mxu0 %v1586
    %4267 = vmatprep.subr.mxu0 %v1579
    %4268 = vmatpush1.msra.mxu0 %v1578
    %4269 = vmatprep.subr.mxu0 %v1571
    %4270 = vmatpush1.msra.mxu0 %v1570
    %4271 = vmatprep.subr.mxu0 %v1563
    %4272 = vmatpush1.msra.mxu0 %v1562
    %4273 = vmatprep.subr.mxu0 %v1555
    %4274 = vmatpush1.msra.mxu0 %v1554
    %4275 = vmatprep.subr.mxu0 %v1547
    %4276 = vmatpush1.msra.mxu0 %v1546
    %4277 = vmatprep.subr.mxu0 %v1539
    %4278 = vmatpush1.msra.mxu0 %v1538
    %4279 = vmatprep.subr.mxu0 %v1531
    %4280 = vmatpush1.msra.mxu0 %v1530
    %4281 = vmatprep.subr.mxu0 %v1523
    %4282 = vmatpush1.msra.mxu0 %v1522
    %4283 = vmatprep.subr.mxu0 %v1515
    %4284 = vmatpush1.msra.mxu0 %v1514
    %4285 = vmatprep.subr.mxu0 %v1507
    %4286 = vmatpush1.msra.mxu0 %v1506
    %4287 = vmatprep.subr.mxu0 %v1499
    %4288 = vmatpush1.msra.mxu0 %v1498
    %4289 = vmatprep.subr.mxu0 %v1491
    %4290 = vmatpush1.msra.mxu0 %v1490
    %4291 = vmatprep.subr.mxu0 %v1483
    %4292 = vmatpush1.msra.mxu0 %v1482
    %4293 = vmatprep.subr.mxu0 %v1475
    %4294 = vmatpush1.msra.mxu0 %v1474
    %4295 = vmatprep.subr.mxu0 %v1723
    %4296 = vmatpush2.msra.mxu0 %v1722
    %4297 = vmatprep.subr.mxu0 %v1715
    %4298 = vmatpush2.msra.mxu0 %v1714
    %4299 = vmatprep.subr.mxu0 %v1707
    %4300 = vmatpush2.msra.mxu0 %v1706
    %4301 = vmatprep.subr.mxu0 %v1699
    %4302 = vmatpush2.msra.mxu0 %v1698
    %4303 = vmatprep.subr.mxu0 %v1691
    %4304 = vmatpush2.msra.mxu0 %v1690
    %4305 = vmatprep.subr.mxu0 %v1683
    %4306 = vmatpush2.msra.mxu0 %v1682
    %4307 = vmatprep.subr.mxu0 %v1675
    %4308 = vmatpush2.msra.mxu0 %v1674
    %4309 = vmatprep.subr.mxu0 %v1667
    %4310 = vmatpush2.msra.mxu0 %v1666
    %4311 = vmatprep.subr.mxu0 %v1659
    %4312 = vmatpush2.msra.mxu0 %v1658
    %4313 = vmatprep.subr.mxu0 %v1651
    %4314 = vmatpush2.msra.mxu0 %v1650
    %4315 = vmatprep.subr.mxu0 %v1643
    %4316 = vmatpush2.msra.mxu0 %v1642
    %4317 = vmatprep.subr.mxu0 %v1635
    %4318 = vmatpush2.msra.mxu0 %v1634
    %4319 = vmatprep.subr.mxu0 %v1627
    %4320 = vmatpush2.msra.mxu0 %v1626
    %4321 = vmatprep.subr.mxu0 %v1619
    %4322 = vmatpush2.msra.mxu0 %v1618
    %4323 = vmatprep.subr.mxu0 %v1611
    %4324 = vmatpush2.msra.mxu0 %v1610
    %4325 = vmatprep.subr.mxu0 %v1603
    %4326 = vmatpush2.msra.mxu0 %v1602
    %4327 = vmatprep.mubr.f32.mxu0 %v4187
    %4328 = vmatmul.mubr.f32.gmra.mxu0 %v4186
    %v4329 = vpop.f32.mrf.mxu0
    %v4330 = vadd.f32 %v4259, %v4329
    %v4331 = vpop.f32.mrf.mxu0
    %v4332 = vadd.f32 %v4261, %v4331
    %4333 = vdwg.mxu0
    %4334 = vmatprep.subr.mxu0 %v1341
    %4335 = vmatpush1.msra.mxu0 %v1340
    %4336 = vmatprep.subr.mxu0 %v1333
    %4337 = vmatpush1.msra.mxu0 %v1332
    %4338 = vmatprep.subr.mxu0 %v1325
    %4339 = vmatpush1.msra.mxu0 %v1324
    %4340 = vmatprep.subr.mxu0 %v1317
    %4341 = vmatpush1.msra.mxu0 %v1316
    %4342 = vmatprep.subr.mxu0 %v1309
    %4343 = vmatpush1.msra.mxu0 %v1308
    %4344 = vmatprep.subr.mxu0 %v1301
    %4345 = vmatpush1.msra.mxu0 %v1300
    %4346 = vmatprep.subr.mxu0 %v1293
    %4347 = vmatpush1.msra.mxu0 %v1292
    %4348 = vmatprep.subr.mxu0 %v1285
    %4349 = vmatpush1.msra.mxu0 %v1284
    %4350 = vmatprep.subr.mxu0 %v1277
    %4351 = vmatpush1.msra.mxu0 %v1276
    %4352 = vmatprep.subr.mxu0 %v1269
    %4353 = vmatpush1.msra.mxu0 %v1268
    %4354 = vmatprep.subr.mxu0 %v1261
    %4355 = vmatpush1.msra.mxu0 %v1260
    %4356 = vmatprep.subr.mxu0 %v1253
    %4357 = vmatpush1.msra.mxu0 %v1252
    %4358 = vmatprep.subr.mxu0 %v1245
    %4359 = vmatpush1.msra.mxu0 %v1244
    %4360 = vmatprep.subr.mxu0 %v1237
    %4361 = vmatpush1.msra.mxu0 %v1236
    %4362 = vmatprep.subr.mxu0 %v1229
    %4363 = vmatpush1.msra.mxu0 %v1228
    %4364 = vmatprep.subr.mxu0 %v1221
    %4365 = vmatpush1.msra.mxu0 %v1220
    %4366 = vmatprep.subr.mxu0 %v1469
    %4367 = vmatpush2.msra.mxu0 %v1468
    %4368 = vmatprep.subr.mxu0 %v1461
    %4369 = vmatpush2.msra.mxu0 %v1460
    %4370 = vmatprep.subr.mxu0 %v1453
    %4371 = vmatpush2.msra.mxu0 %v1452
    %4372 = vmatprep.subr.mxu0 %v1445
    %4373 = vmatpush2.msra.mxu0 %v1444
    %4374 = vmatprep.subr.mxu0 %v1437
    %4375 = vmatpush2.msra.mxu0 %v1436
    %4376 = vmatprep.subr.mxu0 %v1429
    %4377 = vmatpush2.msra.mxu0 %v1428
    %4378 = vmatprep.subr.mxu0 %v1421
    %4379 = vmatpush2.msra.mxu0 %v1420
    %4380 = vmatprep.subr.mxu0 %v1413
    %4381 = vmatpush2.msra.mxu0 %v1412
    %4382 = vmatprep.subr.mxu0 %v1405
    %4383 = vmatpush2.msra.mxu0 %v1404
    %4384 = vmatprep.subr.mxu0 %v1397
    %4385 = vmatpush2.msra.mxu0 %v1396
    %4386 = vmatprep.subr.mxu0 %v1389
    %4387 = vmatpush2.msra.mxu0 %v1388
    %4388 = vmatprep.subr.mxu0 %v1381
    %4389 = vmatpush2.msra.mxu0 %v1380
    %4390 = vmatprep.subr.mxu0 %v1373
    %4391 = vmatpush2.msra.mxu0 %v1372
    %4392 = vmatprep.subr.mxu0 %v1365
    %4393 = vmatpush2.msra.mxu0 %v1364
    %4394 = vmatprep.subr.mxu0 %v1357
    %4395 = vmatpush2.msra.mxu0 %v1356
    %4396 = vmatprep.subr.mxu0 %v1349
    %4397 = vmatpush2.msra.mxu0 %v1348
    %4398 = vmatprep.mubr.f32.mxu0 %v4185
    %4399 = vmatmul.mubr.f32.gmra.mxu0 %v4184
    %v4400 = vpop.f32.mrf.mxu0
    %v4401 = vadd.f32 %v2128, %v4400
    %v4402 = vpop.f32.mrf.mxu0
    %v4403 = vadd.f32 %v2132, %v4402
    %4404 = vdwg.mxu0
    %4405 = vmatprep.subr.mxu0 %v1597
    %4406 = vmatpush1.msra.mxu0 %v1596
    %4407 = vmatprep.subr.mxu0 %v1589
    %4408 = vmatpush1.msra.mxu0 %v1588
    %4409 = vmatprep.subr.mxu0 %v1581
    %4410 = vmatpush1.msra.mxu0 %v1580
    %4411 = vmatprep.subr.mxu0 %v1573
    %4412 = vmatpush1.msra.mxu0 %v1572
    %4413 = vmatprep.subr.mxu0 %v1565
    %4414 = vmatpush1.msra.mxu0 %v1564
    %4415 = vmatprep.subr.mxu0 %v1557
    %4416 = vmatpush1.msra.mxu0 %v1556
    %4417 = vmatprep.subr.mxu0 %v1549
    %4418 = vmatpush1.msra.mxu0 %v1548
    %4419 = vmatprep.subr.mxu0 %v1541
    %4420 = vmatpush1.msra.mxu0 %v1540
    %4421 = vmatprep.subr.mxu0 %v1533
    %4422 = vmatpush1.msra.mxu0 %v1532
    %4423 = vmatprep.subr.mxu0 %v1525
    %4424 = vmatpush1.msra.mxu0 %v1524
    %4425 = vmatprep.subr.mxu0 %v1517
    %4426 = vmatpush1.msra.mxu0 %v1516
    %4427 = vmatprep.subr.mxu0 %v1509
    %4428 = vmatpush1.msra.mxu0 %v1508
    %4429 = vmatprep.subr.mxu0 %v1501
    %4430 = vmatpush1.msra.mxu0 %v1500
    %4431 = vmatprep.subr.mxu0 %v1493
    %4432 = vmatpush1.msra.mxu0 %v1492
    %4433 = vmatprep.subr.mxu0 %v1485
    %4434 = vmatpush1.msra.mxu0 %v1484
    %4435 = vmatprep.subr.mxu0 %v1477
    %4436 = vmatpush1.msra.mxu0 %v1476
    %4437 = vmatprep.subr.mxu0 %v1725
    %4438 = vmatpush2.msra.mxu0 %v1724
    %4439 = vmatprep.subr.mxu0 %v1717
    %4440 = vmatpush2.msra.mxu0 %v1716
    %4441 = vmatprep.subr.mxu0 %v1709
    %4442 = vmatpush2.msra.mxu0 %v1708
    %4443 = vmatprep.subr.mxu0 %v1701
    %4444 = vmatpush2.msra.mxu0 %v1700
    %4445 = vmatprep.subr.mxu0 %v1693
    %4446 = vmatpush2.msra.mxu0 %v1692
    %4447 = vmatprep.subr.mxu0 %v1685
    %4448 = vmatpush2.msra.mxu0 %v1684
    %4449 = vmatprep.subr.mxu0 %v1677
    %4450 = vmatpush2.msra.mxu0 %v1676
    %4451 = vmatprep.subr.mxu0 %v1669
    %4452 = vmatpush2.msra.mxu0 %v1668
    %4453 = vmatprep.subr.mxu0 %v1661
    %4454 = vmatpush2.msra.mxu0 %v1660
    %4455 = vmatprep.subr.mxu0 %v1653
    %4456 = vmatpush2.msra.mxu0 %v1652
    %4457 = vmatprep.subr.mxu0 %v1645
    %4458 = vmatpush2.msra.mxu0 %v1644
    %4459 = vmatprep.subr.mxu0 %v1637
    %4460 = vmatpush2.msra.mxu0 %v1636
    %4461 = vmatprep.subr.mxu0 %v1629
    %4462 = vmatpush2.msra.mxu0 %v1628
    %4463 = vmatprep.subr.mxu0 %v1621
    %4464 = vmatpush2.msra.mxu0 %v1620
    %4465 = vmatprep.subr.mxu0 %v1613
    %4466 = vmatpush2.msra.mxu0 %v1612
    %4467 = vmatprep.subr.mxu0 %v1605
    %4468 = vmatpush2.msra.mxu0 %v1604
    %4469 = vmatprep.mubr.f32.mxu0 %v4187
    %4470 = vmatmul.mubr.f32.gmra.mxu0 %v4186
    %v4471 = vpop.f32.mrf.mxu0
    %v4472 = vadd.f32 %v4401, %v4471
    %v4473 = vpop.f32.mrf.mxu0
    %v4474 = vadd.f32 %v4403, %v4473
    %4475 = vdwg.mxu0
    %4476 = vmatprep.subr.mxu0 %v1343
    %4477 = vmatpush1.msra.mxu0 %v1342
    %4478 = vmatprep.subr.mxu0 %v1335
    %4479 = vmatpush1.msra.mxu0 %v1334
    %4480 = vmatprep.subr.mxu0 %v1327
    %4481 = vmatpush1.msra.mxu0 %v1326
    %4482 = vmatprep.subr.mxu0 %v1319
    %4483 = vmatpush1.msra.mxu0 %v1318
    %4484 = vmatprep.subr.mxu0 %v1311
    %4485 = vmatpush1.msra.mxu0 %v1310
    %4486 = vmatprep.subr.mxu0 %v1303
    %4487 = vmatpush1.msra.mxu0 %v1302
    %4488 = vmatprep.subr.mxu0 %v1295
    %4489 = vmatpush1.msra.mxu0 %v1294
    %4490 = vmatprep.subr.mxu0 %v1287
    %4491 = vmatpush1.msra.mxu0 %v1286
    %4492 = vmatprep.subr.mxu0 %v1279
    %4493 = vmatpush1.msra.mxu0 %v1278
    %4494 = vmatprep.subr.mxu0 %v1271
    %4495 = vmatpush1.msra.mxu0 %v1270
    %4496 = vmatprep.subr.mxu0 %v1263
    %4497 = vmatpush1.msra.mxu0 %v1262
    %4498 = vmatprep.subr.mxu0 %v1255
    %4499 = vmatpush1.msra.mxu0 %v1254
    %4500 = vmatprep.subr.mxu0 %v1247
    %4501 = vmatpush1.msra.mxu0 %v1246
    %4502 = vmatprep.subr.mxu0 %v1239
    %4503 = vmatpush1.msra.mxu0 %v1238
    %4504 = vmatprep.subr.mxu0 %v1231
    %4505 = vmatpush1.msra.mxu0 %v1230
    %4506 = vmatprep.subr.mxu0 %v1223
    %4507 = vmatpush1.msra.mxu0 %v1222
    %4508 = vmatprep.subr.mxu0 %v1471
    %4509 = vmatpush2.msra.mxu0 %v1470
    %4510 = vmatprep.subr.mxu0 %v1463
    %4511 = vmatpush2.msra.mxu0 %v1462
    %4512 = vmatprep.subr.mxu0 %v1455
    %4513 = vmatpush2.msra.mxu0 %v1454
    %4514 = vmatprep.subr.mxu0 %v1447
    %4515 = vmatpush2.msra.mxu0 %v1446
    %4516 = vmatprep.subr.mxu0 %v1439
    %4517 = vmatpush2.msra.mxu0 %v1438
    %4518 = vmatprep.subr.mxu0 %v1431
    %4519 = vmatpush2.msra.mxu0 %v1430
    %4520 = vmatprep.subr.mxu0 %v1423
    %4521 = vmatpush2.msra.mxu0 %v1422
    %4522 = vmatprep.subr.mxu0 %v1415
    %4523 = vmatpush2.msra.mxu0 %v1414
    %4524 = vmatprep.subr.mxu0 %v1407
    %4525 = vmatpush2.msra.mxu0 %v1406
    %4526 = vmatprep.subr.mxu0 %v1399
    %4527 = vmatpush2.msra.mxu0 %v1398
    %4528 = vmatprep.subr.mxu0 %v1391
    %4529 = vmatpush2.msra.mxu0 %v1390
    %4530 = vmatprep.subr.mxu0 %v1383
    %4531 = vmatpush2.msra.mxu0 %v1382
    %4532 = vmatprep.subr.mxu0 %v1375
    %4533 = vmatpush2.msra.mxu0 %v1374
    %4534 = vmatprep.subr.mxu0 %v1367
    %4535 = vmatpush2.msra.mxu0 %v1366
    %4536 = vmatprep.subr.mxu0 %v1359
    %4537 = vmatpush2.msra.mxu0 %v1358
    %4538 = vmatprep.subr.mxu0 %v1351
    %4539 = vmatpush2.msra.mxu0 %v1350
    %4540 = vmatprep.mubr.f32.mxu0 %v4185
    %4541 = vmatmul.mubr.f32.gmra.mxu0 %v4184
    %v4542 = vpop.f32.mrf.mxu0
    %v4543 = vadd.f32 %v2136, %v4542
    %v4544 = vpop.f32.mrf.mxu0
    %v4545 = vadd.f32 %v2140, %v4544
    %4546 = vdwg.mxu0
    %4547 = vmatprep.subr.mxu0 %v1599
    %4548 = vmatpush1.msra.mxu0 %v1598
    %4549 = vmatprep.subr.mxu0 %v1591
    %4550 = vmatpush1.msra.mxu0 %v1590
    %4551 = vmatprep.subr.mxu0 %v1583
    %4552 = vmatpush1.msra.mxu0 %v1582
    %4553 = vmatprep.subr.mxu0 %v1575
    %4554 = vmatpush1.msra.mxu0 %v1574
    %4555 = vmatprep.subr.mxu0 %v1567
    %4556 = vmatpush1.msra.mxu0 %v1566
    %4557 = vmatprep.subr.mxu0 %v1559
    %4558 = vmatpush1.msra.mxu0 %v1558
    %4559 = vmatprep.subr.mxu0 %v1551
    %4560 = vmatpush1.msra.mxu0 %v1550
    %4561 = vmatprep.subr.mxu0 %v1543
    %4562 = vmatpush1.msra.mxu0 %v1542
    %4563 = vmatprep.subr.mxu0 %v1535
    %4564 = vmatpush1.msra.mxu0 %v1534
    %4565 = vmatprep.subr.mxu0 %v1527
    %4566 = vmatpush1.msra.mxu0 %v1526
    %4567 = vmatprep.subr.mxu0 %v1519
    %4568 = vmatpush1.msra.mxu0 %v1518
    %4569 = vmatprep.subr.mxu0 %v1511
    %4570 = vmatpush1.msra.mxu0 %v1510
    %4571 = vmatprep.subr.mxu0 %v1503
    %4572 = vmatpush1.msra.mxu0 %v1502
    %4573 = vmatprep.subr.mxu0 %v1495
    %4574 = vmatpush1.msra.mxu0 %v1494
    %4575 = vmatprep.subr.mxu0 %v1487
    %4576 = vmatpush1.msra.mxu0 %v1486
    %4577 = vmatprep.subr.mxu0 %v1479
    %4578 = vmatpush1.msra.mxu0 %v1478
    %4579 = vmatprep.subr.mxu0 %v1727
    %4580 = vmatpush2.msra.mxu0 %v1726
    %4581 = vmatprep.subr.mxu0 %v1719
    %4582 = vmatpush2.msra.mxu0 %v1718
    %4583 = vmatprep.subr.mxu0 %v1711
    %4584 = vmatpush2.msra.mxu0 %v1710
    %4585 = vmatprep.subr.mxu0 %v1703
    %4586 = vmatpush2.msra.mxu0 %v1702
    %4587 = vmatprep.subr.mxu0 %v1695
    %4588 = vmatpush2.msra.mxu0 %v1694
    %4589 = vmatprep.subr.mxu0 %v1687
    %4590 = vmatpush2.msra.mxu0 %v1686
    %4591 = vmatprep.subr.mxu0 %v1679
    %4592 = vmatpush2.msra.mxu0 %v1678
    %4593 = vmatprep.subr.mxu0 %v1671
    %4594 = vmatpush2.msra.mxu0 %v1670
    %4595 = vmatprep.subr.mxu0 %v1663
    %4596 = vmatpush2.msra.mxu0 %v1662
    %4597 = vmatprep.subr.mxu0 %v1655
    %4598 = vmatpush2.msra.mxu0 %v1654
    %4599 = vmatprep.subr.mxu0 %v1647
    %4600 = vmatpush2.msra.mxu0 %v1646
    %4601 = vmatprep.subr.mxu0 %v1639
    %4602 = vmatpush2.msra.mxu0 %v1638
    %4603 = vmatprep.subr.mxu0 %v1631
    %4604 = vmatpush2.msra.mxu0 %v1630
    %4605 = vmatprep.subr.mxu0 %v1623
    %4606 = vmatpush2.msra.mxu0 %v1622
    %4607 = vmatprep.subr.mxu0 %v1615
    %4608 = vmatpush2.msra.mxu0 %v1614
    %4609 = vmatprep.subr.mxu0 %v1607
    %4610 = vmatpush2.msra.mxu0 %v1606
    %4611 = vmatprep.mubr.f32.mxu0 %v4187
    %4612 = vmatmul.mubr.f32.gmra.mxu0 %v4186
    %v4613 = vpop.f32.mrf.mxu0
    %v4614 = vadd.f32 %v4543, %v4613
    %v4615 = vpop.f32.mrf.mxu0
    %v4616 = vadd.f32 %v4545, %v4615
    %4617 = vdwg.mxu0
    %4618 = vmatprep.subr.mxu0 %v1345
    %4619 = vmatpush1.msra.mxu0 %v1344
    %4620 = vmatprep.subr.mxu0 %v1337
    %4621 = vmatpush1.msra.mxu0 %v1336
    %4622 = vmatprep.subr.mxu0 %v1329
    %4623 = vmatpush1.msra.mxu0 %v1328
    %4624 = vmatprep.subr.mxu0 %v1321
    %4625 = vmatpush1.msra.mxu0 %v1320
    %4626 = vmatprep.subr.mxu0 %v1313
    %4627 = vmatpush1.msra.mxu0 %v1312
    %4628 = vmatprep.subr.mxu0 %v1305
    %4629 = vmatpush1.msra.mxu0 %v1304
    %4630 = vmatprep.subr.mxu0 %v1297
    %4631 = vmatpush1.msra.mxu0 %v1296
    %4632 = vmatprep.subr.mxu0 %v1289
    %4633 = vmatpush1.msra.mxu0 %v1288
    %4634 = vmatprep.subr.mxu0 %v1281
    %4635 = vmatpush1.msra.mxu0 %v1280
    %4636 = vmatprep.subr.mxu0 %v1273
    %4637 = vmatpush1.msra.mxu0 %v1272
    %4638 = vmatprep.subr.mxu0 %v1265
    %4639 = vmatpush1.msra.mxu0 %v1264
    %4640 = vmatprep.subr.mxu0 %v1257
    %4641 = vmatpush1.msra.mxu0 %v1256
    %4642 = vmatprep.subr.mxu0 %v1249
    %4643 = vmatpush1.msra.mxu0 %v1248
    %4644 = vmatprep.subr.mxu0 %v1241
    %4645 = vmatpush1.msra.mxu0 %v1240
    %4646 = vmatprep.subr.mxu0 %v1233
    %4647 = vmatpush1.msra.mxu0 %v1232
    %4648 = vmatprep.subr.mxu0 %v1225
    %4649 = vmatpush1.msra.mxu0 %v1224
    %4650 = vmatprep.subr.mxu0 %v1473
    %4651 = vmatpush2.msra.mxu0 %v1472
    %4652 = vmatprep.subr.mxu0 %v1465
    %4653 = vmatpush2.msra.mxu0 %v1464
    %4654 = vmatprep.subr.mxu0 %v1457
    %4655 = vmatpush2.msra.mxu0 %v1456
    %4656 = vmatprep.subr.mxu0 %v1449
    %4657 = vmatpush2.msra.mxu0 %v1448
    %4658 = vmatprep.subr.mxu0 %v1441
    %4659 = vmatpush2.msra.mxu0 %v1440
    %4660 = vmatprep.subr.mxu0 %v1433
    %4661 = vmatpush2.msra.mxu0 %v1432
    %4662 = vmatprep.subr.mxu0 %v1425
    %4663 = vmatpush2.msra.mxu0 %v1424
    %4664 = vmatprep.subr.mxu0 %v1417
    %4665 = vmatpush2.msra.mxu0 %v1416
    %4666 = vmatprep.subr.mxu0 %v1409
    %4667 = vmatpush2.msra.mxu0 %v1408
    %4668 = vmatprep.subr.mxu0 %v1401
    %4669 = vmatpush2.msra.mxu0 %v1400
    %4670 = vmatprep.subr.mxu0 %v1393
    %4671 = vmatpush2.msra.mxu0 %v1392
    %4672 = vmatprep.subr.mxu0 %v1385
    %4673 = vmatpush2.msra.mxu0 %v1384
    %4674 = vmatprep.subr.mxu0 %v1377
    %4675 = vmatpush2.msra.mxu0 %v1376
    %4676 = vmatprep.subr.mxu0 %v1369
    %4677 = vmatpush2.msra.mxu0 %v1368
    %4678 = vmatprep.subr.mxu0 %v1361
    %4679 = vmatpush2.msra.mxu0 %v1360
    %4680 = vmatprep.subr.mxu0 %v1353
    %4681 = vmatpush2.msra.mxu0 %v1352
    %4682 = vmatprep.mubr.f32.mxu0 %v4185
    %4683 = vmatmul.mubr.f32.gmra.mxu0 %v4184
    %v4684 = vpop.f32.mrf.mxu0
    %v4685 = vadd.f32 %v2144, %v4684
    %v4686 = vpop.f32.mrf.mxu0
    %v4687 = vadd.f32 %v2148, %v4686
    %4688 = vdwg.mxu0
    %4689 = vmatprep.subr.mxu0 %v1601
    %4690 = vmatpush1.msra.mxu0 %v1600
    %4691 = vmatprep.subr.mxu0 %v1593
    %4692 = vmatpush1.msra.mxu0 %v1592
    %4693 = vmatprep.subr.mxu0 %v1585
    %4694 = vmatpush1.msra.mxu0 %v1584
    %4695 = vmatprep.subr.mxu0 %v1577
    %4696 = vmatpush1.msra.mxu0 %v1576
    %4697 = vmatprep.subr.mxu0 %v1569
    %4698 = vmatpush1.msra.mxu0 %v1568
    %4699 = vmatprep.subr.mxu0 %v1561
    %4700 = vmatpush1.msra.mxu0 %v1560
    %4701 = vmatprep.subr.mxu0 %v1553
    %4702 = vmatpush1.msra.mxu0 %v1552
    %4703 = vmatprep.subr.mxu0 %v1545
    %4704 = vmatpush1.msra.mxu0 %v1544
    %4705 = vmatprep.subr.mxu0 %v1537
    %4706 = vmatpush1.msra.mxu0 %v1536
    %4707 = vmatprep.subr.mxu0 %v1529
    %4708 = vmatpush1.msra.mxu0 %v1528
    %4709 = vmatprep.subr.mxu0 %v1521
    %4710 = vmatpush1.msra.mxu0 %v1520
    %4711 = vmatprep.subr.mxu0 %v1513
    %4712 = vmatpush1.msra.mxu0 %v1512
    %4713 = vmatprep.subr.mxu0 %v1505
    %4714 = vmatpush1.msra.mxu0 %v1504
    %4715 = vmatprep.subr.mxu0 %v1497
    %4716 = vmatpush1.msra.mxu0 %v1496
    %4717 = vmatprep.subr.mxu0 %v1489
    %4718 = vmatpush1.msra.mxu0 %v1488
    %4719 = vmatprep.subr.mxu0 %v1481
    %4720 = vmatpush1.msra.mxu0 %v1480
    %4721 = vmatprep.subr.mxu0 %v1729
    %4722 = vmatpush2.msra.mxu0 %v1728
    %4723 = vmatprep.subr.mxu0 %v1721
    %4724 = vmatpush2.msra.mxu0 %v1720
    %4725 = vmatprep.subr.mxu0 %v1713
    %4726 = vmatpush2.msra.mxu0 %v1712
    %4727 = vmatprep.subr.mxu0 %v1705
    %4728 = vmatpush2.msra.mxu0 %v1704
    %4729 = vmatprep.subr.mxu0 %v1697
    %4730 = vmatpush2.msra.mxu0 %v1696
    %4731 = vmatprep.subr.mxu0 %v1689
    %4732 = vmatpush2.msra.mxu0 %v1688
    %4733 = vmatprep.subr.mxu0 %v1681
    %4734 = vmatpush2.msra.mxu0 %v1680
    %4735 = vmatprep.subr.mxu0 %v1673
    %4736 = vmatpush2.msra.mxu0 %v1672
    %4737 = vmatprep.subr.mxu0 %v1665
    %4738 = vmatpush2.msra.mxu0 %v1664
    %4739 = vmatprep.subr.mxu0 %v1657
    %4740 = vmatpush2.msra.mxu0 %v1656
    %4741 = vmatprep.subr.mxu0 %v1649
    %4742 = vmatpush2.msra.mxu0 %v1648
    %4743 = vmatprep.subr.mxu0 %v1641
    %4744 = vmatpush2.msra.mxu0 %v1640
    %4745 = vmatprep.subr.mxu0 %v1633
    %4746 = vmatpush2.msra.mxu0 %v1632
    %4747 = vmatprep.subr.mxu0 %v1625
    %4748 = vmatpush2.msra.mxu0 %v1624
    %4749 = vmatprep.subr.mxu0 %v1617
    %4750 = vmatpush2.msra.mxu0 %v1616
    %4751 = vmatprep.subr.mxu0 %v1609
    %4752 = vmatpush2.msra.mxu0 %v1608
    %4753 = vmatprep.mubr.f32.mxu0 %v4187
    %4754 = vmatmul.mubr.f32.gmra.mxu0 %v4186
    %v4755 = vpop.f32.mrf.mxu0
    %v4756 = vadd.f32 %v4685, %v4755
    %v4757 = vpop.f32.mrf.mxu0
    %v4758 = vadd.f32 %v4687, %v4757
    %4759 = vdwg.mxu0
    %v4760 = vxor.u32 %v4330, 2147483648
    %v4761 = vxor.u32 %v4332, 2147483648
    %v4762 = vmul.f32 %v4760, 1.442695
    %v4763 = vpow.pop %v4762
    %v4764 = vmul.f32 %v4761, 1.442695
    %v4765 = vpow.pop %v4764
    %v4766 = vadd.f32 %v4763, 1.0
    %v4767 = vadd.f32 %v4765, 1.0
    %v4768 = vrcp.pop %v4766
    %v4769 = vmul.f32 1.0, %v4768
    %v4770 = vrcp.pop %v4767
    %v4771 = vmul.f32 1.0, %v4770
    %v4772 = vxor.u32 %v4472, 2147483648
    %v4773 = vxor.u32 %v4474, 2147483648
    %v4774 = vmul.f32 %v4772, 1.442695
    %v4775 = vpow.pop %v4774
    %v4776 = vmul.f32 %v4773, 1.442695
    %v4777 = vpow.pop %v4776
    %v4778 = vadd.f32 %v4775, 1.0
    %v4779 = vadd.f32 %v4777, 1.0
    %v4780 = vrcp.pop %v4778
    %v4781 = vmul.f32 1.0, %v4780
    %v4782 = vrcp.pop %v4779
    %v4783 = vmul.f32 1.0, %v4782
    %v4784 = vtanh.pop %v4614
    %v4785 = vtanh.pop %v4616
    %v4786 = vxor.u32 %v4756, 2147483648
    %v4787 = vxor.u32 %v4758, 2147483648
    %v4788 = vmul.f32 %v4786, 1.442695
    %v4789 = vpow.pop %v4788
    %v4790 = vmul.f32 %v4787, 1.442695
    %v4791 = vpow.pop %v4790
    %v4792 = vadd.f32 %v4789, 1.0
    %v4793 = vadd.f32 %v4791, 1.0
    %v4794 = vrcp.pop %v4792
    %v4795 = vmul.f32 1.0, %v4794
    %v4796 = vrcp.pop %v4793
    %v4797 = vmul.f32 1.0, %v4796
    %v4798 = vmul.f32 %v4781, %v3788
    %v4799 = vmul.f32 %v4783, %v3789
    %v4800 = vmul.f32 %v4769, %v4784
    %v4801 = vmul.f32 %v4771, %v4785
    %v4802 = vadd.f32 %v4798, %v4800
    %v4803 = vadd.f32 %v4799, %v4801
    %v4804 = vtanh.pop %v4802
    %v4805 = vtanh.pop %v4803
    %v4806 = vmul.f32 %v4795, %v4804
    %v4807 = vmul.f32 %v4797, %v4805
    %v4810 = vrot.slane %v4806, 4
    %v4811 = vrot.slane %v4807, 4
    %4814 = vst [vmem:[#allocation7] sm:$0x30] %v4810
    %4815 = vst [vmem:[#allocation7 + $0x8] sm:$0x30] %v4811
    %v4816 = vld [vmem:[#allocation6] sm:$0xc0]
    %v4817 = vld [vmem:[#allocation6 + $0x8] sm:$0xc0]
    %v4818 = vld [vmem:[#allocation6 + $0x10] sm:$0xc0]
    %v4819 = vld [vmem:[#allocation6 + $0x18] sm:$0xc0]
    %v4820 = vld [vmem:[#allocation6 + $0x20] sm:$0xc0]
    %v4821 = vld [vmem:[#allocation6 + $0x28] sm:$0xc0]
    %v4822 = vld [vmem:[#allocation6 + $0x30] sm:$0xc0]
    %v4823 = vld [vmem:[#allocation6 + $0x38] sm:$0xc0]
    %4824 = vmatprep.subr.mxu0 %v1083
    %4825 = vmatpush1.msra.mxu0 %v1082
    %4826 = vmatprep.subr.mxu0 %v1075
    %4827 = vmatpush1.msra.mxu0 %v1074
    %4828 = vmatprep.subr.mxu0 %v1067
    %4829 = vmatpush1.msra.mxu0 %v1066
    %4830 = vmatprep.subr.mxu0 %v1059
    %4831 = vmatpush1.msra.mxu0 %v1058
    %4832 = vmatprep.subr.mxu0 %v1051
    %4833 = vmatpush1.msra.mxu0 %v1050
    %4834 = vmatprep.subr.mxu0 %v1043
    %4835 = vmatpush1.msra.mxu0 %v1042
    %4836 = vmatprep.subr.mxu0 %v1035
    %4837 = vmatpush1.msra.mxu0 %v1034
    %4838 = vmatprep.subr.mxu0 %v1027
    %4839 = vmatpush1.msra.mxu0 %v1026
    %4840 = vmatprep.subr.mxu0 %v1019
    %4841 = vmatpush1.msra.mxu0 %v1018
    %4842 = vmatprep.subr.mxu0 %v1011
    %4843 = vmatpush1.msra.mxu0 %v1010
    %4844 = vmatprep.subr.mxu0 %v1003
    %4845 = vmatpush1.msra.mxu0 %v1002
    %4846 = vmatprep.subr.mxu0 %v995
    %4847 = vmatpush1.msra.mxu0 %v994
    %4848 = vmatprep.subr.mxu0 %v987
    %4849 = vmatpush1.msra.mxu0 %v986
    %4850 = vmatprep.subr.mxu0 %v979
    %4851 = vmatpush1.msra.mxu0 %v978
    %4852 = vmatprep.subr.mxu0 %v971
    %4853 = vmatpush1.msra.mxu0 %v970
    %4854 = vmatprep.subr.mxu0 %v963
    %4855 = vmatpush1.msra.mxu0 %v962
    %4856 = vmatprep.subr.mxu0 %v1211
    %4857 = vmatpush2.msra.mxu0 %v1210
    %4858 = vmatprep.subr.mxu0 %v1203
    %4859 = vmatpush2.msra.mxu0 %v1202
    %4860 = vmatprep.subr.mxu0 %v1195
    %4861 = vmatpush2.msra.mxu0 %v1194
    %4862 = vmatprep.subr.mxu0 %v1187
    %4863 = vmatpush2.msra.mxu0 %v1186
    %4864 = vmatprep.subr.mxu0 %v1179
    %4865 = vmatpush2.msra.mxu0 %v1178
    %4866 = vmatprep.subr.mxu0 %v1171
    %4867 = vmatpush2.msra.mxu0 %v1170
    %4868 = vmatprep.subr.mxu0 %v1163
    %4869 = vmatpush2.msra.mxu0 %v1162
    %4870 = vmatprep.subr.mxu0 %v1155
    %4871 = vmatpush2.msra.mxu0 %v1154
    %4872 = vmatprep.subr.mxu0 %v1147
    %4873 = vmatpush2.msra.mxu0 %v1146
    %4874 = vmatprep.subr.mxu0 %v1139
    %4875 = vmatpush2.msra.mxu0 %v1138
    %4876 = vmatprep.subr.mxu0 %v1131
    %4877 = vmatpush2.msra.mxu0 %v1130
    %4878 = vmatprep.subr.mxu0 %v1123
    %4879 = vmatpush2.msra.mxu0 %v1122
    %4880 = vmatprep.subr.mxu0 %v1115
    %4881 = vmatpush2.msra.mxu0 %v1114
    %4882 = vmatprep.subr.mxu0 %v1107
    %4883 = vmatpush2.msra.mxu0 %v1106
    %4884 = vmatprep.subr.mxu0 %v1099
    %4885 = vmatpush2.msra.mxu0 %v1098
    %4886 = vmatprep.subr.mxu0 %v1091
    %4887 = vmatpush2.msra.mxu0 %v1090
    %4888 = vmatprep.mubr.f32.mxu0 %v4185
    %4889 = vmatmul.mubr.f32.gmra.mxu0 %v4184
    %v4890 = vpop.f32.mrf.mxu0
    %v4891 = vadd.f32 0.0, %v4890
    %v4892 = vpop.f32.mrf.mxu0
    %v4893 = vadd.f32 0.0, %v4892
    %4894 = vdwg.mxu0
    %4895 = vmatprep.subr.mxu0 %v1085
    %4896 = vmatpush1.msra.mxu0 %v1084
    %4897 = vmatprep.subr.mxu0 %v1077
    %4898 = vmatpush1.msra.mxu0 %v1076
    %4899 = vmatprep.subr.mxu0 %v1069
    %4900 = vmatpush1.msra.mxu0 %v1068
    %4901 = vmatprep.subr.mxu0 %v1061
    %4902 = vmatpush1.msra.mxu0 %v1060
    %4903 = vmatprep.subr.mxu0 %v1053
    %4904 = vmatpush1.msra.mxu0 %v1052
    %4905 = vmatprep.subr.mxu0 %v1045
    %4906 = vmatpush1.msra.mxu0 %v1044
    %4907 = vmatprep.subr.mxu0 %v1037
    %4908 = vmatpush1.msra.mxu0 %v1036
    %4909 = vmatprep.subr.mxu0 %v1029
    %4910 = vmatpush1.msra.mxu0 %v1028
    %4911 = vmatprep.subr.mxu0 %v1021
    %4912 = vmatpush1.msra.mxu0 %v1020
    %4913 = vmatprep.subr.mxu0 %v1013
    %4914 = vmatpush1.msra.mxu0 %v1012
    %4915 = vmatprep.subr.mxu0 %v1005
    %4916 = vmatpush1.msra.mxu0 %v1004
    %4917 = vmatprep.subr.mxu0 %v997
    %4918 = vmatpush1.msra.mxu0 %v996
    %4919 = vmatprep.subr.mxu0 %v989
    %4920 = vmatpush1.msra.mxu0 %v988
    %4921 = vmatprep.subr.mxu0 %v981
    %4922 = vmatpush1.msra.mxu0 %v980
    %4923 = vmatprep.subr.mxu0 %v973
    %4924 = vmatpush1.msra.mxu0 %v972
    %4925 = vmatprep.subr.mxu0 %v965
    %4926 = vmatpush1.msra.mxu0 %v964
    %4927 = vmatprep.subr.mxu0 %v1213
    %4928 = vmatpush2.msra.mxu0 %v1212
    %4929 = vmatprep.subr.mxu0 %v1205
    %4930 = vmatpush2.msra.mxu0 %v1204
    %4931 = vmatprep.subr.mxu0 %v1197
    %4932 = vmatpush2.msra.mxu0 %v1196
    %4933 = vmatprep.subr.mxu0 %v1189
    %4934 = vmatpush2.msra.mxu0 %v1188
    %4935 = vmatprep.subr.mxu0 %v1181
    %4936 = vmatpush2.msra.mxu0 %v1180
    %4937 = vmatprep.subr.mxu0 %v1173
    %4938 = vmatpush2.msra.mxu0 %v1172
    %4939 = vmatprep.subr.mxu0 %v1165
    %4940 = vmatpush2.msra.mxu0 %v1164
    %4941 = vmatprep.subr.mxu0 %v1157
    %4942 = vmatpush2.msra.mxu0 %v1156
    %4943 = vmatprep.subr.mxu0 %v1149
    %4944 = vmatpush2.msra.mxu0 %v1148
    %4945 = vmatprep.subr.mxu0 %v1141
    %4946 = vmatpush2.msra.mxu0 %v1140
    %4947 = vmatprep.subr.mxu0 %v1133
    %4948 = vmatpush2.msra.mxu0 %v1132
    %4949 = vmatprep.subr.mxu0 %v1125
    %4950 = vmatpush2.msra.mxu0 %v1124
    %4951 = vmatprep.subr.mxu0 %v1117
    %4952 = vmatpush2.msra.mxu0 %v1116
    %4953 = vmatprep.subr.mxu0 %v1109
    %4954 = vmatpush2.msra.mxu0 %v1108
    %4955 = vmatprep.subr.mxu0 %v1101
    %4956 = vmatpush2.msra.mxu0 %v1100
    %4957 = vmatprep.subr.mxu0 %v1093
    %4958 = vmatpush2.msra.mxu0 %v1092
    %4959 = vmatprep.mubr.f32.mxu0 %v4185
    %4960 = vmatmul.mubr.f32.gmra.mxu0 %v4184
    %v4961 = vpop.f32.mrf.mxu0
    %v4962 = vadd.f32 0.0, %v4961
    %v4963 = vpop.f32.mrf.mxu0
    %v4964 = vadd.f32 0.0, %v4963
    %4965 = vdwg.mxu0
    %4966 = vmatprep.subr.mxu0 %v1087
    %4967 = vmatpush1.msra.mxu0 %v1086
    %4968 = vmatprep.subr.mxu0 %v1079
    %4969 = vmatpush1.msra.mxu0 %v1078
    %4970 = vmatprep.subr.mxu0 %v1071
    %4971 = vmatpush1.msra.mxu0 %v1070
    %4972 = vmatprep.subr.mxu0 %v1063
    %4973 = vmatpush1.msra.mxu0 %v1062
    %4974 = vmatprep.subr.mxu0 %v1055
    %4975 = vmatpush1.msra.mxu0 %v1054
    %4976 = vmatprep.subr.mxu0 %v1047
    %4977 = vmatpush1.msra.mxu0 %v1046
    %4978 = vmatprep.subr.mxu0 %v1039
    %4979 = vmatpush1.msra.mxu0 %v1038
    %4980 = vmatprep.subr.mxu0 %v1031
    %4981 = vmatpush1.msra.mxu0 %v1030
    %4982 = vmatprep.subr.mxu0 %v1023
    %4983 = vmatpush1.msra.mxu0 %v1022
    %4984 = vmatprep.subr.mxu0 %v1015
    %4985 = vmatpush1.msra.mxu0 %v1014
    %4986 = vmatprep.subr.mxu0 %v1007
    %4987 = vmatpush1.msra.mxu0 %v1006
    %4988 = vmatprep.subr.mxu0 %v999
    %4989 = vmatpush1.msra.mxu0 %v998
    %4990 = vmatprep.subr.mxu0 %v991
    %4991 = vmatpush1.msra.mxu0 %v990
    %4992 = vmatprep.subr.mxu0 %v983
    %4993 = vmatpush1.msra.mxu0 %v982
    %4994 = vmatprep.subr.mxu0 %v975
    %4995 = vmatpush1.msra.mxu0 %v974
    %4996 = vmatprep.subr.mxu0 %v967
    %4997 = vmatpush1.msra.mxu0 %v966
    %4998 = vmatprep.subr.mxu0 %v1215
    %4999 = vmatpush2.msra.mxu0 %v1214
    %5000 = vmatprep.subr.mxu0 %v1207
    %5001 = vmatpush2.msra.mxu0 %v1206
    %5002 = vmatprep.subr.mxu0 %v1199
    %5003 = vmatpush2.msra.mxu0 %v1198
    %5004 = vmatprep.subr.mxu0 %v1191
    %5005 = vmatpush2.msra.mxu0 %v1190
    %5006 = vmatprep.subr.mxu0 %v1183
    %5007 = vmatpush2.msra.mxu0 %v1182
    %5008 = vmatprep.subr.mxu0 %v1175
    %5009 = vmatpush2.msra.mxu0 %v1174
    %5010 = vmatprep.subr.mxu0 %v1167
    %5011 = vmatpush2.msra.mxu0 %v1166
    %5012 = vmatprep.subr.mxu0 %v1159
    %5013 = vmatpush2.msra.mxu0 %v1158
    %5014 = vmatprep.subr.mxu0 %v1151
    %5015 = vmatpush2.msra.mxu0 %v1150
    %5016 = vmatprep.subr.mxu0 %v1143
    %5017 = vmatpush2.msra.mxu0 %v1142
    %5018 = vmatprep.subr.mxu0 %v1135
    %5019 = vmatpush2.msra.mxu0 %v1134
    %5020 = vmatprep.subr.mxu0 %v1127
    %5021 = vmatpush2.msra.mxu0 %v1126
    %5022 = vmatprep.subr.mxu0 %v1119
    %5023 = vmatpush2.msra.mxu0 %v1118
    %5024 = vmatprep.subr.mxu0 %v1111
    %5025 = vmatpush2.msra.mxu0 %v1110
    %5026 = vmatprep.subr.mxu0 %v1103
    %5027 = vmatpush2.msra.mxu0 %v1102
    %5028 = vmatprep.subr.mxu0 %v1095
    %5029 = vmatpush2.msra.mxu0 %v1094
    %5030 = vmatprep.mubr.f32.mxu0 %v4185
    %5031 = vmatmul.mubr.f32.gmra.mxu0 %v4184
    %v5032 = vpop.f32.mrf.mxu0
    %v5033 = vadd.f32 0.0, %v5032
    %v5034 = vpop.f32.mrf.mxu0
    %v5035 = vadd.f32 0.0, %v5034
    %5036 = vdwg.mxu0
    %5037 = vmatprep.subr.mxu0 %v1089
    %5038 = vmatpush1.msra.mxu0 %v1088
    %5039 = vmatprep.subr.mxu0 %v1081
    %5040 = vmatpush1.msra.mxu0 %v1080
    %5041 = vmatprep.subr.mxu0 %v1073
    %5042 = vmatpush1.msra.mxu0 %v1072
    %5043 = vmatprep.subr.mxu0 %v1065
    %5044 = vmatpush1.msra.mxu0 %v1064
    %5045 = vmatprep.subr.mxu0 %v1057
    %5046 = vmatpush1.msra.mxu0 %v1056
    %5047 = vmatprep.subr.mxu0 %v1049
    %5048 = vmatpush1.msra.mxu0 %v1048
    %5049 = vmatprep.subr.mxu0 %v1041
    %5050 = vmatpush1.msra.mxu0 %v1040
    %5051 = vmatprep.subr.mxu0 %v1033
    %5052 = vmatpush1.msra.mxu0 %v1032
    %5053 = vmatprep.subr.mxu0 %v1025
    %5054 = vmatpush1.msra.mxu0 %v1024
    %5055 = vmatprep.subr.mxu0 %v1017
    %5056 = vmatpush1.msra.mxu0 %v1016
    %5057 = vmatprep.subr.mxu0 %v1009
    %5058 = vmatpush1.msra.mxu0 %v1008
    %5059 = vmatprep.subr.mxu0 %v1001
    %5060 = vmatpush1.msra.mxu0 %v1000
    %5061 = vmatprep.subr.mxu0 %v993
    %5062 = vmatpush1.msra.mxu0 %v992
    %5063 = vmatprep.subr.mxu0 %v985
    %5064 = vmatpush1.msra.mxu0 %v984
    %5065 = vmatprep.subr.mxu0 %v977
    %5066 = vmatpush1.msra.mxu0 %v976
    %5067 = vmatprep.subr.mxu0 %v969
    %5068 = vmatpush1.msra.mxu0 %v968
    %5069 = vmatprep.subr.mxu0 %v1217
    %5070 = vmatpush2.msra.mxu0 %v1216
    %5071 = vmatprep.subr.mxu0 %v1209
    %5072 = vmatpush2.msra.mxu0 %v1208
    %5073 = vmatprep.subr.mxu0 %v1201
    %5074 = vmatpush2.msra.mxu0 %v1200
    %5075 = vmatprep.subr.mxu0 %v1193
    %5076 = vmatpush2.msra.mxu0 %v1192
    %5077 = vmatprep.subr.mxu0 %v1185
    %5078 = vmatpush2.msra.mxu0 %v1184
    %5079 = vmatprep.subr.mxu0 %v1177
    %5080 = vmatpush2.msra.mxu0 %v1176
    %5081 = vmatprep.subr.mxu0 %v1169
    %5082 = vmatpush2.msra.mxu0 %v1168
    %5083 = vmatprep.subr.mxu0 %v1161
    %5084 = vmatpush2.msra.mxu0 %v1160
    %5085 = vmatprep.subr.mxu0 %v1153
    %5086 = vmatpush2.msra.mxu0 %v1152
    %5087 = vmatprep.subr.mxu0 %v1145
    %5088 = vmatpush2.msra.mxu0 %v1144
    %5089 = vmatprep.subr.mxu0 %v1137
    %5090 = vmatpush2.msra.mxu0 %v1136
    %5091 = vmatprep.subr.mxu0 %v1129
    %5092 = vmatpush2.msra.mxu0 %v1128
    %5093 = vmatprep.subr.mxu0 %v1121
    %5094 = vmatpush2.msra.mxu0 %v1120
    %5095 = vmatprep.subr.mxu0 %v1113
    %5096 = vmatpush2.msra.mxu0 %v1112
    %5097 = vmatprep.subr.mxu0 %v1105
    %5098 = vmatpush2.msra.mxu0 %v1104
    %5099 = vmatprep.subr.mxu0 %v1097
    %5100 = vmatpush2.msra.mxu0 %v1096
    %5101 = vmatprep.mubr.f32.mxu0 %v4185
    %5102 = vmatmul.mubr.f32.gmra.mxu0 %v4184
    %v5103 = vpop.f32.mrf.mxu0
    %v5104 = vadd.f32 0.0, %v5103
    %v5105 = vpop.f32.mrf.mxu0
    %v5106 = vadd.f32 0.0, %v5105
    %5107 = vdwg.mxu0
    %v5116 = vrot.slane %v4891, 2
    %v5117 = vrot.slane %v4893, 2
    %v5118 = vrot.slane %v4962, 2
    %v5119 = vrot.slane %v4964, 2
    %v5120 = vrot.slane %v5033, 2
    %v5121 = vrot.slane %v5035, 2
    %v5122 = vrot.slane %v5104, 2
    %v5123 = vrot.slane %v5106, 2
    %v5132 = vadd.f32 %v4816, %v5116
    %v5133 = vadd.f32 %v4817, %v5117
    %v5134 = vadd.f32 %v4818, %v5118
    %v5135 = vadd.f32 %v4819, %v5119
    %v5136 = vadd.f32 %v4820, %v5120
    %v5137 = vadd.f32 %v4821, %v5121
    %v5138 = vadd.f32 %v4822, %v5122
    %v5139 = vadd.f32 %v4823, %v5123
    %v5140 = vxor.u32 %v5132, 2147483648
    %v5141 = vxor.u32 %v5133, 2147483648
    %v5142 = vmul.f32 %v5140, 1.442695
    %v5143 = vpow.pop %v5142
    %v5144 = vmul.f32 %v5141, 1.442695
    %v5145 = vpow.pop %v5144
    %v5146 = vadd.f32 %v5143, 1.0
    %v5147 = vadd.f32 %v5145, 1.0
    %v5148 = vrcp.pop %v5146
    %v5149 = vmul.f32 1.0, %v5148
    %v5150 = vrcp.pop %v5147
    %v5151 = vmul.f32 1.0, %v5150
    %v5152 = vxor.u32 %v5134, 2147483648
    %v5153 = vxor.u32 %v5135, 2147483648
    %v5154 = vmul.f32 %v5152, 1.442695
    %v5155 = vpow.pop %v5154
    %v5156 = vmul.f32 %v5153, 1.442695
    %v5157 = vpow.pop %v5156
    %v5158 = vadd.f32 %v5155, 1.0
    %v5159 = vadd.f32 %v5157, 1.0
    %v5160 = vrcp.pop %v5158
    %v5161 = vmul.f32 1.0, %v5160
    %v5162 = vrcp.pop %v5159
    %v5163 = vmul.f32 1.0, %v5162
    %v5164 = vtanh.pop %v5136
    %v5165 = vtanh.pop %v5137
    %v5166 = vxor.u32 %v5138, 2147483648
    %v5167 = vxor.u32 %v5139, 2147483648
    %v5168 = vmul.f32 %v5166, 1.442695
    %v5169 = vpow.pop %v5168
    %v5170 = vmul.f32 %v5167, 1.442695
    %v5171 = vpow.pop %v5170
    %v5172 = vadd.f32 %v5169, 1.0
    %v5173 = vadd.f32 %v5171, 1.0
    %v5174 = vrcp.pop %v5172
    %v5175 = vmul.f32 1.0, %v5174
    %v5176 = vrcp.pop %v5173
    %v5177 = vmul.f32 1.0, %v5176
    %v5180 = vrot.slane %v4174, 6
    %v5181 = vrot.slane %v4175, 6
    %v5184 = vmul.f32 %v5161, %v5180
    %v5185 = vmul.f32 %v5163, %v5181
    %v5186 = vmul.f32 %v5149, %v5164
    %v5187 = vmul.f32 %v5151, %v5165
    %v5188 = vadd.f32 %v5184, %v5186
    %v5189 = vadd.f32 %v5185, %v5187
    %v5190 = vtanh.pop %v5188
    %v5191 = vtanh.pop %v5189
    %v5192 = vmul.f32 %v5175, %v5190
    %v5193 = vmul.f32 %v5177, %v5191
    %v5194 = vrot.slane %v4806, 2
    %v5195 = vrot.slane %v4807, 2
    %v5198 = vrot.slane %v5192, 6
    %v5199 = vrot.slane %v5193, 6
    %v5200 = vrot.slane %v5194, 6
    %v5201 = vrot.slane %v5195, 6
    %5206 = vmatprep.subr.mxu0 %v1339
    %5207 = vmatpush1.msra.mxu0 %v1338
    %5208 = vmatprep.subr.mxu0 %v1331
    %5209 = vmatpush1.msra.mxu0 %v1330
    %5210 = vmatprep.subr.mxu0 %v1323
    %5211 = vmatpush1.msra.mxu0 %v1322
    %5212 = vmatprep.subr.mxu0 %v1315
    %5213 = vmatpush1.msra.mxu0 %v1314
    %5214 = vmatprep.subr.mxu0 %v1307
    %5215 = vmatpush1.msra.mxu0 %v1306
    %5216 = vmatprep.subr.mxu0 %v1299
    %5217 = vmatpush1.msra.mxu0 %v1298
    %5218 = vmatprep.subr.mxu0 %v1291
    %5219 = vmatpush1.msra.mxu0 %v1290
    %5220 = vmatprep.subr.mxu0 %v1283
    %5221 = vmatpush1.msra.mxu0 %v1282
    %5222 = vmatprep.subr.mxu0 %v1275
    %5223 = vmatpush1.msra.mxu0 %v1274
    %5224 = vmatprep.subr.mxu0 %v1267
    %5225 = vmatpush1.msra.mxu0 %v1266
    %5226 = vmatprep.subr.mxu0 %v1259
    %5227 = vmatpush1.msra.mxu0 %v1258
    %5228 = vmatprep.subr.mxu0 %v1251
    %5229 = vmatpush1.msra.mxu0 %v1250
    %5230 = vmatprep.subr.mxu0 %v1243
    %5231 = vmatpush1.msra.mxu0 %v1242
    %5232 = vmatprep.subr.mxu0 %v1235
    %5233 = vmatpush1.msra.mxu0 %v1234
    %5234 = vmatprep.subr.mxu0 %v1227
    %5235 = vmatpush1.msra.mxu0 %v1226
    %5236 = vmatprep.subr.mxu0 %v1219
    %5237 = vmatpush1.msra.mxu0 %v1218
    %5238 = vmatprep.subr.mxu0 %v1467
    %5239 = vmatpush2.msra.mxu0 %v1466
    %5240 = vmatprep.subr.mxu0 %v1459
    %5241 = vmatpush2.msra.mxu0 %v1458
    %5242 = vmatprep.subr.mxu0 %v1451
    %5243 = vmatpush2.msra.mxu0 %v1450
    %5244 = vmatprep.subr.mxu0 %v1443
    %5245 = vmatpush2.msra.mxu0 %v1442
    %5246 = vmatprep.subr.mxu0 %v1435
    %5247 = vmatpush2.msra.mxu0 %v1434
    %5248 = vmatprep.subr.mxu0 %v1427
    %5249 = vmatpush2.msra.mxu0 %v1426
    %5250 = vmatprep.subr.mxu0 %v1419
    %5251 = vmatpush2.msra.mxu0 %v1418
    %5252 = vmatprep.subr.mxu0 %v1411
    %5253 = vmatpush2.msra.mxu0 %v1410
    %5254 = vmatprep.subr.mxu0 %v1403
    %5255 = vmatpush2.msra.mxu0 %v1402
    %5256 = vmatprep.subr.mxu0 %v1395
    %5257 = vmatpush2.msra.mxu0 %v1394
    %5258 = vmatprep.subr.mxu0 %v1387
    %5259 = vmatpush2.msra.mxu0 %v1386
    %5260 = vmatprep.subr.mxu0 %v1379
    %5261 = vmatpush2.msra.mxu0 %v1378
    %5262 = vmatprep.subr.mxu0 %v1371
    %5263 = vmatpush2.msra.mxu0 %v1370
    %5264 = vmatprep.subr.mxu0 %v1363
    %5265 = vmatpush2.msra.mxu0 %v1362
    %5266 = vmatprep.subr.mxu0 %v1355
    %5267 = vmatpush2.msra.mxu0 %v1354
    %5268 = vmatprep.subr.mxu0 %v1347
    %5269 = vmatpush2.msra.mxu0 %v1346
    %5270 = vmatprep.mubr.f32.mxu0 %v5199
    %5271 = vmatmul.mubr.f32.gmra.mxu0 %v5198
    %v5272 = vpop.f32.mrf.mxu0
    %v5273 = vadd.f32 %v2120, %v5272
    %v5274 = vpop.f32.mrf.mxu0
    %v5275 = vadd.f32 %v2124, %v5274
    %5276 = vdwg.mxu0
    %5277 = vmatprep.subr.mxu0 %v1595
    %5278 = vmatpush1.msra.mxu0 %v1594
    %5279 = vmatprep.subr.mxu0 %v1587
    %5280 = vmatpush1.msra.mxu0 %v1586
    %5281 = vmatprep.subr.mxu0 %v1579
    %5282 = vmatpush1.msra.mxu0 %v1578
    %5283 = vmatprep.subr.mxu0 %v1571
    %5284 = vmatpush1.msra.mxu0 %v1570
    %5285 = vmatprep.subr.mxu0 %v1563
    %5286 = vmatpush1.msra.mxu0 %v1562
    %5287 = vmatprep.subr.mxu0 %v1555
    %5288 = vmatpush1.msra.mxu0 %v1554
    %5289 = vmatprep.subr.mxu0 %v1547
    %5290 = vmatpush1.msra.mxu0 %v1546
    %5291 = vmatprep.subr.mxu0 %v1539
    %5292 = vmatpush1.msra.mxu0 %v1538
    %5293 = vmatprep.subr.mxu0 %v1531
    %5294 = vmatpush1.msra.mxu0 %v1530
    %5295 = vmatprep.subr.mxu0 %v1523
    %5296 = vmatpush1.msra.mxu0 %v1522
    %5297 = vmatprep.subr.mxu0 %v1515
    %5298 = vmatpush1.msra.mxu0 %v1514
    %5299 = vmatprep.subr.mxu0 %v1507
    %5300 = vmatpush1.msra.mxu0 %v1506
    %5301 = vmatprep.subr.mxu0 %v1499
    %5302 = vmatpush1.msra.mxu0 %v1498
    %5303 = vmatprep.subr.mxu0 %v1491
    %5304 = vmatpush1.msra.mxu0 %v1490
    %5305 = vmatprep.subr.mxu0 %v1483
    %5306 = vmatpush1.msra.mxu0 %v1482
    %5307 = vmatprep.subr.mxu0 %v1475
    %5308 = vmatpush1.msra.mxu0 %v1474
    %5309 = vmatprep.subr.mxu0 %v1723
    %5310 = vmatpush2.msra.mxu0 %v1722
    %5311 = vmatprep.subr.mxu0 %v1715
    %5312 = vmatpush2.msra.mxu0 %v1714
    %5313 = vmatprep.subr.mxu0 %v1707
    %5314 = vmatpush2.msra.mxu0 %v1706
    %5315 = vmatprep.subr.mxu0 %v1699
    %5316 = vmatpush2.msra.mxu0 %v1698
    %5317 = vmatprep.subr.mxu0 %v1691
    %5318 = vmatpush2.msra.mxu0 %v1690
    %5319 = vmatprep.subr.mxu0 %v1683
    %5320 = vmatpush2.msra.mxu0 %v1682
    %5321 = vmatprep.subr.mxu0 %v1675
    %5322 = vmatpush2.msra.mxu0 %v1674
    %5323 = vmatprep.subr.mxu0 %v1667
    %5324 = vmatpush2.msra.mxu0 %v1666
    %5325 = vmatprep.subr.mxu0 %v1659
    %5326 = vmatpush2.msra.mxu0 %v1658
    %5327 = vmatprep.subr.mxu0 %v1651
    %5328 = vmatpush2.msra.mxu0 %v1650
    %5329 = vmatprep.subr.mxu0 %v1643
    %5330 = vmatpush2.msra.mxu0 %v1642
    %5331 = vmatprep.subr.mxu0 %v1635
    %5332 = vmatpush2.msra.mxu0 %v1634
    %5333 = vmatprep.subr.mxu0 %v1627
    %5334 = vmatpush2.msra.mxu0 %v1626
    %5335 = vmatprep.subr.mxu0 %v1619
    %5336 = vmatpush2.msra.mxu0 %v1618
    %5337 = vmatprep.subr.mxu0 %v1611
    %5338 = vmatpush2.msra.mxu0 %v1610
    %5339 = vmatprep.subr.mxu0 %v1603
    %5340 = vmatpush2.msra.mxu0 %v1602
    %5341 = vmatprep.mubr.f32.mxu0 %v5201
    %5342 = vmatmul.mubr.f32.gmra.mxu0 %v5200
    %v5343 = vpop.f32.mrf.mxu0
    %v5344 = vadd.f32 %v5273, %v5343
    %v5345 = vpop.f32.mrf.mxu0
    %v5346 = vadd.f32 %v5275, %v5345
    %5347 = vdwg.mxu0
    %5348 = vmatprep.subr.mxu0 %v1341
    %5349 = vmatpush1.msra.mxu0 %v1340
    %5350 = vmatprep.subr.mxu0 %v1333
    %5351 = vmatpush1.msra.mxu0 %v1332
    %5352 = vmatprep.subr.mxu0 %v1325
    %5353 = vmatpush1.msra.mxu0 %v1324
    %5354 = vmatprep.subr.mxu0 %v1317
    %5355 = vmatpush1.msra.mxu0 %v1316
    %5356 = vmatprep.subr.mxu0 %v1309
    %5357 = vmatpush1.msra.mxu0 %v1308
    %5358 = vmatprep.subr.mxu0 %v1301
    %5359 = vmatpush1.msra.mxu0 %v1300
    %5360 = vmatprep.subr.mxu0 %v1293
    %5361 = vmatpush1.msra.mxu0 %v1292
    %5362 = vmatprep.subr.mxu0 %v1285
    %5363 = vmatpush1.msra.mxu0 %v1284
    %5364 = vmatprep.subr.mxu0 %v1277
    %5365 = vmatpush1.msra.mxu0 %v1276
    %5366 = vmatprep.subr.mxu0 %v1269
    %5367 = vmatpush1.msra.mxu0 %v1268
    %5368 = vmatprep.subr.mxu0 %v1261
    %5369 = vmatpush1.msra.mxu0 %v1260
    %5370 = vmatprep.subr.mxu0 %v1253
    %5371 = vmatpush1.msra.mxu0 %v1252
    %5372 = vmatprep.subr.mxu0 %v1245
    %5373 = vmatpush1.msra.mxu0 %v1244
    %5374 = vmatprep.subr.mxu0 %v1237
    %5375 = vmatpush1.msra.mxu0 %v1236
    %5376 = vmatprep.subr.mxu0 %v1229
    %5377 = vmatpush1.msra.mxu0 %v1228
    %5378 = vmatprep.subr.mxu0 %v1221
    %5379 = vmatpush1.msra.mxu0 %v1220
    %5380 = vmatprep.subr.mxu0 %v1469
    %5381 = vmatpush2.msra.mxu0 %v1468
    %5382 = vmatprep.subr.mxu0 %v1461
    %5383 = vmatpush2.msra.mxu0 %v1460
    %5384 = vmatprep.subr.mxu0 %v1453
    %5385 = vmatpush2.msra.mxu0 %v1452
    %5386 = vmatprep.subr.mxu0 %v1445
    %5387 = vmatpush2.msra.mxu0 %v1444
    %5388 = vmatprep.subr.mxu0 %v1437
    %5389 = vmatpush2.msra.mxu0 %v1436
    %5390 = vmatprep.subr.mxu0 %v1429
    %5391 = vmatpush2.msra.mxu0 %v1428
    %5392 = vmatprep.subr.mxu0 %v1421
    %5393 = vmatpush2.msra.mxu0 %v1420
    %5394 = vmatprep.subr.mxu0 %v1413
    %5395 = vmatpush2.msra.mxu0 %v1412
    %5396 = vmatprep.subr.mxu0 %v1405
    %5397 = vmatpush2.msra.mxu0 %v1404
    %5398 = vmatprep.subr.mxu0 %v1397
    %5399 = vmatpush2.msra.mxu0 %v1396
    %5400 = vmatprep.subr.mxu0 %v1389
    %5401 = vmatpush2.msra.mxu0 %v1388
    %5402 = vmatprep.subr.mxu0 %v1381
    %5403 = vmatpush2.msra.mxu0 %v1380
    %5404 = vmatprep.subr.mxu0 %v1373
    %5405 = vmatpush2.msra.mxu0 %v1372
    %5406 = vmatprep.subr.mxu0 %v1365
    %5407 = vmatpush2.msra.mxu0 %v1364
    %5408 = vmatprep.subr.mxu0 %v1357
    %5409 = vmatpush2.msra.mxu0 %v1356
    %5410 = vmatprep.subr.mxu0 %v1349
    %5411 = vmatpush2.msra.mxu0 %v1348
    %5412 = vmatprep.mubr.f32.mxu0 %v5199
    %5413 = vmatmul.mubr.f32.gmra.mxu0 %v5198
    %v5414 = vpop.f32.mrf.mxu0
    %v5415 = vadd.f32 %v2128, %v5414
    %v5416 = vpop.f32.mrf.mxu0
    %v5417 = vadd.f32 %v2132, %v5416
    %5418 = vdwg.mxu0
    %5419 = vmatprep.subr.mxu0 %v1597
    %5420 = vmatpush1.msra.mxu0 %v1596
    %5421 = vmatprep.subr.mxu0 %v1589
    %5422 = vmatpush1.msra.mxu0 %v1588
    %5423 = vmatprep.subr.mxu0 %v1581
    %5424 = vmatpush1.msra.mxu0 %v1580
    %5425 = vmatprep.subr.mxu0 %v1573
    %5426 = vmatpush1.msra.mxu0 %v1572
    %5427 = vmatprep.subr.mxu0 %v1565
    %5428 = vmatpush1.msra.mxu0 %v1564
    %5429 = vmatprep.subr.mxu0 %v1557
    %5430 = vmatpush1.msra.mxu0 %v1556
    %5431 = vmatprep.subr.mxu0 %v1549
    %5432 = vmatpush1.msra.mxu0 %v1548
    %5433 = vmatprep.subr.mxu0 %v1541
    %5434 = vmatpush1.msra.mxu0 %v1540
    %5435 = vmatprep.subr.mxu0 %v1533
    %5436 = vmatpush1.msra.mxu0 %v1532
    %5437 = vmatprep.subr.mxu0 %v1525
    %5438 = vmatpush1.msra.mxu0 %v1524
    %5439 = vmatprep.subr.mxu0 %v1517
    %5440 = vmatpush1.msra.mxu0 %v1516
    %5441 = vmatprep.subr.mxu0 %v1509
    %5442 = vmatpush1.msra.mxu0 %v1508
    %5443 = vmatprep.subr.mxu0 %v1501
    %5444 = vmatpush1.msra.mxu0 %v1500
    %5445 = vmatprep.subr.mxu0 %v1493
    %5446 = vmatpush1.msra.mxu0 %v1492
    %5447 = vmatprep.subr.mxu0 %v1485
    %5448 = vmatpush1.msra.mxu0 %v1484
    %5449 = vmatprep.subr.mxu0 %v1477
    %5450 = vmatpush1.msra.mxu0 %v1476
    %5451 = vmatprep.subr.mxu0 %v1725
    %5452 = vmatpush2.msra.mxu0 %v1724
    %5453 = vmatprep.subr.mxu0 %v1717
    %5454 = vmatpush2.msra.mxu0 %v1716
    %5455 = vmatprep.subr.mxu0 %v1709
    %5456 = vmatpush2.msra.mxu0 %v1708
    %5457 = vmatprep.subr.mxu0 %v1701
    %5458 = vmatpush2.msra.mxu0 %v1700
    %5459 = vmatprep.subr.mxu0 %v1693
    %5460 = vmatpush2.msra.mxu0 %v1692
    %5461 = vmatprep.subr.mxu0 %v1685
    %5462 = vmatpush2.msra.mxu0 %v1684
    %5463 = vmatprep.subr.mxu0 %v1677
    %5464 = vmatpush2.msra.mxu0 %v1676
    %5465 = vmatprep.subr.mxu0 %v1669
    %5466 = vmatpush2.msra.mxu0 %v1668
    %5467 = vmatprep.subr.mxu0 %v1661
    %5468 = vmatpush2.msra.mxu0 %v1660
    %5469 = vmatprep.subr.mxu0 %v1653
    %5470 = vmatpush2.msra.mxu0 %v1652
    %5471 = vmatprep.subr.mxu0 %v1645
    %5472 = vmatpush2.msra.mxu0 %v1644
    %5473 = vmatprep.subr.mxu0 %v1637
    %5474 = vmatpush2.msra.mxu0 %v1636
    %5475 = vmatprep.subr.mxu0 %v1629
    %5476 = vmatpush2.msra.mxu0 %v1628
    %5477 = vmatprep.subr.mxu0 %v1621
    %5478 = vmatpush2.msra.mxu0 %v1620
    %5479 = vmatprep.subr.mxu0 %v1613
    %5480 = vmatpush2.msra.mxu0 %v1612
    %5481 = vmatprep.subr.mxu0 %v1605
    %5482 = vmatpush2.msra.mxu0 %v1604
    %5483 = vmatprep.mubr.f32.mxu0 %v5201
    %5484 = vmatmul.mubr.f32.gmra.mxu0 %v5200
    %v5485 = vpop.f32.mrf.mxu0
    %v5486 = vadd.f32 %v5415, %v5485
    %v5487 = vpop.f32.mrf.mxu0
    %v5488 = vadd.f32 %v5417, %v5487
    %5489 = vdwg.mxu0
    %5490 = vmatprep.subr.mxu0 %v1343
    %5491 = vmatpush1.msra.mxu0 %v1342
    %5492 = vmatprep.subr.mxu0 %v1335
    %5493 = vmatpush1.msra.mxu0 %v1334
    %5494 = vmatprep.subr.mxu0 %v1327
    %5495 = vmatpush1.msra.mxu0 %v1326
    %5496 = vmatprep.subr.mxu0 %v1319
    %5497 = vmatpush1.msra.mxu0 %v1318
    %5498 = vmatprep.subr.mxu0 %v1311
    %5499 = vmatpush1.msra.mxu0 %v1310
    %5500 = vmatprep.subr.mxu0 %v1303
    %5501 = vmatpush1.msra.mxu0 %v1302
    %5502 = vmatprep.subr.mxu0 %v1295
    %5503 = vmatpush1.msra.mxu0 %v1294
    %5504 = vmatprep.subr.mxu0 %v1287
    %5505 = vmatpush1.msra.mxu0 %v1286
    %5506 = vmatprep.subr.mxu0 %v1279
    %5507 = vmatpush1.msra.mxu0 %v1278
    %5508 = vmatprep.subr.mxu0 %v1271
    %5509 = vmatpush1.msra.mxu0 %v1270
    %5510 = vmatprep.subr.mxu0 %v1263
    %5511 = vmatpush1.msra.mxu0 %v1262
    %5512 = vmatprep.subr.mxu0 %v1255
    %5513 = vmatpush1.msra.mxu0 %v1254
    %5514 = vmatprep.subr.mxu0 %v1247
    %5515 = vmatpush1.msra.mxu0 %v1246
    %5516 = vmatprep.subr.mxu0 %v1239
    %5517 = vmatpush1.msra.mxu0 %v1238
    %5518 = vmatprep.subr.mxu0 %v1231
    %5519 = vmatpush1.msra.mxu0 %v1230
    %5520 = vmatprep.subr.mxu0 %v1223
    %5521 = vmatpush1.msra.mxu0 %v1222
    %5522 = vmatprep.subr.mxu0 %v1471
    %5523 = vmatpush2.msra.mxu0 %v1470
    %5524 = vmatprep.subr.mxu0 %v1463
    %5525 = vmatpush2.msra.mxu0 %v1462
    %5526 = vmatprep.subr.mxu0 %v1455
    %5527 = vmatpush2.msra.mxu0 %v1454
    %5528 = vmatprep.subr.mxu0 %v1447
    %5529 = vmatpush2.msra.mxu0 %v1446
    %5530 = vmatprep.subr.mxu0 %v1439
    %5531 = vmatpush2.msra.mxu0 %v1438
    %5532 = vmatprep.subr.mxu0 %v1431
    %5533 = vmatpush2.msra.mxu0 %v1430
    %5534 = vmatprep.subr.mxu0 %v1423
    %5535 = vmatpush2.msra.mxu0 %v1422
    %5536 = vmatprep.subr.mxu0 %v1415
    %5537 = vmatpush2.msra.mxu0 %v1414
    %5538 = vmatprep.subr.mxu0 %v1407
    %5539 = vmatpush2.msra.mxu0 %v1406
    %5540 = vmatprep.subr.mxu0 %v1399
    %5541 = vmatpush2.msra.mxu0 %v1398
    %5542 = vmatprep.subr.mxu0 %v1391
    %5543 = vmatpush2.msra.mxu0 %v1390
    %5544 = vmatprep.subr.mxu0 %v1383
    %5545 = vmatpush2.msra.mxu0 %v1382
    %5546 = vmatprep.subr.mxu0 %v1375
    %5547 = vmatpush2.msra.mxu0 %v1374
    %5548 = vmatprep.subr.mxu0 %v1367
    %5549 = vmatpush2.msra.mxu0 %v1366
    %5550 = vmatprep.subr.mxu0 %v1359
    %5551 = vmatpush2.msra.mxu0 %v1358
    %5552 = vmatprep.subr.mxu0 %v1351
    %5553 = vmatpush2.msra.mxu0 %v1350
    %5554 = vmatprep.mubr.f32.mxu0 %v5199
    %5555 = vmatmul.mubr.f32.gmra.mxu0 %v5198
    %v5556 = vpop.f32.mrf.mxu0
    %v5557 = vadd.f32 %v2136, %v5556
    %v5558 = vpop.f32.mrf.mxu0
    %v5559 = vadd.f32 %v2140, %v5558
    %5560 = vdwg.mxu0
    %5561 = vmatprep.subr.mxu0 %v1599
    %5562 = vmatpush1.msra.mxu0 %v1598
    %5563 = vmatprep.subr.mxu0 %v1591
    %5564 = vmatpush1.msra.mxu0 %v1590
    %5565 = vmatprep.subr.mxu0 %v1583
    %5566 = vmatpush1.msra.mxu0 %v1582
    %5567 = vmatprep.subr.mxu0 %v1575
    %5568 = vmatpush1.msra.mxu0 %v1574
    %5569 = vmatprep.subr.mxu0 %v1567
    %5570 = vmatpush1.msra.mxu0 %v1566
    %5571 = vmatprep.subr.mxu0 %v1559
    %5572 = vmatpush1.msra.mxu0 %v1558
    %5573 = vmatprep.subr.mxu0 %v1551
    %5574 = vmatpush1.msra.mxu0 %v1550
    %5575 = vmatprep.subr.mxu0 %v1543
    %5576 = vmatpush1.msra.mxu0 %v1542
    %5577 = vmatprep.subr.mxu0 %v1535
    %5578 = vmatpush1.msra.mxu0 %v1534
    %5579 = vmatprep.subr.mxu0 %v1527
    %5580 = vmatpush1.msra.mxu0 %v1526
    %5581 = vmatprep.subr.mxu0 %v1519
    %5582 = vmatpush1.msra.mxu0 %v1518
    %5583 = vmatprep.subr.mxu0 %v1511
    %5584 = vmatpush1.msra.mxu0 %v1510
    %5585 = vmatprep.subr.mxu0 %v1503
    %5586 = vmatpush1.msra.mxu0 %v1502
    %5587 = vmatprep.subr.mxu0 %v1495
    %5588 = vmatpush1.msra.mxu0 %v1494
    %5589 = vmatprep.subr.mxu0 %v1487
    %5590 = vmatpush1.msra.mxu0 %v1486
    %5591 = vmatprep.subr.mxu0 %v1479
    %5592 = vmatpush1.msra.mxu0 %v1478
    %5593 = vmatprep.subr.mxu0 %v1727
    %5594 = vmatpush2.msra.mxu0 %v1726
    %5595 = vmatprep.subr.mxu0 %v1719
    %5596 = vmatpush2.msra.mxu0 %v1718
    %5597 = vmatprep.subr.mxu0 %v1711
    %5598 = vmatpush2.msra.mxu0 %v1710
    %5599 = vmatprep.subr.mxu0 %v1703
    %5600 = vmatpush2.msra.mxu0 %v1702
    %5601 = vmatprep.subr.mxu0 %v1695
    %5602 = vmatpush2.msra.mxu0 %v1694
    %5603 = vmatprep.subr.mxu0 %v1687
    %5604 = vmatpush2.msra.mxu0 %v1686
    %5605 = vmatprep.subr.mxu0 %v1679
    %5606 = vmatpush2.msra.mxu0 %v1678
    %5607 = vmatprep.subr.mxu0 %v1671
    %5608 = vmatpush2.msra.mxu0 %v1670
    %5609 = vmatprep.subr.mxu0 %v1663
    %5610 = vmatpush2.msra.mxu0 %v1662
    %5611 = vmatprep.subr.mxu0 %v1655
    %5612 = vmatpush2.msra.mxu0 %v1654
    %5613 = vmatprep.subr.mxu0 %v1647
    %5614 = vmatpush2.msra.mxu0 %v1646
    %5615 = vmatprep.subr.mxu0 %v1639
    %5616 = vmatpush2.msra.mxu0 %v1638
    %5617 = vmatprep.subr.mxu0 %v1631
    %5618 = vmatpush2.msra.mxu0 %v1630
    %5619 = vmatprep.subr.mxu0 %v1623
    %5620 = vmatpush2.msra.mxu0 %v1622
    %5621 = vmatprep.subr.mxu0 %v1615
    %5622 = vmatpush2.msra.mxu0 %v1614
    %5623 = vmatprep.subr.mxu0 %v1607
    %5624 = vmatpush2.msra.mxu0 %v1606
    %5625 = vmatprep.mubr.f32.mxu0 %v5201
    %5626 = vmatmul.mubr.f32.gmra.mxu0 %v5200
    %v5627 = vpop.f32.mrf.mxu0
    %v5628 = vadd.f32 %v5557, %v5627
    %v5629 = vpop.f32.mrf.mxu0
    %v5630 = vadd.f32 %v5559, %v5629
    %5631 = vdwg.mxu0
    %5632 = vmatprep.subr.mxu0 %v1345
    %5633 = vmatpush1.msra.mxu0 %v1344
    %5634 = vmatprep.subr.mxu0 %v1337
    %5635 = vmatpush1.msra.mxu0 %v1336
    %5636 = vmatprep.subr.mxu0 %v1329
    %5637 = vmatpush1.msra.mxu0 %v1328
    %5638 = vmatprep.subr.mxu0 %v1321
    %5639 = vmatpush1.msra.mxu0 %v1320
    %5640 = vmatprep.subr.mxu0 %v1313
    %5641 = vmatpush1.msra.mxu0 %v1312
    %5642 = vmatprep.subr.mxu0 %v1305
    %5643 = vmatpush1.msra.mxu0 %v1304
    %5644 = vmatprep.subr.mxu0 %v1297
    %5645 = vmatpush1.msra.mxu0 %v1296
    %5646 = vmatprep.subr.mxu0 %v1289
    %5647 = vmatpush1.msra.mxu0 %v1288
    %5648 = vmatprep.subr.mxu0 %v1281
    %5649 = vmatpush1.msra.mxu0 %v1280
    %5650 = vmatprep.subr.mxu0 %v1273
    %5651 = vmatpush1.msra.mxu0 %v1272
    %5652 = vmatprep.subr.mxu0 %v1265
    %5653 = vmatpush1.msra.mxu0 %v1264
    %5654 = vmatprep.subr.mxu0 %v1257
    %5655 = vmatpush1.msra.mxu0 %v1256
    %5656 = vmatprep.subr.mxu0 %v1249
    %5657 = vmatpush1.msra.mxu0 %v1248
    %5658 = vmatprep.subr.mxu0 %v1241
    %5659 = vmatpush1.msra.mxu0 %v1240
    %5660 = vmatprep.subr.mxu0 %v1233
    %5661 = vmatpush1.msra.mxu0 %v1232
    %5662 = vmatprep.subr.mxu0 %v1225
    %5663 = vmatpush1.msra.mxu0 %v1224
    %5664 = vmatprep.subr.mxu0 %v1473
    %5665 = vmatpush2.msra.mxu0 %v1472
    %5666 = vmatprep.subr.mxu0 %v1465
    %5667 = vmatpush2.msra.mxu0 %v1464
    %5668 = vmatprep.subr.mxu0 %v1457
    %5669 = vmatpush2.msra.mxu0 %v1456
    %5670 = vmatprep.subr.mxu0 %v1449
    %5671 = vmatpush2.msra.mxu0 %v1448
    %5672 = vmatprep.subr.mxu0 %v1441
    %5673 = vmatpush2.msra.mxu0 %v1440
    %5674 = vmatprep.subr.mxu0 %v1433
    %5675 = vmatpush2.msra.mxu0 %v1432
    %5676 = vmatprep.subr.mxu0 %v1425
    %5677 = vmatpush2.msra.mxu0 %v1424
    %5678 = vmatprep.subr.mxu0 %v1417
    %5679 = vmatpush2.msra.mxu0 %v1416
    %5680 = vmatprep.subr.mxu0 %v1409
    %5681 = vmatpush2.msra.mxu0 %v1408
    %5682 = vmatprep.subr.mxu0 %v1401
    %5683 = vmatpush2.msra.mxu0 %v1400
    %5684 = vmatprep.subr.mxu0 %v1393
    %5685 = vmatpush2.msra.mxu0 %v1392
    %5686 = vmatprep.subr.mxu0 %v1385
    %5687 = vmatpush2.msra.mxu0 %v1384
    %5688 = vmatprep.subr.mxu0 %v1377
    %5689 = vmatpush2.msra.mxu0 %v1376
    %5690 = vmatprep.subr.mxu0 %v1369
    %5691 = vmatpush2.msra.mxu0 %v1368
    %5692 = vmatprep.subr.mxu0 %v1361
    %5693 = vmatpush2.msra.mxu0 %v1360
    %5694 = vmatprep.subr.mxu0 %v1353
    %5695 = vmatpush2.msra.mxu0 %v1352
    %5696 = vmatprep.mubr.f32.mxu0 %v5199
    %5697 = vmatmul.mubr.f32.gmra.mxu0 %v5198
    %v5698 = vpop.f32.mrf.mxu0
    %v5699 = vadd.f32 %v2144, %v5698
    %v5700 = vpop.f32.mrf.mxu0
    %v5701 = vadd.f32 %v2148, %v5700
    %5702 = vdwg.mxu0
    %5703 = vmatprep.subr.mxu0 %v1601
    %5704 = vmatpush1.msra.mxu0 %v1600
    %5705 = vmatprep.subr.mxu0 %v1593
    %5706 = vmatpush1.msra.mxu0 %v1592
    %5707 = vmatprep.subr.mxu0 %v1585
    %5708 = vmatpush1.msra.mxu0 %v1584
    %5709 = vmatprep.subr.mxu0 %v1577
    %5710 = vmatpush1.msra.mxu0 %v1576
    %5711 = vmatprep.subr.mxu0 %v1569
    %5712 = vmatpush1.msra.mxu0 %v1568
    %5713 = vmatprep.subr.mxu0 %v1561
    %5714 = vmatpush1.msra.mxu0 %v1560
    %5715 = vmatprep.subr.mxu0 %v1553
    %5716 = vmatpush1.msra.mxu0 %v1552
    %5717 = vmatprep.subr.mxu0 %v1545
    %5718 = vmatpush1.msra.mxu0 %v1544
    %5719 = vmatprep.subr.mxu0 %v1537
    %5720 = vmatpush1.msra.mxu0 %v1536
    %5721 = vmatprep.subr.mxu0 %v1529
    %5722 = vmatpush1.msra.mxu0 %v1528
    %5723 = vmatprep.subr.mxu0 %v1521
    %5724 = vmatpush1.msra.mxu0 %v1520
    %5725 = vmatprep.subr.mxu0 %v1513
    %5726 = vmatpush1.msra.mxu0 %v1512
    %5727 = vmatprep.subr.mxu0 %v1505
    %5728 = vmatpush1.msra.mxu0 %v1504
    %5729 = vmatprep.subr.mxu0 %v1497
    %5730 = vmatpush1.msra.mxu0 %v1496
    %5731 = vmatprep.subr.mxu0 %v1489
    %5732 = vmatpush1.msra.mxu0 %v1488
    %5733 = vmatprep.subr.mxu0 %v1481
    %5734 = vmatpush1.msra.mxu0 %v1480
    %5735 = vmatprep.subr.mxu0 %v1729
    %5736 = vmatpush2.msra.mxu0 %v1728
    %5737 = vmatprep.subr.mxu0 %v1721
    %5738 = vmatpush2.msra.mxu0 %v1720
    %5739 = vmatprep.subr.mxu0 %v1713
    %5740 = vmatpush2.msra.mxu0 %v1712
    %5741 = vmatprep.subr.mxu0 %v1705
    %5742 = vmatpush2.msra.mxu0 %v1704
    %5743 = vmatprep.subr.mxu0 %v1697
    %5744 = vmatpush2.msra.mxu0 %v1696
    %5745 = vmatprep.subr.mxu0 %v1689
    %5746 = vmatpush2.msra.mxu0 %v1688
    %5747 = vmatprep.subr.mxu0 %v1681
    %5748 = vmatpush2.msra.mxu0 %v1680
    %5749 = vmatprep.subr.mxu0 %v1673
    %5750 = vmatpush2.msra.mxu0 %v1672
    %5751 = vmatprep.subr.mxu0 %v1665
    %5752 = vmatpush2.msra.mxu0 %v1664
    %5753 = vmatprep.subr.mxu0 %v1657
    %5754 = vmatpush2.msra.mxu0 %v1656
    %5755 = vmatprep.subr.mxu0 %v1649
    %5756 = vmatpush2.msra.mxu0 %v1648
    %5757 = vmatprep.subr.mxu0 %v1641
    %5758 = vmatpush2.msra.mxu0 %v1640
    %5759 = vmatprep.subr.mxu0 %v1633
    %5760 = vmatpush2.msra.mxu0 %v1632
    %5761 = vmatprep.subr.mxu0 %v1625
    %5762 = vmatpush2.msra.mxu0 %v1624
    %5763 = vmatprep.subr.mxu0 %v1617
    %5764 = vmatpush2.msra.mxu0 %v1616
    %5765 = vmatprep.subr.mxu0 %v1609
    %5766 = vmatpush2.msra.mxu0 %v1608
    %5767 = vmatprep.mubr.f32.mxu0 %v5201
    %5768 = vmatmul.mubr.f32.gmra.mxu0 %v5200
    %v5769 = vpop.f32.mrf.mxu0
    %v5770 = vadd.f32 %v5699, %v5769
    %v5771 = vpop.f32.mrf.mxu0
    %v5772 = vadd.f32 %v5701, %v5771
    %5773 = vdwg.mxu0
    %v5774 = vxor.u32 %v5344, 2147483648
    %v5775 = vxor.u32 %v5346, 2147483648
    %v5776 = vmul.f32 %v5774, 1.442695
    %v5777 = vpow.pop %v5776
    %v5778 = vmul.f32 %v5775, 1.442695
    %v5779 = vpow.pop %v5778
    %v5780 = vadd.f32 %v5777, 1.0
    %v5781 = vadd.f32 %v5779, 1.0
    %v5782 = vrcp.pop %v5780
    %v5783 = vmul.f32 1.0, %v5782
    %v5784 = vrcp.pop %v5781
    %v5785 = vmul.f32 1.0, %v5784
    %v5786 = vxor.u32 %v5486, 2147483648
    %v5787 = vxor.u32 %v5488, 2147483648
    %v5788 = vmul.f32 %v5786, 1.442695
    %v5789 = vpow.pop %v5788
    %v5790 = vmul.f32 %v5787, 1.442695
    %v5791 = vpow.pop %v5790
    %v5792 = vadd.f32 %v5789, 1.0
    %v5793 = vadd.f32 %v5791, 1.0
    %v5794 = vrcp.pop %v5792
    %v5795 = vmul.f32 1.0, %v5794
    %v5796 = vrcp.pop %v5793
    %v5797 = vmul.f32 1.0, %v5796
    %v5798 = vtanh.pop %v5628
    %v5799 = vtanh.pop %v5630
    %v5800 = vxor.u32 %v5770, 2147483648
    %v5801 = vxor.u32 %v5772, 2147483648
    %v5802 = vmul.f32 %v5800, 1.442695
    %v5803 = vpow.pop %v5802
    %v5804 = vmul.f32 %v5801, 1.442695
    %v5805 = vpow.pop %v5804
    %v5806 = vadd.f32 %v5803, 1.0
    %v5807 = vadd.f32 %v5805, 1.0
    %v5808 = vrcp.pop %v5806
    %v5809 = vmul.f32 1.0, %v5808
    %v5810 = vrcp.pop %v5807
    %v5811 = vmul.f32 1.0, %v5810
    %v5812 = vmul.f32 %v5795, %v4802
    %v5813 = vmul.f32 %v5797, %v4803
    %v5814 = vmul.f32 %v5783, %v5798
    %v5815 = vmul.f32 %v5785, %v5799
    %v5816 = vadd.f32 %v5812, %v5814
    %v5817 = vadd.f32 %v5813, %v5815
    %v5818 = vtanh.pop %v5816
    %v5819 = vtanh.pop %v5817
    %v5820 = vmul.f32 %v5809, %v5818
    %v5821 = vmul.f32 %v5811, %v5819
    %v5824 = vrot.slane %v5820, 2
    %v5825 = vrot.slane %v5821, 2
    %5828 = vst [vmem:[#allocation7] sm:$0xc0] %v5824
    %5829 = vst [vmem:[#allocation7 + $0x8] sm:$0xc0] %v5825
    %v5830 = vld [vmem:[#allocation6 + $0x40] sm:$0x3]
    %v5831 = vld [vmem:[#allocation6 + $0x48] sm:$0x3]
    %v5832 = vld [vmem:[#allocation6 + $0x50] sm:$0x3]
    %v5833 = vld [vmem:[#allocation6 + $0x58] sm:$0x3]
    %v5834 = vld [vmem:[#allocation6 + $0x60] sm:$0x3]
    %v5835 = vld [vmem:[#allocation6 + $0x68] sm:$0x3]
    %v5836 = vld [vmem:[#allocation6 + $0x70] sm:$0x3]
    %v5837 = vld [vmem:[#allocation6 + $0x78] sm:$0x3]
    %5838 = vmatprep.subr.mxu0 %v1083
    %5839 = vmatpush1.msra.mxu0 %v1082
    %5840 = vmatprep.subr.mxu0 %v1075
    %5841 = vmatpush1.msra.mxu0 %v1074
    %5842 = vmatprep.subr.mxu0 %v1067
    %5843 = vmatpush1.msra.mxu0 %v1066
    %5844 = vmatprep.subr.mxu0 %v1059
    %5845 = vmatpush1.msra.mxu0 %v1058
    %5846 = vmatprep.subr.mxu0 %v1051
    %5847 = vmatpush1.msra.mxu0 %v1050
    %5848 = vmatprep.subr.mxu0 %v1043
    %5849 = vmatpush1.msra.mxu0 %v1042
    %5850 = vmatprep.subr.mxu0 %v1035
    %5851 = vmatpush1.msra.mxu0 %v1034
    %5852 = vmatprep.subr.mxu0 %v1027
    %5853 = vmatpush1.msra.mxu0 %v1026
    %5854 = vmatprep.subr.mxu0 %v1019
    %5855 = vmatpush1.msra.mxu0 %v1018
    %5856 = vmatprep.subr.mxu0 %v1011
    %5857 = vmatpush1.msra.mxu0 %v1010
    %5858 = vmatprep.subr.mxu0 %v1003
    %5859 = vmatpush1.msra.mxu0 %v1002
    %5860 = vmatprep.subr.mxu0 %v995
    %5861 = vmatpush1.msra.mxu0 %v994
    %5862 = vmatprep.subr.mxu0 %v987
    %5863 = vmatpush1.msra.mxu0 %v986
    %5864 = vmatprep.subr.mxu0 %v979
    %5865 = vmatpush1.msra.mxu0 %v978
    %5866 = vmatprep.subr.mxu0 %v971
    %5867 = vmatpush1.msra.mxu0 %v970
    %5868 = vmatprep.subr.mxu0 %v963
    %5869 = vmatpush1.msra.mxu0 %v962
    %5870 = vmatprep.subr.mxu0 %v1211
    %5871 = vmatpush2.msra.mxu0 %v1210
    %5872 = vmatprep.subr.mxu0 %v1203
    %5873 = vmatpush2.msra.mxu0 %v1202
    %5874 = vmatprep.subr.mxu0 %v1195
    %5875 = vmatpush2.msra.mxu0 %v1194
    %5876 = vmatprep.subr.mxu0 %v1187
    %5877 = vmatpush2.msra.mxu0 %v1186
    %5878 = vmatprep.subr.mxu0 %v1179
    %5879 = vmatpush2.msra.mxu0 %v1178
    %5880 = vmatprep.subr.mxu0 %v1171
    %5881 = vmatpush2.msra.mxu0 %v1170
    %5882 = vmatprep.subr.mxu0 %v1163
    %5883 = vmatpush2.msra.mxu0 %v1162
    %5884 = vmatprep.subr.mxu0 %v1155
    %5885 = vmatpush2.msra.mxu0 %v1154
    %5886 = vmatprep.subr.mxu0 %v1147
    %5887 = vmatpush2.msra.mxu0 %v1146
    %5888 = vmatprep.subr.mxu0 %v1139
    %5889 = vmatpush2.msra.mxu0 %v1138
    %5890 = vmatprep.subr.mxu0 %v1131
    %5891 = vmatpush2.msra.mxu0 %v1130
    %5892 = vmatprep.subr.mxu0 %v1123
    %5893 = vmatpush2.msra.mxu0 %v1122
    %5894 = vmatprep.subr.mxu0 %v1115
    %5895 = vmatpush2.msra.mxu0 %v1114
    %5896 = vmatprep.subr.mxu0 %v1107
    %5897 = vmatpush2.msra.mxu0 %v1106
    %5898 = vmatprep.subr.mxu0 %v1099
    %5899 = vmatpush2.msra.mxu0 %v1098
    %5900 = vmatprep.subr.mxu0 %v1091
    %5901 = vmatpush2.msra.mxu0 %v1090
    %5902 = vmatprep.mubr.f32.mxu0 %v5199
    %5903 = vmatmul.mubr.f32.gmra.mxu0 %v5198
    %v5904 = vpop.f32.mrf.mxu0
    %v5905 = vadd.f32 0.0, %v5904
    %v5906 = vpop.f32.mrf.mxu0
    %v5907 = vadd.f32 0.0, %v5906
    %5908 = vdwg.mxu0
    %5909 = vmatprep.subr.mxu0 %v1085
    %5910 = vmatpush1.msra.mxu0 %v1084
    %5911 = vmatprep.subr.mxu0 %v1077
    %5912 = vmatpush1.msra.mxu0 %v1076
    %5913 = vmatprep.subr.mxu0 %v1069
    %5914 = vmatpush1.msra.mxu0 %v1068
    %5915 = vmatprep.subr.mxu0 %v1061
    %5916 = vmatpush1.msra.mxu0 %v1060
    %5917 = vmatprep.subr.mxu0 %v1053
    %5918 = vmatpush1.msra.mxu0 %v1052
    %5919 = vmatprep.subr.mxu0 %v1045
    %5920 = vmatpush1.msra.mxu0 %v1044
    %5921 = vmatprep.subr.mxu0 %v1037
    %5922 = vmatpush1.msra.mxu0 %v1036
    %5923 = vmatprep.subr.mxu0 %v1029
    %5924 = vmatpush1.msra.mxu0 %v1028
    %5925 = vmatprep.subr.mxu0 %v1021
    %5926 = vmatpush1.msra.mxu0 %v1020
    %5927 = vmatprep.subr.mxu0 %v1013
    %5928 = vmatpush1.msra.mxu0 %v1012
    %5929 = vmatprep.subr.mxu0 %v1005
    %5930 = vmatpush1.msra.mxu0 %v1004
    %5931 = vmatprep.subr.mxu0 %v997
    %5932 = vmatpush1.msra.mxu0 %v996
    %5933 = vmatprep.subr.mxu0 %v989
    %5934 = vmatpush1.msra.mxu0 %v988
    %5935 = vmatprep.subr.mxu0 %v981
    %5936 = vmatpush1.msra.mxu0 %v980
    %5937 = vmatprep.subr.mxu0 %v973
    %5938 = vmatpush1.msra.mxu0 %v972
    %5939 = vmatprep.subr.mxu0 %v965
    %5940 = vmatpush1.msra.mxu0 %v964
    %5941 = vmatprep.subr.mxu0 %v1213
    %5942 = vmatpush2.msra.mxu0 %v1212
    %5943 = vmatprep.subr.mxu0 %v1205
    %5944 = vmatpush2.msra.mxu0 %v1204
    %5945 = vmatprep.subr.mxu0 %v1197
    %5946 = vmatpush2.msra.mxu0 %v1196
    %5947 = vmatprep.subr.mxu0 %v1189
    %5948 = vmatpush2.msra.mxu0 %v1188
    %5949 = vmatprep.subr.mxu0 %v1181
    %5950 = vmatpush2.msra.mxu0 %v1180
    %5951 = vmatprep.subr.mxu0 %v1173
    %5952 = vmatpush2.msra.mxu0 %v1172
    %5953 = vmatprep.subr.mxu0 %v1165
    %5954 = vmatpush2.msra.mxu0 %v1164
    %5955 = vmatprep.subr.mxu0 %v1157
    %5956 = vmatpush2.msra.mxu0 %v1156
    %5957 = vmatprep.subr.mxu0 %v1149
    %5958 = vmatpush2.msra.mxu0 %v1148
    %5959 = vmatprep.subr.mxu0 %v1141
    %5960 = vmatpush2.msra.mxu0 %v1140
    %5961 = vmatprep.subr.mxu0 %v1133
    %5962 = vmatpush2.msra.mxu0 %v1132
    %5963 = vmatprep.subr.mxu0 %v1125
    %5964 = vmatpush2.msra.mxu0 %v1124
    %5965 = vmatprep.subr.mxu0 %v1117
    %5966 = vmatpush2.msra.mxu0 %v1116
    %5967 = vmatprep.subr.mxu0 %v1109
    %5968 = vmatpush2.msra.mxu0 %v1108
    %5969 = vmatprep.subr.mxu0 %v1101
    %5970 = vmatpush2.msra.mxu0 %v1100
    %5971 = vmatprep.subr.mxu0 %v1093
    %5972 = vmatpush2.msra.mxu0 %v1092
    %5973 = vmatprep.mubr.f32.mxu0 %v5199
    %5974 = vmatmul.mubr.f32.gmra.mxu0 %v5198
    %v5975 = vpop.f32.mrf.mxu0
    %v5976 = vadd.f32 0.0, %v5975
    %v5977 = vpop.f32.mrf.mxu0
    %v5978 = vadd.f32 0.0, %v5977
    %5979 = vdwg.mxu0
    %5980 = vmatprep.subr.mxu0 %v1087
    %5981 = vmatpush1.msra.mxu0 %v1086
    %5982 = vmatprep.subr.mxu0 %v1079
    %5983 = vmatpush1.msra.mxu0 %v1078
    %5984 = vmatprep.subr.mxu0 %v1071
    %5985 = vmatpush1.msra.mxu0 %v1070
    %5986 = vmatprep.subr.mxu0 %v1063
    %5987 = vmatpush1.msra.mxu0 %v1062
    %5988 = vmatprep.subr.mxu0 %v1055
    %5989 = vmatpush1.msra.mxu0 %v1054
    %5990 = vmatprep.subr.mxu0 %v1047
    %5991 = vmatpush1.msra.mxu0 %v1046
    %5992 = vmatprep.subr.mxu0 %v1039
    %5993 = vmatpush1.msra.mxu0 %v1038
    %5994 = vmatprep.subr.mxu0 %v1031
    %5995 = vmatpush1.msra.mxu0 %v1030
    %5996 = vmatprep.subr.mxu0 %v1023
    %5997 = vmatpush1.msra.mxu0 %v1022
    %5998 = vmatprep.subr.mxu0 %v1015
    %5999 = vmatpush1.msra.mxu0 %v1014
    %6000 = vmatprep.subr.mxu0 %v1007
    %6001 = vmatpush1.msra.mxu0 %v1006
    %6002 = vmatprep.subr.mxu0 %v999
    %6003 = vmatpush1.msra.mxu0 %v998
    %6004 = vmatprep.subr.mxu0 %v991
    %6005 = vmatpush1.msra.mxu0 %v990
    %6006 = vmatprep.subr.mxu0 %v983
    %6007 = vmatpush1.msra.mxu0 %v982
    %6008 = vmatprep.subr.mxu0 %v975
    %6009 = vmatpush1.msra.mxu0 %v974
    %6010 = vmatprep.subr.mxu0 %v967
    %6011 = vmatpush1.msra.mxu0 %v966
    %6012 = vmatprep.subr.mxu0 %v1215
    %6013 = vmatpush2.msra.mxu0 %v1214
    %6014 = vmatprep.subr.mxu0 %v1207
    %6015 = vmatpush2.msra.mxu0 %v1206
    %6016 = vmatprep.subr.mxu0 %v1199
    %6017 = vmatpush2.msra.mxu0 %v1198
    %6018 = vmatprep.subr.mxu0 %v1191
    %6019 = vmatpush2.msra.mxu0 %v1190
    %6020 = vmatprep.subr.mxu0 %v1183
    %6021 = vmatpush2.msra.mxu0 %v1182
    %6022 = vmatprep.subr.mxu0 %v1175
    %6023 = vmatpush2.msra.mxu0 %v1174
    %6024 = vmatprep.subr.mxu0 %v1167
    %6025 = vmatpush2.msra.mxu0 %v1166
    %6026 = vmatprep.subr.mxu0 %v1159
    %6027 = vmatpush2.msra.mxu0 %v1158
    %6028 = vmatprep.subr.mxu0 %v1151
    %6029 = vmatpush2.msra.mxu0 %v1150
    %6030 = vmatprep.subr.mxu0 %v1143
    %6031 = vmatpush2.msra.mxu0 %v1142
    %6032 = vmatprep.subr.mxu0 %v1135
    %6033 = vmatpush2.msra.mxu0 %v1134
    %6034 = vmatprep.subr.mxu0 %v1127
    %6035 = vmatpush2.msra.mxu0 %v1126
    %6036 = vmatprep.subr.mxu0 %v1119
    %6037 = vmatpush2.msra.mxu0 %v1118
    %6038 = vmatprep.subr.mxu0 %v1111
    %6039 = vmatpush2.msra.mxu0 %v1110
    %6040 = vmatprep.subr.mxu0 %v1103
    %6041 = vmatpush2.msra.mxu0 %v1102
    %6042 = vmatprep.subr.mxu0 %v1095
    %6043 = vmatpush2.msra.mxu0 %v1094
    %6044 = vmatprep.mubr.f32.mxu0 %v5199
    %6045 = vmatmul.mubr.f32.gmra.mxu0 %v5198
    %v6046 = vpop.f32.mrf.mxu0
    %v6047 = vadd.f32 0.0, %v6046
    %v6048 = vpop.f32.mrf.mxu0
    %v6049 = vadd.f32 0.0, %v6048
    %6050 = vdwg.mxu0
    %6051 = vmatprep.subr.mxu0 %v1089
    %6052 = vmatpush1.msra.mxu0 %v1088
    %6053 = vmatprep.subr.mxu0 %v1081
    %6054 = vmatpush1.msra.mxu0 %v1080
    %6055 = vmatprep.subr.mxu0 %v1073
    %6056 = vmatpush1.msra.mxu0 %v1072
    %6057 = vmatprep.subr.mxu0 %v1065
    %6058 = vmatpush1.msra.mxu0 %v1064
    %6059 = vmatprep.subr.mxu0 %v1057
    %6060 = vmatpush1.msra.mxu0 %v1056
    %6061 = vmatprep.subr.mxu0 %v1049
    %6062 = vmatpush1.msra.mxu0 %v1048
    %6063 = vmatprep.subr.mxu0 %v1041
    %6064 = vmatpush1.msra.mxu0 %v1040
    %6065 = vmatprep.subr.mxu0 %v1033
    %6066 = vmatpush1.msra.mxu0 %v1032
    %6067 = vmatprep.subr.mxu0 %v1025
    %6068 = vmatpush1.msra.mxu0 %v1024
    %6069 = vmatprep.subr.mxu0 %v1017
    %6070 = vmatpush1.msra.mxu0 %v1016
    %6071 = vmatprep.subr.mxu0 %v1009
    %6072 = vmatpush1.msra.mxu0 %v1008
    %6073 = vmatprep.subr.mxu0 %v1001
    %6074 = vmatpush1.msra.mxu0 %v1000
    %6075 = vmatprep.subr.mxu0 %v993
    %6076 = vmatpush1.msra.mxu0 %v992
    %6077 = vmatprep.subr.mxu0 %v985
    %6078 = vmatpush1.msra.mxu0 %v984
    %6079 = vmatprep.subr.mxu0 %v977
    %6080 = vmatpush1.msra.mxu0 %v976
    %6081 = vmatprep.subr.mxu0 %v969
    %6082 = vmatpush1.msra.mxu0 %v968
    %6083 = vmatprep.subr.mxu0 %v1217
    %6084 = vmatpush2.msra.mxu0 %v1216
    %6085 = vmatprep.subr.mxu0 %v1209
    %6086 = vmatpush2.msra.mxu0 %v1208
    %6087 = vmatprep.subr.mxu0 %v1201
    %6088 = vmatpush2.msra.mxu0 %v1200
    %6089 = vmatprep.subr.mxu0 %v1193
    %6090 = vmatpush2.msra.mxu0 %v1192
    %6091 = vmatprep.subr.mxu0 %v1185
    %6092 = vmatpush2.msra.mxu0 %v1184
    %6093 = vmatprep.subr.mxu0 %v1177
    %6094 = vmatpush2.msra.mxu0 %v1176
    %6095 = vmatprep.subr.mxu0 %v1169
    %6096 = vmatpush2.msra.mxu0 %v1168
    %6097 = vmatprep.subr.mxu0 %v1161
    %6098 = vmatpush2.msra.mxu0 %v1160
    %6099 = vmatprep.subr.mxu0 %v1153
    %6100 = vmatpush2.msra.mxu0 %v1152
    %6101 = vmatprep.subr.mxu0 %v1145
    %6102 = vmatpush2.msra.mxu0 %v1144
    %6103 = vmatprep.subr.mxu0 %v1137
    %6104 = vmatpush2.msra.mxu0 %v1136
    %6105 = vmatprep.subr.mxu0 %v1129
    %6106 = vmatpush2.msra.mxu0 %v1128
    %6107 = vmatprep.subr.mxu0 %v1121
    %6108 = vmatpush2.msra.mxu0 %v1120
    %6109 = vmatprep.subr.mxu0 %v1113
    %6110 = vmatpush2.msra.mxu0 %v1112
    %6111 = vmatprep.subr.mxu0 %v1105
    %6112 = vmatpush2.msra.mxu0 %v1104
    %6113 = vmatprep.subr.mxu0 %v1097
    %6114 = vmatpush2.msra.mxu0 %v1096
    %6115 = vmatprep.mubr.f32.mxu0 %v5199
    %6116 = vmatmul.mubr.f32.gmra.mxu0 %v5198
    %v6117 = vpop.f32.mrf.mxu0
    %v6118 = vadd.f32 0.0, %v6117
    %v6119 = vpop.f32.mrf.mxu0
    %v6120 = vadd.f32 0.0, %v6119
    %6121 = vdwg.mxu0
    %v6122 = vadd.f32 %v5830, %v5905
    %v6123 = vadd.f32 %v5831, %v5907
    %v6124 = vadd.f32 %v5832, %v5976
    %v6125 = vadd.f32 %v5833, %v5978
    %v6126 = vadd.f32 %v5834, %v6047
    %v6127 = vadd.f32 %v5835, %v6049
    %v6128 = vadd.f32 %v5836, %v6118
    %v6129 = vadd.f32 %v5837, %v6120
    %v6130 = vxor.u32 %v6122, 2147483648
    %v6131 = vxor.u32 %v6123, 2147483648
    %v6132 = vmul.f32 %v6130, 1.442695
    %v6133 = vpow.pop %v6132
    %v6134 = vmul.f32 %v6131, 1.442695
    %v6135 = vpow.pop %v6134
    %v6136 = vadd.f32 %v6133, 1.0
    %v6137 = vadd.f32 %v6135, 1.0
    %v6138 = vrcp.pop %v6136
    %v6139 = vmul.f32 1.0, %v6138
    %v6140 = vrcp.pop %v6137
    %v6141 = vmul.f32 1.0, %v6140
    %v6142 = vxor.u32 %v6124, 2147483648
    %v6143 = vxor.u32 %v6125, 2147483648
    %v6144 = vmul.f32 %v6142, 1.442695
    %v6145 = vpow.pop %v6144
    %v6146 = vmul.f32 %v6143, 1.442695
    %v6147 = vpow.pop %v6146
    %v6148 = vadd.f32 %v6145, 1.0
    %v6149 = vadd.f32 %v6147, 1.0
    %v6150 = vrcp.pop %v6148
    %v6151 = vmul.f32 1.0, %v6150
    %v6152 = vrcp.pop %v6149
    %v6153 = vmul.f32 1.0, %v6152
    %v6154 = vtanh.pop %v6126
    %v6155 = vtanh.pop %v6127
    %v6156 = vxor.u32 %v6128, 2147483648
    %v6157 = vxor.u32 %v6129, 2147483648
    %v6158 = vmul.f32 %v6156, 1.442695
    %v6159 = vpow.pop %v6158
    %v6160 = vmul.f32 %v6157, 1.442695
    %v6161 = vpow.pop %v6160
    %v6162 = vadd.f32 %v6159, 1.0
    %v6163 = vadd.f32 %v6161, 1.0
    %v6164 = vrcp.pop %v6162
    %v6165 = vmul.f32 1.0, %v6164
    %v6166 = vrcp.pop %v6163
    %v6167 = vmul.f32 1.0, %v6166
    %v6170 = vrot.slane %v5188, 6
    %v6171 = vrot.slane %v5189, 6
    %v6174 = vmul.f32 %v6151, %v6170
    %v6175 = vmul.f32 %v6153, %v6171
    %v6176 = vmul.f32 %v6139, %v6154
    %v6177 = vmul.f32 %v6141, %v6155
    %v6178 = vadd.f32 %v6174, %v6176
    %v6179 = vadd.f32 %v6175, %v6177
    %v6180 = vtanh.pop %v6178
    %v6181 = vtanh.pop %v6179
    %v6182 = vmul.f32 %v6165, %v6180
    %v6183 = vmul.f32 %v6167, %v6181
    %6184 = vmatprep.subr.mxu0 %v1339
    %6185 = vmatpush1.msra.mxu0 %v1338
    %6186 = vmatprep.subr.mxu0 %v1331
    %6187 = vmatpush1.msra.mxu0 %v1330
    %6188 = vmatprep.subr.mxu0 %v1323
    %6189 = vmatpush1.msra.mxu0 %v1322
    %6190 = vmatprep.subr.mxu0 %v1315
    %6191 = vmatpush1.msra.mxu0 %v1314
    %6192 = vmatprep.subr.mxu0 %v1307
    %6193 = vmatpush1.msra.mxu0 %v1306
    %6194 = vmatprep.subr.mxu0 %v1299
    %6195 = vmatpush1.msra.mxu0 %v1298
    %6196 = vmatprep.subr.mxu0 %v1291
    %6197 = vmatpush1.msra.mxu0 %v1290
    %6198 = vmatprep.subr.mxu0 %v1283
    %6199 = vmatpush1.msra.mxu0 %v1282
    %6200 = vmatprep.subr.mxu0 %v1275
    %6201 = vmatpush1.msra.mxu0 %v1274
    %6202 = vmatprep.subr.mxu0 %v1267
    %6203 = vmatpush1.msra.mxu0 %v1266
    %6204 = vmatprep.subr.mxu0 %v1259
    %6205 = vmatpush1.msra.mxu0 %v1258
    %6206 = vmatprep.subr.mxu0 %v1251
    %6207 = vmatpush1.msra.mxu0 %v1250
    %6208 = vmatprep.subr.mxu0 %v1243
    %6209 = vmatpush1.msra.mxu0 %v1242
    %6210 = vmatprep.subr.mxu0 %v1235
    %6211 = vmatpush1.msra.mxu0 %v1234
    %6212 = vmatprep.subr.mxu0 %v1227
    %6213 = vmatpush1.msra.mxu0 %v1226
    %6214 = vmatprep.subr.mxu0 %v1219
    %6215 = vmatpush1.msra.mxu0 %v1218
    %6216 = vmatprep.subr.mxu0 %v1467
    %6217 = vmatpush2.msra.mxu0 %v1466
    %6218 = vmatprep.subr.mxu0 %v1459
    %6219 = vmatpush2.msra.mxu0 %v1458
    %6220 = vmatprep.subr.mxu0 %v1451
    %6221 = vmatpush2.msra.mxu0 %v1450
    %6222 = vmatprep.subr.mxu0 %v1443
    %6223 = vmatpush2.msra.mxu0 %v1442
    %6224 = vmatprep.subr.mxu0 %v1435
    %6225 = vmatpush2.msra.mxu0 %v1434
    %6226 = vmatprep.subr.mxu0 %v1427
    %6227 = vmatpush2.msra.mxu0 %v1426
    %6228 = vmatprep.subr.mxu0 %v1419
    %6229 = vmatpush2.msra.mxu0 %v1418
    %6230 = vmatprep.subr.mxu0 %v1411
    %6231 = vmatpush2.msra.mxu0 %v1410
    %6232 = vmatprep.subr.mxu0 %v1403
    %6233 = vmatpush2.msra.mxu0 %v1402
    %6234 = vmatprep.subr.mxu0 %v1395
    %6235 = vmatpush2.msra.mxu0 %v1394
    %6236 = vmatprep.subr.mxu0 %v1387
    %6237 = vmatpush2.msra.mxu0 %v1386
    %6238 = vmatprep.subr.mxu0 %v1379
    %6239 = vmatpush2.msra.mxu0 %v1378
    %6240 = vmatprep.subr.mxu0 %v1371
    %6241 = vmatpush2.msra.mxu0 %v1370
    %6242 = vmatprep.subr.mxu0 %v1363
    %6243 = vmatpush2.msra.mxu0 %v1362
    %6244 = vmatprep.subr.mxu0 %v1355
    %6245 = vmatpush2.msra.mxu0 %v1354
    %6246 = vmatprep.subr.mxu0 %v1347
    %6247 = vmatpush2.msra.mxu0 %v1346
    %6248 = vmatprep.mubr.f32.mxu0 %v6183
    %6249 = vmatmul.mubr.f32.gmra.mxu0 %v6182
    %v6250 = vpop.f32.mrf.mxu0
    %v6251 = vadd.f32 %v2120, %v6250
    %v6252 = vpop.f32.mrf.mxu0
    %v6253 = vadd.f32 %v2124, %v6252
    %6254 = vdwg.mxu0
    %6255 = vmatprep.subr.mxu0 %v1595
    %6256 = vmatpush1.msra.mxu0 %v1594
    %6257 = vmatprep.subr.mxu0 %v1587
    %6258 = vmatpush1.msra.mxu0 %v1586
    %6259 = vmatprep.subr.mxu0 %v1579
    %6260 = vmatpush1.msra.mxu0 %v1578
    %6261 = vmatprep.subr.mxu0 %v1571
    %6262 = vmatpush1.msra.mxu0 %v1570
    %6263 = vmatprep.subr.mxu0 %v1563
    %6264 = vmatpush1.msra.mxu0 %v1562
    %6265 = vmatprep.subr.mxu0 %v1555
    %6266 = vmatpush1.msra.mxu0 %v1554
    %6267 = vmatprep.subr.mxu0 %v1547
    %6268 = vmatpush1.msra.mxu0 %v1546
    %6269 = vmatprep.subr.mxu0 %v1539
    %6270 = vmatpush1.msra.mxu0 %v1538
    %6271 = vmatprep.subr.mxu0 %v1531
    %6272 = vmatpush1.msra.mxu0 %v1530
    %6273 = vmatprep.subr.mxu0 %v1523
    %6274 = vmatpush1.msra.mxu0 %v1522
    %6275 = vmatprep.subr.mxu0 %v1515
    %6276 = vmatpush1.msra.mxu0 %v1514
    %6277 = vmatprep.subr.mxu0 %v1507
    %6278 = vmatpush1.msra.mxu0 %v1506
    %6279 = vmatprep.subr.mxu0 %v1499
    %6280 = vmatpush1.msra.mxu0 %v1498
    %6281 = vmatprep.subr.mxu0 %v1491
    %6282 = vmatpush1.msra.mxu0 %v1490
    %6283 = vmatprep.subr.mxu0 %v1483
    %6284 = vmatpush1.msra.mxu0 %v1482
    %6285 = vmatprep.subr.mxu0 %v1475
    %6286 = vmatpush1.msra.mxu0 %v1474
    %6287 = vmatprep.subr.mxu0 %v1723
    %6288 = vmatpush2.msra.mxu0 %v1722
    %6289 = vmatprep.subr.mxu0 %v1715
    %6290 = vmatpush2.msra.mxu0 %v1714
    %6291 = vmatprep.subr.mxu0 %v1707
    %6292 = vmatpush2.msra.mxu0 %v1706
    %6293 = vmatprep.subr.mxu0 %v1699
    %6294 = vmatpush2.msra.mxu0 %v1698
    %6295 = vmatprep.subr.mxu0 %v1691
    %6296 = vmatpush2.msra.mxu0 %v1690
    %6297 = vmatprep.subr.mxu0 %v1683
    %6298 = vmatpush2.msra.mxu0 %v1682
    %6299 = vmatprep.subr.mxu0 %v1675
    %6300 = vmatpush2.msra.mxu0 %v1674
    %6301 = vmatprep.subr.mxu0 %v1667
    %6302 = vmatpush2.msra.mxu0 %v1666
    %6303 = vmatprep.subr.mxu0 %v1659
    %6304 = vmatpush2.msra.mxu0 %v1658
    %6305 = vmatprep.subr.mxu0 %v1651
    %6306 = vmatpush2.msra.mxu0 %v1650
    %6307 = vmatprep.subr.mxu0 %v1643
    %6308 = vmatpush2.msra.mxu0 %v1642
    %6309 = vmatprep.subr.mxu0 %v1635
    %6310 = vmatpush2.msra.mxu0 %v1634
    %6311 = vmatprep.subr.mxu0 %v1627
    %6312 = vmatpush2.msra.mxu0 %v1626
    %6313 = vmatprep.subr.mxu0 %v1619
    %6314 = vmatpush2.msra.mxu0 %v1618
    %6315 = vmatprep.subr.mxu0 %v1611
    %6316 = vmatpush2.msra.mxu0 %v1610
    %6317 = vmatprep.subr.mxu0 %v1603
    %6318 = vmatpush2.msra.mxu0 %v1602
    %6319 = vmatprep.mubr.f32.mxu0 %v5821
    %6320 = vmatmul.mubr.f32.gmra.mxu0 %v5820
    %v6321 = vpop.f32.mrf.mxu0
    %v6322 = vadd.f32 %v6251, %v6321
    %v6323 = vpop.f32.mrf.mxu0
    %v6324 = vadd.f32 %v6253, %v6323
    %6325 = vdwg.mxu0
    %6326 = vmatprep.subr.mxu0 %v1341
    %6327 = vmatpush1.msra.mxu0 %v1340
    %6328 = vmatprep.subr.mxu0 %v1333
    %6329 = vmatpush1.msra.mxu0 %v1332
    %6330 = vmatprep.subr.mxu0 %v1325
    %6331 = vmatpush1.msra.mxu0 %v1324
    %6332 = vmatprep.subr.mxu0 %v1317
    %6333 = vmatpush1.msra.mxu0 %v1316
    %6334 = vmatprep.subr.mxu0 %v1309
    %6335 = vmatpush1.msra.mxu0 %v1308
    %6336 = vmatprep.subr.mxu0 %v1301
    %6337 = vmatpush1.msra.mxu0 %v1300
    %6338 = vmatprep.subr.mxu0 %v1293
    %6339 = vmatpush1.msra.mxu0 %v1292
    %6340 = vmatprep.subr.mxu0 %v1285
    %6341 = vmatpush1.msra.mxu0 %v1284
    %6342 = vmatprep.subr.mxu0 %v1277
    %6343 = vmatpush1.msra.mxu0 %v1276
    %6344 = vmatprep.subr.mxu0 %v1269
    %6345 = vmatpush1.msra.mxu0 %v1268
    %6346 = vmatprep.subr.mxu0 %v1261
    %6347 = vmatpush1.msra.mxu0 %v1260
    %6348 = vmatprep.subr.mxu0 %v1253
    %6349 = vmatpush1.msra.mxu0 %v1252
    %6350 = vmatprep.subr.mxu0 %v1245
    %6351 = vmatpush1.msra.mxu0 %v1244
    %6352 = vmatprep.subr.mxu0 %v1237
    %6353 = vmatpush1.msra.mxu0 %v1236
    %6354 = vmatprep.subr.mxu0 %v1229
    %6355 = vmatpush1.msra.mxu0 %v1228
    %6356 = vmatprep.subr.mxu0 %v1221
    %6357 = vmatpush1.msra.mxu0 %v1220
    %6358 = vmatprep.subr.mxu0 %v1469
    %6359 = vmatpush2.msra.mxu0 %v1468
    %6360 = vmatprep.subr.mxu0 %v1461
    %6361 = vmatpush2.msra.mxu0 %v1460
    %6362 = vmatprep.subr.mxu0 %v1453
    %6363 = vmatpush2.msra.mxu0 %v1452
    %6364 = vmatprep.subr.mxu0 %v1445
    %6365 = vmatpush2.msra.mxu0 %v1444
    %6366 = vmatprep.subr.mxu0 %v1437
    %6367 = vmatpush2.msra.mxu0 %v1436
    %6368 = vmatprep.subr.mxu0 %v1429
    %6369 = vmatpush2.msra.mxu0 %v1428
    %6370 = vmatprep.subr.mxu0 %v1421
    %6371 = vmatpush2.msra.mxu0 %v1420
    %6372 = vmatprep.subr.mxu0 %v1413
    %6373 = vmatpush2.msra.mxu0 %v1412
    %6374 = vmatprep.subr.mxu0 %v1405
    %6375 = vmatpush2.msra.mxu0 %v1404
    %6376 = vmatprep.subr.mxu0 %v1397
    %6377 = vmatpush2.msra.mxu0 %v1396
    %6378 = vmatprep.subr.mxu0 %v1389
    %6379 = vmatpush2.msra.mxu0 %v1388
    %6380 = vmatprep.subr.mxu0 %v1381
    %6381 = vmatpush2.msra.mxu0 %v1380
    %6382 = vmatprep.subr.mxu0 %v1373
    %6383 = vmatpush2.msra.mxu0 %v1372
    %6384 = vmatprep.subr.mxu0 %v1365
    %6385 = vmatpush2.msra.mxu0 %v1364
    %6386 = vmatprep.subr.mxu0 %v1357
    %6387 = vmatpush2.msra.mxu0 %v1356
    %6388 = vmatprep.subr.mxu0 %v1349
    %6389 = vmatpush2.msra.mxu0 %v1348
    %6390 = vmatprep.mubr.f32.mxu0 %v6183
    %6391 = vmatmul.mubr.f32.gmra.mxu0 %v6182
    %v6392 = vpop.f32.mrf.mxu0
    %v6393 = vadd.f32 %v2128, %v6392
    %v6394 = vpop.f32.mrf.mxu0
    %v6395 = vadd.f32 %v2132, %v6394
    %6396 = vdwg.mxu0
    %6397 = vmatprep.subr.mxu0 %v1597
    %6398 = vmatpush1.msra.mxu0 %v1596
    %6399 = vmatprep.subr.mxu0 %v1589
    %6400 = vmatpush1.msra.mxu0 %v1588
    %6401 = vmatprep.subr.mxu0 %v1581
    %6402 = vmatpush1.msra.mxu0 %v1580
    %6403 = vmatprep.subr.mxu0 %v1573
    %6404 = vmatpush1.msra.mxu0 %v1572
    %6405 = vmatprep.subr.mxu0 %v1565
    %6406 = vmatpush1.msra.mxu0 %v1564
    %6407 = vmatprep.subr.mxu0 %v1557
    %6408 = vmatpush1.msra.mxu0 %v1556
    %6409 = vmatprep.subr.mxu0 %v1549
    %6410 = vmatpush1.msra.mxu0 %v1548
    %6411 = vmatprep.subr.mxu0 %v1541
    %6412 = vmatpush1.msra.mxu0 %v1540
    %6413 = vmatprep.subr.mxu0 %v1533
    %6414 = vmatpush1.msra.mxu0 %v1532
    %6415 = vmatprep.subr.mxu0 %v1525
    %6416 = vmatpush1.msra.mxu0 %v1524
    %6417 = vmatprep.subr.mxu0 %v1517
    %6418 = vmatpush1.msra.mxu0 %v1516
    %6419 = vmatprep.subr.mxu0 %v1509
    %6420 = vmatpush1.msra.mxu0 %v1508
    %6421 = vmatprep.subr.mxu0 %v1501
    %6422 = vmatpush1.msra.mxu0 %v1500
    %6423 = vmatprep.subr.mxu0 %v1493
    %6424 = vmatpush1.msra.mxu0 %v1492
    %6425 = vmatprep.subr.mxu0 %v1485
    %6426 = vmatpush1.msra.mxu0 %v1484
    %6427 = vmatprep.subr.mxu0 %v1477
    %6428 = vmatpush1.msra.mxu0 %v1476
    %6429 = vmatprep.subr.mxu0 %v1725
    %6430 = vmatpush2.msra.mxu0 %v1724
    %6431 = vmatprep.subr.mxu0 %v1717
    %6432 = vmatpush2.msra.mxu0 %v1716
    %6433 = vmatprep.subr.mxu0 %v1709
    %6434 = vmatpush2.msra.mxu0 %v1708
    %6435 = vmatprep.subr.mxu0 %v1701
    %6436 = vmatpush2.msra.mxu0 %v1700
    %6437 = vmatprep.subr.mxu0 %v1693
    %6438 = vmatpush2.msra.mxu0 %v1692
    %6439 = vmatprep.subr.mxu0 %v1685
    %6440 = vmatpush2.msra.mxu0 %v1684
    %6441 = vmatprep.subr.mxu0 %v1677
    %6442 = vmatpush2.msra.mxu0 %v1676
    %6443 = vmatprep.subr.mxu0 %v1669
    %6444 = vmatpush2.msra.mxu0 %v1668
    %6445 = vmatprep.subr.mxu0 %v1661
    %6446 = vmatpush2.msra.mxu0 %v1660
    %6447 = vmatprep.subr.mxu0 %v1653
    %6448 = vmatpush2.msra.mxu0 %v1652
    %6449 = vmatprep.subr.mxu0 %v1645
    %6450 = vmatpush2.msra.mxu0 %v1644
    %6451 = vmatprep.subr.mxu0 %v1637
    %6452 = vmatpush2.msra.mxu0 %v1636
    %6453 = vmatprep.subr.mxu0 %v1629
    %6454 = vmatpush2.msra.mxu0 %v1628
    %6455 = vmatprep.subr.mxu0 %v1621
    %6456 = vmatpush2.msra.mxu0 %v1620
    %6457 = vmatprep.subr.mxu0 %v1613
    %6458 = vmatpush2.msra.mxu0 %v1612
    %6459 = vmatprep.subr.mxu0 %v1605
    %6460 = vmatpush2.msra.mxu0 %v1604
    %6461 = vmatprep.mubr.f32.mxu0 %v5821
    %6462 = vmatmul.mubr.f32.gmra.mxu0 %v5820
    %v6463 = vpop.f32.mrf.mxu0
    %v6464 = vadd.f32 %v6393, %v6463
    %v6465 = vpop.f32.mrf.mxu0
    %v6466 = vadd.f32 %v6395, %v6465
    %6467 = vdwg.mxu0
    %6468 = vmatprep.subr.mxu0 %v1343
    %6469 = vmatpush1.msra.mxu0 %v1342
    %6470 = vmatprep.subr.mxu0 %v1335
    %6471 = vmatpush1.msra.mxu0 %v1334
    %6472 = vmatprep.subr.mxu0 %v1327
    %6473 = vmatpush1.msra.mxu0 %v1326
    %6474 = vmatprep.subr.mxu0 %v1319
    %6475 = vmatpush1.msra.mxu0 %v1318
    %6476 = vmatprep.subr.mxu0 %v1311
    %6477 = vmatpush1.msra.mxu0 %v1310
    %6478 = vmatprep.subr.mxu0 %v1303
    %6479 = vmatpush1.msra.mxu0 %v1302
    %6480 = vmatprep.subr.mxu0 %v1295
    %6481 = vmatpush1.msra.mxu0 %v1294
    %6482 = vmatprep.subr.mxu0 %v1287
    %6483 = vmatpush1.msra.mxu0 %v1286
    %6484 = vmatprep.subr.mxu0 %v1279
    %6485 = vmatpush1.msra.mxu0 %v1278
    %6486 = vmatprep.subr.mxu0 %v1271
    %6487 = vmatpush1.msra.mxu0 %v1270
    %6488 = vmatprep.subr.mxu0 %v1263
    %6489 = vmatpush1.msra.mxu0 %v1262
    %6490 = vmatprep.subr.mxu0 %v1255
    %6491 = vmatpush1.msra.mxu0 %v1254
    %6492 = vmatprep.subr.mxu0 %v1247
    %6493 = vmatpush1.msra.mxu0 %v1246
    %6494 = vmatprep.subr.mxu0 %v1239
    %6495 = vmatpush1.msra.mxu0 %v1238
    %6496 = vmatprep.subr.mxu0 %v1231
    %6497 = vmatpush1.msra.mxu0 %v1230
    %6498 = vmatprep.subr.mxu0 %v1223
    %6499 = vmatpush1.msra.mxu0 %v1222
    %6500 = vmatprep.subr.mxu0 %v1471
    %6501 = vmatpush2.msra.mxu0 %v1470
    %6502 = vmatprep.subr.mxu0 %v1463
    %6503 = vmatpush2.msra.mxu0 %v1462
    %6504 = vmatprep.subr.mxu0 %v1455
    %6505 = vmatpush2.msra.mxu0 %v1454
    %6506 = vmatprep.subr.mxu0 %v1447
    %6507 = vmatpush2.msra.mxu0 %v1446
    %6508 = vmatprep.subr.mxu0 %v1439
    %6509 = vmatpush2.msra.mxu0 %v1438
    %6510 = vmatprep.subr.mxu0 %v1431
    %6511 = vmatpush2.msra.mxu0 %v1430
    %6512 = vmatprep.subr.mxu0 %v1423
    %6513 = vmatpush2.msra.mxu0 %v1422
    %6514 = vmatprep.subr.mxu0 %v1415
    %6515 = vmatpush2.msra.mxu0 %v1414
    %6516 = vmatprep.subr.mxu0 %v1407
    %6517 = vmatpush2.msra.mxu0 %v1406
    %6518 = vmatprep.subr.mxu0 %v1399
    %6519 = vmatpush2.msra.mxu0 %v1398
    %6520 = vmatprep.subr.mxu0 %v1391
    %6521 = vmatpush2.msra.mxu0 %v1390
    %6522 = vmatprep.subr.mxu0 %v1383
    %6523 = vmatpush2.msra.mxu0 %v1382
    %6524 = vmatprep.subr.mxu0 %v1375
    %6525 = vmatpush2.msra.mxu0 %v1374
    %6526 = vmatprep.subr.mxu0 %v1367
    %6527 = vmatpush2.msra.mxu0 %v1366
    %6528 = vmatprep.subr.mxu0 %v1359
    %6529 = vmatpush2.msra.mxu0 %v1358
    %6530 = vmatprep.subr.mxu0 %v1351
    %6531 = vmatpush2.msra.mxu0 %v1350
    %6532 = vmatprep.mubr.f32.mxu0 %v6183
    %6533 = vmatmul.mubr.f32.gmra.mxu0 %v6182
    %v6534 = vpop.f32.mrf.mxu0
    %v6535 = vadd.f32 %v2136, %v6534
    %v6536 = vpop.f32.mrf.mxu0
    %v6537 = vadd.f32 %v2140, %v6536
    %6538 = vdwg.mxu0
    %6539 = vmatprep.subr.mxu0 %v1599
    %6540 = vmatpush1.msra.mxu0 %v1598
    %6541 = vmatprep.subr.mxu0 %v1591
    %6542 = vmatpush1.msra.mxu0 %v1590
    %6543 = vmatprep.subr.mxu0 %v1583
    %6544 = vmatpush1.msra.mxu0 %v1582
    %6545 = vmatprep.subr.mxu0 %v1575
    %6546 = vmatpush1.msra.mxu0 %v1574
    %6547 = vmatprep.subr.mxu0 %v1567
    %6548 = vmatpush1.msra.mxu0 %v1566
    %6549 = vmatprep.subr.mxu0 %v1559
    %6550 = vmatpush1.msra.mxu0 %v1558
    %6551 = vmatprep.subr.mxu0 %v1551
    %6552 = vmatpush1.msra.mxu0 %v1550
    %6553 = vmatprep.subr.mxu0 %v1543
    %6554 = vmatpush1.msra.mxu0 %v1542
    %6555 = vmatprep.subr.mxu0 %v1535
    %6556 = vmatpush1.msra.mxu0 %v1534
    %6557 = vmatprep.subr.mxu0 %v1527
    %6558 = vmatpush1.msra.mxu0 %v1526
    %6559 = vmatprep.subr.mxu0 %v1519
    %6560 = vmatpush1.msra.mxu0 %v1518
    %6561 = vmatprep.subr.mxu0 %v1511
    %6562 = vmatpush1.msra.mxu0 %v1510
    %6563 = vmatprep.subr.mxu0 %v1503
    %6564 = vmatpush1.msra.mxu0 %v1502
    %6565 = vmatprep.subr.mxu0 %v1495
    %6566 = vmatpush1.msra.mxu0 %v1494
    %6567 = vmatprep.subr.mxu0 %v1487
    %6568 = vmatpush1.msra.mxu0 %v1486
    %6569 = vmatprep.subr.mxu0 %v1479
    %6570 = vmatpush1.msra.mxu0 %v1478
    %6571 = vmatprep.subr.mxu0 %v1727
    %6572 = vmatpush2.msra.mxu0 %v1726
    %6573 = vmatprep.subr.mxu0 %v1719
    %6574 = vmatpush2.msra.mxu0 %v1718
    %6575 = vmatprep.subr.mxu0 %v1711
    %6576 = vmatpush2.msra.mxu0 %v1710
    %6577 = vmatprep.subr.mxu0 %v1703
    %6578 = vmatpush2.msra.mxu0 %v1702
    %6579 = vmatprep.subr.mxu0 %v1695
    %6580 = vmatpush2.msra.mxu0 %v1694
    %6581 = vmatprep.subr.mxu0 %v1687
    %6582 = vmatpush2.msra.mxu0 %v1686
    %6583 = vmatprep.subr.mxu0 %v1679
    %6584 = vmatpush2.msra.mxu0 %v1678
    %6585 = vmatprep.subr.mxu0 %v1671
    %6586 = vmatpush2.msra.mxu0 %v1670
    %6587 = vmatprep.subr.mxu0 %v1663
    %6588 = vmatpush2.msra.mxu0 %v1662
    %6589 = vmatprep.subr.mxu0 %v1655
    %6590 = vmatpush2.msra.mxu0 %v1654
    %6591 = vmatprep.subr.mxu0 %v1647
    %6592 = vmatpush2.msra.mxu0 %v1646
    %6593 = vmatprep.subr.mxu0 %v1639
    %6594 = vmatpush2.msra.mxu0 %v1638
    %6595 = vmatprep.subr.mxu0 %v1631
    %6596 = vmatpush2.msra.mxu0 %v1630
    %6597 = vmatprep.subr.mxu0 %v1623
    %6598 = vmatpush2.msra.mxu0 %v1622
    %6599 = vmatprep.subr.mxu0 %v1615
    %6600 = vmatpush2.msra.mxu0 %v1614
    %6601 = vmatprep.subr.mxu0 %v1607
    %6602 = vmatpush2.msra.mxu0 %v1606
    %6603 = vmatprep.mubr.f32.mxu0 %v5821
    %6604 = vmatmul.mubr.f32.gmra.mxu0 %v5820
    %v6605 = vpop.f32.mrf.mxu0
    %v6606 = vadd.f32 %v6535, %v6605
    %v6607 = vpop.f32.mrf.mxu0
    %v6608 = vadd.f32 %v6537, %v6607
    %6609 = vdwg.mxu0
    %6610 = vmatprep.subr.mxu0 %v1345
    %6611 = vmatpush1.msra.mxu0 %v1344
    %6612 = vmatprep.subr.mxu0 %v1337
    %6613 = vmatpush1.msra.mxu0 %v1336
    %6614 = vmatprep.subr.mxu0 %v1329
    %6615 = vmatpush1.msra.mxu0 %v1328
    %6616 = vmatprep.subr.mxu0 %v1321
    %6617 = vmatpush1.msra.mxu0 %v1320
    %6618 = vmatprep.subr.mxu0 %v1313
    %6619 = vmatpush1.msra.mxu0 %v1312
    %6620 = vmatprep.subr.mxu0 %v1305
    %6621 = vmatpush1.msra.mxu0 %v1304
    %6622 = vmatprep.subr.mxu0 %v1297
    %6623 = vmatpush1.msra.mxu0 %v1296
    %6624 = vmatprep.subr.mxu0 %v1289
    %6625 = vmatpush1.msra.mxu0 %v1288
    %6626 = vmatprep.subr.mxu0 %v1281
    %6627 = vmatpush1.msra.mxu0 %v1280
    %6628 = vmatprep.subr.mxu0 %v1273
    %6629 = vmatpush1.msra.mxu0 %v1272
    %6630 = vmatprep.subr.mxu0 %v1265
    %6631 = vmatpush1.msra.mxu0 %v1264
    %6632 = vmatprep.subr.mxu0 %v1257
    %6633 = vmatpush1.msra.mxu0 %v1256
    %6634 = vmatprep.subr.mxu0 %v1249
    %6635 = vmatpush1.msra.mxu0 %v1248
    %6636 = vmatprep.subr.mxu0 %v1241
    %6637 = vmatpush1.msra.mxu0 %v1240
    %6638 = vmatprep.subr.mxu0 %v1233
    %6639 = vmatpush1.msra.mxu0 %v1232
    %6640 = vmatprep.subr.mxu0 %v1225
    %6641 = vmatpush1.msra.mxu0 %v1224
    %6642 = vmatprep.subr.mxu0 %v1473
    %6643 = vmatpush2.msra.mxu0 %v1472
    %6644 = vmatprep.subr.mxu0 %v1465
    %6645 = vmatpush2.msra.mxu0 %v1464
    %6646 = vmatprep.subr.mxu0 %v1457
    %6647 = vmatpush2.msra.mxu0 %v1456
    %6648 = vmatprep.subr.mxu0 %v1449
    %6649 = vmatpush2.msra.mxu0 %v1448
    %6650 = vmatprep.subr.mxu0 %v1441
    %6651 = vmatpush2.msra.mxu0 %v1440
    %6652 = vmatprep.subr.mxu0 %v1433
    %6653 = vmatpush2.msra.mxu0 %v1432
    %6654 = vmatprep.subr.mxu0 %v1425
    %6655 = vmatpush2.msra.mxu0 %v1424
    %6656 = vmatprep.subr.mxu0 %v1417
    %6657 = vmatpush2.msra.mxu0 %v1416
    %6658 = vmatprep.subr.mxu0 %v1409
    %6659 = vmatpush2.msra.mxu0 %v1408
    %6660 = vmatprep.subr.mxu0 %v1401
    %6661 = vmatpush2.msra.mxu0 %v1400
    %6662 = vmatprep.subr.mxu0 %v1393
    %6663 = vmatpush2.msra.mxu0 %v1392
    %6664 = vmatprep.subr.mxu0 %v1385
    %6665 = vmatpush2.msra.mxu0 %v1384
    %6666 = vmatprep.subr.mxu0 %v1377
    %6667 = vmatpush2.msra.mxu0 %v1376
    %6668 = vmatprep.subr.mxu0 %v1369
    %6669 = vmatpush2.msra.mxu0 %v1368
    %6670 = vmatprep.subr.mxu0 %v1361
    %6671 = vmatpush2.msra.mxu0 %v1360
    %6672 = vmatprep.subr.mxu0 %v1353
    %6673 = vmatpush2.msra.mxu0 %v1352
    %6674 = vmatprep.mubr.f32.mxu0 %v6183
    %6675 = vmatmul.mubr.f32.gmra.mxu0 %v6182
    %v6676 = vpop.f32.mrf.mxu0
    %v6677 = vadd.f32 %v2144, %v6676
    %v6678 = vpop.f32.mrf.mxu0
    %v6679 = vadd.f32 %v2148, %v6678
    %6680 = vdwg.mxu0
    %6681 = vmatprep.subr.mxu0 %v1601
    %6682 = vmatpush1.msra.mxu0 %v1600
    %6683 = vmatprep.subr.mxu0 %v1593
    %6684 = vmatpush1.msra.mxu0 %v1592
    %6685 = vmatprep.subr.mxu0 %v1585
    %6686 = vmatpush1.msra.mxu0 %v1584
    %6687 = vmatprep.subr.mxu0 %v1577
    %6688 = vmatpush1.msra.mxu0 %v1576
    %6689 = vmatprep.subr.mxu0 %v1569
    %6690 = vmatpush1.msra.mxu0 %v1568
    %6691 = vmatprep.subr.mxu0 %v1561
    %6692 = vmatpush1.msra.mxu0 %v1560
    %6693 = vmatprep.subr.mxu0 %v1553
    %6694 = vmatpush1.msra.mxu0 %v1552
    %6695 = vmatprep.subr.mxu0 %v1545
    %6696 = vmatpush1.msra.mxu0 %v1544
    %6697 = vmatprep.subr.mxu0 %v1537
    %6698 = vmatpush1.msra.mxu0 %v1536
    %6699 = vmatprep.subr.mxu0 %v1529
    %6700 = vmatpush1.msra.mxu0 %v1528
    %6701 = vmatprep.subr.mxu0 %v1521
    %6702 = vmatpush1.msra.mxu0 %v1520
    %6703 = vmatprep.subr.mxu0 %v1513
    %6704 = vmatpush1.msra.mxu0 %v1512
    %6705 = vmatprep.subr.mxu0 %v1505
    %6706 = vmatpush1.msra.mxu0 %v1504
    %6707 = vmatprep.subr.mxu0 %v1497
    %6708 = vmatpush1.msra.mxu0 %v1496
    %6709 = vmatprep.subr.mxu0 %v1489
    %6710 = vmatpush1.msra.mxu0 %v1488
    %6711 = vmatprep.subr.mxu0 %v1481
    %6712 = vmatpush1.msra.mxu0 %v1480
    %6713 = vmatprep.subr.mxu0 %v1729
    %6714 = vmatpush2.msra.mxu0 %v1728
    %6715 = vmatprep.subr.mxu0 %v1721
    %6716 = vmatpush2.msra.mxu0 %v1720
    %6717 = vmatprep.subr.mxu0 %v1713
    %6718 = vmatpush2.msra.mxu0 %v1712
    %6719 = vmatprep.subr.mxu0 %v1705
    %6720 = vmatpush2.msra.mxu0 %v1704
    %6721 = vmatprep.subr.mxu0 %v1697
    %6722 = vmatpush2.msra.mxu0 %v1696
    %6723 = vmatprep.subr.mxu0 %v1689
    %6724 = vmatpush2.msra.mxu0 %v1688
    %6725 = vmatprep.subr.mxu0 %v1681
    %6726 = vmatpush2.msra.mxu0 %v1680
    %6727 = vmatprep.subr.mxu0 %v1673
    %6728 = vmatpush2.msra.mxu0 %v1672
    %6729 = vmatprep.subr.mxu0 %v1665
    %6730 = vmatpush2.msra.mxu0 %v1664
    %6731 = vmatprep.subr.mxu0 %v1657
    %6732 = vmatpush2.msra.mxu0 %v1656
    %6733 = vmatprep.subr.mxu0 %v1649
    %6734 = vmatpush2.msra.mxu0 %v1648
    %6735 = vmatprep.subr.mxu0 %v1641
    %6736 = vmatpush2.msra.mxu0 %v1640
    %6737 = vmatprep.subr.mxu0 %v1633
    %6738 = vmatpush2.msra.mxu0 %v1632
    %6739 = vmatprep.subr.mxu0 %v1625
    %6740 = vmatpush2.msra.mxu0 %v1624
    %6741 = vmatprep.subr.mxu0 %v1617
    %6742 = vmatpush2.msra.mxu0 %v1616
    %6743 = vmatprep.subr.mxu0 %v1609
    %6744 = vmatpush2.msra.mxu0 %v1608
    %6745 = vmatprep.mubr.f32.mxu0 %v5821
    %6746 = vmatmul.mubr.f32.gmra.mxu0 %v5820
    %v6747 = vpop.f32.mrf.mxu0
    %v6748 = vadd.f32 %v6677, %v6747
    %v6749 = vpop.f32.mrf.mxu0
    %v6750 = vadd.f32 %v6679, %v6749
    %6751 = vdwg.mxu0
    %v6752 = vxor.u32 %v6322, 2147483648
    %v6753 = vxor.u32 %v6324, 2147483648
    %v6754 = vmul.f32 %v6752, 1.442695
    %v6755 = vpow.pop %v6754
    %v6756 = vmul.f32 %v6753, 1.442695
    %v6757 = vpow.pop %v6756
    %v6758 = vadd.f32 %v6755, 1.0
    %v6759 = vadd.f32 %v6757, 1.0
    %v6760 = vrcp.pop %v6758
    %v6761 = vmul.f32 1.0, %v6760
    %v6762 = vrcp.pop %v6759
    %v6763 = vmul.f32 1.0, %v6762
    %v6764 = vxor.u32 %v6464, 2147483648
    %v6765 = vxor.u32 %v6466, 2147483648
    %v6766 = vmul.f32 %v6764, 1.442695
    %v6767 = vpow.pop %v6766
    %v6768 = vmul.f32 %v6765, 1.442695
    %v6769 = vpow.pop %v6768
    %v6770 = vadd.f32 %v6767, 1.0
    %v6771 = vadd.f32 %v6769, 1.0
    %v6772 = vrcp.pop %v6770
    %v6773 = vmul.f32 1.0, %v6772
    %v6774 = vrcp.pop %v6771
    %v6775 = vmul.f32 1.0, %v6774
    %v6776 = vtanh.pop %v6606
    %v6777 = vtanh.pop %v6608
    %v6778 = vxor.u32 %v6748, 2147483648
    %v6779 = vxor.u32 %v6750, 2147483648
    %v6780 = vmul.f32 %v6778, 1.442695
    %v6781 = vpow.pop %v6780
    %v6782 = vmul.f32 %v6779, 1.442695
    %v6783 = vpow.pop %v6782
    %v6784 = vadd.f32 %v6781, 1.0
    %v6785 = vadd.f32 %v6783, 1.0
    %v6786 = vrcp.pop %v6784
    %v6787 = vmul.f32 1.0, %v6786
    %v6788 = vrcp.pop %v6785
    %v6789 = vmul.f32 1.0, %v6788
    %v6790 = vmul.f32 %v6773, %v5816
    %v6791 = vmul.f32 %v6775, %v5817
    %v6792 = vmul.f32 %v6761, %v6776
    %v6793 = vmul.f32 %v6763, %v6777
    %v6794 = vadd.f32 %v6790, %v6792
    %v6795 = vadd.f32 %v6791, %v6793
    %v6796 = vtanh.pop %v6794
    %v6797 = vtanh.pop %v6795
    %v6798 = vmul.f32 %v6787, %v6796
    %v6799 = vmul.f32 %v6789, %v6797
    %6800 = vst [vmem:[#allocation7 + $0x10] sm:$0x3] %v6798
    %6801 = vst [vmem:[#allocation7 + $0x18] sm:$0x3] %v6799
    %v6802 = vld [vmem:[#allocation6 + $0x40] sm:$0xc]
    %v6803 = vld [vmem:[#allocation6 + $0x48] sm:$0xc]
    %v6804 = vld [vmem:[#allocation6 + $0x50] sm:$0xc]
    %v6805 = vld [vmem:[#allocation6 + $0x58] sm:$0xc]
    %v6806 = vld [vmem:[#allocation6 + $0x60] sm:$0xc]
    %v6807 = vld [vmem:[#allocation6 + $0x68] sm:$0xc]
    %v6808 = vld [vmem:[#allocation6 + $0x70] sm:$0xc]
    %v6809 = vld [vmem:[#allocation6 + $0x78] sm:$0xc]
    %6810 = vmatprep.subr.mxu0 %v1083
    %6811 = vmatpush1.msra.mxu0 %v1082
    %6812 = vmatprep.subr.mxu0 %v1075
    %6813 = vmatpush1.msra.mxu0 %v1074
    %6814 = vmatprep.subr.mxu0 %v1067
    %6815 = vmatpush1.msra.mxu0 %v1066
    %6816 = vmatprep.subr.mxu0 %v1059
    %6817 = vmatpush1.msra.mxu0 %v1058
    %6818 = vmatprep.subr.mxu0 %v1051
    %6819 = vmatpush1.msra.mxu0 %v1050
    %6820 = vmatprep.subr.mxu0 %v1043
    %6821 = vmatpush1.msra.mxu0 %v1042
    %6822 = vmatprep.subr.mxu0 %v1035
    %6823 = vmatpush1.msra.mxu0 %v1034
    %6824 = vmatprep.subr.mxu0 %v1027
    %6825 = vmatpush1.msra.mxu0 %v1026
    %6826 = vmatprep.subr.mxu0 %v1019
    %6827 = vmatpush1.msra.mxu0 %v1018
    %6828 = vmatprep.subr.mxu0 %v1011
    %6829 = vmatpush1.msra.mxu0 %v1010
    %6830 = vmatprep.subr.mxu0 %v1003
    %6831 = vmatpush1.msra.mxu0 %v1002
    %6832 = vmatprep.subr.mxu0 %v995
    %6833 = vmatpush1.msra.mxu0 %v994
    %6834 = vmatprep.subr.mxu0 %v987
    %6835 = vmatpush1.msra.mxu0 %v986
    %6836 = vmatprep.subr.mxu0 %v979
    %6837 = vmatpush1.msra.mxu0 %v978
    %6838 = vmatprep.subr.mxu0 %v971
    %6839 = vmatpush1.msra.mxu0 %v970
    %6840 = vmatprep.subr.mxu0 %v963
    %6841 = vmatpush1.msra.mxu0 %v962
    %6842 = vmatprep.subr.mxu0 %v1211
    %6843 = vmatpush2.msra.mxu0 %v1210
    %6844 = vmatprep.subr.mxu0 %v1203
    %6845 = vmatpush2.msra.mxu0 %v1202
    %6846 = vmatprep.subr.mxu0 %v1195
    %6847 = vmatpush2.msra.mxu0 %v1194
    %6848 = vmatprep.subr.mxu0 %v1187
    %6849 = vmatpush2.msra.mxu0 %v1186
    %6850 = vmatprep.subr.mxu0 %v1179
    %6851 = vmatpush2.msra.mxu0 %v1178
    %6852 = vmatprep.subr.mxu0 %v1171
    %6853 = vmatpush2.msra.mxu0 %v1170
    %6854 = vmatprep.subr.mxu0 %v1163
    %6855 = vmatpush2.msra.mxu0 %v1162
    %6856 = vmatprep.subr.mxu0 %v1155
    %6857 = vmatpush2.msra.mxu0 %v1154
    %6858 = vmatprep.subr.mxu0 %v1147
    %6859 = vmatpush2.msra.mxu0 %v1146
    %6860 = vmatprep.subr.mxu0 %v1139
    %6861 = vmatpush2.msra.mxu0 %v1138
    %6862 = vmatprep.subr.mxu0 %v1131
    %6863 = vmatpush2.msra.mxu0 %v1130
    %6864 = vmatprep.subr.mxu0 %v1123
    %6865 = vmatpush2.msra.mxu0 %v1122
    %6866 = vmatprep.subr.mxu0 %v1115
    %6867 = vmatpush2.msra.mxu0 %v1114
    %6868 = vmatprep.subr.mxu0 %v1107
    %6869 = vmatpush2.msra.mxu0 %v1106
    %6870 = vmatprep.subr.mxu0 %v1099
    %6871 = vmatpush2.msra.mxu0 %v1098
    %6872 = vmatprep.subr.mxu0 %v1091
    %6873 = vmatpush2.msra.mxu0 %v1090
    %6874 = vmatprep.mubr.f32.mxu0 %v6183
    %6875 = vmatmul.mubr.f32.gmra.mxu0 %v6182
    %v6876 = vpop.f32.mrf.mxu0
    %v6877 = vadd.f32 0.0, %v6876
    %v6878 = vpop.f32.mrf.mxu0
    %v6879 = vadd.f32 0.0, %v6878
    %6880 = vdwg.mxu0
    %6881 = vmatprep.subr.mxu0 %v1085
    %6882 = vmatpush1.msra.mxu0 %v1084
    %6883 = vmatprep.subr.mxu0 %v1077
    %6884 = vmatpush1.msra.mxu0 %v1076
    %6885 = vmatprep.subr.mxu0 %v1069
    %6886 = vmatpush1.msra.mxu0 %v1068
    %6887 = vmatprep.subr.mxu0 %v1061
    %6888 = vmatpush1.msra.mxu0 %v1060
    %6889 = vmatprep.subr.mxu0 %v1053
    %6890 = vmatpush1.msra.mxu0 %v1052
    %6891 = vmatprep.subr.mxu0 %v1045
    %6892 = vmatpush1.msra.mxu0 %v1044
    %6893 = vmatprep.subr.mxu0 %v1037
    %6894 = vmatpush1.msra.mxu0 %v1036
    %6895 = vmatprep.subr.mxu0 %v1029
    %6896 = vmatpush1.msra.mxu0 %v1028
    %6897 = vmatprep.subr.mxu0 %v1021
    %6898 = vmatpush1.msra.mxu0 %v1020
    %6899 = vmatprep.subr.mxu0 %v1013
    %6900 = vmatpush1.msra.mxu0 %v1012
    %6901 = vmatprep.subr.mxu0 %v1005
    %6902 = vmatpush1.msra.mxu0 %v1004
    %6903 = vmatprep.subr.mxu0 %v997
    %6904 = vmatpush1.msra.mxu0 %v996
    %6905 = vmatprep.subr.mxu0 %v989
    %6906 = vmatpush1.msra.mxu0 %v988
    %6907 = vmatprep.subr.mxu0 %v981
    %6908 = vmatpush1.msra.mxu0 %v980
    %6909 = vmatprep.subr.mxu0 %v973
    %6910 = vmatpush1.msra.mxu0 %v972
    %6911 = vmatprep.subr.mxu0 %v965
    %6912 = vmatpush1.msra.mxu0 %v964
    %6913 = vmatprep.subr.mxu0 %v1213
    %6914 = vmatpush2.msra.mxu0 %v1212
    %6915 = vmatprep.subr.mxu0 %v1205
    %6916 = vmatpush2.msra.mxu0 %v1204
    %6917 = vmatprep.subr.mxu0 %v1197
    %6918 = vmatpush2.msra.mxu0 %v1196
    %6919 = vmatprep.subr.mxu0 %v1189
    %6920 = vmatpush2.msra.mxu0 %v1188
    %6921 = vmatprep.subr.mxu0 %v1181
    %6922 = vmatpush2.msra.mxu0 %v1180
    %6923 = vmatprep.subr.mxu0 %v1173
    %6924 = vmatpush2.msra.mxu0 %v1172
    %6925 = vmatprep.subr.mxu0 %v1165
    %6926 = vmatpush2.msra.mxu0 %v1164
    %6927 = vmatprep.subr.mxu0 %v1157
    %6928 = vmatpush2.msra.mxu0 %v1156
    %6929 = vmatprep.subr.mxu0 %v1149
    %6930 = vmatpush2.msra.mxu0 %v1148
    %6931 = vmatprep.subr.mxu0 %v1141
    %6932 = vmatpush2.msra.mxu0 %v1140
    %6933 = vmatprep.subr.mxu0 %v1133
    %6934 = vmatpush2.msra.mxu0 %v1132
    %6935 = vmatprep.subr.mxu0 %v1125
    %6936 = vmatpush2.msra.mxu0 %v1124
    %6937 = vmatprep.subr.mxu0 %v1117
    %6938 = vmatpush2.msra.mxu0 %v1116
    %6939 = vmatprep.subr.mxu0 %v1109
    %6940 = vmatpush2.msra.mxu0 %v1108
    %6941 = vmatprep.subr.mxu0 %v1101
    %6942 = vmatpush2.msra.mxu0 %v1100
    %6943 = vmatprep.subr.mxu0 %v1093
    %6944 = vmatpush2.msra.mxu0 %v1092
    %6945 = vmatprep.mubr.f32.mxu0 %v6183
    %6946 = vmatmul.mubr.f32.gmra.mxu0 %v6182
    %v6947 = vpop.f32.mrf.mxu0
    %v6948 = vadd.f32 0.0, %v6947
    %v6949 = vpop.f32.mrf.mxu0
    %v6950 = vadd.f32 0.0, %v6949
    %6951 = vdwg.mxu0
    %6952 = vmatprep.subr.mxu0 %v1087
    %6953 = vmatpush1.msra.mxu0 %v1086
    %6954 = vmatprep.subr.mxu0 %v1079
    %6955 = vmatpush1.msra.mxu0 %v1078
    %6956 = vmatprep.subr.mxu0 %v1071
    %6957 = vmatpush1.msra.mxu0 %v1070
    %6958 = vmatprep.subr.mxu0 %v1063
    %6959 = vmatpush1.msra.mxu0 %v1062
    %6960 = vmatprep.subr.mxu0 %v1055
    %6961 = vmatpush1.msra.mxu0 %v1054
    %6962 = vmatprep.subr.mxu0 %v1047
    %6963 = vmatpush1.msra.mxu0 %v1046
    %6964 = vmatprep.subr.mxu0 %v1039
    %6965 = vmatpush1.msra.mxu0 %v1038
    %6966 = vmatprep.subr.mxu0 %v1031
    %6967 = vmatpush1.msra.mxu0 %v1030
    %6968 = vmatprep.subr.mxu0 %v1023
    %6969 = vmatpush1.msra.mxu0 %v1022
    %6970 = vmatprep.subr.mxu0 %v1015
    %6971 = vmatpush1.msra.mxu0 %v1014
    %6972 = vmatprep.subr.mxu0 %v1007
    %6973 = vmatpush1.msra.mxu0 %v1006
    %6974 = vmatprep.subr.mxu0 %v999
    %6975 = vmatpush1.msra.mxu0 %v998
    %6976 = vmatprep.subr.mxu0 %v991
    %6977 = vmatpush1.msra.mxu0 %v990
    %6978 = vmatprep.subr.mxu0 %v983
    %6979 = vmatpush1.msra.mxu0 %v982
    %6980 = vmatprep.subr.mxu0 %v975
    %6981 = vmatpush1.msra.mxu0 %v974
    %6982 = vmatprep.subr.mxu0 %v967
    %6983 = vmatpush1.msra.mxu0 %v966
    %6984 = vmatprep.subr.mxu0 %v1215
    %6985 = vmatpush2.msra.mxu0 %v1214
    %6986 = vmatprep.subr.mxu0 %v1207
    %6987 = vmatpush2.msra.mxu0 %v1206
    %6988 = vmatprep.subr.mxu0 %v1199
    %6989 = vmatpush2.msra.mxu0 %v1198
    %6990 = vmatprep.subr.mxu0 %v1191
    %6991 = vmatpush2.msra.mxu0 %v1190
    %6992 = vmatprep.subr.mxu0 %v1183
    %6993 = vmatpush2.msra.mxu0 %v1182
    %6994 = vmatprep.subr.mxu0 %v1175
    %6995 = vmatpush2.msra.mxu0 %v1174
    %6996 = vmatprep.subr.mxu0 %v1167
    %6997 = vmatpush2.msra.mxu0 %v1166
    %6998 = vmatprep.subr.mxu0 %v1159
    %6999 = vmatpush2.msra.mxu0 %v1158
    %7000 = vmatprep.subr.mxu0 %v1151
    %7001 = vmatpush2.msra.mxu0 %v1150
    %7002 = vmatprep.subr.mxu0 %v1143
    %7003 = vmatpush2.msra.mxu0 %v1142
    %7004 = vmatprep.subr.mxu0 %v1135
    %7005 = vmatpush2.msra.mxu0 %v1134
    %7006 = vmatprep.subr.mxu0 %v1127
    %7007 = vmatpush2.msra.mxu0 %v1126
    %7008 = vmatprep.subr.mxu0 %v1119
    %7009 = vmatpush2.msra.mxu0 %v1118
    %7010 = vmatprep.subr.mxu0 %v1111
    %7011 = vmatpush2.msra.mxu0 %v1110
    %7012 = vmatprep.subr.mxu0 %v1103
    %7013 = vmatpush2.msra.mxu0 %v1102
    %7014 = vmatprep.subr.mxu0 %v1095
    %7015 = vmatpush2.msra.mxu0 %v1094
    %7016 = vmatprep.mubr.f32.mxu0 %v6183
    %7017 = vmatmul.mubr.f32.gmra.mxu0 %v6182
    %v7018 = vpop.f32.mrf.mxu0
    %v7019 = vadd.f32 0.0, %v7018
    %v7020 = vpop.f32.mrf.mxu0
    %v7021 = vadd.f32 0.0, %v7020
    %7022 = vdwg.mxu0
    %7023 = vmatprep.subr.mxu0 %v1089
    %7024 = vmatpush1.msra.mxu0 %v1088
    %7025 = vmatprep.subr.mxu0 %v1081
    %7026 = vmatpush1.msra.mxu0 %v1080
    %7027 = vmatprep.subr.mxu0 %v1073
    %7028 = vmatpush1.msra.mxu0 %v1072
    %7029 = vmatprep.subr.mxu0 %v1065
    %7030 = vmatpush1.msra.mxu0 %v1064
    %7031 = vmatprep.subr.mxu0 %v1057
    %7032 = vmatpush1.msra.mxu0 %v1056
    %7033 = vmatprep.subr.mxu0 %v1049
    %7034 = vmatpush1.msra.mxu0 %v1048
    %7035 = vmatprep.subr.mxu0 %v1041
    %7036 = vmatpush1.msra.mxu0 %v1040
    %7037 = vmatprep.subr.mxu0 %v1033
    %7038 = vmatpush1.msra.mxu0 %v1032
    %7039 = vmatprep.subr.mxu0 %v1025
    %7040 = vmatpush1.msra.mxu0 %v1024
    %7041 = vmatprep.subr.mxu0 %v1017
    %7042 = vmatpush1.msra.mxu0 %v1016
    %7043 = vmatprep.subr.mxu0 %v1009
    %7044 = vmatpush1.msra.mxu0 %v1008
    %7045 = vmatprep.subr.mxu0 %v1001
    %7046 = vmatpush1.msra.mxu0 %v1000
    %7047 = vmatprep.subr.mxu0 %v993
    %7048 = vmatpush1.msra.mxu0 %v992
    %7049 = vmatprep.subr.mxu0 %v985
    %7050 = vmatpush1.msra.mxu0 %v984
    %7051 = vmatprep.subr.mxu0 %v977
    %7052 = vmatpush1.msra.mxu0 %v976
    %7053 = vmatprep.subr.mxu0 %v969
    %7054 = vmatpush1.msra.mxu0 %v968
    %7055 = vmatprep.subr.mxu0 %v1217
    %7056 = vmatpush2.msra.mxu0 %v1216
    %7057 = vmatprep.subr.mxu0 %v1209
    %7058 = vmatpush2.msra.mxu0 %v1208
    %7059 = vmatprep.subr.mxu0 %v1201
    %7060 = vmatpush2.msra.mxu0 %v1200
    %7061 = vmatprep.subr.mxu0 %v1193
    %7062 = vmatpush2.msra.mxu0 %v1192
    %7063 = vmatprep.subr.mxu0 %v1185
    %7064 = vmatpush2.msra.mxu0 %v1184
    %7065 = vmatprep.subr.mxu0 %v1177
    %7066 = vmatpush2.msra.mxu0 %v1176
    %7067 = vmatprep.subr.mxu0 %v1169
    %7068 = vmatpush2.msra.mxu0 %v1168
    %7069 = vmatprep.subr.mxu0 %v1161
    %7070 = vmatpush2.msra.mxu0 %v1160
    %7071 = vmatprep.subr.mxu0 %v1153
    %7072 = vmatpush2.msra.mxu0 %v1152
    %7073 = vmatprep.subr.mxu0 %v1145
    %7074 = vmatpush2.msra.mxu0 %v1144
    %7075 = vmatprep.subr.mxu0 %v1137
    %7076 = vmatpush2.msra.mxu0 %v1136
    %7077 = vmatprep.subr.mxu0 %v1129
    %7078 = vmatpush2.msra.mxu0 %v1128
    %7079 = vmatprep.subr.mxu0 %v1121
    %7080 = vmatpush2.msra.mxu0 %v1120
    %7081 = vmatprep.subr.mxu0 %v1113
    %7082 = vmatpush2.msra.mxu0 %v1112
    %7083 = vmatprep.subr.mxu0 %v1105
    %7084 = vmatpush2.msra.mxu0 %v1104
    %7085 = vmatprep.subr.mxu0 %v1097
    %7086 = vmatpush2.msra.mxu0 %v1096
    %7087 = vmatprep.mubr.f32.mxu0 %v6183
    %7088 = vmatmul.mubr.f32.gmra.mxu0 %v6182
    %v7089 = vpop.f32.mrf.mxu0
    %v7090 = vadd.f32 0.0, %v7089
    %v7091 = vpop.f32.mrf.mxu0
    %v7092 = vadd.f32 0.0, %v7091
    %7093 = vdwg.mxu0
    %v7102 = vrot.slane %v6877, 6
    %v7103 = vrot.slane %v6879, 6
    %v7104 = vrot.slane %v6948, 6
    %v7105 = vrot.slane %v6950, 6
    %v7106 = vrot.slane %v7019, 6
    %v7107 = vrot.slane %v7021, 6
    %v7108 = vrot.slane %v7090, 6
    %v7109 = vrot.slane %v7092, 6
    %v7118 = vadd.f32 %v6802, %v7102
    %v7119 = vadd.f32 %v6803, %v7103
    %v7120 = vadd.f32 %v6804, %v7104
    %v7121 = vadd.f32 %v6805, %v7105
    %v7122 = vadd.f32 %v6806, %v7106
    %v7123 = vadd.f32 %v6807, %v7107
    %v7124 = vadd.f32 %v6808, %v7108
    %v7125 = vadd.f32 %v6809, %v7109
    %v7126 = vxor.u32 %v7118, 2147483648
    %v7127 = vxor.u32 %v7119, 2147483648
    %v7128 = vmul.f32 %v7126, 1.442695
    %v7129 = vpow.pop %v7128
    %v7130 = vmul.f32 %v7127, 1.442695
    %v7131 = vpow.pop %v7130
    %v7132 = vadd.f32 %v7129, 1.0
    %v7133 = vadd.f32 %v7131, 1.0
    %v7134 = vrcp.pop %v7132
    %v7135 = vmul.f32 1.0, %v7134
    %v7136 = vrcp.pop %v7133
    %v7137 = vmul.f32 1.0, %v7136
    %v7138 = vxor.u32 %v7120, 2147483648
    %v7139 = vxor.u32 %v7121, 2147483648
    %v7140 = vmul.f32 %v7138, 1.442695
    %v7141 = vpow.pop %v7140
    %v7142 = vmul.f32 %v7139, 1.442695
    %v7143 = vpow.pop %v7142
    %v7144 = vadd.f32 %v7141, 1.0
    %v7145 = vadd.f32 %v7143, 1.0
    %v7146 = vrcp.pop %v7144
    %v7147 = vmul.f32 1.0, %v7146
    %v7148 = vrcp.pop %v7145
    %v7149 = vmul.f32 1.0, %v7148
    %v7150 = vtanh.pop %v7122
    %v7151 = vtanh.pop %v7123
    %v7152 = vxor.u32 %v7124, 2147483648
    %v7153 = vxor.u32 %v7125, 2147483648
    %v7154 = vmul.f32 %v7152, 1.442695
    %v7155 = vpow.pop %v7154
    %v7156 = vmul.f32 %v7153, 1.442695
    %v7157 = vpow.pop %v7156
    %v7158 = vadd.f32 %v7155, 1.0
    %v7159 = vadd.f32 %v7157, 1.0
    %v7160 = vrcp.pop %v7158
    %v7161 = vmul.f32 1.0, %v7160
    %v7162 = vrcp.pop %v7159
    %v7163 = vmul.f32 1.0, %v7162
    %v7166 = vrot.slane %v6178, 6
    %v7167 = vrot.slane %v6179, 6
    %v7170 = vmul.f32 %v7147, %v7166
    %v7171 = vmul.f32 %v7149, %v7167
    %v7172 = vmul.f32 %v7135, %v7150
    %v7173 = vmul.f32 %v7137, %v7151
    %v7174 = vadd.f32 %v7170, %v7172
    %v7175 = vadd.f32 %v7171, %v7173
    %v7176 = vtanh.pop %v7174
    %v7177 = vtanh.pop %v7175
    %v7178 = vmul.f32 %v7161, %v7176
    %v7179 = vmul.f32 %v7163, %v7177
    %v7182 = vrot.slane %v6798, 6
    %v7183 = vrot.slane %v6799, 6
    %v7186 = vrot.slane %v7178, 2
    %v7187 = vrot.slane %v7179, 2
    %v7188 = vrot.slane %v7182, 2
    %v7189 = vrot.slane %v7183, 2
    %7194 = vmatprep.subr.mxu0 %v1339
    %7195 = vmatpush1.msra.mxu0 %v1338
    %7196 = vmatprep.subr.mxu0 %v1331
    %7197 = vmatpush1.msra.mxu0 %v1330
    %7198 = vmatprep.subr.mxu0 %v1323
    %7199 = vmatpush1.msra.mxu0 %v1322
    %7200 = vmatprep.subr.mxu0 %v1315
    %7201 = vmatpush1.msra.mxu0 %v1314
    %7202 = vmatprep.subr.mxu0 %v1307
    %7203 = vmatpush1.msra.mxu0 %v1306
    %7204 = vmatprep.subr.mxu0 %v1299
    %7205 = vmatpush1.msra.mxu0 %v1298
    %7206 = vmatprep.subr.mxu0 %v1291
    %7207 = vmatpush1.msra.mxu0 %v1290
    %7208 = vmatprep.subr.mxu0 %v1283
    %7209 = vmatpush1.msra.mxu0 %v1282
    %7210 = vmatprep.subr.mxu0 %v1275
    %7211 = vmatpush1.msra.mxu0 %v1274
    %7212 = vmatprep.subr.mxu0 %v1267
    %7213 = vmatpush1.msra.mxu0 %v1266
    %7214 = vmatprep.subr.mxu0 %v1259
    %7215 = vmatpush1.msra.mxu0 %v1258
    %7216 = vmatprep.subr.mxu0 %v1251
    %7217 = vmatpush1.msra.mxu0 %v1250
    %7218 = vmatprep.subr.mxu0 %v1243
    %7219 = vmatpush1.msra.mxu0 %v1242
    %7220 = vmatprep.subr.mxu0 %v1235
    %7221 = vmatpush1.msra.mxu0 %v1234
    %7222 = vmatprep.subr.mxu0 %v1227
    %7223 = vmatpush1.msra.mxu0 %v1226
    %7224 = vmatprep.subr.mxu0 %v1219
    %7225 = vmatpush1.msra.mxu0 %v1218
    %7226 = vmatprep.subr.mxu0 %v1467
    %7227 = vmatpush2.msra.mxu0 %v1466
    %7228 = vmatprep.subr.mxu0 %v1459
    %7229 = vmatpush2.msra.mxu0 %v1458
    %7230 = vmatprep.subr.mxu0 %v1451
    %7231 = vmatpush2.msra.mxu0 %v1450
    %7232 = vmatprep.subr.mxu0 %v1443
    %7233 = vmatpush2.msra.mxu0 %v1442
    %7234 = vmatprep.subr.mxu0 %v1435
    %7235 = vmatpush2.msra.mxu0 %v1434
    %7236 = vmatprep.subr.mxu0 %v1427
    %7237 = vmatpush2.msra.mxu0 %v1426
    %7238 = vmatprep.subr.mxu0 %v1419
    %7239 = vmatpush2.msra.mxu0 %v1418
    %7240 = vmatprep.subr.mxu0 %v1411
    %7241 = vmatpush2.msra.mxu0 %v1410
    %7242 = vmatprep.subr.mxu0 %v1403
    %7243 = vmatpush2.msra.mxu0 %v1402
    %7244 = vmatprep.subr.mxu0 %v1395
    %7245 = vmatpush2.msra.mxu0 %v1394
    %7246 = vmatprep.subr.mxu0 %v1387
    %7247 = vmatpush2.msra.mxu0 %v1386
    %7248 = vmatprep.subr.mxu0 %v1379
    %7249 = vmatpush2.msra.mxu0 %v1378
    %7250 = vmatprep.subr.mxu0 %v1371
    %7251 = vmatpush2.msra.mxu0 %v1370
    %7252 = vmatprep.subr.mxu0 %v1363
    %7253 = vmatpush2.msra.mxu0 %v1362
    %7254 = vmatprep.subr.mxu0 %v1355
    %7255 = vmatpush2.msra.mxu0 %v1354
    %7256 = vmatprep.subr.mxu0 %v1347
    %7257 = vmatpush2.msra.mxu0 %v1346
    %7258 = vmatprep.mubr.f32.mxu0 %v7187
    %7259 = vmatmul.mubr.f32.gmra.mxu0 %v7186
    %v7260 = vpop.f32.mrf.mxu0
    %v7261 = vadd.f32 %v2120, %v7260
    %v7262 = vpop.f32.mrf.mxu0
    %v7263 = vadd.f32 %v2124, %v7262
    %7264 = vdwg.mxu0
    %7265 = vmatprep.subr.mxu0 %v1595
    %7266 = vmatpush1.msra.mxu0 %v1594
    %7267 = vmatprep.subr.mxu0 %v1587
    %7268 = vmatpush1.msra.mxu0 %v1586
    %7269 = vmatprep.subr.mxu0 %v1579
    %7270 = vmatpush1.msra.mxu0 %v1578
    %7271 = vmatprep.subr.mxu0 %v1571
    %7272 = vmatpush1.msra.mxu0 %v1570
    %7273 = vmatprep.subr.mxu0 %v1563
    %7274 = vmatpush1.msra.mxu0 %v1562
    %7275 = vmatprep.subr.mxu0 %v1555
    %7276 = vmatpush1.msra.mxu0 %v1554
    %7277 = vmatprep.subr.mxu0 %v1547
    %7278 = vmatpush1.msra.mxu0 %v1546
    %7279 = vmatprep.subr.mxu0 %v1539
    %7280 = vmatpush1.msra.mxu0 %v1538
    %7281 = vmatprep.subr.mxu0 %v1531
    %7282 = vmatpush1.msra.mxu0 %v1530
    %7283 = vmatprep.subr.mxu0 %v1523
    %7284 = vmatpush1.msra.mxu0 %v1522
    %7285 = vmatprep.subr.mxu0 %v1515
    %7286 = vmatpush1.msra.mxu0 %v1514
    %7287 = vmatprep.subr.mxu0 %v1507
    %7288 = vmatpush1.msra.mxu0 %v1506
    %7289 = vmatprep.subr.mxu0 %v1499
    %7290 = vmatpush1.msra.mxu0 %v1498
    %7291 = vmatprep.subr.mxu0 %v1491
    %7292 = vmatpush1.msra.mxu0 %v1490
    %7293 = vmatprep.subr.mxu0 %v1483
    %7294 = vmatpush1.msra.mxu0 %v1482
    %7295 = vmatprep.subr.mxu0 %v1475
    %7296 = vmatpush1.msra.mxu0 %v1474
    %7297 = vmatprep.subr.mxu0 %v1723
    %7298 = vmatpush2.msra.mxu0 %v1722
    %7299 = vmatprep.subr.mxu0 %v1715
    %7300 = vmatpush2.msra.mxu0 %v1714
    %7301 = vmatprep.subr.mxu0 %v1707
    %7302 = vmatpush2.msra.mxu0 %v1706
    %7303 = vmatprep.subr.mxu0 %v1699
    %7304 = vmatpush2.msra.mxu0 %v1698
    %7305 = vmatprep.subr.mxu0 %v1691
    %7306 = vmatpush2.msra.mxu0 %v1690
    %7307 = vmatprep.subr.mxu0 %v1683
    %7308 = vmatpush2.msra.mxu0 %v1682
    %7309 = vmatprep.subr.mxu0 %v1675
    %7310 = vmatpush2.msra.mxu0 %v1674
    %7311 = vmatprep.subr.mxu0 %v1667
    %7312 = vmatpush2.msra.mxu0 %v1666
    %7313 = vmatprep.subr.mxu0 %v1659
    %7314 = vmatpush2.msra.mxu0 %v1658
    %7315 = vmatprep.subr.mxu0 %v1651
    %7316 = vmatpush2.msra.mxu0 %v1650
    %7317 = vmatprep.subr.mxu0 %v1643
    %7318 = vmatpush2.msra.mxu0 %v1642
    %7319 = vmatprep.subr.mxu0 %v1635
    %7320 = vmatpush2.msra.mxu0 %v1634
    %7321 = vmatprep.subr.mxu0 %v1627
    %7322 = vmatpush2.msra.mxu0 %v1626
    %7323 = vmatprep.subr.mxu0 %v1619
    %7324 = vmatpush2.msra.mxu0 %v1618
    %7325 = vmatprep.subr.mxu0 %v1611
    %7326 = vmatpush2.msra.mxu0 %v1610
    %7327 = vmatprep.subr.mxu0 %v1603
    %7328 = vmatpush2.msra.mxu0 %v1602
    %7329 = vmatprep.mubr.f32.mxu0 %v7189
    %7330 = vmatmul.mubr.f32.gmra.mxu0 %v7188
    %v7331 = vpop.f32.mrf.mxu0
    %v7332 = vadd.f32 %v7261, %v7331
    %v7333 = vpop.f32.mrf.mxu0
    %v7334 = vadd.f32 %v7263, %v7333
    %7335 = vdwg.mxu0
    %7336 = vmatprep.subr.mxu0 %v1341
    %7337 = vmatpush1.msra.mxu0 %v1340
    %7338 = vmatprep.subr.mxu0 %v1333
    %7339 = vmatpush1.msra.mxu0 %v1332
    %7340 = vmatprep.subr.mxu0 %v1325
    %7341 = vmatpush1.msra.mxu0 %v1324
    %7342 = vmatprep.subr.mxu0 %v1317
    %7343 = vmatpush1.msra.mxu0 %v1316
    %7344 = vmatprep.subr.mxu0 %v1309
    %7345 = vmatpush1.msra.mxu0 %v1308
    %7346 = vmatprep.subr.mxu0 %v1301
    %7347 = vmatpush1.msra.mxu0 %v1300
    %7348 = vmatprep.subr.mxu0 %v1293
    %7349 = vmatpush1.msra.mxu0 %v1292
    %7350 = vmatprep.subr.mxu0 %v1285
    %7351 = vmatpush1.msra.mxu0 %v1284
    %7352 = vmatprep.subr.mxu0 %v1277
    %7353 = vmatpush1.msra.mxu0 %v1276
    %7354 = vmatprep.subr.mxu0 %v1269
    %7355 = vmatpush1.msra.mxu0 %v1268
    %7356 = vmatprep.subr.mxu0 %v1261
    %7357 = vmatpush1.msra.mxu0 %v1260
    %7358 = vmatprep.subr.mxu0 %v1253
    %7359 = vmatpush1.msra.mxu0 %v1252
    %7360 = vmatprep.subr.mxu0 %v1245
    %7361 = vmatpush1.msra.mxu0 %v1244
    %7362 = vmatprep.subr.mxu0 %v1237
    %7363 = vmatpush1.msra.mxu0 %v1236
    %7364 = vmatprep.subr.mxu0 %v1229
    %7365 = vmatpush1.msra.mxu0 %v1228
    %7366 = vmatprep.subr.mxu0 %v1221
    %7367 = vmatpush1.msra.mxu0 %v1220
    %7368 = vmatprep.subr.mxu0 %v1469
    %7369 = vmatpush2.msra.mxu0 %v1468
    %7370 = vmatprep.subr.mxu0 %v1461
    %7371 = vmatpush2.msra.mxu0 %v1460
    %7372 = vmatprep.subr.mxu0 %v1453
    %7373 = vmatpush2.msra.mxu0 %v1452
    %7374 = vmatprep.subr.mxu0 %v1445
    %7375 = vmatpush2.msra.mxu0 %v1444
    %7376 = vmatprep.subr.mxu0 %v1437
    %7377 = vmatpush2.msra.mxu0 %v1436
    %7378 = vmatprep.subr.mxu0 %v1429
    %7379 = vmatpush2.msra.mxu0 %v1428
    %7380 = vmatprep.subr.mxu0 %v1421
    %7381 = vmatpush2.msra.mxu0 %v1420
    %7382 = vmatprep.subr.mxu0 %v1413
    %7383 = vmatpush2.msra.mxu0 %v1412
    %7384 = vmatprep.subr.mxu0 %v1405
    %7385 = vmatpush2.msra.mxu0 %v1404
    %7386 = vmatprep.subr.mxu0 %v1397
    %7387 = vmatpush2.msra.mxu0 %v1396
    %7388 = vmatprep.subr.mxu0 %v1389
    %7389 = vmatpush2.msra.mxu0 %v1388
    %7390 = vmatprep.subr.mxu0 %v1381
    %7391 = vmatpush2.msra.mxu0 %v1380
    %7392 = vmatprep.subr.mxu0 %v1373
    %7393 = vmatpush2.msra.mxu0 %v1372
    %7394 = vmatprep.subr.mxu0 %v1365
    %7395 = vmatpush2.msra.mxu0 %v1364
    %7396 = vmatprep.subr.mxu0 %v1357
    %7397 = vmatpush2.msra.mxu0 %v1356
    %7398 = vmatprep.subr.mxu0 %v1349
    %7399 = vmatpush2.msra.mxu0 %v1348
    %7400 = vmatprep.mubr.f32.mxu0 %v7187
    %7401 = vmatmul.mubr.f32.gmra.mxu0 %v7186
    %v7402 = vpop.f32.mrf.mxu0
    %v7403 = vadd.f32 %v2128, %v7402
    %v7404 = vpop.f32.mrf.mxu0
    %v7405 = vadd.f32 %v2132, %v7404
    %7406 = vdwg.mxu0
    %7407 = vmatprep.subr.mxu0 %v1597
    %7408 = vmatpush1.msra.mxu0 %v1596
    %7409 = vmatprep.subr.mxu0 %v1589
    %7410 = vmatpush1.msra.mxu0 %v1588
    %7411 = vmatprep.subr.mxu0 %v1581
    %7412 = vmatpush1.msra.mxu0 %v1580
    %7413 = vmatprep.subr.mxu0 %v1573
    %7414 = vmatpush1.msra.mxu0 %v1572
    %7415 = vmatprep.subr.mxu0 %v1565
    %7416 = vmatpush1.msra.mxu0 %v1564
    %7417 = vmatprep.subr.mxu0 %v1557
    %7418 = vmatpush1.msra.mxu0 %v1556
    %7419 = vmatprep.subr.mxu0 %v1549
    %7420 = vmatpush1.msra.mxu0 %v1548
    %7421 = vmatprep.subr.mxu0 %v1541
    %7422 = vmatpush1.msra.mxu0 %v1540
    %7423 = vmatprep.subr.mxu0 %v1533
    %7424 = vmatpush1.msra.mxu0 %v1532
    %7425 = vmatprep.subr.mxu0 %v1525
    %7426 = vmatpush1.msra.mxu0 %v1524
    %7427 = vmatprep.subr.mxu0 %v1517
    %7428 = vmatpush1.msra.mxu0 %v1516
    %7429 = vmatprep.subr.mxu0 %v1509
    %7430 = vmatpush1.msra.mxu0 %v1508
    %7431 = vmatprep.subr.mxu0 %v1501
    %7432 = vmatpush1.msra.mxu0 %v1500
    %7433 = vmatprep.subr.mxu0 %v1493
    %7434 = vmatpush1.msra.mxu0 %v1492
    %7435 = vmatprep.subr.mxu0 %v1485
    %7436 = vmatpush1.msra.mxu0 %v1484
    %7437 = vmatprep.subr.mxu0 %v1477
    %7438 = vmatpush1.msra.mxu0 %v1476
    %7439 = vmatprep.subr.mxu0 %v1725
    %7440 = vmatpush2.msra.mxu0 %v1724
    %7441 = vmatprep.subr.mxu0 %v1717
    %7442 = vmatpush2.msra.mxu0 %v1716
    %7443 = vmatprep.subr.mxu0 %v1709
    %7444 = vmatpush2.msra.mxu0 %v1708
    %7445 = vmatprep.subr.mxu0 %v1701
    %7446 = vmatpush2.msra.mxu0 %v1700
    %7447 = vmatprep.subr.mxu0 %v1693
    %7448 = vmatpush2.msra.mxu0 %v1692
    %7449 = vmatprep.subr.mxu0 %v1685
    %7450 = vmatpush2.msra.mxu0 %v1684
    %7451 = vmatprep.subr.mxu0 %v1677
    %7452 = vmatpush2.msra.mxu0 %v1676
    %7453 = vmatprep.subr.mxu0 %v1669
    %7454 = vmatpush2.msra.mxu0 %v1668
    %7455 = vmatprep.subr.mxu0 %v1661
    %7456 = vmatpush2.msra.mxu0 %v1660
    %7457 = vmatprep.subr.mxu0 %v1653
    %7458 = vmatpush2.msra.mxu0 %v1652
    %7459 = vmatprep.subr.mxu0 %v1645
    %7460 = vmatpush2.msra.mxu0 %v1644
    %7461 = vmatprep.subr.mxu0 %v1637
    %7462 = vmatpush2.msra.mxu0 %v1636
    %7463 = vmatprep.subr.mxu0 %v1629
    %7464 = vmatpush2.msra.mxu0 %v1628
    %7465 = vmatprep.subr.mxu0 %v1621
    %7466 = vmatpush2.msra.mxu0 %v1620
    %7467 = vmatprep.subr.mxu0 %v1613
    %7468 = vmatpush2.msra.mxu0 %v1612
    %7469 = vmatprep.subr.mxu0 %v1605
    %7470 = vmatpush2.msra.mxu0 %v1604
    %7471 = vmatprep.mubr.f32.mxu0 %v7189
    %7472 = vmatmul.mubr.f32.gmra.mxu0 %v7188
    %v7473 = vpop.f32.mrf.mxu0
    %v7474 = vadd.f32 %v7403, %v7473
    %v7475 = vpop.f32.mrf.mxu0
    %v7476 = vadd.f32 %v7405, %v7475
    %7477 = vdwg.mxu0
    %7478 = vmatprep.subr.mxu0 %v1343
    %7479 = vmatpush1.msra.mxu0 %v1342
    %7480 = vmatprep.subr.mxu0 %v1335
    %7481 = vmatpush1.msra.mxu0 %v1334
    %7482 = vmatprep.subr.mxu0 %v1327
    %7483 = vmatpush1.msra.mxu0 %v1326
    %7484 = vmatprep.subr.mxu0 %v1319
    %7485 = vmatpush1.msra.mxu0 %v1318
    %7486 = vmatprep.subr.mxu0 %v1311
    %7487 = vmatpush1.msra.mxu0 %v1310
    %7488 = vmatprep.subr.mxu0 %v1303
    %7489 = vmatpush1.msra.mxu0 %v1302
    %7490 = vmatprep.subr.mxu0 %v1295
    %7491 = vmatpush1.msra.mxu0 %v1294
    %7492 = vmatprep.subr.mxu0 %v1287
    %7493 = vmatpush1.msra.mxu0 %v1286
    %7494 = vmatprep.subr.mxu0 %v1279
    %7495 = vmatpush1.msra.mxu0 %v1278
    %7496 = vmatprep.subr.mxu0 %v1271
    %7497 = vmatpush1.msra.mxu0 %v1270
    %7498 = vmatprep.subr.mxu0 %v1263
    %7499 = vmatpush1.msra.mxu0 %v1262
    %7500 = vmatprep.subr.mxu0 %v1255
    %7501 = vmatpush1.msra.mxu0 %v1254
    %7502 = vmatprep.subr.mxu0 %v1247
    %7503 = vmatpush1.msra.mxu0 %v1246
    %7504 = vmatprep.subr.mxu0 %v1239
    %7505 = vmatpush1.msra.mxu0 %v1238
    %7506 = vmatprep.subr.mxu0 %v1231
    %7507 = vmatpush1.msra.mxu0 %v1230
    %7508 = vmatprep.subr.mxu0 %v1223
    %7509 = vmatpush1.msra.mxu0 %v1222
    %7510 = vmatprep.subr.mxu0 %v1471
    %7511 = vmatpush2.msra.mxu0 %v1470
    %7512 = vmatprep.subr.mxu0 %v1463
    %7513 = vmatpush2.msra.mxu0 %v1462
    %7514 = vmatprep.subr.mxu0 %v1455
    %7515 = vmatpush2.msra.mxu0 %v1454
    %7516 = vmatprep.subr.mxu0 %v1447
    %7517 = vmatpush2.msra.mxu0 %v1446
    %7518 = vmatprep.subr.mxu0 %v1439
    %7519 = vmatpush2.msra.mxu0 %v1438
    %7520 = vmatprep.subr.mxu0 %v1431
    %7521 = vmatpush2.msra.mxu0 %v1430
    %7522 = vmatprep.subr.mxu0 %v1423
    %7523 = vmatpush2.msra.mxu0 %v1422
    %7524 = vmatprep.subr.mxu0 %v1415
    %7525 = vmatpush2.msra.mxu0 %v1414
    %7526 = vmatprep.subr.mxu0 %v1407
    %7527 = vmatpush2.msra.mxu0 %v1406
    %7528 = vmatprep.subr.mxu0 %v1399
    %7529 = vmatpush2.msra.mxu0 %v1398
    %7530 = vmatprep.subr.mxu0 %v1391
    %7531 = vmatpush2.msra.mxu0 %v1390
    %7532 = vmatprep.subr.mxu0 %v1383
    %7533 = vmatpush2.msra.mxu0 %v1382
    %7534 = vmatprep.subr.mxu0 %v1375
    %7535 = vmatpush2.msra.mxu0 %v1374
    %7536 = vmatprep.subr.mxu0 %v1367
    %7537 = vmatpush2.msra.mxu0 %v1366
    %7538 = vmatprep.subr.mxu0 %v1359
    %7539 = vmatpush2.msra.mxu0 %v1358
    %7540 = vmatprep.subr.mxu0 %v1351
    %7541 = vmatpush2.msra.mxu0 %v1350
    %7542 = vmatprep.mubr.f32.mxu0 %v7187
    %7543 = vmatmul.mubr.f32.gmra.mxu0 %v7186
    %v7544 = vpop.f32.mrf.mxu0
    %v7545 = vadd.f32 %v2136, %v7544
    %v7546 = vpop.f32.mrf.mxu0
    %v7547 = vadd.f32 %v2140, %v7546
    %7548 = vdwg.mxu0
    %7549 = vmatprep.subr.mxu0 %v1599
    %7550 = vmatpush1.msra.mxu0 %v1598
    %7551 = vmatprep.subr.mxu0 %v1591
    %7552 = vmatpush1.msra.mxu0 %v1590
    %7553 = vmatprep.subr.mxu0 %v1583
    %7554 = vmatpush1.msra.mxu0 %v1582
    %7555 = vmatprep.subr.mxu0 %v1575
    %7556 = vmatpush1.msra.mxu0 %v1574
    %7557 = vmatprep.subr.mxu0 %v1567
    %7558 = vmatpush1.msra.mxu0 %v1566
    %7559 = vmatprep.subr.mxu0 %v1559
    %7560 = vmatpush1.msra.mxu0 %v1558
    %7561 = vmatprep.subr.mxu0 %v1551
    %7562 = vmatpush1.msra.mxu0 %v1550
    %7563 = vmatprep.subr.mxu0 %v1543
    %7564 = vmatpush1.msra.mxu0 %v1542
    %7565 = vmatprep.subr.mxu0 %v1535
    %7566 = vmatpush1.msra.mxu0 %v1534
    %7567 = vmatprep.subr.mxu0 %v1527
    %7568 = vmatpush1.msra.mxu0 %v1526
    %7569 = vmatprep.subr.mxu0 %v1519
    %7570 = vmatpush1.msra.mxu0 %v1518
    %7571 = vmatprep.subr.mxu0 %v1511
    %7572 = vmatpush1.msra.mxu0 %v1510
    %7573 = vmatprep.subr.mxu0 %v1503
    %7574 = vmatpush1.msra.mxu0 %v1502
    %7575 = vmatprep.subr.mxu0 %v1495
    %7576 = vmatpush1.msra.mxu0 %v1494
    %7577 = vmatprep.subr.mxu0 %v1487
    %7578 = vmatpush1.msra.mxu0 %v1486
    %7579 = vmatprep.subr.mxu0 %v1479
    %7580 = vmatpush1.msra.mxu0 %v1478
    %7581 = vmatprep.subr.mxu0 %v1727
    %7582 = vmatpush2.msra.mxu0 %v1726
    %7583 = vmatprep.subr.mxu0 %v1719
    %7584 = vmatpush2.msra.mxu0 %v1718
    %7585 = vmatprep.subr.mxu0 %v1711
    %7586 = vmatpush2.msra.mxu0 %v1710
    %7587 = vmatprep.subr.mxu0 %v1703
    %7588 = vmatpush2.msra.mxu0 %v1702
    %7589 = vmatprep.subr.mxu0 %v1695
    %7590 = vmatpush2.msra.mxu0 %v1694
    %7591 = vmatprep.subr.mxu0 %v1687
    %7592 = vmatpush2.msra.mxu0 %v1686
    %7593 = vmatprep.subr.mxu0 %v1679
    %7594 = vmatpush2.msra.mxu0 %v1678
    %7595 = vmatprep.subr.mxu0 %v1671
    %7596 = vmatpush2.msra.mxu0 %v1670
    %7597 = vmatprep.subr.mxu0 %v1663
    %7598 = vmatpush2.msra.mxu0 %v1662
    %7599 = vmatprep.subr.mxu0 %v1655
    %7600 = vmatpush2.msra.mxu0 %v1654
    %7601 = vmatprep.subr.mxu0 %v1647
    %7602 = vmatpush2.msra.mxu0 %v1646
    %7603 = vmatprep.subr.mxu0 %v1639
    %7604 = vmatpush2.msra.mxu0 %v1638
    %7605 = vmatprep.subr.mxu0 %v1631
    %7606 = vmatpush2.msra.mxu0 %v1630
    %7607 = vmatprep.subr.mxu0 %v1623
    %7608 = vmatpush2.msra.mxu0 %v1622
    %7609 = vmatprep.subr.mxu0 %v1615
    %7610 = vmatpush2.msra.mxu0 %v1614
    %7611 = vmatprep.subr.mxu0 %v1607
    %7612 = vmatpush2.msra.mxu0 %v1606
    %7613 = vmatprep.mubr.f32.mxu0 %v7189
    %7614 = vmatmul.mubr.f32.gmra.mxu0 %v7188
    %v7615 = vpop.f32.mrf.mxu0
    %v7616 = vadd.f32 %v7545, %v7615
    %v7617 = vpop.f32.mrf.mxu0
    %v7618 = vadd.f32 %v7547, %v7617
    %7619 = vdwg.mxu0
    %7620 = vmatprep.subr.mxu0 %v1345
    %7621 = vmatpush1.msra.mxu0 %v1344
    %7622 = vmatprep.subr.mxu0 %v1337
    %7623 = vmatpush1.msra.mxu0 %v1336
    %7624 = vmatprep.subr.mxu0 %v1329
    %7625 = vmatpush1.msra.mxu0 %v1328
    %7626 = vmatprep.subr.mxu0 %v1321
    %7627 = vmatpush1.msra.mxu0 %v1320
    %7628 = vmatprep.subr.mxu0 %v1313
    %7629 = vmatpush1.msra.mxu0 %v1312
    %7630 = vmatprep.subr.mxu0 %v1305
    %7631 = vmatpush1.msra.mxu0 %v1304
    %7632 = vmatprep.subr.mxu0 %v1297
    %7633 = vmatpush1.msra.mxu0 %v1296
    %7634 = vmatprep.subr.mxu0 %v1289
    %7635 = vmatpush1.msra.mxu0 %v1288
    %7636 = vmatprep.subr.mxu0 %v1281
    %7637 = vmatpush1.msra.mxu0 %v1280
    %7638 = vmatprep.subr.mxu0 %v1273
    %7639 = vmatpush1.msra.mxu0 %v1272
    %7640 = vmatprep.subr.mxu0 %v1265
    %7641 = vmatpush1.msra.mxu0 %v1264
    %7642 = vmatprep.subr.mxu0 %v1257
    %7643 = vmatpush1.msra.mxu0 %v1256
    %7644 = vmatprep.subr.mxu0 %v1249
    %7645 = vmatpush1.msra.mxu0 %v1248
    %7646 = vmatprep.subr.mxu0 %v1241
    %7647 = vmatpush1.msra.mxu0 %v1240
    %7648 = vmatprep.subr.mxu0 %v1233
    %7649 = vmatpush1.msra.mxu0 %v1232
    %7650 = vmatprep.subr.mxu0 %v1225
    %7651 = vmatpush1.msra.mxu0 %v1224
    %7652 = vmatprep.subr.mxu0 %v1473
    %7653 = vmatpush2.msra.mxu0 %v1472
    %7654 = vmatprep.subr.mxu0 %v1465
    %7655 = vmatpush2.msra.mxu0 %v1464
    %7656 = vmatprep.subr.mxu0 %v1457
    %7657 = vmatpush2.msra.mxu0 %v1456
    %7658 = vmatprep.subr.mxu0 %v1449
    %7659 = vmatpush2.msra.mxu0 %v1448
    %7660 = vmatprep.subr.mxu0 %v1441
    %7661 = vmatpush2.msra.mxu0 %v1440
    %7662 = vmatprep.subr.mxu0 %v1433
    %7663 = vmatpush2.msra.mxu0 %v1432
    %7664 = vmatprep.subr.mxu0 %v1425
    %7665 = vmatpush2.msra.mxu0 %v1424
    %7666 = vmatprep.subr.mxu0 %v1417
    %7667 = vmatpush2.msra.mxu0 %v1416
    %7668 = vmatprep.subr.mxu0 %v1409
    %7669 = vmatpush2.msra.mxu0 %v1408
    %7670 = vmatprep.subr.mxu0 %v1401
    %7671 = vmatpush2.msra.mxu0 %v1400
    %7672 = vmatprep.subr.mxu0 %v1393
    %7673 = vmatpush2.msra.mxu0 %v1392
    %7674 = vmatprep.subr.mxu0 %v1385
    %7675 = vmatpush2.msra.mxu0 %v1384
    %7676 = vmatprep.subr.mxu0 %v1377
    %7677 = vmatpush2.msra.mxu0 %v1376
    %7678 = vmatprep.subr.mxu0 %v1369
    %7679 = vmatpush2.msra.mxu0 %v1368
    %7680 = vmatprep.subr.mxu0 %v1361
    %7681 = vmatpush2.msra.mxu0 %v1360
    %7682 = vmatprep.subr.mxu0 %v1353
    %7683 = vmatpush2.msra.mxu0 %v1352
    %7684 = vmatprep.mubr.f32.mxu0 %v7187
    %7685 = vmatmul.mubr.f32.gmra.mxu0 %v7186
    %v7686 = vpop.f32.mrf.mxu0
    %v7687 = vadd.f32 %v2144, %v7686
    %v7688 = vpop.f32.mrf.mxu0
    %v7689 = vadd.f32 %v2148, %v7688
    %7690 = vdwg.mxu0
    %7691 = vmatprep.subr.mxu0 %v1601
    %7692 = vmatpush1.msra.mxu0 %v1600
    %7693 = vmatprep.subr.mxu0 %v1593
    %7694 = vmatpush1.msra.mxu0 %v1592
    %7695 = vmatprep.subr.mxu0 %v1585
    %7696 = vmatpush1.msra.mxu0 %v1584
    %7697 = vmatprep.subr.mxu0 %v1577
    %7698 = vmatpush1.msra.mxu0 %v1576
    %7699 = vmatprep.subr.mxu0 %v1569
    %7700 = vmatpush1.msra.mxu0 %v1568
    %7701 = vmatprep.subr.mxu0 %v1561
    %7702 = vmatpush1.msra.mxu0 %v1560
    %7703 = vmatprep.subr.mxu0 %v1553
    %7704 = vmatpush1.msra.mxu0 %v1552
    %7705 = vmatprep.subr.mxu0 %v1545
    %7706 = vmatpush1.msra.mxu0 %v1544
    %7707 = vmatprep.subr.mxu0 %v1537
    %7708 = vmatpush1.msra.mxu0 %v1536
    %7709 = vmatprep.subr.mxu0 %v1529
    %7710 = vmatpush1.msra.mxu0 %v1528
    %7711 = vmatprep.subr.mxu0 %v1521
    %7712 = vmatpush1.msra.mxu0 %v1520
    %7713 = vmatprep.subr.mxu0 %v1513
    %7714 = vmatpush1.msra.mxu0 %v1512
    %7715 = vmatprep.subr.mxu0 %v1505
    %7716 = vmatpush1.msra.mxu0 %v1504
    %7717 = vmatprep.subr.mxu0 %v1497
    %7718 = vmatpush1.msra.mxu0 %v1496
    %7719 = vmatprep.subr.mxu0 %v1489
    %7720 = vmatpush1.msra.mxu0 %v1488
    %7721 = vmatprep.subr.mxu0 %v1481
    %7722 = vmatpush1.msra.mxu0 %v1480
    %7723 = vmatprep.subr.mxu0 %v1729
    %7724 = vmatpush2.msra.mxu0 %v1728
    %7725 = vmatprep.subr.mxu0 %v1721
    %7726 = vmatpush2.msra.mxu0 %v1720
    %7727 = vmatprep.subr.mxu0 %v1713
    %7728 = vmatpush2.msra.mxu0 %v1712
    %7729 = vmatprep.subr.mxu0 %v1705
    %7730 = vmatpush2.msra.mxu0 %v1704
    %7731 = vmatprep.subr.mxu0 %v1697
    %7732 = vmatpush2.msra.mxu0 %v1696
    %7733 = vmatprep.subr.mxu0 %v1689
    %7734 = vmatpush2.msra.mxu0 %v1688
    %7735 = vmatprep.subr.mxu0 %v1681
    %7736 = vmatpush2.msra.mxu0 %v1680
    %7737 = vmatprep.subr.mxu0 %v1673
    %7738 = vmatpush2.msra.mxu0 %v1672
    %7739 = vmatprep.subr.mxu0 %v1665
    %7740 = vmatpush2.msra.mxu0 %v1664
    %7741 = vmatprep.subr.mxu0 %v1657
    %7742 = vmatpush2.msra.mxu0 %v1656
    %7743 = vmatprep.subr.mxu0 %v1649
    %7744 = vmatpush2.msra.mxu0 %v1648
    %7745 = vmatprep.subr.mxu0 %v1641
    %7746 = vmatpush2.msra.mxu0 %v1640
    %7747 = vmatprep.subr.mxu0 %v1633
    %7748 = vmatpush2.msra.mxu0 %v1632
    %7749 = vmatprep.subr.mxu0 %v1625
    %7750 = vmatpush2.msra.mxu0 %v1624
    %7751 = vmatprep.subr.mxu0 %v1617
    %7752 = vmatpush2.msra.mxu0 %v1616
    %7753 = vmatprep.subr.mxu0 %v1609
    %7754 = vmatpush2.msra.mxu0 %v1608
    %7755 = vmatprep.mubr.f32.mxu0 %v7189
    %7756 = vmatmul.mubr.f32.gmra.mxu0 %v7188
    %v7757 = vpop.f32.mrf.mxu0
    %v7758 = vadd.f32 %v7687, %v7757
    %v7759 = vpop.f32.mrf.mxu0
    %v7760 = vadd.f32 %v7689, %v7759
    %7761 = vdwg.mxu0
    %v7762 = vxor.u32 %v7332, 2147483648
    %v7763 = vxor.u32 %v7334, 2147483648
    %v7764 = vmul.f32 %v7762, 1.442695
    %v7765 = vpow.pop %v7764
    %v7766 = vmul.f32 %v7763, 1.442695
    %v7767 = vpow.pop %v7766
    %v7768 = vadd.f32 %v7765, 1.0
    %v7769 = vadd.f32 %v7767, 1.0
    %v7770 = vrcp.pop %v7768
    %v7771 = vmul.f32 1.0, %v7770
    %v7772 = vrcp.pop %v7769
    %v7773 = vmul.f32 1.0, %v7772
    %v7774 = vxor.u32 %v7474, 2147483648
    %v7775 = vxor.u32 %v7476, 2147483648
    %v7776 = vmul.f32 %v7774, 1.442695
    %v7777 = vpow.pop %v7776
    %v7778 = vmul.f32 %v7775, 1.442695
    %v7779 = vpow.pop %v7778
    %v7780 = vadd.f32 %v7777, 1.0
    %v7781 = vadd.f32 %v7779, 1.0
    %v7782 = vrcp.pop %v7780
    %v7783 = vmul.f32 1.0, %v7782
    %v7784 = vrcp.pop %v7781
    %v7785 = vmul.f32 1.0, %v7784
    %v7786 = vtanh.pop %v7616
    %v7787 = vtanh.pop %v7618
    %v7788 = vxor.u32 %v7758, 2147483648
    %v7789 = vxor.u32 %v7760, 2147483648
    %v7790 = vmul.f32 %v7788, 1.442695
    %v7791 = vpow.pop %v7790
    %v7792 = vmul.f32 %v7789, 1.442695
    %v7793 = vpow.pop %v7792
    %v7794 = vadd.f32 %v7791, 1.0
    %v7795 = vadd.f32 %v7793, 1.0
    %v7796 = vrcp.pop %v7794
    %v7797 = vmul.f32 1.0, %v7796
    %v7798 = vrcp.pop %v7795
    %v7799 = vmul.f32 1.0, %v7798
    %v7800 = vmul.f32 %v7783, %v6794
    %v7801 = vmul.f32 %v7785, %v6795
    %v7802 = vmul.f32 %v7771, %v7786
    %v7803 = vmul.f32 %v7773, %v7787
    %v7804 = vadd.f32 %v7800, %v7802
    %v7805 = vadd.f32 %v7801, %v7803
    %v7806 = vtanh.pop %v7804
    %v7807 = vtanh.pop %v7805
    %v7808 = vmul.f32 %v7797, %v7806
    %v7809 = vmul.f32 %v7799, %v7807
    %v7812 = vrot.slane %v7808, 6
    %v7813 = vrot.slane %v7809, 6
    %7816 = vst [vmem:[#allocation7 + $0x10] sm:$0xc] %v7812
    %7817 = vst [vmem:[#allocation7 + $0x18] sm:$0xc] %v7813
    %v7818 = vld [vmem:[#allocation6 + $0x40] sm:$0x30]
    %v7819 = vld [vmem:[#allocation6 + $0x48] sm:$0x30]
    %v7820 = vld [vmem:[#allocation6 + $0x50] sm:$0x30]
    %v7821 = vld [vmem:[#allocation6 + $0x58] sm:$0x30]
    %v7822 = vld [vmem:[#allocation6 + $0x60] sm:$0x30]
    %v7823 = vld [vmem:[#allocation6 + $0x68] sm:$0x30]
    %v7824 = vld [vmem:[#allocation6 + $0x70] sm:$0x30]
    %v7825 = vld [vmem:[#allocation6 + $0x78] sm:$0x30]
    %7826 = vmatprep.subr.mxu0 %v1083
    %7827 = vmatpush1.msra.mxu0 %v1082
    %7828 = vmatprep.subr.mxu0 %v1075
    %7829 = vmatpush1.msra.mxu0 %v1074
    %7830 = vmatprep.subr.mxu0 %v1067
    %7831 = vmatpush1.msra.mxu0 %v1066
    %7832 = vmatprep.subr.mxu0 %v1059
    %7833 = vmatpush1.msra.mxu0 %v1058
    %7834 = vmatprep.subr.mxu0 %v1051
    %7835 = vmatpush1.msra.mxu0 %v1050
    %7836 = vmatprep.subr.mxu0 %v1043
    %7837 = vmatpush1.msra.mxu0 %v1042
    %7838 = vmatprep.subr.mxu0 %v1035
    %7839 = vmatpush1.msra.mxu0 %v1034
    %7840 = vmatprep.subr.mxu0 %v1027
    %7841 = vmatpush1.msra.mxu0 %v1026
    %7842 = vmatprep.subr.mxu0 %v1019
    %7843 = vmatpush1.msra.mxu0 %v1018
    %7844 = vmatprep.subr.mxu0 %v1011
    %7845 = vmatpush1.msra.mxu0 %v1010
    %7846 = vmatprep.subr.mxu0 %v1003
    %7847 = vmatpush1.msra.mxu0 %v1002
    %7848 = vmatprep.subr.mxu0 %v995
    %7849 = vmatpush1.msra.mxu0 %v994
    %7850 = vmatprep.subr.mxu0 %v987
    %7851 = vmatpush1.msra.mxu0 %v986
    %7852 = vmatprep.subr.mxu0 %v979
    %7853 = vmatpush1.msra.mxu0 %v978
    %7854 = vmatprep.subr.mxu0 %v971
    %7855 = vmatpush1.msra.mxu0 %v970
    %7856 = vmatprep.subr.mxu0 %v963
    %7857 = vmatpush1.msra.mxu0 %v962
    %7858 = vmatprep.subr.mxu0 %v1211
    %7859 = vmatpush2.msra.mxu0 %v1210
    %7860 = vmatprep.subr.mxu0 %v1203
    %7861 = vmatpush2.msra.mxu0 %v1202
    %7862 = vmatprep.subr.mxu0 %v1195
    %7863 = vmatpush2.msra.mxu0 %v1194
    %7864 = vmatprep.subr.mxu0 %v1187
    %7865 = vmatpush2.msra.mxu0 %v1186
    %7866 = vmatprep.subr.mxu0 %v1179
    %7867 = vmatpush2.msra.mxu0 %v1178
    %7868 = vmatprep.subr.mxu0 %v1171
    %7869 = vmatpush2.msra.mxu0 %v1170
    %7870 = vmatprep.subr.mxu0 %v1163
    %7871 = vmatpush2.msra.mxu0 %v1162
    %7872 = vmatprep.subr.mxu0 %v1155
    %7873 = vmatpush2.msra.mxu0 %v1154
    %7874 = vmatprep.subr.mxu0 %v1147
    %7875 = vmatpush2.msra.mxu0 %v1146
    %7876 = vmatprep.subr.mxu0 %v1139
    %7877 = vmatpush2.msra.mxu0 %v1138
    %7878 = vmatprep.subr.mxu0 %v1131
    %7879 = vmatpush2.msra.mxu0 %v1130
    %7880 = vmatprep.subr.mxu0 %v1123
    %7881 = vmatpush2.msra.mxu0 %v1122
    %7882 = vmatprep.subr.mxu0 %v1115
    %7883 = vmatpush2.msra.mxu0 %v1114
    %7884 = vmatprep.subr.mxu0 %v1107
    %7885 = vmatpush2.msra.mxu0 %v1106
    %7886 = vmatprep.subr.mxu0 %v1099
    %7887 = vmatpush2.msra.mxu0 %v1098
    %7888 = vmatprep.subr.mxu0 %v1091
    %7889 = vmatpush2.msra.mxu0 %v1090
    %7890 = vmatprep.mubr.f32.mxu0 %v7187
    %7891 = vmatmul.mubr.f32.gmra.mxu0 %v7186
    %v7892 = vpop.f32.mrf.mxu0
    %v7893 = vadd.f32 0.0, %v7892
    %v7894 = vpop.f32.mrf.mxu0
    %v7895 = vadd.f32 0.0, %v7894
    %7896 = vdwg.mxu0
    %7897 = vmatprep.subr.mxu0 %v1085
    %7898 = vmatpush1.msra.mxu0 %v1084
    %7899 = vmatprep.subr.mxu0 %v1077
    %7900 = vmatpush1.msra.mxu0 %v1076
    %7901 = vmatprep.subr.mxu0 %v1069
    %7902 = vmatpush1.msra.mxu0 %v1068
    %7903 = vmatprep.subr.mxu0 %v1061
    %7904 = vmatpush1.msra.mxu0 %v1060
    %7905 = vmatprep.subr.mxu0 %v1053
    %7906 = vmatpush1.msra.mxu0 %v1052
    %7907 = vmatprep.subr.mxu0 %v1045
    %7908 = vmatpush1.msra.mxu0 %v1044
    %7909 = vmatprep.subr.mxu0 %v1037
    %7910 = vmatpush1.msra.mxu0 %v1036
    %7911 = vmatprep.subr.mxu0 %v1029
    %7912 = vmatpush1.msra.mxu0 %v1028
    %7913 = vmatprep.subr.mxu0 %v1021
    %7914 = vmatpush1.msra.mxu0 %v1020
    %7915 = vmatprep.subr.mxu0 %v1013
    %7916 = vmatpush1.msra.mxu0 %v1012
    %7917 = vmatprep.subr.mxu0 %v1005
    %7918 = vmatpush1.msra.mxu0 %v1004
    %7919 = vmatprep.subr.mxu0 %v997
    %7920 = vmatpush1.msra.mxu0 %v996
    %7921 = vmatprep.subr.mxu0 %v989
    %7922 = vmatpush1.msra.mxu0 %v988
    %7923 = vmatprep.subr.mxu0 %v981
    %7924 = vmatpush1.msra.mxu0 %v980
    %7925 = vmatprep.subr.mxu0 %v973
    %7926 = vmatpush1.msra.mxu0 %v972
    %7927 = vmatprep.subr.mxu0 %v965
    %7928 = vmatpush1.msra.mxu0 %v964
    %7929 = vmatprep.subr.mxu0 %v1213
    %7930 = vmatpush2.msra.mxu0 %v1212
    %7931 = vmatprep.subr.mxu0 %v1205
    %7932 = vmatpush2.msra.mxu0 %v1204
    %7933 = vmatprep.subr.mxu0 %v1197
    %7934 = vmatpush2.msra.mxu0 %v1196
    %7935 = vmatprep.subr.mxu0 %v1189
    %7936 = vmatpush2.msra.mxu0 %v1188
    %7937 = vmatprep.subr.mxu0 %v1181
    %7938 = vmatpush2.msra.mxu0 %v1180
    %7939 = vmatprep.subr.mxu0 %v1173
    %7940 = vmatpush2.msra.mxu0 %v1172
    %7941 = vmatprep.subr.mxu0 %v1165
    %7942 = vmatpush2.msra.mxu0 %v1164
    %7943 = vmatprep.subr.mxu0 %v1157
    %7944 = vmatpush2.msra.mxu0 %v1156
    %7945 = vmatprep.subr.mxu0 %v1149
    %7946 = vmatpush2.msra.mxu0 %v1148
    %7947 = vmatprep.subr.mxu0 %v1141
    %7948 = vmatpush2.msra.mxu0 %v1140
    %7949 = vmatprep.subr.mxu0 %v1133
    %7950 = vmatpush2.msra.mxu0 %v1132
    %7951 = vmatprep.subr.mxu0 %v1125
    %7952 = vmatpush2.msra.mxu0 %v1124
    %7953 = vmatprep.subr.mxu0 %v1117
    %7954 = vmatpush2.msra.mxu0 %v1116
    %7955 = vmatprep.subr.mxu0 %v1109
    %7956 = vmatpush2.msra.mxu0 %v1108
    %7957 = vmatprep.subr.mxu0 %v1101
    %7958 = vmatpush2.msra.mxu0 %v1100
    %7959 = vmatprep.subr.mxu0 %v1093
    %7960 = vmatpush2.msra.mxu0 %v1092
    %7961 = vmatprep.mubr.f32.mxu0 %v7187
    %7962 = vmatmul.mubr.f32.gmra.mxu0 %v7186
    %v7963 = vpop.f32.mrf.mxu0
    %v7964 = vadd.f32 0.0, %v7963
    %v7965 = vpop.f32.mrf.mxu0
    %v7966 = vadd.f32 0.0, %v7965
    %7967 = vdwg.mxu0
    %7968 = vmatprep.subr.mxu0 %v1087
    %7969 = vmatpush1.msra.mxu0 %v1086
    %7970 = vmatprep.subr.mxu0 %v1079
    %7971 = vmatpush1.msra.mxu0 %v1078
    %7972 = vmatprep.subr.mxu0 %v1071
    %7973 = vmatpush1.msra.mxu0 %v1070
    %7974 = vmatprep.subr.mxu0 %v1063
    %7975 = vmatpush1.msra.mxu0 %v1062
    %7976 = vmatprep.subr.mxu0 %v1055
    %7977 = vmatpush1.msra.mxu0 %v1054
    %7978 = vmatprep.subr.mxu0 %v1047
    %7979 = vmatpush1.msra.mxu0 %v1046
    %7980 = vmatprep.subr.mxu0 %v1039
    %7981 = vmatpush1.msra.mxu0 %v1038
    %7982 = vmatprep.subr.mxu0 %v1031
    %7983 = vmatpush1.msra.mxu0 %v1030
    %7984 = vmatprep.subr.mxu0 %v1023
    %7985 = vmatpush1.msra.mxu0 %v1022
    %7986 = vmatprep.subr.mxu0 %v1015
    %7987 = vmatpush1.msra.mxu0 %v1014
    %7988 = vmatprep.subr.mxu0 %v1007
    %7989 = vmatpush1.msra.mxu0 %v1006
    %7990 = vmatprep.subr.mxu0 %v999
    %7991 = vmatpush1.msra.mxu0 %v998
    %7992 = vmatprep.subr.mxu0 %v991
    %7993 = vmatpush1.msra.mxu0 %v990
    %7994 = vmatprep.subr.mxu0 %v983
    %7995 = vmatpush1.msra.mxu0 %v982
    %7996 = vmatprep.subr.mxu0 %v975
    %7997 = vmatpush1.msra.mxu0 %v974
    %7998 = vmatprep.subr.mxu0 %v967
    %7999 = vmatpush1.msra.mxu0 %v966
    %8000 = vmatprep.subr.mxu0 %v1215
    %8001 = vmatpush2.msra.mxu0 %v1214
    %8002 = vmatprep.subr.mxu0 %v1207
    %8003 = vmatpush2.msra.mxu0 %v1206
    %8004 = vmatprep.subr.mxu0 %v1199
    %8005 = vmatpush2.msra.mxu0 %v1198
    %8006 = vmatprep.subr.mxu0 %v1191
    %8007 = vmatpush2.msra.mxu0 %v1190
    %8008 = vmatprep.subr.mxu0 %v1183
    %8009 = vmatpush2.msra.mxu0 %v1182
    %8010 = vmatprep.subr.mxu0 %v1175
    %8011 = vmatpush2.msra.mxu0 %v1174
    %8012 = vmatprep.subr.mxu0 %v1167
    %8013 = vmatpush2.msra.mxu0 %v1166
    %8014 = vmatprep.subr.mxu0 %v1159
    %8015 = vmatpush2.msra.mxu0 %v1158
    %8016 = vmatprep.subr.mxu0 %v1151
    %8017 = vmatpush2.msra.mxu0 %v1150
    %8018 = vmatprep.subr.mxu0 %v1143
    %8019 = vmatpush2.msra.mxu0 %v1142
    %8020 = vmatprep.subr.mxu0 %v1135
    %8021 = vmatpush2.msra.mxu0 %v1134
    %8022 = vmatprep.subr.mxu0 %v1127
    %8023 = vmatpush2.msra.mxu0 %v1126
    %8024 = vmatprep.subr.mxu0 %v1119
    %8025 = vmatpush2.msra.mxu0 %v1118
    %8026 = vmatprep.subr.mxu0 %v1111
    %8027 = vmatpush2.msra.mxu0 %v1110
    %8028 = vmatprep.subr.mxu0 %v1103
    %8029 = vmatpush2.msra.mxu0 %v1102
    %8030 = vmatprep.subr.mxu0 %v1095
    %8031 = vmatpush2.msra.mxu0 %v1094
    %8032 = vmatprep.mubr.f32.mxu0 %v7187
    %8033 = vmatmul.mubr.f32.gmra.mxu0 %v7186
    %v8034 = vpop.f32.mrf.mxu0
    %v8035 = vadd.f32 0.0, %v8034
    %v8036 = vpop.f32.mrf.mxu0
    %v8037 = vadd.f32 0.0, %v8036
    %8038 = vdwg.mxu0
    %8039 = vmatprep.subr.mxu0 %v1089
    %8040 = vmatpush1.msra.mxu0 %v1088
    %8041 = vmatprep.subr.mxu0 %v1081
    %8042 = vmatpush1.msra.mxu0 %v1080
    %8043 = vmatprep.subr.mxu0 %v1073
    %8044 = vmatpush1.msra.mxu0 %v1072
    %8045 = vmatprep.subr.mxu0 %v1065
    %8046 = vmatpush1.msra.mxu0 %v1064
    %8047 = vmatprep.subr.mxu0 %v1057
    %8048 = vmatpush1.msra.mxu0 %v1056
    %8049 = vmatprep.subr.mxu0 %v1049
    %8050 = vmatpush1.msra.mxu0 %v1048
    %8051 = vmatprep.subr.mxu0 %v1041
    %8052 = vmatpush1.msra.mxu0 %v1040
    %8053 = vmatprep.subr.mxu0 %v1033
    %8054 = vmatpush1.msra.mxu0 %v1032
    %8055 = vmatprep.subr.mxu0 %v1025
    %8056 = vmatpush1.msra.mxu0 %v1024
    %8057 = vmatprep.subr.mxu0 %v1017
    %8058 = vmatpush1.msra.mxu0 %v1016
    %8059 = vmatprep.subr.mxu0 %v1009
    %8060 = vmatpush1.msra.mxu0 %v1008
    %8061 = vmatprep.subr.mxu0 %v1001
    %8062 = vmatpush1.msra.mxu0 %v1000
    %8063 = vmatprep.subr.mxu0 %v993
    %8064 = vmatpush1.msra.mxu0 %v992
    %8065 = vmatprep.subr.mxu0 %v985
    %8066 = vmatpush1.msra.mxu0 %v984
    %8067 = vmatprep.subr.mxu0 %v977
    %8068 = vmatpush1.msra.mxu0 %v976
    %8069 = vmatprep.subr.mxu0 %v969
    %8070 = vmatpush1.msra.mxu0 %v968
    %8071 = vmatprep.subr.mxu0 %v1217
    %8072 = vmatpush2.msra.mxu0 %v1216
    %8073 = vmatprep.subr.mxu0 %v1209
    %8074 = vmatpush2.msra.mxu0 %v1208
    %8075 = vmatprep.subr.mxu0 %v1201
    %8076 = vmatpush2.msra.mxu0 %v1200
    %8077 = vmatprep.subr.mxu0 %v1193
    %8078 = vmatpush2.msra.mxu0 %v1192
    %8079 = vmatprep.subr.mxu0 %v1185
    %8080 = vmatpush2.msra.mxu0 %v1184
    %8081 = vmatprep.subr.mxu0 %v1177
    %8082 = vmatpush2.msra.mxu0 %v1176
    %8083 = vmatprep.subr.mxu0 %v1169
    %8084 = vmatpush2.msra.mxu0 %v1168
    %8085 = vmatprep.subr.mxu0 %v1161
    %8086 = vmatpush2.msra.mxu0 %v1160
    %8087 = vmatprep.subr.mxu0 %v1153
    %8088 = vmatpush2.msra.mxu0 %v1152
    %8089 = vmatprep.subr.mxu0 %v1145
    %8090 = vmatpush2.msra.mxu0 %v1144
    %8091 = vmatprep.subr.mxu0 %v1137
    %8092 = vmatpush2.msra.mxu0 %v1136
    %8093 = vmatprep.subr.mxu0 %v1129
    %8094 = vmatpush2.msra.mxu0 %v1128
    %8095 = vmatprep.subr.mxu0 %v1121
    %8096 = vmatpush2.msra.mxu0 %v1120
    %8097 = vmatprep.subr.mxu0 %v1113
    %8098 = vmatpush2.msra.mxu0 %v1112
    %8099 = vmatprep.subr.mxu0 %v1105
    %8100 = vmatpush2.msra.mxu0 %v1104
    %8101 = vmatprep.subr.mxu0 %v1097
    %8102 = vmatpush2.msra.mxu0 %v1096
    %8103 = vmatprep.mubr.f32.mxu0 %v7187
    %8104 = vmatmul.mubr.f32.gmra.mxu0 %v7186
    %v8105 = vpop.f32.mrf.mxu0
    %v8106 = vadd.f32 0.0, %v8105
    %v8107 = vpop.f32.mrf.mxu0
    %v8108 = vadd.f32 0.0, %v8107
    %8109 = vdwg.mxu0
    %v8118 = vrot.slane %v7893, 4
    %v8119 = vrot.slane %v7895, 4
    %v8120 = vrot.slane %v7964, 4
    %v8121 = vrot.slane %v7966, 4
    %v8122 = vrot.slane %v8035, 4
    %v8123 = vrot.slane %v8037, 4
    %v8124 = vrot.slane %v8106, 4
    %v8125 = vrot.slane %v8108, 4
    %v8134 = vadd.f32 %v7818, %v8118
    %v8135 = vadd.f32 %v7819, %v8119
    %v8136 = vadd.f32 %v7820, %v8120
    %v8137 = vadd.f32 %v7821, %v8121
    %v8138 = vadd.f32 %v7822, %v8122
    %v8139 = vadd.f32 %v7823, %v8123
    %v8140 = vadd.f32 %v7824, %v8124
    %v8141 = vadd.f32 %v7825, %v8125
    %v8142 = vxor.u32 %v8134, 2147483648
    %v8143 = vxor.u32 %v8135, 2147483648
    %v8144 = vmul.f32 %v8142, 1.442695
    %v8145 = vpow.pop %v8144
    %v8146 = vmul.f32 %v8143, 1.442695
    %v8147 = vpow.pop %v8146
    %v8148 = vadd.f32 %v8145, 1.0
    %v8149 = vadd.f32 %v8147, 1.0
    %v8150 = vrcp.pop %v8148
    %v8151 = vmul.f32 1.0, %v8150
    %v8152 = vrcp.pop %v8149
    %v8153 = vmul.f32 1.0, %v8152
    %v8154 = vxor.u32 %v8136, 2147483648
    %v8155 = vxor.u32 %v8137, 2147483648
    %v8156 = vmul.f32 %v8154, 1.442695
    %v8157 = vpow.pop %v8156
    %v8158 = vmul.f32 %v8155, 1.442695
    %v8159 = vpow.pop %v8158
    %v8160 = vadd.f32 %v8157, 1.0
    %v8161 = vadd.f32 %v8159, 1.0
    %v8162 = vrcp.pop %v8160
    %v8163 = vmul.f32 1.0, %v8162
    %v8164 = vrcp.pop %v8161
    %v8165 = vmul.f32 1.0, %v8164
    %v8166 = vtanh.pop %v8138
    %v8167 = vtanh.pop %v8139
    %v8168 = vxor.u32 %v8140, 2147483648
    %v8169 = vxor.u32 %v8141, 2147483648
    %v8170 = vmul.f32 %v8168, 1.442695
    %v8171 = vpow.pop %v8170
    %v8172 = vmul.f32 %v8169, 1.442695
    %v8173 = vpow.pop %v8172
    %v8174 = vadd.f32 %v8171, 1.0
    %v8175 = vadd.f32 %v8173, 1.0
    %v8176 = vrcp.pop %v8174
    %v8177 = vmul.f32 1.0, %v8176
    %v8178 = vrcp.pop %v8175
    %v8179 = vmul.f32 1.0, %v8178
    %v8182 = vrot.slane %v7174, 6
    %v8183 = vrot.slane %v7175, 6
    %v8186 = vmul.f32 %v8163, %v8182
    %v8187 = vmul.f32 %v8165, %v8183
    %v8188 = vmul.f32 %v8151, %v8166
    %v8189 = vmul.f32 %v8153, %v8167
    %v8190 = vadd.f32 %v8186, %v8188
    %v8191 = vadd.f32 %v8187, %v8189
    %v8192 = vtanh.pop %v8190
    %v8193 = vtanh.pop %v8191
    %v8194 = vmul.f32 %v8177, %v8192
    %v8195 = vmul.f32 %v8179, %v8193
    %v8196 = vrot.slane %v7808, 4
    %v8197 = vrot.slane %v7809, 4
    %v8200 = vrot.slane %v8194, 4
    %v8201 = vrot.slane %v8195, 4
    %v8202 = vrot.slane %v8196, 4
    %v8203 = vrot.slane %v8197, 4
    %8208 = vmatprep.subr.mxu0 %v1339
    %8209 = vmatpush1.msra.mxu0 %v1338
    %8210 = vmatprep.subr.mxu0 %v1331
    %8211 = vmatpush1.msra.mxu0 %v1330
    %8212 = vmatprep.subr.mxu0 %v1323
    %8213 = vmatpush1.msra.mxu0 %v1322
    %8214 = vmatprep.subr.mxu0 %v1315
    %8215 = vmatpush1.msra.mxu0 %v1314
    %8216 = vmatprep.subr.mxu0 %v1307
    %8217 = vmatpush1.msra.mxu0 %v1306
    %8218 = vmatprep.subr.mxu0 %v1299
    %8219 = vmatpush1.msra.mxu0 %v1298
    %8220 = vmatprep.subr.mxu0 %v1291
    %8221 = vmatpush1.msra.mxu0 %v1290
    %8222 = vmatprep.subr.mxu0 %v1283
    %8223 = vmatpush1.msra.mxu0 %v1282
    %8224 = vmatprep.subr.mxu0 %v1275
    %8225 = vmatpush1.msra.mxu0 %v1274
    %8226 = vmatprep.subr.mxu0 %v1267
    %8227 = vmatpush1.msra.mxu0 %v1266
    %8228 = vmatprep.subr.mxu0 %v1259
    %8229 = vmatpush1.msra.mxu0 %v1258
    %8230 = vmatprep.subr.mxu0 %v1251
    %8231 = vmatpush1.msra.mxu0 %v1250
    %8232 = vmatprep.subr.mxu0 %v1243
    %8233 = vmatpush1.msra.mxu0 %v1242
    %8234 = vmatprep.subr.mxu0 %v1235
    %8235 = vmatpush1.msra.mxu0 %v1234
    %8236 = vmatprep.subr.mxu0 %v1227
    %8237 = vmatpush1.msra.mxu0 %v1226
    %8238 = vmatprep.subr.mxu0 %v1219
    %8239 = vmatpush1.msra.mxu0 %v1218
    %8240 = vmatprep.subr.mxu0 %v1467
    %8241 = vmatpush2.msra.mxu0 %v1466
    %8242 = vmatprep.subr.mxu0 %v1459
    %8243 = vmatpush2.msra.mxu0 %v1458
    %8244 = vmatprep.subr.mxu0 %v1451
    %8245 = vmatpush2.msra.mxu0 %v1450
    %8246 = vmatprep.subr.mxu0 %v1443
    %8247 = vmatpush2.msra.mxu0 %v1442
    %8248 = vmatprep.subr.mxu0 %v1435
    %8249 = vmatpush2.msra.mxu0 %v1434
    %8250 = vmatprep.subr.mxu0 %v1427
    %8251 = vmatpush2.msra.mxu0 %v1426
    %8252 = vmatprep.subr.mxu0 %v1419
    %8253 = vmatpush2.msra.mxu0 %v1418
    %8254 = vmatprep.subr.mxu0 %v1411
    %8255 = vmatpush2.msra.mxu0 %v1410
    %8256 = vmatprep.subr.mxu0 %v1403
    %8257 = vmatpush2.msra.mxu0 %v1402
    %8258 = vmatprep.subr.mxu0 %v1395
    %8259 = vmatpush2.msra.mxu0 %v1394
    %8260 = vmatprep.subr.mxu0 %v1387
    %8261 = vmatpush2.msra.mxu0 %v1386
    %8262 = vmatprep.subr.mxu0 %v1379
    %8263 = vmatpush2.msra.mxu0 %v1378
    %8264 = vmatprep.subr.mxu0 %v1371
    %8265 = vmatpush2.msra.mxu0 %v1370
    %8266 = vmatprep.subr.mxu0 %v1363
    %8267 = vmatpush2.msra.mxu0 %v1362
    %8268 = vmatprep.subr.mxu0 %v1355
    %8269 = vmatpush2.msra.mxu0 %v1354
    %8270 = vmatprep.subr.mxu0 %v1347
    %8271 = vmatpush2.msra.mxu0 %v1346
    %8272 = vmatprep.mubr.f32.mxu0 %v8201
    %8273 = vmatmul.mubr.f32.gmra.mxu0 %v8200
    %v8274 = vpop.f32.mrf.mxu0
    %v8275 = vadd.f32 %v2120, %v8274
    %v8276 = vpop.f32.mrf.mxu0
    %v8277 = vadd.f32 %v2124, %v8276
    %8278 = vdwg.mxu0
    %8279 = vmatprep.subr.mxu0 %v1595
    %8280 = vmatpush1.msra.mxu0 %v1594
    %8281 = vmatprep.subr.mxu0 %v1587
    %8282 = vmatpush1.msra.mxu0 %v1586
    %8283 = vmatprep.subr.mxu0 %v1579
    %8284 = vmatpush1.msra.mxu0 %v1578
    %8285 = vmatprep.subr.mxu0 %v1571
    %8286 = vmatpush1.msra.mxu0 %v1570
    %8287 = vmatprep.subr.mxu0 %v1563
    %8288 = vmatpush1.msra.mxu0 %v1562
    %8289 = vmatprep.subr.mxu0 %v1555
    %8290 = vmatpush1.msra.mxu0 %v1554
    %8291 = vmatprep.subr.mxu0 %v1547
    %8292 = vmatpush1.msra.mxu0 %v1546
    %8293 = vmatprep.subr.mxu0 %v1539
    %8294 = vmatpush1.msra.mxu0 %v1538
    %8295 = vmatprep.subr.mxu0 %v1531
    %8296 = vmatpush1.msra.mxu0 %v1530
    %8297 = vmatprep.subr.mxu0 %v1523
    %8298 = vmatpush1.msra.mxu0 %v1522
    %8299 = vmatprep.subr.mxu0 %v1515
    %8300 = vmatpush1.msra.mxu0 %v1514
    %8301 = vmatprep.subr.mxu0 %v1507
    %8302 = vmatpush1.msra.mxu0 %v1506
    %8303 = vmatprep.subr.mxu0 %v1499
    %8304 = vmatpush1.msra.mxu0 %v1498
    %8305 = vmatprep.subr.mxu0 %v1491
    %8306 = vmatpush1.msra.mxu0 %v1490
    %8307 = vmatprep.subr.mxu0 %v1483
    %8308 = vmatpush1.msra.mxu0 %v1482
    %8309 = vmatprep.subr.mxu0 %v1475
    %8310 = vmatpush1.msra.mxu0 %v1474
    %8311 = vmatprep.subr.mxu0 %v1723
    %8312 = vmatpush2.msra.mxu0 %v1722
    %8313 = vmatprep.subr.mxu0 %v1715
    %8314 = vmatpush2.msra.mxu0 %v1714
    %8315 = vmatprep.subr.mxu0 %v1707
    %8316 = vmatpush2.msra.mxu0 %v1706
    %8317 = vmatprep.subr.mxu0 %v1699
    %8318 = vmatpush2.msra.mxu0 %v1698
    %8319 = vmatprep.subr.mxu0 %v1691
    %8320 = vmatpush2.msra.mxu0 %v1690
    %8321 = vmatprep.subr.mxu0 %v1683
    %8322 = vmatpush2.msra.mxu0 %v1682
    %8323 = vmatprep.subr.mxu0 %v1675
    %8324 = vmatpush2.msra.mxu0 %v1674
    %8325 = vmatprep.subr.mxu0 %v1667
    %8326 = vmatpush2.msra.mxu0 %v1666
    %8327 = vmatprep.subr.mxu0 %v1659
    %8328 = vmatpush2.msra.mxu0 %v1658
    %8329 = vmatprep.subr.mxu0 %v1651
    %8330 = vmatpush2.msra.mxu0 %v1650
    %8331 = vmatprep.subr.mxu0 %v1643
    %8332 = vmatpush2.msra.mxu0 %v1642
    %8333 = vmatprep.subr.mxu0 %v1635
    %8334 = vmatpush2.msra.mxu0 %v1634
    %8335 = vmatprep.subr.mxu0 %v1627
    %8336 = vmatpush2.msra.mxu0 %v1626
    %8337 = vmatprep.subr.mxu0 %v1619
    %8338 = vmatpush2.msra.mxu0 %v1618
    %8339 = vmatprep.subr.mxu0 %v1611
    %8340 = vmatpush2.msra.mxu0 %v1610
    %8341 = vmatprep.subr.mxu0 %v1603
    %8342 = vmatpush2.msra.mxu0 %v1602
    %8343 = vmatprep.mubr.f32.mxu0 %v8203
    %8344 = vmatmul.mubr.f32.gmra.mxu0 %v8202
    %v8345 = vpop.f32.mrf.mxu0
    %v8346 = vadd.f32 %v8275, %v8345
    %v8347 = vpop.f32.mrf.mxu0
    %v8348 = vadd.f32 %v8277, %v8347
    %8349 = vdwg.mxu0
    %8350 = vmatprep.subr.mxu0 %v1341
    %8351 = vmatpush1.msra.mxu0 %v1340
    %8352 = vmatprep.subr.mxu0 %v1333
    %8353 = vmatpush1.msra.mxu0 %v1332
    %8354 = vmatprep.subr.mxu0 %v1325
    %8355 = vmatpush1.msra.mxu0 %v1324
    %8356 = vmatprep.subr.mxu0 %v1317
    %8357 = vmatpush1.msra.mxu0 %v1316
    %8358 = vmatprep.subr.mxu0 %v1309
    %8359 = vmatpush1.msra.mxu0 %v1308
    %8360 = vmatprep.subr.mxu0 %v1301
    %8361 = vmatpush1.msra.mxu0 %v1300
    %8362 = vmatprep.subr.mxu0 %v1293
    %8363 = vmatpush1.msra.mxu0 %v1292
    %8364 = vmatprep.subr.mxu0 %v1285
    %8365 = vmatpush1.msra.mxu0 %v1284
    %8366 = vmatprep.subr.mxu0 %v1277
    %8367 = vmatpush1.msra.mxu0 %v1276
    %8368 = vmatprep.subr.mxu0 %v1269
    %8369 = vmatpush1.msra.mxu0 %v1268
    %8370 = vmatprep.subr.mxu0 %v1261
    %8371 = vmatpush1.msra.mxu0 %v1260
    %8372 = vmatprep.subr.mxu0 %v1253
    %8373 = vmatpush1.msra.mxu0 %v1252
    %8374 = vmatprep.subr.mxu0 %v1245
    %8375 = vmatpush1.msra.mxu0 %v1244
    %8376 = vmatprep.subr.mxu0 %v1237
    %8377 = vmatpush1.msra.mxu0 %v1236
    %8378 = vmatprep.subr.mxu0 %v1229
    %8379 = vmatpush1.msra.mxu0 %v1228
    %8380 = vmatprep.subr.mxu0 %v1221
    %8381 = vmatpush1.msra.mxu0 %v1220
    %8382 = vmatprep.subr.mxu0 %v1469
    %8383 = vmatpush2.msra.mxu0 %v1468
    %8384 = vmatprep.subr.mxu0 %v1461
    %8385 = vmatpush2.msra.mxu0 %v1460
    %8386 = vmatprep.subr.mxu0 %v1453
    %8387 = vmatpush2.msra.mxu0 %v1452
    %8388 = vmatprep.subr.mxu0 %v1445
    %8389 = vmatpush2.msra.mxu0 %v1444
    %8390 = vmatprep.subr.mxu0 %v1437
    %8391 = vmatpush2.msra.mxu0 %v1436
    %8392 = vmatprep.subr.mxu0 %v1429
    %8393 = vmatpush2.msra.mxu0 %v1428
    %8394 = vmatprep.subr.mxu0 %v1421
    %8395 = vmatpush2.msra.mxu0 %v1420
    %8396 = vmatprep.subr.mxu0 %v1413
    %8397 = vmatpush2.msra.mxu0 %v1412
    %8398 = vmatprep.subr.mxu0 %v1405
    %8399 = vmatpush2.msra.mxu0 %v1404
    %8400 = vmatprep.subr.mxu0 %v1397
    %8401 = vmatpush2.msra.mxu0 %v1396
    %8402 = vmatprep.subr.mxu0 %v1389
    %8403 = vmatpush2.msra.mxu0 %v1388
    %8404 = vmatprep.subr.mxu0 %v1381
    %8405 = vmatpush2.msra.mxu0 %v1380
    %8406 = vmatprep.subr.mxu0 %v1373
    %8407 = vmatpush2.msra.mxu0 %v1372
    %8408 = vmatprep.subr.mxu0 %v1365
    %8409 = vmatpush2.msra.mxu0 %v1364
    %8410 = vmatprep.subr.mxu0 %v1357
    %8411 = vmatpush2.msra.mxu0 %v1356
    %8412 = vmatprep.subr.mxu0 %v1349
    %8413 = vmatpush2.msra.mxu0 %v1348
    %8414 = vmatprep.mubr.f32.mxu0 %v8201
    %8415 = vmatmul.mubr.f32.gmra.mxu0 %v8200
    %v8416 = vpop.f32.mrf.mxu0
    %v8417 = vadd.f32 %v2128, %v8416
    %v8418 = vpop.f32.mrf.mxu0
    %v8419 = vadd.f32 %v2132, %v8418
    %8420 = vdwg.mxu0
    %8421 = vmatprep.subr.mxu0 %v1597
    %8422 = vmatpush1.msra.mxu0 %v1596
    %8423 = vmatprep.subr.mxu0 %v1589
    %8424 = vmatpush1.msra.mxu0 %v1588
    %8425 = vmatprep.subr.mxu0 %v1581
    %8426 = vmatpush1.msra.mxu0 %v1580
    %8427 = vmatprep.subr.mxu0 %v1573
    %8428 = vmatpush1.msra.mxu0 %v1572
    %8429 = vmatprep.subr.mxu0 %v1565
    %8430 = vmatpush1.msra.mxu0 %v1564
    %8431 = vmatprep.subr.mxu0 %v1557
    %8432 = vmatpush1.msra.mxu0 %v1556
    %8433 = vmatprep.subr.mxu0 %v1549
    %8434 = vmatpush1.msra.mxu0 %v1548
    %8435 = vmatprep.subr.mxu0 %v1541
    %8436 = vmatpush1.msra.mxu0 %v1540
    %8437 = vmatprep.subr.mxu0 %v1533
    %8438 = vmatpush1.msra.mxu0 %v1532
    %8439 = vmatprep.subr.mxu0 %v1525
    %8440 = vmatpush1.msra.mxu0 %v1524
    %8441 = vmatprep.subr.mxu0 %v1517
    %8442 = vmatpush1.msra.mxu0 %v1516
    %8443 = vmatprep.subr.mxu0 %v1509
    %8444 = vmatpush1.msra.mxu0 %v1508
    %8445 = vmatprep.subr.mxu0 %v1501
    %8446 = vmatpush1.msra.mxu0 %v1500
    %8447 = vmatprep.subr.mxu0 %v1493
    %8448 = vmatpush1.msra.mxu0 %v1492
    %8449 = vmatprep.subr.mxu0 %v1485
    %8450 = vmatpush1.msra.mxu0 %v1484
    %8451 = vmatprep.subr.mxu0 %v1477
    %8452 = vmatpush1.msra.mxu0 %v1476
    %8453 = vmatprep.subr.mxu0 %v1725
    %8454 = vmatpush2.msra.mxu0 %v1724
    %8455 = vmatprep.subr.mxu0 %v1717
    %8456 = vmatpush2.msra.mxu0 %v1716
    %8457 = vmatprep.subr.mxu0 %v1709
    %8458 = vmatpush2.msra.mxu0 %v1708
    %8459 = vmatprep.subr.mxu0 %v1701
    %8460 = vmatpush2.msra.mxu0 %v1700
    %8461 = vmatprep.subr.mxu0 %v1693
    %8462 = vmatpush2.msra.mxu0 %v1692
    %8463 = vmatprep.subr.mxu0 %v1685
    %8464 = vmatpush2.msra.mxu0 %v1684
    %8465 = vmatprep.subr.mxu0 %v1677
    %8466 = vmatpush2.msra.mxu0 %v1676
    %8467 = vmatprep.subr.mxu0 %v1669
    %8468 = vmatpush2.msra.mxu0 %v1668
    %8469 = vmatprep.subr.mxu0 %v1661
    %8470 = vmatpush2.msra.mxu0 %v1660
    %8471 = vmatprep.subr.mxu0 %v1653
    %8472 = vmatpush2.msra.mxu0 %v1652
    %8473 = vmatprep.subr.mxu0 %v1645
    %8474 = vmatpush2.msra.mxu0 %v1644
    %8475 = vmatprep.subr.mxu0 %v1637
    %8476 = vmatpush2.msra.mxu0 %v1636
    %8477 = vmatprep.subr.mxu0 %v1629
    %8478 = vmatpush2.msra.mxu0 %v1628
    %8479 = vmatprep.subr.mxu0 %v1621
    %8480 = vmatpush2.msra.mxu0 %v1620
    %8481 = vmatprep.subr.mxu0 %v1613
    %8482 = vmatpush2.msra.mxu0 %v1612
    %8483 = vmatprep.subr.mxu0 %v1605
    %8484 = vmatpush2.msra.mxu0 %v1604
    %8485 = vmatprep.mubr.f32.mxu0 %v8203
    %8486 = vmatmul.mubr.f32.gmra.mxu0 %v8202
    %v8487 = vpop.f32.mrf.mxu0
    %v8488 = vadd.f32 %v8417, %v8487
    %v8489 = vpop.f32.mrf.mxu0
    %v8490 = vadd.f32 %v8419, %v8489
    %8491 = vdwg.mxu0
    %8492 = vmatprep.subr.mxu0 %v1343
    %8493 = vmatpush1.msra.mxu0 %v1342
    %8494 = vmatprep.subr.mxu0 %v1335
    %8495 = vmatpush1.msra.mxu0 %v1334
    %8496 = vmatprep.subr.mxu0 %v1327
    %8497 = vmatpush1.msra.mxu0 %v1326
    %8498 = vmatprep.subr.mxu0 %v1319
    %8499 = vmatpush1.msra.mxu0 %v1318
    %8500 = vmatprep.subr.mxu0 %v1311
    %8501 = vmatpush1.msra.mxu0 %v1310
    %8502 = vmatprep.subr.mxu0 %v1303
    %8503 = vmatpush1.msra.mxu0 %v1302
    %8504 = vmatprep.subr.mxu0 %v1295
    %8505 = vmatpush1.msra.mxu0 %v1294
    %8506 = vmatprep.subr.mxu0 %v1287
    %8507 = vmatpush1.msra.mxu0 %v1286
    %8508 = vmatprep.subr.mxu0 %v1279
    %8509 = vmatpush1.msra.mxu0 %v1278
    %8510 = vmatprep.subr.mxu0 %v1271
    %8511 = vmatpush1.msra.mxu0 %v1270
    %8512 = vmatprep.subr.mxu0 %v1263
    %8513 = vmatpush1.msra.mxu0 %v1262
    %8514 = vmatprep.subr.mxu0 %v1255
    %8515 = vmatpush1.msra.mxu0 %v1254
    %8516 = vmatprep.subr.mxu0 %v1247
    %8517 = vmatpush1.msra.mxu0 %v1246
    %8518 = vmatprep.subr.mxu0 %v1239
    %8519 = vmatpush1.msra.mxu0 %v1238
    %8520 = vmatprep.subr.mxu0 %v1231
    %8521 = vmatpush1.msra.mxu0 %v1230
    %8522 = vmatprep.subr.mxu0 %v1223
    %8523 = vmatpush1.msra.mxu0 %v1222
    %8524 = vmatprep.subr.mxu0 %v1471
    %8525 = vmatpush2.msra.mxu0 %v1470
    %8526 = vmatprep.subr.mxu0 %v1463
    %8527 = vmatpush2.msra.mxu0 %v1462
    %8528 = vmatprep.subr.mxu0 %v1455
    %8529 = vmatpush2.msra.mxu0 %v1454
    %8530 = vmatprep.subr.mxu0 %v1447
    %8531 = vmatpush2.msra.mxu0 %v1446
    %8532 = vmatprep.subr.mxu0 %v1439
    %8533 = vmatpush2.msra.mxu0 %v1438
    %8534 = vmatprep.subr.mxu0 %v1431
    %8535 = vmatpush2.msra.mxu0 %v1430
    %8536 = vmatprep.subr.mxu0 %v1423
    %8537 = vmatpush2.msra.mxu0 %v1422
    %8538 = vmatprep.subr.mxu0 %v1415
    %8539 = vmatpush2.msra.mxu0 %v1414
    %8540 = vmatprep.subr.mxu0 %v1407
    %8541 = vmatpush2.msra.mxu0 %v1406
    %8542 = vmatprep.subr.mxu0 %v1399
    %8543 = vmatpush2.msra.mxu0 %v1398
    %8544 = vmatprep.subr.mxu0 %v1391
    %8545 = vmatpush2.msra.mxu0 %v1390
    %8546 = vmatprep.subr.mxu0 %v1383
    %8547 = vmatpush2.msra.mxu0 %v1382
    %8548 = vmatprep.subr.mxu0 %v1375
    %8549 = vmatpush2.msra.mxu0 %v1374
    %8550 = vmatprep.subr.mxu0 %v1367
    %8551 = vmatpush2.msra.mxu0 %v1366
    %8552 = vmatprep.subr.mxu0 %v1359
    %8553 = vmatpush2.msra.mxu0 %v1358
    %8554 = vmatprep.subr.mxu0 %v1351
    %8555 = vmatpush2.msra.mxu0 %v1350
    %8556 = vmatprep.mubr.f32.mxu0 %v8201
    %8557 = vmatmul.mubr.f32.gmra.mxu0 %v8200
    %v8558 = vpop.f32.mrf.mxu0
    %v8559 = vadd.f32 %v2136, %v8558
    %v8560 = vpop.f32.mrf.mxu0
    %v8561 = vadd.f32 %v2140, %v8560
    %8562 = vdwg.mxu0
    %8563 = vmatprep.subr.mxu0 %v1599
    %8564 = vmatpush1.msra.mxu0 %v1598
    %8565 = vmatprep.subr.mxu0 %v1591
    %8566 = vmatpush1.msra.mxu0 %v1590
    %8567 = vmatprep.subr.mxu0 %v1583
    %8568 = vmatpush1.msra.mxu0 %v1582
    %8569 = vmatprep.subr.mxu0 %v1575
    %8570 = vmatpush1.msra.mxu0 %v1574
    %8571 = vmatprep.subr.mxu0 %v1567
    %8572 = vmatpush1.msra.mxu0 %v1566
    %8573 = vmatprep.subr.mxu0 %v1559
    %8574 = vmatpush1.msra.mxu0 %v1558
    %8575 = vmatprep.subr.mxu0 %v1551
    %8576 = vmatpush1.msra.mxu0 %v1550
    %8577 = vmatprep.subr.mxu0 %v1543
    %8578 = vmatpush1.msra.mxu0 %v1542
    %8579 = vmatprep.subr.mxu0 %v1535
    %8580 = vmatpush1.msra.mxu0 %v1534
    %8581 = vmatprep.subr.mxu0 %v1527
    %8582 = vmatpush1.msra.mxu0 %v1526
    %8583 = vmatprep.subr.mxu0 %v1519
    %8584 = vmatpush1.msra.mxu0 %v1518
    %8585 = vmatprep.subr.mxu0 %v1511
    %8586 = vmatpush1.msra.mxu0 %v1510
    %8587 = vmatprep.subr.mxu0 %v1503
    %8588 = vmatpush1.msra.mxu0 %v1502
    %8589 = vmatprep.subr.mxu0 %v1495
    %8590 = vmatpush1.msra.mxu0 %v1494
    %8591 = vmatprep.subr.mxu0 %v1487
    %8592 = vmatpush1.msra.mxu0 %v1486
    %8593 = vmatprep.subr.mxu0 %v1479
    %8594 = vmatpush1.msra.mxu0 %v1478
    %8595 = vmatprep.subr.mxu0 %v1727
    %8596 = vmatpush2.msra.mxu0 %v1726
    %8597 = vmatprep.subr.mxu0 %v1719
    %8598 = vmatpush2.msra.mxu0 %v1718
    %8599 = vmatprep.subr.mxu0 %v1711
    %8600 = vmatpush2.msra.mxu0 %v1710
    %8601 = vmatprep.subr.mxu0 %v1703
    %8602 = vmatpush2.msra.mxu0 %v1702
    %8603 = vmatprep.subr.mxu0 %v1695
    %8604 = vmatpush2.msra.mxu0 %v1694
    %8605 = vmatprep.subr.mxu0 %v1687
    %8606 = vmatpush2.msra.mxu0 %v1686
    %8607 = vmatprep.subr.mxu0 %v1679
    %8608 = vmatpush2.msra.mxu0 %v1678
    %8609 = vmatprep.subr.mxu0 %v1671
    %8610 = vmatpush2.msra.mxu0 %v1670
    %8611 = vmatprep.subr.mxu0 %v1663
    %8612 = vmatpush2.msra.mxu0 %v1662
    %8613 = vmatprep.subr.mxu0 %v1655
    %8614 = vmatpush2.msra.mxu0 %v1654
    %8615 = vmatprep.subr.mxu0 %v1647
    %8616 = vmatpush2.msra.mxu0 %v1646
    %8617 = vmatprep.subr.mxu0 %v1639
    %8618 = vmatpush2.msra.mxu0 %v1638
    %8619 = vmatprep.subr.mxu0 %v1631
    %8620 = vmatpush2.msra.mxu0 %v1630
    %8621 = vmatprep.subr.mxu0 %v1623
    %8622 = vmatpush2.msra.mxu0 %v1622
    %8623 = vmatprep.subr.mxu0 %v1615
    %8624 = vmatpush2.msra.mxu0 %v1614
    %8625 = vmatprep.subr.mxu0 %v1607
    %8626 = vmatpush2.msra.mxu0 %v1606
    %8627 = vmatprep.mubr.f32.mxu0 %v8203
    %8628 = vmatmul.mubr.f32.gmra.mxu0 %v8202
    %v8629 = vpop.f32.mrf.mxu0
    %v8630 = vadd.f32 %v8559, %v8629
    %v8631 = vpop.f32.mrf.mxu0
    %v8632 = vadd.f32 %v8561, %v8631
    %8633 = vdwg.mxu0
    %8634 = vmatprep.subr.mxu0 %v1345
    %8635 = vmatpush1.msra.mxu0 %v1344
    %8636 = vmatprep.subr.mxu0 %v1337
    %8637 = vmatpush1.msra.mxu0 %v1336
    %8638 = vmatprep.subr.mxu0 %v1329
    %8639 = vmatpush1.msra.mxu0 %v1328
    %8640 = vmatprep.subr.mxu0 %v1321
    %8641 = vmatpush1.msra.mxu0 %v1320
    %8642 = vmatprep.subr.mxu0 %v1313
    %8643 = vmatpush1.msra.mxu0 %v1312
    %8644 = vmatprep.subr.mxu0 %v1305
    %8645 = vmatpush1.msra.mxu0 %v1304
    %8646 = vmatprep.subr.mxu0 %v1297
    %8647 = vmatpush1.msra.mxu0 %v1296
    %8648 = vmatprep.subr.mxu0 %v1289
    %8649 = vmatpush1.msra.mxu0 %v1288
    %8650 = vmatprep.subr.mxu0 %v1281
    %8651 = vmatpush1.msra.mxu0 %v1280
    %8652 = vmatprep.subr.mxu0 %v1273
    %8653 = vmatpush1.msra.mxu0 %v1272
    %8654 = vmatprep.subr.mxu0 %v1265
    %8655 = vmatpush1.msra.mxu0 %v1264
    %8656 = vmatprep.subr.mxu0 %v1257
    %8657 = vmatpush1.msra.mxu0 %v1256
    %8658 = vmatprep.subr.mxu0 %v1249
    %8659 = vmatpush1.msra.mxu0 %v1248
    %8660 = vmatprep.subr.mxu0 %v1241
    %8661 = vmatpush1.msra.mxu0 %v1240
    %8662 = vmatprep.subr.mxu0 %v1233
    %8663 = vmatpush1.msra.mxu0 %v1232
    %8664 = vmatprep.subr.mxu0 %v1225
    %8665 = vmatpush1.msra.mxu0 %v1224
    %8666 = vmatprep.subr.mxu0 %v1473
    %8667 = vmatpush2.msra.mxu0 %v1472
    %8668 = vmatprep.subr.mxu0 %v1465
    %8669 = vmatpush2.msra.mxu0 %v1464
    %8670 = vmatprep.subr.mxu0 %v1457
    %8671 = vmatpush2.msra.mxu0 %v1456
    %8672 = vmatprep.subr.mxu0 %v1449
    %8673 = vmatpush2.msra.mxu0 %v1448
    %8674 = vmatprep.subr.mxu0 %v1441
    %8675 = vmatpush2.msra.mxu0 %v1440
    %8676 = vmatprep.subr.mxu0 %v1433
    %8677 = vmatpush2.msra.mxu0 %v1432
    %8678 = vmatprep.subr.mxu0 %v1425
    %8679 = vmatpush2.msra.mxu0 %v1424
    %8680 = vmatprep.subr.mxu0 %v1417
    %8681 = vmatpush2.msra.mxu0 %v1416
    %8682 = vmatprep.subr.mxu0 %v1409
    %8683 = vmatpush2.msra.mxu0 %v1408
    %8684 = vmatprep.subr.mxu0 %v1401
    %8685 = vmatpush2.msra.mxu0 %v1400
    %8686 = vmatprep.subr.mxu0 %v1393
    %8687 = vmatpush2.msra.mxu0 %v1392
    %8688 = vmatprep.subr.mxu0 %v1385
    %8689 = vmatpush2.msra.mxu0 %v1384
    %8690 = vmatprep.subr.mxu0 %v1377
    %8691 = vmatpush2.msra.mxu0 %v1376
    %8692 = vmatprep.subr.mxu0 %v1369
    %8693 = vmatpush2.msra.mxu0 %v1368
    %8694 = vmatprep.subr.mxu0 %v1361
    %8695 = vmatpush2.msra.mxu0 %v1360
    %8696 = vmatprep.subr.mxu0 %v1353
    %8697 = vmatpush2.msra.mxu0 %v1352
    %8698 = vmatprep.mubr.f32.mxu0 %v8201
    %8699 = vmatmul.mubr.f32.gmra.mxu0 %v8200
    %v8700 = vpop.f32.mrf.mxu0
    %v8701 = vadd.f32 %v2144, %v8700
    %v8702 = vpop.f32.mrf.mxu0
    %v8703 = vadd.f32 %v2148, %v8702
    %8704 = vdwg.mxu0
    %8705 = vmatprep.subr.mxu0 %v1601
    %8706 = vmatpush1.msra.mxu0 %v1600
    %8707 = vmatprep.subr.mxu0 %v1593
    %8708 = vmatpush1.msra.mxu0 %v1592
    %8709 = vmatprep.subr.mxu0 %v1585
    %8710 = vmatpush1.msra.mxu0 %v1584
    %8711 = vmatprep.subr.mxu0 %v1577
    %8712 = vmatpush1.msra.mxu0 %v1576
    %8713 = vmatprep.subr.mxu0 %v1569
    %8714 = vmatpush1.msra.mxu0 %v1568
    %8715 = vmatprep.subr.mxu0 %v1561
    %8716 = vmatpush1.msra.mxu0 %v1560
    %8717 = vmatprep.subr.mxu0 %v1553
    %8718 = vmatpush1.msra.mxu0 %v1552
    %8719 = vmatprep.subr.mxu0 %v1545
    %8720 = vmatpush1.msra.mxu0 %v1544
    %8721 = vmatprep.subr.mxu0 %v1537
    %8722 = vmatpush1.msra.mxu0 %v1536
    %8723 = vmatprep.subr.mxu0 %v1529
    %8724 = vmatpush1.msra.mxu0 %v1528
    %8725 = vmatprep.subr.mxu0 %v1521
    %8726 = vmatpush1.msra.mxu0 %v1520
    %8727 = vmatprep.subr.mxu0 %v1513
    %8728 = vmatpush1.msra.mxu0 %v1512
    %8729 = vmatprep.subr.mxu0 %v1505
    %8730 = vmatpush1.msra.mxu0 %v1504
    %8731 = vmatprep.subr.mxu0 %v1497
    %8732 = vmatpush1.msra.mxu0 %v1496
    %8733 = vmatprep.subr.mxu0 %v1489
    %8734 = vmatpush1.msra.mxu0 %v1488
    %8735 = vmatprep.subr.mxu0 %v1481
    %8736 = vmatpush1.msra.mxu0 %v1480
    %8737 = vmatprep.subr.mxu0 %v1729
    %8738 = vmatpush2.msra.mxu0 %v1728
    %8739 = vmatprep.subr.mxu0 %v1721
    %8740 = vmatpush2.msra.mxu0 %v1720
    %8741 = vmatprep.subr.mxu0 %v1713
    %8742 = vmatpush2.msra.mxu0 %v1712
    %8743 = vmatprep.subr.mxu0 %v1705
    %8744 = vmatpush2.msra.mxu0 %v1704
    %8745 = vmatprep.subr.mxu0 %v1697
    %8746 = vmatpush2.msra.mxu0 %v1696
    %8747 = vmatprep.subr.mxu0 %v1689
    %8748 = vmatpush2.msra.mxu0 %v1688
    %8749 = vmatprep.subr.mxu0 %v1681
    %8750 = vmatpush2.msra.mxu0 %v1680
    %8751 = vmatprep.subr.mxu0 %v1673
    %8752 = vmatpush2.msra.mxu0 %v1672
    %8753 = vmatprep.subr.mxu0 %v1665
    %8754 = vmatpush2.msra.mxu0 %v1664
    %8755 = vmatprep.subr.mxu0 %v1657
    %8756 = vmatpush2.msra.mxu0 %v1656
    %8757 = vmatprep.subr.mxu0 %v1649
    %8758 = vmatpush2.msra.mxu0 %v1648
    %8759 = vmatprep.subr.mxu0 %v1641
    %8760 = vmatpush2.msra.mxu0 %v1640
    %8761 = vmatprep.subr.mxu0 %v1633
    %8762 = vmatpush2.msra.mxu0 %v1632
    %8763 = vmatprep.subr.mxu0 %v1625
    %8764 = vmatpush2.msra.mxu0 %v1624
    %8765 = vmatprep.subr.mxu0 %v1617
    %8766 = vmatpush2.msra.mxu0 %v1616
    %8767 = vmatprep.subr.mxu0 %v1609
    %8768 = vmatpush2.msra.mxu0 %v1608
    %8769 = vmatprep.mubr.f32.mxu0 %v8203
    %8770 = vmatmul.mubr.f32.gmra.mxu0 %v8202
    %v8771 = vpop.f32.mrf.mxu0
    %v8772 = vadd.f32 %v8701, %v8771
    %v8773 = vpop.f32.mrf.mxu0
    %v8774 = vadd.f32 %v8703, %v8773
    %8775 = vdwg.mxu0
    %v8776 = vxor.u32 %v8346, 2147483648
    %v8777 = vxor.u32 %v8348, 2147483648
    %v8778 = vmul.f32 %v8776, 1.442695
    %v8779 = vpow.pop %v8778
    %v8780 = vmul.f32 %v8777, 1.442695
    %v8781 = vpow.pop %v8780
    %v8782 = vadd.f32 %v8779, 1.0
    %v8783 = vadd.f32 %v8781, 1.0
    %v8784 = vrcp.pop %v8782
    %v8785 = vmul.f32 1.0, %v8784
    %v8786 = vrcp.pop %v8783
    %v8787 = vmul.f32 1.0, %v8786
    %v8788 = vxor.u32 %v8488, 2147483648
    %v8789 = vxor.u32 %v8490, 2147483648
    %v8790 = vmul.f32 %v8788, 1.442695
    %v8791 = vpow.pop %v8790
    %v8792 = vmul.f32 %v8789, 1.442695
    %v8793 = vpow.pop %v8792
    %v8794 = vadd.f32 %v8791, 1.0
    %v8795 = vadd.f32 %v8793, 1.0
    %v8796 = vrcp.pop %v8794
    %v8797 = vmul.f32 1.0, %v8796
    %v8798 = vrcp.pop %v8795
    %v8799 = vmul.f32 1.0, %v8798
    %v8800 = vtanh.pop %v8630
    %v8801 = vtanh.pop %v8632
    %v8802 = vxor.u32 %v8772, 2147483648
    %v8803 = vxor.u32 %v8774, 2147483648
    %v8804 = vmul.f32 %v8802, 1.442695
    %v8805 = vpow.pop %v8804
    %v8806 = vmul.f32 %v8803, 1.442695
    %v8807 = vpow.pop %v8806
    %v8808 = vadd.f32 %v8805, 1.0
    %v8809 = vadd.f32 %v8807, 1.0
    %v8810 = vrcp.pop %v8808
    %v8811 = vmul.f32 1.0, %v8810
    %v8812 = vrcp.pop %v8809
    %v8813 = vmul.f32 1.0, %v8812
    %v8814 = vmul.f32 %v8797, %v7804
    %v8815 = vmul.f32 %v8799, %v7805
    %v8816 = vmul.f32 %v8785, %v8800
    %v8817 = vmul.f32 %v8787, %v8801
    %v8818 = vadd.f32 %v8814, %v8816
    %v8819 = vadd.f32 %v8815, %v8817
    %v8820 = vtanh.pop %v8818
    %v8821 = vtanh.pop %v8819
    %v8822 = vmul.f32 %v8811, %v8820
    %v8823 = vmul.f32 %v8813, %v8821
    %v8826 = vrot.slane %v8822, 4
    %v8827 = vrot.slane %v8823, 4
    %8830 = vst [vmem:[#allocation7 + $0x10] sm:$0x30] %v8826
    %8831 = vst [vmem:[#allocation7 + $0x18] sm:$0x30] %v8827
    %v8832 = vld [vmem:[#allocation6 + $0x40] sm:$0xc0]
    %v8833 = vld [vmem:[#allocation6 + $0x48] sm:$0xc0]
    %v8834 = vld [vmem:[#allocation6 + $0x50] sm:$0xc0]
    %v8835 = vld [vmem:[#allocation6 + $0x58] sm:$0xc0]
    %v8836 = vld [vmem:[#allocation6 + $0x60] sm:$0xc0]
    %v8837 = vld [vmem:[#allocation6 + $0x68] sm:$0xc0]
    %v8838 = vld [vmem:[#allocation6 + $0x70] sm:$0xc0]
    %v8839 = vld [vmem:[#allocation6 + $0x78] sm:$0xc0]
    %8840 = vmatprep.subr.mxu0 %v1083
    %8841 = vmatpush1.msra.mxu0 %v1082
    %8842 = vmatprep.subr.mxu0 %v1075
    %8843 = vmatpush1.msra.mxu0 %v1074
    %8844 = vmatprep.subr.mxu0 %v1067
    %8845 = vmatpush1.msra.mxu0 %v1066
    %8846 = vmatprep.subr.mxu0 %v1059
    %8847 = vmatpush1.msra.mxu0 %v1058
    %8848 = vmatprep.subr.mxu0 %v1051
    %8849 = vmatpush1.msra.mxu0 %v1050
    %8850 = vmatprep.subr.mxu0 %v1043
    %8851 = vmatpush1.msra.mxu0 %v1042
    %8852 = vmatprep.subr.mxu0 %v1035
    %8853 = vmatpush1.msra.mxu0 %v1034
    %8854 = vmatprep.subr.mxu0 %v1027
    %8855 = vmatpush1.msra.mxu0 %v1026
    %8856 = vmatprep.subr.mxu0 %v1019
    %8857 = vmatpush1.msra.mxu0 %v1018
    %8858 = vmatprep.subr.mxu0 %v1011
    %8859 = vmatpush1.msra.mxu0 %v1010
    %8860 = vmatprep.subr.mxu0 %v1003
    %8861 = vmatpush1.msra.mxu0 %v1002
    %8862 = vmatprep.subr.mxu0 %v995
    %8863 = vmatpush1.msra.mxu0 %v994
    %8864 = vmatprep.subr.mxu0 %v987
    %8865 = vmatpush1.msra.mxu0 %v986
    %8866 = vmatprep.subr.mxu0 %v979
    %8867 = vmatpush1.msra.mxu0 %v978
    %8868 = vmatprep.subr.mxu0 %v971
    %8869 = vmatpush1.msra.mxu0 %v970
    %8870 = vmatprep.subr.mxu0 %v963
    %8871 = vmatpush1.msra.mxu0 %v962
    %8872 = vmatprep.subr.mxu0 %v1211
    %8873 = vmatpush2.msra.mxu0 %v1210
    %8874 = vmatprep.subr.mxu0 %v1203
    %8875 = vmatpush2.msra.mxu0 %v1202
    %8876 = vmatprep.subr.mxu0 %v1195
    %8877 = vmatpush2.msra.mxu0 %v1194
    %8878 = vmatprep.subr.mxu0 %v1187
    %8879 = vmatpush2.msra.mxu0 %v1186
    %8880 = vmatprep.subr.mxu0 %v1179
    %8881 = vmatpush2.msra.mxu0 %v1178
    %8882 = vmatprep.subr.mxu0 %v1171
    %8883 = vmatpush2.msra.mxu0 %v1170
    %8884 = vmatprep.subr.mxu0 %v1163
    %8885 = vmatpush2.msra.mxu0 %v1162
    %8886 = vmatprep.subr.mxu0 %v1155
    %8887 = vmatpush2.msra.mxu0 %v1154
    %8888 = vmatprep.subr.mxu0 %v1147
    %8889 = vmatpush2.msra.mxu0 %v1146
    %8890 = vmatprep.subr.mxu0 %v1139
    %8891 = vmatpush2.msra.mxu0 %v1138
    %8892 = vmatprep.subr.mxu0 %v1131
    %8893 = vmatpush2.msra.mxu0 %v1130
    %8894 = vmatprep.subr.mxu0 %v1123
    %8895 = vmatpush2.msra.mxu0 %v1122
    %8896 = vmatprep.subr.mxu0 %v1115
    %8897 = vmatpush2.msra.mxu0 %v1114
    %8898 = vmatprep.subr.mxu0 %v1107
    %8899 = vmatpush2.msra.mxu0 %v1106
    %8900 = vmatprep.subr.mxu0 %v1099
    %8901 = vmatpush2.msra.mxu0 %v1098
    %8902 = vmatprep.subr.mxu0 %v1091
    %8903 = vmatpush2.msra.mxu0 %v1090
    %8904 = vmatprep.mubr.f32.mxu0 %v8201
    %8905 = vmatmul.mubr.f32.gmra.mxu0 %v8200
    %v8906 = vpop.f32.mrf.mxu0
    %v8907 = vadd.f32 0.0, %v8906
    %v8908 = vpop.f32.mrf.mxu0
    %v8909 = vadd.f32 0.0, %v8908
    %8910 = vdwg.mxu0
    %8911 = vmatprep.subr.mxu0 %v1085
    %8912 = vmatpush1.msra.mxu0 %v1084
    %8913 = vmatprep.subr.mxu0 %v1077
    %8914 = vmatpush1.msra.mxu0 %v1076
    %8915 = vmatprep.subr.mxu0 %v1069
    %8916 = vmatpush1.msra.mxu0 %v1068
    %8917 = vmatprep.subr.mxu0 %v1061
    %8918 = vmatpush1.msra.mxu0 %v1060
    %8919 = vmatprep.subr.mxu0 %v1053
    %8920 = vmatpush1.msra.mxu0 %v1052
    %8921 = vmatprep.subr.mxu0 %v1045
    %8922 = vmatpush1.msra.mxu0 %v1044
    %8923 = vmatprep.subr.mxu0 %v1037
    %8924 = vmatpush1.msra.mxu0 %v1036
    %8925 = vmatprep.subr.mxu0 %v1029
    %8926 = vmatpush1.msra.mxu0 %v1028
    %8927 = vmatprep.subr.mxu0 %v1021
    %8928 = vmatpush1.msra.mxu0 %v1020
    %8929 = vmatprep.subr.mxu0 %v1013
    %8930 = vmatpush1.msra.mxu0 %v1012
    %8931 = vmatprep.subr.mxu0 %v1005
    %8932 = vmatpush1.msra.mxu0 %v1004
    %8933 = vmatprep.subr.mxu0 %v997
    %8934 = vmatpush1.msra.mxu0 %v996
    %8935 = vmatprep.subr.mxu0 %v989
    %8936 = vmatpush1.msra.mxu0 %v988
    %8937 = vmatprep.subr.mxu0 %v981
    %8938 = vmatpush1.msra.mxu0 %v980
    %8939 = vmatprep.subr.mxu0 %v973
    %8940 = vmatpush1.msra.mxu0 %v972
    %8941 = vmatprep.subr.mxu0 %v965
    %8942 = vmatpush1.msra.mxu0 %v964
    %8943 = vmatprep.subr.mxu0 %v1213
    %8944 = vmatpush2.msra.mxu0 %v1212
    %8945 = vmatprep.subr.mxu0 %v1205
    %8946 = vmatpush2.msra.mxu0 %v1204
    %8947 = vmatprep.subr.mxu0 %v1197
    %8948 = vmatpush2.msra.mxu0 %v1196
    %8949 = vmatprep.subr.mxu0 %v1189
    %8950 = vmatpush2.msra.mxu0 %v1188
    %8951 = vmatprep.subr.mxu0 %v1181
    %8952 = vmatpush2.msra.mxu0 %v1180
    %8953 = vmatprep.subr.mxu0 %v1173
    %8954 = vmatpush2.msra.mxu0 %v1172
    %8955 = vmatprep.subr.mxu0 %v1165
    %8956 = vmatpush2.msra.mxu0 %v1164
    %8957 = vmatprep.subr.mxu0 %v1157
    %8958 = vmatpush2.msra.mxu0 %v1156
    %8959 = vmatprep.subr.mxu0 %v1149
    %8960 = vmatpush2.msra.mxu0 %v1148
    %8961 = vmatprep.subr.mxu0 %v1141
    %8962 = vmatpush2.msra.mxu0 %v1140
    %8963 = vmatprep.subr.mxu0 %v1133
    %8964 = vmatpush2.msra.mxu0 %v1132
    %8965 = vmatprep.subr.mxu0 %v1125
    %8966 = vmatpush2.msra.mxu0 %v1124
    %8967 = vmatprep.subr.mxu0 %v1117
    %8968 = vmatpush2.msra.mxu0 %v1116
    %8969 = vmatprep.subr.mxu0 %v1109
    %8970 = vmatpush2.msra.mxu0 %v1108
    %8971 = vmatprep.subr.mxu0 %v1101
    %8972 = vmatpush2.msra.mxu0 %v1100
    %8973 = vmatprep.subr.mxu0 %v1093
    %8974 = vmatpush2.msra.mxu0 %v1092
    %8975 = vmatprep.mubr.f32.mxu0 %v8201
    %8976 = vmatmul.mubr.f32.gmra.mxu0 %v8200
    %v8977 = vpop.f32.mrf.mxu0
    %v8978 = vadd.f32 0.0, %v8977
    %v8979 = vpop.f32.mrf.mxu0
    %v8980 = vadd.f32 0.0, %v8979
    %8981 = vdwg.mxu0
    %8982 = vmatprep.subr.mxu0 %v1087
    %8983 = vmatpush1.msra.mxu0 %v1086
    %8984 = vmatprep.subr.mxu0 %v1079
    %8985 = vmatpush1.msra.mxu0 %v1078
    %8986 = vmatprep.subr.mxu0 %v1071
    %8987 = vmatpush1.msra.mxu0 %v1070
    %8988 = vmatprep.subr.mxu0 %v1063
    %8989 = vmatpush1.msra.mxu0 %v1062
    %8990 = vmatprep.subr.mxu0 %v1055
    %8991 = vmatpush1.msra.mxu0 %v1054
    %8992 = vmatprep.subr.mxu0 %v1047
    %8993 = vmatpush1.msra.mxu0 %v1046
    %8994 = vmatprep.subr.mxu0 %v1039
    %8995 = vmatpush1.msra.mxu0 %v1038
    %8996 = vmatprep.subr.mxu0 %v1031
    %8997 = vmatpush1.msra.mxu0 %v1030
    %8998 = vmatprep.subr.mxu0 %v1023
    %8999 = vmatpush1.msra.mxu0 %v1022
    %9000 = vmatprep.subr.mxu0 %v1015
    %9001 = vmatpush1.msra.mxu0 %v1014
    %9002 = vmatprep.subr.mxu0 %v1007
    %9003 = vmatpush1.msra.mxu0 %v1006
    %9004 = vmatprep.subr.mxu0 %v999
    %9005 = vmatpush1.msra.mxu0 %v998
    %9006 = vmatprep.subr.mxu0 %v991
    %9007 = vmatpush1.msra.mxu0 %v990
    %9008 = vmatprep.subr.mxu0 %v983
    %9009 = vmatpush1.msra.mxu0 %v982
    %9010 = vmatprep.subr.mxu0 %v975
    %9011 = vmatpush1.msra.mxu0 %v974
    %9012 = vmatprep.subr.mxu0 %v967
    %9013 = vmatpush1.msra.mxu0 %v966
    %9014 = vmatprep.subr.mxu0 %v1215
    %9015 = vmatpush2.msra.mxu0 %v1214
    %9016 = vmatprep.subr.mxu0 %v1207
    %9017 = vmatpush2.msra.mxu0 %v1206
    %9018 = vmatprep.subr.mxu0 %v1199
    %9019 = vmatpush2.msra.mxu0 %v1198
    %9020 = vmatprep.subr.mxu0 %v1191
    %9021 = vmatpush2.msra.mxu0 %v1190
    %9022 = vmatprep.subr.mxu0 %v1183
    %9023 = vmatpush2.msra.mxu0 %v1182
    %9024 = vmatprep.subr.mxu0 %v1175
    %9025 = vmatpush2.msra.mxu0 %v1174
    %9026 = vmatprep.subr.mxu0 %v1167
    %9027 = vmatpush2.msra.mxu0 %v1166
    %9028 = vmatprep.subr.mxu0 %v1159
    %9029 = vmatpush2.msra.mxu0 %v1158
    %9030 = vmatprep.subr.mxu0 %v1151
    %9031 = vmatpush2.msra.mxu0 %v1150
    %9032 = vmatprep.subr.mxu0 %v1143
    %9033 = vmatpush2.msra.mxu0 %v1142
    %9034 = vmatprep.subr.mxu0 %v1135
    %9035 = vmatpush2.msra.mxu0 %v1134
    %9036 = vmatprep.subr.mxu0 %v1127
    %9037 = vmatpush2.msra.mxu0 %v1126
    %9038 = vmatprep.subr.mxu0 %v1119
    %9039 = vmatpush2.msra.mxu0 %v1118
    %9040 = vmatprep.subr.mxu0 %v1111
    %9041 = vmatpush2.msra.mxu0 %v1110
    %9042 = vmatprep.subr.mxu0 %v1103
    %9043 = vmatpush2.msra.mxu0 %v1102
    %9044 = vmatprep.subr.mxu0 %v1095
    %9045 = vmatpush2.msra.mxu0 %v1094
    %9046 = vmatprep.mubr.f32.mxu0 %v8201
    %9047 = vmatmul.mubr.f32.gmra.mxu0 %v8200
    %v9048 = vpop.f32.mrf.mxu0
    %v9049 = vadd.f32 0.0, %v9048
    %v9050 = vpop.f32.mrf.mxu0
    %v9051 = vadd.f32 0.0, %v9050
    %9052 = vdwg.mxu0
    %9053 = vmatprep.subr.mxu0 %v1089
    %9054 = vmatpush1.msra.mxu0 %v1088
    %9055 = vmatprep.subr.mxu0 %v1081
    %9056 = vmatpush1.msra.mxu0 %v1080
    %9057 = vmatprep.subr.mxu0 %v1073
    %9058 = vmatpush1.msra.mxu0 %v1072
    %9059 = vmatprep.subr.mxu0 %v1065
    %9060 = vmatpush1.msra.mxu0 %v1064
    %9061 = vmatprep.subr.mxu0 %v1057
    %9062 = vmatpush1.msra.mxu0 %v1056
    %9063 = vmatprep.subr.mxu0 %v1049
    %9064 = vmatpush1.msra.mxu0 %v1048
    %9065 = vmatprep.subr.mxu0 %v1041
    %9066 = vmatpush1.msra.mxu0 %v1040
    %9067 = vmatprep.subr.mxu0 %v1033
    %9068 = vmatpush1.msra.mxu0 %v1032
    %9069 = vmatprep.subr.mxu0 %v1025
    %9070 = vmatpush1.msra.mxu0 %v1024
    %9071 = vmatprep.subr.mxu0 %v1017
    %9072 = vmatpush1.msra.mxu0 %v1016
    %9073 = vmatprep.subr.mxu0 %v1009
    %9074 = vmatpush1.msra.mxu0 %v1008
    %9075 = vmatprep.subr.mxu0 %v1001
    %9076 = vmatpush1.msra.mxu0 %v1000
    %9077 = vmatprep.subr.mxu0 %v993
    %9078 = vmatpush1.msra.mxu0 %v992
    %9079 = vmatprep.subr.mxu0 %v985
    %9080 = vmatpush1.msra.mxu0 %v984
    %9081 = vmatprep.subr.mxu0 %v977
    %9082 = vmatpush1.msra.mxu0 %v976
    %9083 = vmatprep.subr.mxu0 %v969
    %9084 = vmatpush1.msra.mxu0 %v968
    %9085 = vmatprep.subr.mxu0 %v1217
    %9086 = vmatpush2.msra.mxu0 %v1216
    %9087 = vmatprep.subr.mxu0 %v1209
    %9088 = vmatpush2.msra.mxu0 %v1208
    %9089 = vmatprep.subr.mxu0 %v1201
    %9090 = vmatpush2.msra.mxu0 %v1200
    %9091 = vmatprep.subr.mxu0 %v1193
    %9092 = vmatpush2.msra.mxu0 %v1192
    %9093 = vmatprep.subr.mxu0 %v1185
    %9094 = vmatpush2.msra.mxu0 %v1184
    %9095 = vmatprep.subr.mxu0 %v1177
    %9096 = vmatpush2.msra.mxu0 %v1176
    %9097 = vmatprep.subr.mxu0 %v1169
    %9098 = vmatpush2.msra.mxu0 %v1168
    %9099 = vmatprep.subr.mxu0 %v1161
    %9100 = vmatpush2.msra.mxu0 %v1160
    %9101 = vmatprep.subr.mxu0 %v1153
    %9102 = vmatpush2.msra.mxu0 %v1152
    %9103 = vmatprep.subr.mxu0 %v1145
    %9104 = vmatpush2.msra.mxu0 %v1144
    %9105 = vmatprep.subr.mxu0 %v1137
    %9106 = vmatpush2.msra.mxu0 %v1136
    %9107 = vmatprep.subr.mxu0 %v1129
    %9108 = vmatpush2.msra.mxu0 %v1128
    %9109 = vmatprep.subr.mxu0 %v1121
    %9110 = vmatpush2.msra.mxu0 %v1120
    %9111 = vmatprep.subr.mxu0 %v1113
    %9112 = vmatpush2.msra.mxu0 %v1112
    %9113 = vmatprep.subr.mxu0 %v1105
    %9114 = vmatpush2.msra.mxu0 %v1104
    %9115 = vmatprep.subr.mxu0 %v1097
    %9116 = vmatpush2.msra.mxu0 %v1096
    %9117 = vmatprep.mubr.f32.mxu0 %v8201
    %9118 = vmatmul.mubr.f32.gmra.mxu0 %v8200
    %v9119 = vpop.f32.mrf.mxu0
    %v9120 = vadd.f32 0.0, %v9119
    %v9121 = vpop.f32.mrf.mxu0
    %v9122 = vadd.f32 0.0, %v9121
    %9123 = vdwg.mxu0
    %v9132 = vrot.slane %v8907, 2
    %v9133 = vrot.slane %v8909, 2
    %v9134 = vrot.slane %v8978, 2
    %v9135 = vrot.slane %v8980, 2
    %v9136 = vrot.slane %v9049, 2
    %v9137 = vrot.slane %v9051, 2
    %v9138 = vrot.slane %v9120, 2
    %v9139 = vrot.slane %v9122, 2
    %v9148 = vadd.f32 %v8832, %v9132
    %v9149 = vadd.f32 %v8833, %v9133
    %v9150 = vadd.f32 %v8834, %v9134
    %v9151 = vadd.f32 %v8835, %v9135
    %v9152 = vadd.f32 %v8836, %v9136
    %v9153 = vadd.f32 %v8837, %v9137
    %v9154 = vadd.f32 %v8838, %v9138
    %v9155 = vadd.f32 %v8839, %v9139
    %v9156 = vxor.u32 %v9148, 2147483648
    %v9157 = vxor.u32 %v9149, 2147483648
    %v9158 = vmul.f32 %v9156, 1.442695
    %v9159 = vpow.pop %v9158
    %v9160 = vmul.f32 %v9157, 1.442695
    %v9161 = vpow.pop %v9160
    %v9162 = vadd.f32 %v9159, 1.0
    %v9163 = vadd.f32 %v9161, 1.0
    %v9164 = vrcp.pop %v9162
    %v9165 = vmul.f32 1.0, %v9164
    %v9166 = vrcp.pop %v9163
    %v9167 = vmul.f32 1.0, %v9166
    %v9168 = vxor.u32 %v9150, 2147483648
    %v9169 = vxor.u32 %v9151, 2147483648
    %v9170 = vmul.f32 %v9168, 1.442695
    %v9171 = vpow.pop %v9170
    %v9172 = vmul.f32 %v9169, 1.442695
    %v9173 = vpow.pop %v9172
    %v9174 = vadd.f32 %v9171, 1.0
    %v9175 = vadd.f32 %v9173, 1.0
    %v9176 = vrcp.pop %v9174
    %v9177 = vmul.f32 1.0, %v9176
    %v9178 = vrcp.pop %v9175
    %v9179 = vmul.f32 1.0, %v9178
    %v9180 = vtanh.pop %v9152
    %v9181 = vtanh.pop %v9153
    %v9182 = vxor.u32 %v9154, 2147483648
    %v9183 = vxor.u32 %v9155, 2147483648
    %v9184 = vmul.f32 %v9182, 1.442695
    %v9185 = vpow.pop %v9184
    %v9186 = vmul.f32 %v9183, 1.442695
    %v9187 = vpow.pop %v9186
    %v9188 = vadd.f32 %v9185, 1.0
    %v9189 = vadd.f32 %v9187, 1.0
    %v9190 = vrcp.pop %v9188
    %v9191 = vmul.f32 1.0, %v9190
    %v9192 = vrcp.pop %v9189
    %v9193 = vmul.f32 1.0, %v9192
    %v9196 = vrot.slane %v8190, 6
    %v9197 = vrot.slane %v8191, 6
    %v9200 = vmul.f32 %v9177, %v9196
    %v9201 = vmul.f32 %v9179, %v9197
    %v9202 = vmul.f32 %v9165, %v9180
    %v9203 = vmul.f32 %v9167, %v9181
    %v9204 = vadd.f32 %v9200, %v9202
    %v9205 = vadd.f32 %v9201, %v9203
    %v9206 = vtanh.pop %v9204
    %v9207 = vtanh.pop %v9205
    %v9208 = vmul.f32 %v9191, %v9206
    %v9209 = vmul.f32 %v9193, %v9207
    %v9210 = vrot.slane %v8822, 2
    %v9211 = vrot.slane %v8823, 2
    %v9214 = vrot.slane %v9208, 6
    %v9215 = vrot.slane %v9209, 6
    %v9216 = vrot.slane %v9210, 6
    %v9217 = vrot.slane %v9211, 6
    %9222 = vmatprep.subr.mxu0 %v1339
    %9223 = vmatpush1.msra.mxu0 %v1338
    %9224 = vmatprep.subr.mxu0 %v1331
    %9225 = vmatpush1.msra.mxu0 %v1330
    %9226 = vmatprep.subr.mxu0 %v1323
    %9227 = vmatpush1.msra.mxu0 %v1322
    %9228 = vmatprep.subr.mxu0 %v1315
    %9229 = vmatpush1.msra.mxu0 %v1314
    %9230 = vmatprep.subr.mxu0 %v1307
    %9231 = vmatpush1.msra.mxu0 %v1306
    %9232 = vmatprep.subr.mxu0 %v1299
    %9233 = vmatpush1.msra.mxu0 %v1298
    %9234 = vmatprep.subr.mxu0 %v1291
    %9235 = vmatpush1.msra.mxu0 %v1290
    %9236 = vmatprep.subr.mxu0 %v1283
    %9237 = vmatpush1.msra.mxu0 %v1282
    %9238 = vmatprep.subr.mxu0 %v1275
    %9239 = vmatpush1.msra.mxu0 %v1274
    %9240 = vmatprep.subr.mxu0 %v1267
    %9241 = vmatpush1.msra.mxu0 %v1266
    %9242 = vmatprep.subr.mxu0 %v1259
    %9243 = vmatpush1.msra.mxu0 %v1258
    %9244 = vmatprep.subr.mxu0 %v1251
    %9245 = vmatpush1.msra.mxu0 %v1250
    %9246 = vmatprep.subr.mxu0 %v1243
    %9247 = vmatpush1.msra.mxu0 %v1242
    %9248 = vmatprep.subr.mxu0 %v1235
    %9249 = vmatpush1.msra.mxu0 %v1234
    %9250 = vmatprep.subr.mxu0 %v1227
    %9251 = vmatpush1.msra.mxu0 %v1226
    %9252 = vmatprep.subr.mxu0 %v1219
    %9253 = vmatpush1.msra.mxu0 %v1218
    %9254 = vmatprep.subr.mxu0 %v1467
    %9255 = vmatpush2.msra.mxu0 %v1466
    %9256 = vmatprep.subr.mxu0 %v1459
    %9257 = vmatpush2.msra.mxu0 %v1458
    %9258 = vmatprep.subr.mxu0 %v1451
    %9259 = vmatpush2.msra.mxu0 %v1450
    %9260 = vmatprep.subr.mxu0 %v1443
    %9261 = vmatpush2.msra.mxu0 %v1442
    %9262 = vmatprep.subr.mxu0 %v1435
    %9263 = vmatpush2.msra.mxu0 %v1434
    %9264 = vmatprep.subr.mxu0 %v1427
    %9265 = vmatpush2.msra.mxu0 %v1426
    %9266 = vmatprep.subr.mxu0 %v1419
    %9267 = vmatpush2.msra.mxu0 %v1418
    %9268 = vmatprep.subr.mxu0 %v1411
    %9269 = vmatpush2.msra.mxu0 %v1410
    %9270 = vmatprep.subr.mxu0 %v1403
    %9271 = vmatpush2.msra.mxu0 %v1402
    %9272 = vmatprep.subr.mxu0 %v1395
    %9273 = vmatpush2.msra.mxu0 %v1394
    %9274 = vmatprep.subr.mxu0 %v1387
    %9275 = vmatpush2.msra.mxu0 %v1386
    %9276 = vmatprep.subr.mxu0 %v1379
    %9277 = vmatpush2.msra.mxu0 %v1378
    %9278 = vmatprep.subr.mxu0 %v1371
    %9279 = vmatpush2.msra.mxu0 %v1370
    %9280 = vmatprep.subr.mxu0 %v1363
    %9281 = vmatpush2.msra.mxu0 %v1362
    %9282 = vmatprep.subr.mxu0 %v1355
    %9283 = vmatpush2.msra.mxu0 %v1354
    %9284 = vmatprep.subr.mxu0 %v1347
    %9285 = vmatpush2.msra.mxu0 %v1346
    %9286 = vmatprep.mubr.f32.mxu0 %v9215
    %9287 = vmatmul.mubr.f32.gmra.mxu0 %v9214
    %v9288 = vpop.f32.mrf.mxu0
    %v9289 = vadd.f32 %v2120, %v9288
    %v9290 = vpop.f32.mrf.mxu0
    %v9291 = vadd.f32 %v2124, %v9290
    %9292 = vdwg.mxu0
    %9293 = vmatprep.subr.mxu0 %v1595
    %9294 = vmatpush1.msra.mxu0 %v1594
    %9295 = vmatprep.subr.mxu0 %v1587
    %9296 = vmatpush1.msra.mxu0 %v1586
    %9297 = vmatprep.subr.mxu0 %v1579
    %9298 = vmatpush1.msra.mxu0 %v1578
    %9299 = vmatprep.subr.mxu0 %v1571
    %9300 = vmatpush1.msra.mxu0 %v1570
    %9301 = vmatprep.subr.mxu0 %v1563
    %9302 = vmatpush1.msra.mxu0 %v1562
    %9303 = vmatprep.subr.mxu0 %v1555
    %9304 = vmatpush1.msra.mxu0 %v1554
    %9305 = vmatprep.subr.mxu0 %v1547
    %9306 = vmatpush1.msra.mxu0 %v1546
    %9307 = vmatprep.subr.mxu0 %v1539
    %9308 = vmatpush1.msra.mxu0 %v1538
    %9309 = vmatprep.subr.mxu0 %v1531
    %9310 = vmatpush1.msra.mxu0 %v1530
    %9311 = vmatprep.subr.mxu0 %v1523
    %9312 = vmatpush1.msra.mxu0 %v1522
    %9313 = vmatprep.subr.mxu0 %v1515
    %9314 = vmatpush1.msra.mxu0 %v1514
    %9315 = vmatprep.subr.mxu0 %v1507
    %9316 = vmatpush1.msra.mxu0 %v1506
    %9317 = vmatprep.subr.mxu0 %v1499
    %9318 = vmatpush1.msra.mxu0 %v1498
    %9319 = vmatprep.subr.mxu0 %v1491
    %9320 = vmatpush1.msra.mxu0 %v1490
    %9321 = vmatprep.subr.mxu0 %v1483
    %9322 = vmatpush1.msra.mxu0 %v1482
    %9323 = vmatprep.subr.mxu0 %v1475
    %9324 = vmatpush1.msra.mxu0 %v1474
    %9325 = vmatprep.subr.mxu0 %v1723
    %9326 = vmatpush2.msra.mxu0 %v1722
    %9327 = vmatprep.subr.mxu0 %v1715
    %9328 = vmatpush2.msra.mxu0 %v1714
    %9329 = vmatprep.subr.mxu0 %v1707
    %9330 = vmatpush2.msra.mxu0 %v1706
    %9331 = vmatprep.subr.mxu0 %v1699
    %9332 = vmatpush2.msra.mxu0 %v1698
    %9333 = vmatprep.subr.mxu0 %v1691
    %9334 = vmatpush2.msra.mxu0 %v1690
    %9335 = vmatprep.subr.mxu0 %v1683
    %9336 = vmatpush2.msra.mxu0 %v1682
    %9337 = vmatprep.subr.mxu0 %v1675
    %9338 = vmatpush2.msra.mxu0 %v1674
    %9339 = vmatprep.subr.mxu0 %v1667
    %9340 = vmatpush2.msra.mxu0 %v1666
    %9341 = vmatprep.subr.mxu0 %v1659
    %9342 = vmatpush2.msra.mxu0 %v1658
    %9343 = vmatprep.subr.mxu0 %v1651
    %9344 = vmatpush2.msra.mxu0 %v1650
    %9345 = vmatprep.subr.mxu0 %v1643
    %9346 = vmatpush2.msra.mxu0 %v1642
    %9347 = vmatprep.subr.mxu0 %v1635
    %9348 = vmatpush2.msra.mxu0 %v1634
    %9349 = vmatprep.subr.mxu0 %v1627
    %9350 = vmatpush2.msra.mxu0 %v1626
    %9351 = vmatprep.subr.mxu0 %v1619
    %9352 = vmatpush2.msra.mxu0 %v1618
    %9353 = vmatprep.subr.mxu0 %v1611
    %9354 = vmatpush2.msra.mxu0 %v1610
    %9355 = vmatprep.subr.mxu0 %v1603
    %9356 = vmatpush2.msra.mxu0 %v1602
    %9357 = vmatprep.mubr.f32.mxu0 %v9217
    %9358 = vmatmul.mubr.f32.gmra.mxu0 %v9216
    %v9359 = vpop.f32.mrf.mxu0
    %v9360 = vadd.f32 %v9289, %v9359
    %v9361 = vpop.f32.mrf.mxu0
    %v9362 = vadd.f32 %v9291, %v9361
    %9363 = vdwg.mxu0
    %9364 = vmatprep.subr.mxu0 %v1341
    %9365 = vmatpush1.msra.mxu0 %v1340
    %9366 = vmatprep.subr.mxu0 %v1333
    %9367 = vmatpush1.msra.mxu0 %v1332
    %9368 = vmatprep.subr.mxu0 %v1325
    %9369 = vmatpush1.msra.mxu0 %v1324
    %9370 = vmatprep.subr.mxu0 %v1317
    %9371 = vmatpush1.msra.mxu0 %v1316
    %9372 = vmatprep.subr.mxu0 %v1309
    %9373 = vmatpush1.msra.mxu0 %v1308
    %9374 = vmatprep.subr.mxu0 %v1301
    %9375 = vmatpush1.msra.mxu0 %v1300
    %9376 = vmatprep.subr.mxu0 %v1293
    %9377 = vmatpush1.msra.mxu0 %v1292
    %9378 = vmatprep.subr.mxu0 %v1285
    %9379 = vmatpush1.msra.mxu0 %v1284
    %9380 = vmatprep.subr.mxu0 %v1277
    %9381 = vmatpush1.msra.mxu0 %v1276
    %9382 = vmatprep.subr.mxu0 %v1269
    %9383 = vmatpush1.msra.mxu0 %v1268
    %9384 = vmatprep.subr.mxu0 %v1261
    %9385 = vmatpush1.msra.mxu0 %v1260
    %9386 = vmatprep.subr.mxu0 %v1253
    %9387 = vmatpush1.msra.mxu0 %v1252
    %9388 = vmatprep.subr.mxu0 %v1245
    %9389 = vmatpush1.msra.mxu0 %v1244
    %9390 = vmatprep.subr.mxu0 %v1237
    %9391 = vmatpush1.msra.mxu0 %v1236
    %9392 = vmatprep.subr.mxu0 %v1229
    %9393 = vmatpush1.msra.mxu0 %v1228
    %9394 = vmatprep.subr.mxu0 %v1221
    %9395 = vmatpush1.msra.mxu0 %v1220
    %9396 = vmatprep.subr.mxu0 %v1469
    %9397 = vmatpush2.msra.mxu0 %v1468
    %9398 = vmatprep.subr.mxu0 %v1461
    %9399 = vmatpush2.msra.mxu0 %v1460
    %9400 = vmatprep.subr.mxu0 %v1453
    %9401 = vmatpush2.msra.mxu0 %v1452
    %9402 = vmatprep.subr.mxu0 %v1445
    %9403 = vmatpush2.msra.mxu0 %v1444
    %9404 = vmatprep.subr.mxu0 %v1437
    %9405 = vmatpush2.msra.mxu0 %v1436
    %9406 = vmatprep.subr.mxu0 %v1429
    %9407 = vmatpush2.msra.mxu0 %v1428
    %9408 = vmatprep.subr.mxu0 %v1421
    %9409 = vmatpush2.msra.mxu0 %v1420
    %9410 = vmatprep.subr.mxu0 %v1413
    %9411 = vmatpush2.msra.mxu0 %v1412
    %9412 = vmatprep.subr.mxu0 %v1405
    %9413 = vmatpush2.msra.mxu0 %v1404
    %9414 = vmatprep.subr.mxu0 %v1397
    %9415 = vmatpush2.msra.mxu0 %v1396
    %9416 = vmatprep.subr.mxu0 %v1389
    %9417 = vmatpush2.msra.mxu0 %v1388
    %9418 = vmatprep.subr.mxu0 %v1381
    %9419 = vmatpush2.msra.mxu0 %v1380
    %9420 = vmatprep.subr.mxu0 %v1373
    %9421 = vmatpush2.msra.mxu0 %v1372
    %9422 = vmatprep.subr.mxu0 %v1365
    %9423 = vmatpush2.msra.mxu0 %v1364
    %9424 = vmatprep.subr.mxu0 %v1357
    %9425 = vmatpush2.msra.mxu0 %v1356
    %9426 = vmatprep.subr.mxu0 %v1349
    %9427 = vmatpush2.msra.mxu0 %v1348
    %9428 = vmatprep.mubr.f32.mxu0 %v9215
    %9429 = vmatmul.mubr.f32.gmra.mxu0 %v9214
    %v9430 = vpop.f32.mrf.mxu0
    %v9431 = vadd.f32 %v2128, %v9430
    %v9432 = vpop.f32.mrf.mxu0
    %v9433 = vadd.f32 %v2132, %v9432
    %9434 = vdwg.mxu0
    %9435 = vmatprep.subr.mxu0 %v1597
    %9436 = vmatpush1.msra.mxu0 %v1596
    %9437 = vmatprep.subr.mxu0 %v1589
    %9438 = vmatpush1.msra.mxu0 %v1588
    %9439 = vmatprep.subr.mxu0 %v1581
    %9440 = vmatpush1.msra.mxu0 %v1580
    %9441 = vmatprep.subr.mxu0 %v1573
    %9442 = vmatpush1.msra.mxu0 %v1572
    %9443 = vmatprep.subr.mxu0 %v1565
    %9444 = vmatpush1.msra.mxu0 %v1564
    %9445 = vmatprep.subr.mxu0 %v1557
    %9446 = vmatpush1.msra.mxu0 %v1556
    %9447 = vmatprep.subr.mxu0 %v1549
    %9448 = vmatpush1.msra.mxu0 %v1548
    %9449 = vmatprep.subr.mxu0 %v1541
    %9450 = vmatpush1.msra.mxu0 %v1540
    %9451 = vmatprep.subr.mxu0 %v1533
    %9452 = vmatpush1.msra.mxu0 %v1532
    %9453 = vmatprep.subr.mxu0 %v1525
    %9454 = vmatpush1.msra.mxu0 %v1524
    %9455 = vmatprep.subr.mxu0 %v1517
    %9456 = vmatpush1.msra.mxu0 %v1516
    %9457 = vmatprep.subr.mxu0 %v1509
    %9458 = vmatpush1.msra.mxu0 %v1508
    %9459 = vmatprep.subr.mxu0 %v1501
    %9460 = vmatpush1.msra.mxu0 %v1500
    %9461 = vmatprep.subr.mxu0 %v1493
    %9462 = vmatpush1.msra.mxu0 %v1492
    %9463 = vmatprep.subr.mxu0 %v1485
    %9464 = vmatpush1.msra.mxu0 %v1484
    %9465 = vmatprep.subr.mxu0 %v1477
    %9466 = vmatpush1.msra.mxu0 %v1476
    %9467 = vmatprep.subr.mxu0 %v1725
    %9468 = vmatpush2.msra.mxu0 %v1724
    %9469 = vmatprep.subr.mxu0 %v1717
    %9470 = vmatpush2.msra.mxu0 %v1716
    %9471 = vmatprep.subr.mxu0 %v1709
    %9472 = vmatpush2.msra.mxu0 %v1708
    %9473 = vmatprep.subr.mxu0 %v1701
    %9474 = vmatpush2.msra.mxu0 %v1700
    %9475 = vmatprep.subr.mxu0 %v1693
    %9476 = vmatpush2.msra.mxu0 %v1692
    %9477 = vmatprep.subr.mxu0 %v1685
    %9478 = vmatpush2.msra.mxu0 %v1684
    %9479 = vmatprep.subr.mxu0 %v1677
    %9480 = vmatpush2.msra.mxu0 %v1676
    %9481 = vmatprep.subr.mxu0 %v1669
    %9482 = vmatpush2.msra.mxu0 %v1668
    %9483 = vmatprep.subr.mxu0 %v1661
    %9484 = vmatpush2.msra.mxu0 %v1660
    %9485 = vmatprep.subr.mxu0 %v1653
    %9486 = vmatpush2.msra.mxu0 %v1652
    %9487 = vmatprep.subr.mxu0 %v1645
    %9488 = vmatpush2.msra.mxu0 %v1644
    %9489 = vmatprep.subr.mxu0 %v1637
    %9490 = vmatpush2.msra.mxu0 %v1636
    %9491 = vmatprep.subr.mxu0 %v1629
    %9492 = vmatpush2.msra.mxu0 %v1628
    %9493 = vmatprep.subr.mxu0 %v1621
    %9494 = vmatpush2.msra.mxu0 %v1620
    %9495 = vmatprep.subr.mxu0 %v1613
    %9496 = vmatpush2.msra.mxu0 %v1612
    %9497 = vmatprep.subr.mxu0 %v1605
    %9498 = vmatpush2.msra.mxu0 %v1604
    %9499 = vmatprep.mubr.f32.mxu0 %v9217
    %9500 = vmatmul.mubr.f32.gmra.mxu0 %v9216
    %v9501 = vpop.f32.mrf.mxu0
    %v9502 = vadd.f32 %v9431, %v9501
    %v9503 = vpop.f32.mrf.mxu0
    %v9504 = vadd.f32 %v9433, %v9503
    %9505 = vdwg.mxu0
    %9506 = vmatprep.subr.mxu0 %v1343
    %9507 = vmatpush1.msra.mxu0 %v1342
    %9508 = vmatprep.subr.mxu0 %v1335
    %9509 = vmatpush1.msra.mxu0 %v1334
    %9510 = vmatprep.subr.mxu0 %v1327
    %9511 = vmatpush1.msra.mxu0 %v1326
    %9512 = vmatprep.subr.mxu0 %v1319
    %9513 = vmatpush1.msra.mxu0 %v1318
    %9514 = vmatprep.subr.mxu0 %v1311
    %9515 = vmatpush1.msra.mxu0 %v1310
    %9516 = vmatprep.subr.mxu0 %v1303
    %9517 = vmatpush1.msra.mxu0 %v1302
    %9518 = vmatprep.subr.mxu0 %v1295
    %9519 = vmatpush1.msra.mxu0 %v1294
    %9520 = vmatprep.subr.mxu0 %v1287
    %9521 = vmatpush1.msra.mxu0 %v1286
    %9522 = vmatprep.subr.mxu0 %v1279
    %9523 = vmatpush1.msra.mxu0 %v1278
    %9524 = vmatprep.subr.mxu0 %v1271
    %9525 = vmatpush1.msra.mxu0 %v1270
    %9526 = vmatprep.subr.mxu0 %v1263
    %9527 = vmatpush1.msra.mxu0 %v1262
    %9528 = vmatprep.subr.mxu0 %v1255
    %9529 = vmatpush1.msra.mxu0 %v1254
    %9530 = vmatprep.subr.mxu0 %v1247
    %9531 = vmatpush1.msra.mxu0 %v1246
    %9532 = vmatprep.subr.mxu0 %v1239
    %9533 = vmatpush1.msra.mxu0 %v1238
    %9534 = vmatprep.subr.mxu0 %v1231
    %9535 = vmatpush1.msra.mxu0 %v1230
    %9536 = vmatprep.subr.mxu0 %v1223
    %9537 = vmatpush1.msra.mxu0 %v1222
    %9538 = vmatprep.subr.mxu0 %v1471
    %9539 = vmatpush2.msra.mxu0 %v1470
    %9540 = vmatprep.subr.mxu0 %v1463
    %9541 = vmatpush2.msra.mxu0 %v1462
    %9542 = vmatprep.subr.mxu0 %v1455
    %9543 = vmatpush2.msra.mxu0 %v1454
    %9544 = vmatprep.subr.mxu0 %v1447
    %9545 = vmatpush2.msra.mxu0 %v1446
    %9546 = vmatprep.subr.mxu0 %v1439
    %9547 = vmatpush2.msra.mxu0 %v1438
    %9548 = vmatprep.subr.mxu0 %v1431
    %9549 = vmatpush2.msra.mxu0 %v1430
    %9550 = vmatprep.subr.mxu0 %v1423
    %9551 = vmatpush2.msra.mxu0 %v1422
    %9552 = vmatprep.subr.mxu0 %v1415
    %9553 = vmatpush2.msra.mxu0 %v1414
    %9554 = vmatprep.subr.mxu0 %v1407
    %9555 = vmatpush2.msra.mxu0 %v1406
    %9556 = vmatprep.subr.mxu0 %v1399
    %9557 = vmatpush2.msra.mxu0 %v1398
    %9558 = vmatprep.subr.mxu0 %v1391
    %9559 = vmatpush2.msra.mxu0 %v1390
    %9560 = vmatprep.subr.mxu0 %v1383
    %9561 = vmatpush2.msra.mxu0 %v1382
    %9562 = vmatprep.subr.mxu0 %v1375
    %9563 = vmatpush2.msra.mxu0 %v1374
    %9564 = vmatprep.subr.mxu0 %v1367
    %9565 = vmatpush2.msra.mxu0 %v1366
    %9566 = vmatprep.subr.mxu0 %v1359
    %9567 = vmatpush2.msra.mxu0 %v1358
    %9568 = vmatprep.subr.mxu0 %v1351
    %9569 = vmatpush2.msra.mxu0 %v1350
    %9570 = vmatprep.mubr.f32.mxu0 %v9215
    %9571 = vmatmul.mubr.f32.gmra.mxu0 %v9214
    %v9572 = vpop.f32.mrf.mxu0
    %v9573 = vadd.f32 %v2136, %v9572
    %v9574 = vpop.f32.mrf.mxu0
    %v9575 = vadd.f32 %v2140, %v9574
    %9576 = vdwg.mxu0
    %9577 = vmatprep.subr.mxu0 %v1599
    %9578 = vmatpush1.msra.mxu0 %v1598
    %9579 = vmatprep.subr.mxu0 %v1591
    %9580 = vmatpush1.msra.mxu0 %v1590
    %9581 = vmatprep.subr.mxu0 %v1583
    %9582 = vmatpush1.msra.mxu0 %v1582
    %9583 = vmatprep.subr.mxu0 %v1575
    %9584 = vmatpush1.msra.mxu0 %v1574
    %9585 = vmatprep.subr.mxu0 %v1567
    %9586 = vmatpush1.msra.mxu0 %v1566
    %9587 = vmatprep.subr.mxu0 %v1559
    %9588 = vmatpush1.msra.mxu0 %v1558
    %9589 = vmatprep.subr.mxu0 %v1551
    %9590 = vmatpush1.msra.mxu0 %v1550
    %9591 = vmatprep.subr.mxu0 %v1543
    %9592 = vmatpush1.msra.mxu0 %v1542
    %9593 = vmatprep.subr.mxu0 %v1535
    %9594 = vmatpush1.msra.mxu0 %v1534
    %9595 = vmatprep.subr.mxu0 %v1527
    %9596 = vmatpush1.msra.mxu0 %v1526
    %9597 = vmatprep.subr.mxu0 %v1519
    %9598 = vmatpush1.msra.mxu0 %v1518
    %9599 = vmatprep.subr.mxu0 %v1511
    %9600 = vmatpush1.msra.mxu0 %v1510
    %9601 = vmatprep.subr.mxu0 %v1503
    %9602 = vmatpush1.msra.mxu0 %v1502
    %9603 = vmatprep.subr.mxu0 %v1495
    %9604 = vmatpush1.msra.mxu0 %v1494
    %9605 = vmatprep.subr.mxu0 %v1487
    %9606 = vmatpush1.msra.mxu0 %v1486
    %9607 = vmatprep.subr.mxu0 %v1479
    %9608 = vmatpush1.msra.mxu0 %v1478
    %9609 = vmatprep.subr.mxu0 %v1727
    %9610 = vmatpush2.msra.mxu0 %v1726
    %9611 = vmatprep.subr.mxu0 %v1719
    %9612 = vmatpush2.msra.mxu0 %v1718
    %9613 = vmatprep.subr.mxu0 %v1711
    %9614 = vmatpush2.msra.mxu0 %v1710
    %9615 = vmatprep.subr.mxu0 %v1703
    %9616 = vmatpush2.msra.mxu0 %v1702
    %9617 = vmatprep.subr.mxu0 %v1695
    %9618 = vmatpush2.msra.mxu0 %v1694
    %9619 = vmatprep.subr.mxu0 %v1687
    %9620 = vmatpush2.msra.mxu0 %v1686
    %9621 = vmatprep.subr.mxu0 %v1679
    %9622 = vmatpush2.msra.mxu0 %v1678
    %9623 = vmatprep.subr.mxu0 %v1671
    %9624 = vmatpush2.msra.mxu0 %v1670
    %9625 = vmatprep.subr.mxu0 %v1663
    %9626 = vmatpush2.msra.mxu0 %v1662
    %9627 = vmatprep.subr.mxu0 %v1655
    %9628 = vmatpush2.msra.mxu0 %v1654
    %9629 = vmatprep.subr.mxu0 %v1647
    %9630 = vmatpush2.msra.mxu0 %v1646
    %9631 = vmatprep.subr.mxu0 %v1639
    %9632 = vmatpush2.msra.mxu0 %v1638
    %9633 = vmatprep.subr.mxu0 %v1631
    %9634 = vmatpush2.msra.mxu0 %v1630
    %9635 = vmatprep.subr.mxu0 %v1623
    %9636 = vmatpush2.msra.mxu0 %v1622
    %9637 = vmatprep.subr.mxu0 %v1615
    %9638 = vmatpush2.msra.mxu0 %v1614
    %9639 = vmatprep.subr.mxu0 %v1607
    %9640 = vmatpush2.msra.mxu0 %v1606
    %9641 = vmatprep.mubr.f32.mxu0 %v9217
    %9642 = vmatmul.mubr.f32.gmra.mxu0 %v9216
    %v9643 = vpop.f32.mrf.mxu0
    %v9644 = vadd.f32 %v9573, %v9643
    %v9645 = vpop.f32.mrf.mxu0
    %v9646 = vadd.f32 %v9575, %v9645
    %9647 = vdwg.mxu0
    %9648 = vmatprep.subr.mxu0 %v1345
    %9649 = vmatpush1.msra.mxu0 %v1344
    %9650 = vmatprep.subr.mxu0 %v1337
    %9651 = vmatpush1.msra.mxu0 %v1336
    %9652 = vmatprep.subr.mxu0 %v1329
    %9653 = vmatpush1.msra.mxu0 %v1328
    %9654 = vmatprep.subr.mxu0 %v1321
    %9655 = vmatpush1.msra.mxu0 %v1320
    %9656 = vmatprep.subr.mxu0 %v1313
    %9657 = vmatpush1.msra.mxu0 %v1312
    %9658 = vmatprep.subr.mxu0 %v1305
    %9659 = vmatpush1.msra.mxu0 %v1304
    %9660 = vmatprep.subr.mxu0 %v1297
    %9661 = vmatpush1.msra.mxu0 %v1296
    %9662 = vmatprep.subr.mxu0 %v1289
    %9663 = vmatpush1.msra.mxu0 %v1288
    %9664 = vmatprep.subr.mxu0 %v1281
    %9665 = vmatpush1.msra.mxu0 %v1280
    %9666 = vmatprep.subr.mxu0 %v1273
    %9667 = vmatpush1.msra.mxu0 %v1272
    %9668 = vmatprep.subr.mxu0 %v1265
    %9669 = vmatpush1.msra.mxu0 %v1264
    %9670 = vmatprep.subr.mxu0 %v1257
    %9671 = vmatpush1.msra.mxu0 %v1256
    %9672 = vmatprep.subr.mxu0 %v1249
    %9673 = vmatpush1.msra.mxu0 %v1248
    %9674 = vmatprep.subr.mxu0 %v1241
    %9675 = vmatpush1.msra.mxu0 %v1240
    %9676 = vmatprep.subr.mxu0 %v1233
    %9677 = vmatpush1.msra.mxu0 %v1232
    %9678 = vmatprep.subr.mxu0 %v1225
    %9679 = vmatpush1.msra.mxu0 %v1224
    %9680 = vmatprep.subr.mxu0 %v1473
    %9681 = vmatpush2.msra.mxu0 %v1472
    %9682 = vmatprep.subr.mxu0 %v1465
    %9683 = vmatpush2.msra.mxu0 %v1464
    %9684 = vmatprep.subr.mxu0 %v1457
    %9685 = vmatpush2.msra.mxu0 %v1456
    %9686 = vmatprep.subr.mxu0 %v1449
    %9687 = vmatpush2.msra.mxu0 %v1448
    %9688 = vmatprep.subr.mxu0 %v1441
    %9689 = vmatpush2.msra.mxu0 %v1440
    %9690 = vmatprep.subr.mxu0 %v1433
    %9691 = vmatpush2.msra.mxu0 %v1432
    %9692 = vmatprep.subr.mxu0 %v1425
    %9693 = vmatpush2.msra.mxu0 %v1424
    %9694 = vmatprep.subr.mxu0 %v1417
    %9695 = vmatpush2.msra.mxu0 %v1416
    %9696 = vmatprep.subr.mxu0 %v1409
    %9697 = vmatpush2.msra.mxu0 %v1408
    %9698 = vmatprep.subr.mxu0 %v1401
    %9699 = vmatpush2.msra.mxu0 %v1400
    %9700 = vmatprep.subr.mxu0 %v1393
    %9701 = vmatpush2.msra.mxu0 %v1392
    %9702 = vmatprep.subr.mxu0 %v1385
    %9703 = vmatpush2.msra.mxu0 %v1384
    %9704 = vmatprep.subr.mxu0 %v1377
    %9705 = vmatpush2.msra.mxu0 %v1376
    %9706 = vmatprep.subr.mxu0 %v1369
    %9707 = vmatpush2.msra.mxu0 %v1368
    %9708 = vmatprep.subr.mxu0 %v1361
    %9709 = vmatpush2.msra.mxu0 %v1360
    %9710 = vmatprep.subr.mxu0 %v1353
    %9711 = vmatpush2.msra.mxu0 %v1352
    %9712 = vmatprep.mubr.f32.mxu0 %v9215
    %9713 = vmatmul.mubr.f32.gmra.mxu0 %v9214
    %v9714 = vpop.f32.mrf.mxu0
    %v9715 = vadd.f32 %v2144, %v9714
    %v9716 = vpop.f32.mrf.mxu0
    %v9717 = vadd.f32 %v2148, %v9716
    %9718 = vdwg.mxu0
    %9719 = vmatprep.subr.mxu0 %v1601
    %9720 = vmatpush1.msra.mxu0 %v1600
    %9721 = vmatprep.subr.mxu0 %v1593
    %9722 = vmatpush1.msra.mxu0 %v1592
    %9723 = vmatprep.subr.mxu0 %v1585
    %9724 = vmatpush1.msra.mxu0 %v1584
    %9725 = vmatprep.subr.mxu0 %v1577
    %9726 = vmatpush1.msra.mxu0 %v1576
    %9727 = vmatprep.subr.mxu0 %v1569
    %9728 = vmatpush1.msra.mxu0 %v1568
    %9729 = vmatprep.subr.mxu0 %v1561
    %9730 = vmatpush1.msra.mxu0 %v1560
    %9731 = vmatprep.subr.mxu0 %v1553
    %9732 = vmatpush1.msra.mxu0 %v1552
    %9733 = vmatprep.subr.mxu0 %v1545
    %9734 = vmatpush1.msra.mxu0 %v1544
    %9735 = vmatprep.subr.mxu0 %v1537
    %9736 = vmatpush1.msra.mxu0 %v1536
    %9737 = vmatprep.subr.mxu0 %v1529
    %9738 = vmatpush1.msra.mxu0 %v1528
    %9739 = vmatprep.subr.mxu0 %v1521
    %9740 = vmatpush1.msra.mxu0 %v1520
    %9741 = vmatprep.subr.mxu0 %v1513
    %9742 = vmatpush1.msra.mxu0 %v1512
    %9743 = vmatprep.subr.mxu0 %v1505
    %9744 = vmatpush1.msra.mxu0 %v1504
    %9745 = vmatprep.subr.mxu0 %v1497
    %9746 = vmatpush1.msra.mxu0 %v1496
    %9747 = vmatprep.subr.mxu0 %v1489
    %9748 = vmatpush1.msra.mxu0 %v1488
    %9749 = vmatprep.subr.mxu0 %v1481
    %9750 = vmatpush1.msra.mxu0 %v1480
    %9751 = vmatprep.subr.mxu0 %v1729
    %9752 = vmatpush2.msra.mxu0 %v1728
    %9753 = vmatprep.subr.mxu0 %v1721
    %9754 = vmatpush2.msra.mxu0 %v1720
    %9755 = vmatprep.subr.mxu0 %v1713
    %9756 = vmatpush2.msra.mxu0 %v1712
    %9757 = vmatprep.subr.mxu0 %v1705
    %9758 = vmatpush2.msra.mxu0 %v1704
    %9759 = vmatprep.subr.mxu0 %v1697
    %9760 = vmatpush2.msra.mxu0 %v1696
    %9761 = vmatprep.subr.mxu0 %v1689
    %9762 = vmatpush2.msra.mxu0 %v1688
    %9763 = vmatprep.subr.mxu0 %v1681
    %9764 = vmatpush2.msra.mxu0 %v1680
    %9765 = vmatprep.subr.mxu0 %v1673
    %9766 = vmatpush2.msra.mxu0 %v1672
    %9767 = vmatprep.subr.mxu0 %v1665
    %9768 = vmatpush2.msra.mxu0 %v1664
    %9769 = vmatprep.subr.mxu0 %v1657
    %9770 = vmatpush2.msra.mxu0 %v1656
    %9771 = vmatprep.subr.mxu0 %v1649
    %9772 = vmatpush2.msra.mxu0 %v1648
    %9773 = vmatprep.subr.mxu0 %v1641
    %9774 = vmatpush2.msra.mxu0 %v1640
    %9775 = vmatprep.subr.mxu0 %v1633
    %9776 = vmatpush2.msra.mxu0 %v1632
    %9777 = vmatprep.subr.mxu0 %v1625
    %9778 = vmatpush2.msra.mxu0 %v1624
    %9779 = vmatprep.subr.mxu0 %v1617
    %9780 = vmatpush2.msra.mxu0 %v1616
    %9781 = vmatprep.subr.mxu0 %v1609
    %9782 = vmatpush2.msra.mxu0 %v1608
    %9783 = vmatprep.mubr.f32.mxu0 %v9217
    %9784 = vmatmul.mubr.f32.gmra.mxu0 %v9216
    %v9785 = vpop.f32.mrf.mxu0
    %v9786 = vadd.f32 %v9715, %v9785
    %v9787 = vpop.f32.mrf.mxu0
    %v9788 = vadd.f32 %v9717, %v9787
    %9789 = vdwg.mxu0
    %v9790 = vxor.u32 %v9360, 2147483648
    %v9791 = vxor.u32 %v9362, 2147483648
    %v9792 = vmul.f32 %v9790, 1.442695
    %v9793 = vpow.pop %v9792
    %v9794 = vmul.f32 %v9791, 1.442695
    %v9795 = vpow.pop %v9794
    %v9796 = vadd.f32 %v9793, 1.0
    %v9797 = vadd.f32 %v9795, 1.0
    %v9798 = vrcp.pop %v9796
    %v9799 = vmul.f32 1.0, %v9798
    %v9800 = vrcp.pop %v9797
    %v9801 = vmul.f32 1.0, %v9800
    %v9802 = vxor.u32 %v9502, 2147483648
    %v9803 = vxor.u32 %v9504, 2147483648
    %v9804 = vmul.f32 %v9802, 1.442695
    %v9805 = vpow.pop %v9804
    %v9806 = vmul.f32 %v9803, 1.442695
    %v9807 = vpow.pop %v9806
    %v9808 = vadd.f32 %v9805, 1.0
    %v9809 = vadd.f32 %v9807, 1.0
    %v9810 = vrcp.pop %v9808
    %v9811 = vmul.f32 1.0, %v9810
    %v9812 = vrcp.pop %v9809
    %v9813 = vmul.f32 1.0, %v9812
    %v9814 = vtanh.pop %v9644
    %v9815 = vtanh.pop %v9646
    %v9816 = vxor.u32 %v9786, 2147483648
    %v9817 = vxor.u32 %v9788, 2147483648
    %v9818 = vmul.f32 %v9816, 1.442695
    %v9819 = vpow.pop %v9818
    %v9820 = vmul.f32 %v9817, 1.442695
    %v9821 = vpow.pop %v9820
    %v9822 = vadd.f32 %v9819, 1.0
    %v9823 = vadd.f32 %v9821, 1.0
    %v9824 = vrcp.pop %v9822
    %v9825 = vmul.f32 1.0, %v9824
    %v9826 = vrcp.pop %v9823
    %v9827 = vmul.f32 1.0, %v9826
    %v9828 = vmul.f32 %v9811, %v8818
    %v9829 = vmul.f32 %v9813, %v8819
    %v9830 = vmul.f32 %v9799, %v9814
    %v9831 = vmul.f32 %v9801, %v9815
    %v9832 = vadd.f32 %v9828, %v9830
    %v9833 = vadd.f32 %v9829, %v9831
    %v9834 = vtanh.pop %v9832
    %v9835 = vtanh.pop %v9833
    %v9836 = vmul.f32 %v9825, %v9834
    %v9837 = vmul.f32 %v9827, %v9835
    %v9840 = vrot.slane %v9836, 2
    %v9841 = vrot.slane %v9837, 2
    %9844 = vst [vmem:[#allocation7 + $0x10] sm:$0xc0] %v9840
    %9845 = vst [vmem:[#allocation7 + $0x18] sm:$0xc0] %v9841
    %v9846 = vcombine.high %v9208, %v9209
    %v9848 = vunpack.c.l.s4 1983009808
    %v9849 = vunpack.c.0.s8 %v9848
    %v9850 = vlaneseq
    %v9851 = vshrl.u32 %v9850, 7
    %v9852 = vsub.s32 %v9849, %v9851
    %v9853 = vrot.slane %v9846, %v9852
    %v9854 = vcombine.high %v9853, %v9853
    %9856 = vst [vmem:[#allocation2] sm:$0xf] %v9854
    %v9859 = vcombine.high %v9204, %v9205
    %v9861 = vunpack.c.l.s4 1983009808
    %v9862 = vunpack.c.0.s8 %v9861
    %v9863 = vlaneseq
    %v9864 = vshrl.u32 %v9863, 7
    %v9865 = vsub.s32 %v9862, %v9864
    %v9866 = vrot.slane %v9859, %v9865
    %v9867 = vcombine.high %v9866, %v9866
    %9869 = vst [vmem:[#allocation3] sm:$0xf] %v9867
    %v9870 = vcombine.low %v9836, %v9837
    %v9872 = vunpack.c.l.s4 1983009808
    %v9873 = vunpack.c.0.s8 %v9872
    %v9874 = vlaneseq
    %v9875 = vshrl.u32 %v9874, 7
    %v9876 = vsub.s32 %v9873, %v9875
    %v9877 = vrot.slane %v9870, %v9876
    %9879 = vst [vmem:[#allocation4] sm:$0xf] %v9877
    %v9882 = vcombine.low %v9832, %v9833
    %v9884 = vunpack.c.l.s4 1983009808
    %v9885 = vunpack.c.0.s8 %v9884
    %v9886 = vlaneseq
    %v9887 = vshrl.u32 %v9886, 7
    %v9888 = vsub.s32 %v9885, %v9887
    %v9889 = vrot.slane %v9882, %v9888
    %9891 = vst [vmem:[#allocation5] sm:$0xf] %v9889
    // Predicated region
    $region98: #{forward.1} parent=1 // pred_check
      %p9892 = pneg %p186
    $region99: #{forward.1} parent=1 // pred_check_branch
      %9894 = sbr.rel (%p9892) target = $region101
    $region100: #{forward.1} parent=1 // pred_region
      %9895 = vst [vmem:[#allocation26] sm:$0xf] %v9854
      %s9896 = scalar_lea.vmem [#allocation26], 4
      %9897 = vst [vmem:[%s9896] sm:$0xf] %v9877
      %9898 = vst [vmem:[#allocation27] sm:$0xf] %v9867
      %s9899 = scalar_lea.vmem [#allocation27], 4
      %9900 = vst [vmem:[%s9899] sm:$0xf] %v9889
    $region101: #{forward.1} parent=1 // pred_fallthru
      _
    %v9901 = vld [vmem:[#allocation7] sm:$0xff]
    %v9902 = vld [vmem:[#allocation7 + $0x8] sm:$0xff]
    %v9903 = vld [vmem:[#allocation7 + $0x10] sm:$0xff]
    %v9904 = vld [vmem:[#allocation7 + $0x18] sm:$0xff]
    %v9905 = vpack.c.bf16 %v9903, %v9901
    %v9906 = vpack.c.bf16 %v9904, %v9902
    %v9907 = vld [vmem:[#allocation17] sm:$0xff]
    %v9908 = vld [vmem:[#allocation17 + $0x8] sm:$0xff]
    %v9909 = vld [vmem:[#allocation17 + $0x10] sm:$0xff]
    %v9910 = vld [vmem:[#allocation17 + $0x18] sm:$0xff]
    %v9911 = vld [vmem:[#allocation17 + $0x20] sm:$0xff]
    %v9912 = vld [vmem:[#allocation17 + $0x28] sm:$0xff]
    %v9913 = vld [vmem:[#allocation17 + $0x30] sm:$0xff]
    %v9914 = vld [vmem:[#allocation17 + $0x38] sm:$0xff]
    %v9915 = vld [vmem:[#allocation17 + $0x40] sm:$0xff]
    %v9916 = vld [vmem:[#allocation17 + $0x48] sm:$0xff]
    %v9917 = vld [vmem:[#allocation17 + $0x50] sm:$0xff]
    %v9918 = vld [vmem:[#allocation17 + $0x58] sm:$0xff]
    %v9919 = vld [vmem:[#allocation17 + $0x60] sm:$0xff]
    %v9920 = vld [vmem:[#allocation17 + $0x68] sm:$0xff]
    %v9921 = vld [vmem:[#allocation17 + $0x70] sm:$0xff]
    %v9922 = vld [vmem:[#allocation17 + $0x78] sm:$0xff]
    %v9923 = vld [vmem:[#allocation17 + $0x80] sm:$0xff]
    %v9924 = vld [vmem:[#allocation17 + $0x88] sm:$0xff]
    %v9925 = vld [vmem:[#allocation17 + $0x90] sm:$0xff]
    %v9926 = vld [vmem:[#allocation17 + $0x98] sm:$0xff]
    %v9927 = vld [vmem:[#allocation17 + $0xa0] sm:$0xff]
    %v9928 = vld [vmem:[#allocation17 + $0xa8] sm:$0xff]
    %v9929 = vld [vmem:[#allocation17 + $0xb0] sm:$0xff]
    %v9930 = vld [vmem:[#allocation17 + $0xb8] sm:$0xff]
    %v9931 = vld [vmem:[#allocation17 + $0xc0] sm:$0xff]
    %v9932 = vld [vmem:[#allocation17 + $0xc8] sm:$0xff]
    %v9933 = vld [vmem:[#allocation17 + $0xd0] sm:$0xff]
    %v9934 = vld [vmem:[#allocation17 + $0xd8] sm:$0xff]
    %v9935 = vld [vmem:[#allocation17 + $0xe0] sm:$0xff]
    %v9936 = vld [vmem:[#allocation17 + $0xe8] sm:$0xff]
    %v9937 = vld [vmem:[#allocation17 + $0xf0] sm:$0xff]
    %v9938 = vld [vmem:[#allocation17 + $0xf8] sm:$0xff]
    %v9939 = vld [vmem:[#allocation19] sm:$0x3]
    %v9941 = vlaneseq
    %v9942 = vshrl.u32 %v9941, 7
    %v9943 = vsub.s32 0, %v9942
    %v9944 = vrot.slane %v9939, %v9943
    %v9945 = vlaneseq
    %v9946 = vshrl.u32 %v9945, 7
    %v9947 = vsub.s32 1, %v9946
    %v9948 = vrot.slane %v9939, %v9947
    %v9983 = vunpack.c.l.b16 %v9907
    %v9984 = vunpack.c.h.b16 %v9907
    %v9985 = vunpack.c.l.b16 %v9908
    %v9986 = vunpack.c.h.b16 %v9908
    %v9987 = vunpack.c.l.b16 %v9909
    %v9988 = vunpack.c.h.b16 %v9909
    %v9989 = vunpack.c.l.b16 %v9910
    %v9990 = vunpack.c.h.b16 %v9910
    %v9991 = vunpack.c.l.b16 %v9911
    %v9992 = vunpack.c.h.b16 %v9911
    %v9993 = vunpack.c.l.b16 %v9912
    %v9994 = vunpack.c.h.b16 %v9912
    %v9995 = vunpack.c.l.b16 %v9913
    %v9996 = vunpack.c.h.b16 %v9913
    %v9997 = vunpack.c.l.b16 %v9914
    %v9998 = vunpack.c.h.b16 %v9914
    %v9999 = vunpack.c.l.b16 %v9915
    %v10000 = vunpack.c.h.b16 %v9915
    %v10001 = vunpack.c.l.b16 %v9916
    %v10002 = vunpack.c.h.b16 %v9916
    %v10003 = vunpack.c.l.b16 %v9917
    %v10004 = vunpack.c.h.b16 %v9917
    %v10005 = vunpack.c.l.b16 %v9918
    %v10006 = vunpack.c.h.b16 %v9918
    %v10007 = vunpack.c.l.b16 %v9919
    %v10008 = vunpack.c.h.b16 %v9919
    %v10009 = vunpack.c.l.b16 %v9920
    %v10010 = vunpack.c.h.b16 %v9920
    %v10011 = vunpack.c.l.b16 %v9921
    %v10012 = vunpack.c.h.b16 %v9921
    %v10013 = vunpack.c.l.b16 %v9922
    %v10014 = vunpack.c.h.b16 %v9922
    %v10015 = vunpack.c.l.b16 %v9923
    %v10016 = vunpack.c.h.b16 %v9923
    %v10017 = vunpack.c.l.b16 %v9924
    %v10018 = vunpack.c.h.b16 %v9924
    %v10019 = vunpack.c.l.b16 %v9925
    %v10020 = vunpack.c.h.b16 %v9925
    %v10021 = vunpack.c.l.b16 %v9926
    %v10022 = vunpack.c.h.b16 %v9926
    %v10023 = vunpack.c.l.b16 %v9927
    %v10024 = vunpack.c.h.b16 %v9927
    %v10025 = vunpack.c.l.b16 %v9928
    %v10026 = vunpack.c.h.b16 %v9928
    %v10027 = vunpack.c.l.b16 %v9929
    %v10028 = vunpack.c.h.b16 %v9929
    %v10029 = vunpack.c.l.b16 %v9930
    %v10030 = vunpack.c.h.b16 %v9930
    %v10031 = vunpack.c.l.b16 %v9931
    %v10032 = vunpack.c.h.b16 %v9931
    %v10033 = vunpack.c.l.b16 %v9932
    %v10034 = vunpack.c.h.b16 %v9932
    %v10035 = vunpack.c.l.b16 %v9933
    %v10036 = vunpack.c.h.b16 %v9933
    %v10037 = vunpack.c.l.b16 %v9934
    %v10038 = vunpack.c.h.b16 %v9934
    %v10039 = vunpack.c.l.b16 %v9935
    %v10040 = vunpack.c.h.b16 %v9935
    %v10041 = vunpack.c.l.b16 %v9936
    %v10042 = vunpack.c.h.b16 %v9936
    %v10043 = vunpack.c.l.b16 %v9937
    %v10044 = vunpack.c.h.b16 %v9937
    %v10045 = vunpack.c.l.b16 %v9938
    %v10046 = vunpack.c.h.b16 %v9938
    %v10047 = vpack.c.b16 %v9985, %v9983
    %v10048 = vpack.c.b16 %v9986, %v9984
    %v10049 = vpack.c.b16 %v9989, %v9987
    %v10050 = vpack.c.b16 %v9990, %v9988
    %v10051 = vpack.c.b16 %v9993, %v9991
    %v10052 = vpack.c.b16 %v9994, %v9992
    %v10053 = vpack.c.b16 %v9997, %v9995
    %v10054 = vpack.c.b16 %v9998, %v9996
    %v10055 = vpack.c.b16 %v10001, %v9999
    %v10056 = vpack.c.b16 %v10002, %v10000
    %v10057 = vpack.c.b16 %v10005, %v10003
    %v10058 = vpack.c.b16 %v10006, %v10004
    %v10059 = vpack.c.b16 %v10009, %v10007
    %v10060 = vpack.c.b16 %v10010, %v10008
    %v10061 = vpack.c.b16 %v10013, %v10011
    %v10062 = vpack.c.b16 %v10014, %v10012
    %v10063 = vpack.c.b16 %v10017, %v10015
    %v10064 = vpack.c.b16 %v10018, %v10016
    %v10065 = vpack.c.b16 %v10021, %v10019
    %v10066 = vpack.c.b16 %v10022, %v10020
    %v10067 = vpack.c.b16 %v10025, %v10023
    %v10068 = vpack.c.b16 %v10026, %v10024
    %v10069 = vpack.c.b16 %v10029, %v10027
    %v10070 = vpack.c.b16 %v10030, %v10028
    %v10071 = vpack.c.b16 %v10033, %v10031
    %v10072 = vpack.c.b16 %v10034, %v10032
    %v10073 = vpack.c.b16 %v10037, %v10035
    %v10074 = vpack.c.b16 %v10038, %v10036
    %v10075 = vpack.c.b16 %v10041, %v10039
    %v10076 = vpack.c.b16 %v10042, %v10040
    %v10077 = vpack.c.b16 %v10045, %v10043
    %v10078 = vpack.c.b16 %v10046, %v10044
    %10111 = vmatprep.subr.bf16.mxu0 %v10062
    %10112 = vmatpush1.bf16.msra.mxu0 %v10061
    %10113 = vmatprep.subr.bf16.mxu0 %v10060
    %10114 = vmatpush1.bf16.msra.mxu0 %v10059
    %10115 = vmatprep.subr.bf16.mxu0 %v10058
    %10116 = vmatpush1.bf16.msra.mxu0 %v10057
    %10117 = vmatprep.subr.bf16.mxu0 %v10056
    %10118 = vmatpush1.bf16.msra.mxu0 %v10055
    %10119 = vmatprep.subr.bf16.mxu0 %v10054
    %10120 = vmatpush1.bf16.msra.mxu0 %v10053
    %10121 = vmatprep.subr.bf16.mxu0 %v10052
    %10122 = vmatpush1.bf16.msra.mxu0 %v10051
    %10123 = vmatprep.subr.bf16.mxu0 %v10050
    %10124 = vmatpush1.bf16.msra.mxu0 %v10049
    %10125 = vmatprep.subr.bf16.mxu0 %v10048
    %10126 = vmatpush1.bf16.msra.mxu0 %v10047
    %10127 = vmatprep.subr.bf16.mxu0 %v10078
    %10128 = vmatpush2.bf16.msra.mxu0 %v10077
    %10129 = vmatprep.subr.bf16.mxu0 %v10076
    %10130 = vmatpush2.bf16.msra.mxu0 %v10075
    %10131 = vmatprep.subr.bf16.mxu0 %v10074
    %10132 = vmatpush2.bf16.msra.mxu0 %v10073
    %10133 = vmatprep.subr.bf16.mxu0 %v10072
    %10134 = vmatpush2.bf16.msra.mxu0 %v10071
    %10135 = vmatprep.subr.bf16.mxu0 %v10070
    %10136 = vmatpush2.bf16.msra.mxu0 %v10069
    %10137 = vmatprep.subr.bf16.mxu0 %v10068
    %10138 = vmatpush2.bf16.msra.mxu0 %v10067
    %10139 = vmatprep.subr.bf16.mxu0 %v10066
    %10140 = vmatpush2.bf16.msra.mxu0 %v10065
    %10141 = vmatprep.subr.bf16.mxu0 %v10064
    %10142 = vmatpush2.bf16.msra.mxu0 %v10063
    %10143 = vmatprep.mubr.bf16.mxu0 %v9906
    %10144 = vmatmul.mubr.bf16.gmra.mxu0 %v9905
    %v10145 = vpop.f32.mrf.mxu0
    %v10146 = vadd.f32 %v9944, %v10145
    %v10147 = vpop.f32.mrf.mxu0
    %v10148 = vadd.f32 %v9948, %v10147
    %v10149 = vpop.f32.mrf.mxu0
    %v10150 = vadd.f32 %v9944, %v10149
    %v10151 = vpop.f32.mrf.mxu0
    %v10152 = vadd.f32 %v9948, %v10151
    %10153 = vdwg.mxu0
    %vm10154 = vcmp.gt.f32.partialorder %v10146, 0.0
    %vm10155 = vcmp.gt.f32.partialorder %v10148, 0.0
    %vm10156 = vcmp.gt.f32.partialorder %v10150, 0.0
    %vm10157 = vcmp.gt.f32.partialorder %v10152, 0.0
    %v10158 = vmul.f32 %v10146, 0.01
    %v10159 = vmul.f32 %v10148, 0.01
    %v10160 = vmul.f32 %v10150, 0.01
    %v10161 = vmul.f32 %v10152, 0.01
    %v10162 = vsel %vm10154, %v10146, %v10158
    %v10163 = vsel %vm10155, %v10148, %v10159
    %v10164 = vsel %vm10156, %v10150, %v10160
    %v10165 = vsel %vm10157, %v10152, %v10161
    %v10166 = vpack.c.bf16 %v10164, %v10162
    %v10167 = vpack.c.bf16 %v10165, %v10163
    %v10168 = vld [vmem:[#allocation20] sm:$0xff]
    %v10169 = vld [vmem:[#allocation20 + $0x8] sm:$0xff]
    %v10170 = vld [vmem:[#allocation20 + $0x10] sm:$0xff]
    %v10171 = vld [vmem:[#allocation20 + $0x18] sm:$0xff]
    %v10172 = vld [vmem:[#allocation20 + $0x20] sm:$0xff]
    %v10173 = vld [vmem:[#allocation20 + $0x28] sm:$0xff]
    %v10174 = vld [vmem:[#allocation20 + $0x30] sm:$0xff]
    %v10175 = vld [vmem:[#allocation20 + $0x38] sm:$0xff]
    %v10176 = vld [vmem:[#allocation20 + $0x40] sm:$0xff]
    %v10177 = vld [vmem:[#allocation20 + $0x48] sm:$0xff]
    %v10178 = vld [vmem:[#allocation20 + $0x50] sm:$0xff]
    %v10179 = vld [vmem:[#allocation20 + $0x58] sm:$0xff]
    %v10180 = vld [vmem:[#allocation20 + $0x60] sm:$0xff]
    %v10181 = vld [vmem:[#allocation20 + $0x68] sm:$0xff]
    %v10182 = vld [vmem:[#allocation20 + $0x70] sm:$0xff]
    %v10183 = vld [vmem:[#allocation20 + $0x78] sm:$0xff]
    %v10184 = vld [vmem:[#allocation20 + $0x80] sm:$0xff]
    %v10185 = vld [vmem:[#allocation20 + $0x88] sm:$0xff]
    %v10186 = vld [vmem:[#allocation20 + $0x90] sm:$0xff]
    %v10187 = vld [vmem:[#allocation20 + $0x98] sm:$0xff]
    %v10188 = vld [vmem:[#allocation20 + $0xa0] sm:$0xff]
    %v10189 = vld [vmem:[#allocation20 + $0xa8] sm:$0xff]
    %v10190 = vld [vmem:[#allocation20 + $0xb0] sm:$0xff]
    %v10191 = vld [vmem:[#allocation20 + $0xb8] sm:$0xff]
    %v10192 = vld [vmem:[#allocation20 + $0xc0] sm:$0xff]
    %v10193 = vld [vmem:[#allocation20 + $0xc8] sm:$0xff]
    %v10194 = vld [vmem:[#allocation20 + $0xd0] sm:$0xff]
    %v10195 = vld [vmem:[#allocation20 + $0xd8] sm:$0xff]
    %v10196 = vld [vmem:[#allocation20 + $0xe0] sm:$0xff]
    %v10197 = vld [vmem:[#allocation20 + $0xe8] sm:$0xff]
    %v10198 = vld [vmem:[#allocation20 + $0xf0] sm:$0xff]
    %v10199 = vld [vmem:[#allocation20 + $0xf8] sm:$0xff]
    %v10200 = vld [vmem:[#allocation22] sm:$0x3]
    %v10202 = vlaneseq
    %v10203 = vshrl.u32 %v10202, 7
    %v10204 = vsub.s32 0, %v10203
    %v10205 = vrot.slane %v10200, %v10204
    %v10206 = vlaneseq
    %v10207 = vshrl.u32 %v10206, 7
    %v10208 = vsub.s32 1, %v10207
    %v10209 = vrot.slane %v10200, %v10208
    %v10244 = vunpack.c.l.b16 %v10168
    %v10245 = vunpack.c.h.b16 %v10168
    %v10246 = vunpack.c.l.b16 %v10169
    %v10247 = vunpack.c.h.b16 %v10169
    %v10248 = vunpack.c.l.b16 %v10170
    %v10249 = vunpack.c.h.b16 %v10170
    %v10250 = vunpack.c.l.b16 %v10171
    %v10251 = vunpack.c.h.b16 %v10171
    %v10252 = vunpack.c.l.b16 %v10172
    %v10253 = vunpack.c.h.b16 %v10172
    %v10254 = vunpack.c.l.b16 %v10173
    %v10255 = vunpack.c.h.b16 %v10173
    %v10256 = vunpack.c.l.b16 %v10174
    %v10257 = vunpack.c.h.b16 %v10174
    %v10258 = vunpack.c.l.b16 %v10175
    %v10259 = vunpack.c.h.b16 %v10175
    %v10260 = vunpack.c.l.b16 %v10176
    %v10261 = vunpack.c.h.b16 %v10176
    %v10262 = vunpack.c.l.b16 %v10177
    %v10263 = vunpack.c.h.b16 %v10177
    %v10264 = vunpack.c.l.b16 %v10178
    %v10265 = vunpack.c.h.b16 %v10178
    %v10266 = vunpack.c.l.b16 %v10179
    %v10267 = vunpack.c.h.b16 %v10179
    %v10268 = vunpack.c.l.b16 %v10180
    %v10269 = vunpack.c.h.b16 %v10180
    %v10270 = vunpack.c.l.b16 %v10181
    %v10271 = vunpack.c.h.b16 %v10181
    %v10272 = vunpack.c.l.b16 %v10182
    %v10273 = vunpack.c.h.b16 %v10182
    %v10274 = vunpack.c.l.b16 %v10183
    %v10275 = vunpack.c.h.b16 %v10183
    %v10276 = vunpack.c.l.b16 %v10184
    %v10277 = vunpack.c.h.b16 %v10184
    %v10278 = vunpack.c.l.b16 %v10185
    %v10279 = vunpack.c.h.b16 %v10185
    %v10280 = vunpack.c.l.b16 %v10186
    %v10281 = vunpack.c.h.b16 %v10186
    %v10282 = vunpack.c.l.b16 %v10187
    %v10283 = vunpack.c.h.b16 %v10187
    %v10284 = vunpack.c.l.b16 %v10188
    %v10285 = vunpack.c.h.b16 %v10188
    %v10286 = vunpack.c.l.b16 %v10189
    %v10287 = vunpack.c.h.b16 %v10189
    %v10288 = vunpack.c.l.b16 %v10190
    %v10289 = vunpack.c.h.b16 %v10190
    %v10290 = vunpack.c.l.b16 %v10191
    %v10291 = vunpack.c.h.b16 %v10191
    %v10292 = vunpack.c.l.b16 %v10192
    %v10293 = vunpack.c.h.b16 %v10192
    %v10294 = vunpack.c.l.b16 %v10193
    %v10295 = vunpack.c.h.b16 %v10193
    %v10296 = vunpack.c.l.b16 %v10194
    %v10297 = vunpack.c.h.b16 %v10194
    %v10298 = vunpack.c.l.b16 %v10195
    %v10299 = vunpack.c.h.b16 %v10195
    %v10300 = vunpack.c.l.b16 %v10196
    %v10301 = vunpack.c.h.b16 %v10196
    %v10302 = vunpack.c.l.b16 %v10197
    %v10303 = vunpack.c.h.b16 %v10197
    %v10304 = vunpack.c.l.b16 %v10198
    %v10305 = vunpack.c.h.b16 %v10198
    %v10306 = vunpack.c.l.b16 %v10199
    %v10307 = vunpack.c.h.b16 %v10199
    %v10308 = vpack.c.b16 %v10246, %v10244
    %v10309 = vpack.c.b16 %v10247, %v10245
    %v10310 = vpack.c.b16 %v10250, %v10248
    %v10311 = vpack.c.b16 %v10251, %v10249
    %v10312 = vpack.c.b16 %v10254, %v10252
    %v10313 = vpack.c.b16 %v10255, %v10253
    %v10314 = vpack.c.b16 %v10258, %v10256
    %v10315 = vpack.c.b16 %v10259, %v10257
    %v10316 = vpack.c.b16 %v10262, %v10260
    %v10317 = vpack.c.b16 %v10263, %v10261
    %v10318 = vpack.c.b16 %v10266, %v10264
    %v10319 = vpack.c.b16 %v10267, %v10265
    %v10320 = vpack.c.b16 %v10270, %v10268
    %v10321 = vpack.c.b16 %v10271, %v10269
    %v10322 = vpack.c.b16 %v10274, %v10272
    %v10323 = vpack.c.b16 %v10275, %v10273
    %v10324 = vpack.c.b16 %v10278, %v10276
    %v10325 = vpack.c.b16 %v10279, %v10277
    %v10326 = vpack.c.b16 %v10282, %v10280
    %v10327 = vpack.c.b16 %v10283, %v10281
    %v10328 = vpack.c.b16 %v10286, %v10284
    %v10329 = vpack.c.b16 %v10287, %v10285
    %v10330 = vpack.c.b16 %v10290, %v10288
    %v10331 = vpack.c.b16 %v10291, %v10289
    %v10332 = vpack.c.b16 %v10294, %v10292
    %v10333 = vpack.c.b16 %v10295, %v10293
    %v10334 = vpack.c.b16 %v10298, %v10296
    %v10335 = vpack.c.b16 %v10299, %v10297
    %v10336 = vpack.c.b16 %v10302, %v10300
    %v10337 = vpack.c.b16 %v10303, %v10301
    %v10338 = vpack.c.b16 %v10306, %v10304
    %v10339 = vpack.c.b16 %v10307, %v10305
    %10372 = vmatprep.subr.bf16.mxu0 %v10323
    %10373 = vmatpush1.bf16.msra.mxu0 %v10322
    %10374 = vmatprep.subr.bf16.mxu0 %v10321
    %10375 = vmatpush1.bf16.msra.mxu0 %v10320
    %10376 = vmatprep.subr.bf16.mxu0 %v10319
    %10377 = vmatpush1.bf16.msra.mxu0 %v10318
    %10378 = vmatprep.subr.bf16.mxu0 %v10317
    %10379 = vmatpush1.bf16.msra.mxu0 %v10316
    %10380 = vmatprep.subr.bf16.mxu0 %v10315
    %10381 = vmatpush1.bf16.msra.mxu0 %v10314
    %10382 = vmatprep.subr.bf16.mxu0 %v10313
    %10383 = vmatpush1.bf16.msra.mxu0 %v10312
    %10384 = vmatprep.subr.bf16.mxu0 %v10311
    %10385 = vmatpush1.bf16.msra.mxu0 %v10310
    %10386 = vmatprep.subr.bf16.mxu0 %v10309
    %10387 = vmatpush1.bf16.msra.mxu0 %v10308
    %10388 = vmatprep.subr.bf16.mxu0 %v10339
    %10389 = vmatpush2.bf16.msra.mxu0 %v10338
    %10390 = vmatprep.subr.bf16.mxu0 %v10337
    %10391 = vmatpush2.bf16.msra.mxu0 %v10336
    %10392 = vmatprep.subr.bf16.mxu0 %v10335
    %10393 = vmatpush2.bf16.msra.mxu0 %v10334
    %10394 = vmatprep.subr.bf16.mxu0 %v10333
    %10395 = vmatpush2.bf16.msra.mxu0 %v10332
    %10396 = vmatprep.subr.bf16.mxu0 %v10331
    %10397 = vmatpush2.bf16.msra.mxu0 %v10330
    %10398 = vmatprep.subr.bf16.mxu0 %v10329
    %10399 = vmatpush2.bf16.msra.mxu0 %v10328
    %10400 = vmatprep.subr.bf16.mxu0 %v10327
    %10401 = vmatpush2.bf16.msra.mxu0 %v10326
    %10402 = vmatprep.subr.bf16.mxu0 %v10325
    %10403 = vmatpush2.bf16.msra.mxu0 %v10324
    %10404 = vmatprep.mubr.bf16.mxu0 %v10167
    %10405 = vmatmul.mubr.bf16.gmra.mxu0 %v10166
    %v10406 = vpop.f32.mrf.mxu0
    %v10407 = vadd.f32 %v10205, %v10406
    %v10408 = vpop.f32.mrf.mxu0
    %v10409 = vadd.f32 %v10209, %v10408
    %v10410 = vpop.f32.mrf.mxu0
    %v10411 = vadd.f32 %v10205, %v10410
    %v10412 = vpop.f32.mrf.mxu0
    %v10413 = vadd.f32 %v10209, %v10412
    %10414 = vdwg.mxu0
    %vm10415 = vcmp.gt.f32.partialorder %v10407, 0.0
    %vm10416 = vcmp.gt.f32.partialorder %v10409, 0.0
    %vm10417 = vcmp.gt.f32.partialorder %v10411, 0.0
    %vm10418 = vcmp.gt.f32.partialorder %v10413, 0.0
    %v10419 = vmul.f32 %v10407, 0.01
    %v10420 = vmul.f32 %v10409, 0.01
    %v10421 = vmul.f32 %v10411, 0.01
    %v10422 = vmul.f32 %v10413, 0.01
    %v10423 = vsel %vm10415, %v10407, %v10419
    %v10424 = vsel %vm10416, %v10409, %v10420
    %v10425 = vsel %vm10417, %v10411, %v10421
    %v10426 = vsel %vm10418, %v10413, %v10422
    %v10427 = vpack.c.bf16 %v10425, %v10423
    %v10428 = vpack.c.bf16 %v10426, %v10424
    %v10429 = vld [vmem:[#allocation23] sm:$0xff]
    %v10430 = vld [vmem:[#allocation23 + $0x8] sm:$0xff]
    %v10431 = vld [vmem:[#allocation23 + $0x10] sm:$0xff]
    %v10432 = vld [vmem:[#allocation23 + $0x18] sm:$0xff]
    %v10433 = vld [vmem:[#allocation23 + $0x20] sm:$0xff]
    %v10434 = vld [vmem:[#allocation23 + $0x28] sm:$0xff]
    %v10435 = vld [vmem:[#allocation23 + $0x30] sm:$0xff]
    %v10436 = vld [vmem:[#allocation23 + $0x38] sm:$0xff]
    %v10437 = vld [vmem:[#allocation23 + $0x40] sm:$0xff]
    %v10438 = vld [vmem:[#allocation23 + $0x48] sm:$0xff]
    %v10439 = vld [vmem:[#allocation23 + $0x50] sm:$0xff]
    %v10440 = vld [vmem:[#allocation23 + $0x58] sm:$0xff]
    %v10441 = vld [vmem:[#allocation23 + $0x60] sm:$0xff]
    %v10442 = vld [vmem:[#allocation23 + $0x68] sm:$0xff]
    %v10443 = vld [vmem:[#allocation23 + $0x70] sm:$0xff]
    %v10444 = vld [vmem:[#allocation23 + $0x78] sm:$0xff]
    %v10445 = vld [vmem:[#allocation23 + $0x80] sm:$0xff]
    %v10446 = vld [vmem:[#allocation23 + $0x88] sm:$0xff]
    %v10447 = vld [vmem:[#allocation23 + $0x90] sm:$0xff]
    %v10448 = vld [vmem:[#allocation23 + $0x98] sm:$0xff]
    %v10449 = vld [vmem:[#allocation23 + $0xa0] sm:$0xff]
    %v10450 = vld [vmem:[#allocation23 + $0xa8] sm:$0xff]
    %v10451 = vld [vmem:[#allocation23 + $0xb0] sm:$0xff]
    %v10452 = vld [vmem:[#allocation23 + $0xb8] sm:$0xff]
    %v10453 = vld [vmem:[#allocation23 + $0xc0] sm:$0xff]
    %v10454 = vld [vmem:[#allocation23 + $0xc8] sm:$0xff]
    %v10455 = vld [vmem:[#allocation23 + $0xd0] sm:$0xff]
    %v10456 = vld [vmem:[#allocation23 + $0xd8] sm:$0xff]
    %v10457 = vld [vmem:[#allocation23 + $0xe0] sm:$0xff]
    %v10458 = vld [vmem:[#allocation23 + $0xe8] sm:$0xff]
    %v10459 = vld [vmem:[#allocation23 + $0xf0] sm:$0xff]
    %v10460 = vld [vmem:[#allocation23 + $0xf8] sm:$0xff]
    %v10461 = vld [vmem:[#allocation25] sm:$0x3]
    %v10463 = vlaneseq
    %v10464 = vshrl.u32 %v10463, 7
    %v10465 = vsub.s32 0, %v10464
    %v10466 = vrot.slane %v10461, %v10465
    %v10467 = vlaneseq
    %v10468 = vshrl.u32 %v10467, 7
    %v10469 = vsub.s32 1, %v10468
    %v10470 = vrot.slane %v10461, %v10469
    %v10505 = vunpack.c.l.b16 %v10429
    %v10506 = vunpack.c.h.b16 %v10429
    %v10507 = vunpack.c.l.b16 %v10430
    %v10508 = vunpack.c.h.b16 %v10430
    %v10509 = vunpack.c.l.b16 %v10431
    %v10510 = vunpack.c.h.b16 %v10431
    %v10511 = vunpack.c.l.b16 %v10432
    %v10512 = vunpack.c.h.b16 %v10432
    %v10513 = vunpack.c.l.b16 %v10433
    %v10514 = vunpack.c.h.b16 %v10433
    %v10515 = vunpack.c.l.b16 %v10434
    %v10516 = vunpack.c.h.b16 %v10434
    %v10517 = vunpack.c.l.b16 %v10435
    %v10518 = vunpack.c.h.b16 %v10435
    %v10519 = vunpack.c.l.b16 %v10436
    %v10520 = vunpack.c.h.b16 %v10436
    %v10521 = vunpack.c.l.b16 %v10437
    %v10522 = vunpack.c.h.b16 %v10437
    %v10523 = vunpack.c.l.b16 %v10438
    %v10524 = vunpack.c.h.b16 %v10438
    %v10525 = vunpack.c.l.b16 %v10439
    %v10526 = vunpack.c.h.b16 %v10439
    %v10527 = vunpack.c.l.b16 %v10440
    %v10528 = vunpack.c.h.b16 %v10440
    %v10529 = vunpack.c.l.b16 %v10441
    %v10530 = vunpack.c.h.b16 %v10441
    %v10531 = vunpack.c.l.b16 %v10442
    %v10532 = vunpack.c.h.b16 %v10442
    %v10533 = vunpack.c.l.b16 %v10443
    %v10534 = vunpack.c.h.b16 %v10443
    %v10535 = vunpack.c.l.b16 %v10444
    %v10536 = vunpack.c.h.b16 %v10444
    %v10537 = vunpack.c.l.b16 %v10445
    %v10538 = vunpack.c.h.b16 %v10445
    %v10539 = vunpack.c.l.b16 %v10446
    %v10540 = vunpack.c.h.b16 %v10446
    %v10541 = vunpack.c.l.b16 %v10447
    %v10542 = vunpack.c.h.b16 %v10447
    %v10543 = vunpack.c.l.b16 %v10448
    %v10544 = vunpack.c.h.b16 %v10448
    %v10545 = vunpack.c.l.b16 %v10449
    %v10546 = vunpack.c.h.b16 %v10449
    %v10547 = vunpack.c.l.b16 %v10450
    %v10548 = vunpack.c.h.b16 %v10450
    %v10549 = vunpack.c.l.b16 %v10451
    %v10550 = vunpack.c.h.b16 %v10451
    %v10551 = vunpack.c.l.b16 %v10452
    %v10552 = vunpack.c.h.b16 %v10452
    %v10553 = vunpack.c.l.b16 %v10453
    %v10554 = vunpack.c.h.b16 %v10453
    %v10555 = vunpack.c.l.b16 %v10454
    %v10556 = vunpack.c.h.b16 %v10454
    %v10557 = vunpack.c.l.b16 %v10455
    %v10558 = vunpack.c.h.b16 %v10455
    %v10559 = vunpack.c.l.b16 %v10456
    %v10560 = vunpack.c.h.b16 %v10456
    %v10561 = vunpack.c.l.b16 %v10457
    %v10562 = vunpack.c.h.b16 %v10457
    %v10563 = vunpack.c.l.b16 %v10458
    %v10564 = vunpack.c.h.b16 %v10458
    %v10565 = vunpack.c.l.b16 %v10459
    %v10566 = vunpack.c.h.b16 %v10459
    %v10567 = vunpack.c.l.b16 %v10460
    %v10568 = vunpack.c.h.b16 %v10460
    %v10569 = vpack.c.b16 %v10507, %v10505
    %v10570 = vpack.c.b16 %v10508, %v10506
    %v10571 = vpack.c.b16 %v10511, %v10509
    %v10572 = vpack.c.b16 %v10512, %v10510
    %v10573 = vpack.c.b16 %v10515, %v10513
    %v10574 = vpack.c.b16 %v10516, %v10514
    %v10575 = vpack.c.b16 %v10519, %v10517
    %v10576 = vpack.c.b16 %v10520, %v10518
    %v10577 = vpack.c.b16 %v10523, %v10521
    %v10578 = vpack.c.b16 %v10524, %v10522
    %v10579 = vpack.c.b16 %v10527, %v10525
    %v10580 = vpack.c.b16 %v10528, %v10526
    %v10581 = vpack.c.b16 %v10531, %v10529
    %v10582 = vpack.c.b16 %v10532, %v10530
    %v10583 = vpack.c.b16 %v10535, %v10533
    %v10584 = vpack.c.b16 %v10536, %v10534
    %v10585 = vpack.c.b16 %v10539, %v10537
    %v10586 = vpack.c.b16 %v10540, %v10538
    %v10587 = vpack.c.b16 %v10543, %v10541
    %v10588 = vpack.c.b16 %v10544, %v10542
    %v10589 = vpack.c.b16 %v10547, %v10545
    %v10590 = vpack.c.b16 %v10548, %v10546
    %v10591 = vpack.c.b16 %v10551, %v10549
    %v10592 = vpack.c.b16 %v10552, %v10550
    %v10593 = vpack.c.b16 %v10555, %v10553
    %v10594 = vpack.c.b16 %v10556, %v10554
    %v10595 = vpack.c.b16 %v10559, %v10557
    %v10596 = vpack.c.b16 %v10560, %v10558
    %v10597 = vpack.c.b16 %v10563, %v10561
    %v10598 = vpack.c.b16 %v10564, %v10562
    %v10599 = vpack.c.b16 %v10567, %v10565
    %v10600 = vpack.c.b16 %v10568, %v10566
    %10633 = vmatprep.subr.bf16.mxu0 %v10584
    %10634 = vmatpush1.bf16.msra.mxu0 %v10583
    %10635 = vmatprep.subr.bf16.mxu0 %v10582
    %10636 = vmatpush1.bf16.msra.mxu0 %v10581
    %10637 = vmatprep.subr.bf16.mxu0 %v10580
    %10638 = vmatpush1.bf16.msra.mxu0 %v10579
    %10639 = vmatprep.subr.bf16.mxu0 %v10578
    %10640 = vmatpush1.bf16.msra.mxu0 %v10577
    %10641 = vmatprep.subr.bf16.mxu0 %v10576
    %10642 = vmatpush1.bf16.msra.mxu0 %v10575
    %10643 = vmatprep.subr.bf16.mxu0 %v10574
    %10644 = vmatpush1.bf16.msra.mxu0 %v10573
    %10645 = vmatprep.subr.bf16.mxu0 %v10572
    %10646 = vmatpush1.bf16.msra.mxu0 %v10571
    %10647 = vmatprep.subr.bf16.mxu0 %v10570
    %10648 = vmatpush1.bf16.msra.mxu0 %v10569
    %10649 = vmatprep.subr.bf16.mxu0 %v10600
    %10650 = vmatpush2.bf16.msra.mxu0 %v10599
    %10651 = vmatprep.subr.bf16.mxu0 %v10598
    %10652 = vmatpush2.bf16.msra.mxu0 %v10597
    %10653 = vmatprep.subr.bf16.mxu0 %v10596
    %10654 = vmatpush2.bf16.msra.mxu0 %v10595
    %10655 = vmatprep.subr.bf16.mxu0 %v10594
    %10656 = vmatpush2.bf16.msra.mxu0 %v10593
    %10657 = vmatprep.subr.bf16.mxu0 %v10592
    %10658 = vmatpush2.bf16.msra.mxu0 %v10591
    %10659 = vmatprep.subr.bf16.mxu0 %v10590
    %10660 = vmatpush2.bf16.msra.mxu0 %v10589
    %10661 = vmatprep.subr.bf16.mxu0 %v10588
    %10662 = vmatpush2.bf16.msra.mxu0 %v10587
    %10663 = vmatprep.subr.bf16.mxu0 %v10586
    %10664 = vmatpush2.bf16.msra.mxu0 %v10585
    %10665 = vmatprep.mubr.bf16.mxu0 %v10428
    %10666 = vmatmul.mubr.bf16.gmra.mxu0 %v10427
    %v10667 = vpop.f32.mrf.mxu0
    %v10668 = vadd.f32 %v10466, %v10667
    %v10669 = vpop.f32.mrf.mxu0
    %v10670 = vadd.f32 %v10470, %v10669
    %v10671 = vpop.f32.mrf.mxu0
    %v10672 = vadd.f32 %v10466, %v10671
    %v10673 = vpop.f32.mrf.mxu0
    %v10674 = vadd.f32 %v10470, %v10673
    %10675 = vdwg.mxu0
    %10676 = vst [vmem:[%s12] sm:$0xff] %v10668
    %10677 = vst [vmem:[%s12 + $0x8] sm:$0xff] %v10670
    %10678 = vst [vmem:[%s12 + $0x10] sm:$0xff] %v10672
    %10679 = vst [vmem:[%s12 + $0x18] sm:$0xff] %v10674
    // Predicated region
    $region102: #{forward.1} parent=1 // pred_check
      _
    $region103: #{forward.1} parent=1 // pred_check_branch
      %10681 = sbr.rel (0) target = $region105
    $region104: #{forward.1} parent=1 // pred_region
      _
    $region105: #{forward.1} parent=1 // pred_fallthru
      _
    // Predicated region
    $region106: #{forward.1} parent=1 // pred_check
      _
    $region107: #{forward.1} parent=1 // pred_check_branch
      %10683 = sbr.rel (0) target = $region109
    $region108: #{forward.1} parent=1 // pred_region
      %s10685 = ssub.s32 128, 128
      %10686 = vsyncadd [#allocation10], %s10685
      %s10687 = sshll.u32 [#allocation26], 4
      %s10688 = int_to_ptr.vmem [resolvable:$true] %s10687
      %10693 = dma.vmem_to_hbm [thread:$0]  %s10688, 128, %s13, [#allocation10], 64, 64, 4
    $region109: #{forward.1} parent=1 // pred_fallthru
      _
    // Predicated region
    $region110: #{forward.1} parent=1 // pred_check
      _
    $region111: #{forward.1} parent=1 // pred_check_branch
      %10695 = sbr.rel (0) target = $region113
    $region112: #{forward.1} parent=1 // pred_region
      %s10697 = ssub.s32 128, 128
      %10698 = vsyncadd [#allocation28], %s10697
      %s10699 = sshll.u32 [#allocation27], 4
      %s10700 = int_to_ptr.vmem [resolvable:$true] %s10699
      %10705 = dma.vmem_to_hbm [thread:$0]  %s10700, 128, %s14, [#allocation28], 64, 64, 4
    $region113: #{forward.1} parent=1 // pred_fallthru
      _
    // Predicated region
    $region114: #{forward.1} parent=1 // pred_check
      _
    $region115: #{forward.1} parent=1 // pred_check_branch
      %10707 = sbr.rel (0) target = $region117
    $region116: #{forward.1} parent=1 // pred_region
      _
    $region117: #{forward.1} parent=1 // pred_fallthru
      _
    // Predicated region
    $region118: #{forward.1} parent=1 // pred_check
      _
    $region119: #{forward.1} parent=1 // pred_check_branch
      %10709 = sbr.rel (0) target = $region121
    $region120: #{forward.1} parent=1 // pred_region
      %10710 = dma.done [#allocation10], 128
    $region121: #{forward.1} parent=1 // pred_fallthru
      _
    // Predicated region
    $region122: #{forward.1} parent=1 // pred_check
      _
    $region123: #{forward.1} parent=1 // pred_check_branch
      %10712 = sbr.rel (0) target = $region125
    $region124: #{forward.1} parent=1 // pred_region
      %10713 = dma.done [#allocation28], 128
    $region125: #{forward.1} parent=1 // pred_fallthru
      _
    %10714 = vsyncpa [#allocation9], 1
    %10715 = vsyncpa [#allocation12], 1
    %10716 = vsyncpa [#allocation15], 1
    %10717 = vsyncpa [#allocation18], 1
    %10718 = vsyncpa [#allocation21], 1
    %10719 = vsyncpa [#allocation24], 1
    %10720 = vsyncpa [#allocation10], 1
    %10721 = vsyncpa [#allocation28], 1

</llo_original>
